<compile_context>
chip_gen: v7x
topology: tpu7x:2x2x1
jax: 0.10.0
libtpu: 0.0.40
codegen_flags: <defaults>
</compile_context>

<pallas_src>
import functools

import jax
import jax.numpy as jnp
from jax.experimental import pallas as pl
from jax.experimental.pallas import tpu as pltpu


# VMEM working-set budget per pallas_call (double-buffered tiles + accumulators).
# Sized for v7x's 64 MiB/TC; also far under v5e/v6e's 128 MiB.
_VMEM_BUDGET = 24 * 1024 * 1024
# Target HBM bytes moved per grid step (amortizes the ~0.35 us/step overhead).
_TARGET_STEP_BYTES = 2 * 1024 * 1024
_K_SINGLE_BLOCK_MAX = 4096          # K up to this stays a single (un-padded) block


def _round_up(x, m):
    return (x + m - 1) // m * m


def _lane_bytes(cols, itemsize):
    # VMEM bytes of one row of a tile: lanes pad to a multiple of 128.
    return _round_up(cols, 128) * itemsize


def _vmem_tile_bytes(rows, cols, itemsize):
    # VMEM footprint of a (rows, cols) tile (lane pad 128, sublane pad 16).
    return _round_up(max(rows, 1), 16) * _round_up(cols, 128) * itemsize


def _pick_tm(M, hbm_bytes_per_row, vmem_bytes_per_row, vmem_fixed_bytes):
    """Row (sublane) tile: large enough that each grid step moves
    ~_TARGET_STEP_BYTES of HBM traffic, small enough that the double-buffered
    working set stays under _VMEM_BUDGET (v7x-safe)."""
    want = _TARGET_STEP_BYTES // max(hbm_bytes_per_row, 1)
    cap = (_VMEM_BUDGET - vmem_fixed_bytes) // max(vmem_bytes_per_row, 1)
    tm = max(512, min(want, cap))
    tm = min(tm, _round_up(M, 8))
    return max(8, (tm // 8) * 8)


def _vmem_limit(footprint_bytes):
    # Per-call scoped-VMEM limit derived from the actual tile plan, with
    # headroom for Mosaic-internal scratch.
    return int(min(48 * 1024 * 1024,
                   max(24 * 1024 * 1024, int(footprint_bytes * 1.5))))


def _cost(m, n, k, a_bytes, b_bytes, o_bytes):
    return pl.CostEstimate(flops=int(2 * m * n * k), transcendentals=0,
                           bytes_accessed=int(a_bytes + b_bytes + o_bytes))


# ----------------------------------------------------------------------------
# Kernel 1: C = A @ B + bias   (tiled, K-reduction grid, f32 accumulator)
# ----------------------------------------------------------------------------
def _mm_nn_kernel(a_ref, b_ref, bias_ref, o_ref, acc_ref):
    k = pl.program_id(2)

    @pl.when(k == 0)
    def _():
        acc_ref[...] = jnp.zeros_like(acc_ref)

    acc_ref[...] += jnp.dot(a_ref[...], b_ref[...],
                            preferred_element_type=jnp.float32)

    @pl.when(k == pl.num_programs(2) - 1)
    def _():
        o_ref[...] = acc_ref[...] + bias_ref[...]


def _matmul_nn_bias_raw(a, b, bias):
    """a:(M,K), b:(K,N), bias:(N,) -> (M,N) f32 = a@b + bias (bf16 MXU, f32 acc)."""
    a = a.astype(jnp.bfloat16)
    b = b.astype(jnp.bfloat16)
    M, K = a.shape
    K2, N = b.shape
    assert K == K2, (a.shape, b.shape)

    if K <= _K_SINGLE_BLOCK_MAX:
        tk = K                                    # full-dim block: no K padding
    else:                                         # rare: pad K to tile multiple
        tk = 512
        Kp = _round_up(K, tk)
        a = jnp.pad(a, ((0, 0), (0, Kp - K)))
        b = jnp.pad(b, ((0, Kp - K), (0, 0)))
        K = Kp
    tn = N if N <= 128 else 128

    # tm scaled with K (>= ~2 MiB moved per step), capped by the VMEM budget.
    hbm_row = tk * 2 + tn * 4                       # A tile read + out tile write
    vmem_row = (2 * _lane_bytes(tk, 2)              # A, double-buffered
                + 2 * _lane_bytes(tn, 4)            # out, double-buffered
                + _lane_bytes(tn, 4))               # f32 accumulator
    vmem_fixed = 2 * _vmem_tile_bytes(tk, tn, 2) + 2 * _vmem_tile_bytes(1, tn, 4)
    tm = _pick_tm(M, hbm_row, vmem_row, vmem_fixed)
    nm, nn, nk = pl.cdiv(M, tm), pl.cdiv(N, tn), K // tk

    # TODO(synk): reorient the conv matmul so the big spatial axis is the lane
    # dimension (y^T = W(c_out,K) @ patches^T(K,M)) for unmasked lane-dense
    # stores; kept in the (M, c_out) orientation here.
    bias2 = bias.astype(jnp.float32).reshape(1, N)
    out = pl.pallas_call(
        _mm_nn_kernel,
        out_shape=jax.ShapeDtypeStruct((M, N), jnp.float32),
        grid_spec=pltpu.PrefetchScalarGridSpec(
            num_scalar_prefetch=0,
            grid=(nm, nn, nk),
            in_specs=[pl.BlockSpec((tm, tk), lambda i, j, k: (i, k)),
                      pl.BlockSpec((tk, tn), lambda i, j, k: (k, j)),
                      pl.BlockSpec((1, tn), lambda i, j, k: (0, j))],
            out_specs=pl.BlockSpec((tm, tn), lambda i, j, k: (i, j)),
            scratch_shapes=[pltpu.VMEM((tm, tn), jnp.float32)]),
        compiler_params=pltpu.CompilerParams(
            dimension_semantics=("parallel", "parallel", "arbitrary"),
            vmem_limit_bytes=_vmem_limit(tm * vmem_row + vmem_fixed)),
        cost_estimate=_cost(M, N, K, a.size * 2, b.size * 2, M * N * 4),
    )(a, b, bias2)
    return out


# ----------------------------------------------------------------------------
# Kernel 2: C = G @ B^T   (backward dA; contraction over the small N axis,
# transposed operand handled via dot_general — no XLA b.T; bf16 output)
# ----------------------------------------------------------------------------
def _mm_nt_kernel(g_ref, b_ref, o_ref):
    o_ref[...] = jax.lax.dot_general(
        g_ref[...], b_ref[...],
        dimension_numbers=(((1,), (1,)), ((), ())),
        preferred_element_type=jnp.float32).astype(o_ref.dtype)


def _matmul_nt_raw(g, b):
    """g:(M,N), b:(K,N) -> (M,K) bf16 = g @ b.T (consumer dtype written directly)."""
    g = g.astype(jnp.bfloat16)
    b = b.astype(jnp.bfloat16)
    M, N = g.shape
    K, _ = b.shape

    hbm_row = N * 2 + K * 2                          # g read + bf16 out write
    vmem_row = 2 * _lane_bytes(N, 2) + 2 * _lane_bytes(K, 2)
    vmem_fixed = 2 * _vmem_tile_bytes(K, N, 2)
    tm = _pick_tm(M, hbm_row, vmem_row, vmem_fixed)
    nm = pl.cdiv(M, tm)
    return pl.pallas_call(
        _mm_nt_kernel,
        out_shape=jax.ShapeDtypeStruct((M, K), jnp.bfloat16),
        grid_spec=pltpu.PrefetchScalarGridSpec(
            num_scalar_prefetch=0,
            grid=(nm,),
            in_specs=[pl.BlockSpec((tm, N), lambda i: (i, 0)),
                      pl.BlockSpec((K, N), lambda i: (0, 0))],
            out_specs=pl.BlockSpec((tm, K), lambda i: (i, 0))),
        compiler_params=pltpu.CompilerParams(
            dimension_semantics=("parallel",),
            vmem_limit_bytes=_vmem_limit(tm * vmem_row + vmem_fixed)),
        cost_estimate=_cost(M, K, N, g.size * 2, b.size * 2, M * K * 2),
    )(g, b)


# ----------------------------------------------------------------------------
# Kernel 3: (C, dbias) = (A^T @ G, colsum(G))  — backward dB with fused bias
# gradient. Reduction grid over the big M axis with VMEM accumulators; only
# the ragged last block pays for masking.
# ----------------------------------------------------------------------------
def _mm_tn_kernel(a_ref, g_ref, o_ref, dbias_ref, acc_ref, bsum_ref,
                  *, m_real, tm, ragged):
    s = pl.program_id(0)
    last = pl.num_programs(0) - 1

    @pl.when(s == 0)
    def _():
        acc_ref[...] = jnp.zeros_like(acc_ref)
        bsum_ref[...] = jnp.zeros_like(bsum_ref)

    def accumulate(a_blk, g_blk):
        acc_ref[...] += jax.lax.dot_general(
            a_blk, g_blk,
            dimension_numbers=(((0,), (0,)), ((), ())),
            preferred_element_type=jnp.float32)
        bsum_ref[...] += jnp.sum(g_blk.astype(jnp.float32), axis=0,
                                 keepdims=True)

    if not ragged:                           # trace-time: no ragged tail at all
        accumulate(a_ref[...], g_ref[...])
    else:
        # Full blocks take the cheap unmasked path; only the final (ragged)
        # block pays for the iota+where. Both operands are zeroed there so
        # undefined OOB rows (possibly Inf/NaN bit patterns) can never hit the
        # MXU as 0 * NaN.
        @pl.when(s != last)
        def _():
            accumulate(a_ref[...], g_ref[...])

        @pl.when(s == last)
        def _():
            def mask(blk):
                rows = jax.lax.broadcasted_iota(jnp.int32, blk.shape, 0) + s * tm
                return jnp.where(rows < m_real, blk, jnp.zeros_like(blk))
            accumulate(mask(a_ref[...]), mask(g_ref[...]))

    @pl.when(s == last)
    def _():
        o_ref[...] = acc_ref[...].astype(o_ref.dtype)
        dbias_ref[...] = bsum_ref[...]


def _matmul_tn_raw(a, g):
    """a:(M,K), g:(M,N) -> (db:(K,N) bf16 = a.T @ g, dbias:(1,N) f32 = colsum g)."""
    a = a.astype(jnp.bfloat16)
    g = g.astype(jnp.bfloat16)
    M, K = a.shape
    _, N = g.shape

    hbm_row = K * 2 + N * 2
    vmem_row = 2 * _lane_bytes(K, 2) + 2 * _lane_bytes(N, 2)
    vmem_fixed = (_vmem_tile_bytes(K, N, 4) + _vmem_tile_bytes(1, N, 4)
                  + 2 * _vmem_tile_bytes(K, N, 2) + 2 * _vmem_tile_bytes(1, N, 4))
    tm = _pick_tm(M, hbm_row, vmem_row, vmem_fixed)
    nm = pl.cdiv(M, tm)
    kernel = functools.partial(_mm_tn_kernel, m_real=M, tm=tm,
                               ragged=(M % tm != 0))
    # TODO(synk): on v7x (2 TCs) add a leading "parallel" grid axis splitting M
    # into per-core halves with independent accumulators, summed in XLA.
    db, dbias = pl.pallas_call(
        kernel,
        out_shape=(jax.ShapeDtypeStruct((K, N), jnp.bfloat16),
                   jax.ShapeDtypeStruct((1, N), jnp.float32)),
        grid_spec=pltpu.PrefetchScalarGridSpec(
            num_scalar_prefetch=0,
            grid=(nm,),
            in_specs=[pl.BlockSpec((tm, K), lambda i: (i, 0)),
                      pl.BlockSpec((tm, N), lambda i: (i, 0))],
            out_specs=[pl.BlockSpec((K, N), lambda i: (0, 0)),
                       pl.BlockSpec((1, N), lambda i: (0, 0))],
            scratch_shapes=[pltpu.VMEM((K, N), jnp.float32),
                            pltpu.VMEM((1, N), jnp.float32)]),
        compiler_params=pltpu.CompilerParams(
            dimension_semantics=("arbitrary",),
            vmem_limit_bytes=_vmem_limit(tm * vmem_row + vmem_fixed)),
        cost_estimate=_cost(K, N, M, a.size * 2, g.size * 2, K * N * 2 + N * 4),
    )(a, g)
    return db, dbias


# ----------------------------------------------------------------------------
# Differentiable fused matmul+bias (used by the inner-loop jax.grad).
# ----------------------------------------------------------------------------
@jax.custom_vjp
def pallas_matmul_bias(a, b, bias):
    return _matmul_nn_bias_raw(a, b, bias)


def _mmb_fwd(a, b, bias):
    # TODO(synk): residual `a` is the (bf16) im2col patches matrix per layer per
    # inner step; the full fix is fusing the 9-tap gather into the matmul grid
    # (shifted-view reduction axis) so patches never reach HBM at all.
    return _matmul_nn_bias_raw(a, b, bias), (a, b)


def _mmb_bwd(res, g):
    a, b = res
    gl = g.astype(jnp.bfloat16)
    da = _matmul_nt_raw(gl, b)               # g @ b.T  -> bf16 directly
    db, dbias = _matmul_tn_raw(a, gl)        # a.T @ g  + fused bias gradient
    return (da.astype(a.dtype), db.astype(b.dtype),
            dbias.reshape(-1).astype(jnp.float32))


pallas_matmul_bias.defvjp(_mmb_fwd, _mmb_bwd)


# ----------------------------------------------------------------------------
# Pallas cross-entropy + accuracy kernel for the query set.
# Labels passed as a tiny (M,1) int32; one-hot built in-kernel with iota.
# ----------------------------------------------------------------------------
def _ce_acc_kernel(logits_ref, labels_ref, loss_ref, acc_ref, *, n_valid):
    logits = logits_ref[...]                              # (Mp, C) f32
    labels = labels_ref[...]                              # (Mp, 1) int32 (-1 = pad)
    C = logits.shape[1]
    cls = jax.lax.broadcasted_iota(jnp.int32, logits.shape, 1)
    onehot = (cls == labels).astype(jnp.float32)          # pad rows -> all zero

    m = jnp.max(logits, axis=1, keepdims=True)
    z = logits - m
    lse = jnp.log(jnp.sum(jnp.exp(z), axis=1, keepdims=True))
    logp = z - lse
    row_loss = -jnp.sum(onehot * logp, axis=1, keepdims=True)

    # PyTorch-style argmax: lowest index among ties wins.
    is_max = logits >= m
    cls_f = cls.astype(jnp.float32)
    argmax = jnp.min(jnp.where(is_max, cls_f, float(C)), axis=1, keepdims=True)
    correct = (argmax == labels.astype(jnp.float32)).astype(jnp.float32)

    inv_n = 1.0 / float(n_valid)
    loss_ref[...] = jnp.sum(row_loss, axis=0, keepdims=True) * inv_n
    acc_ref[...] = jnp.sum(correct, axis=0, keepdims=True) * inv_n


def pallas_ce_acc(logits, labels):
    M, C = logits.shape
    Mp = _round_up(M, 8)
    lp = jnp.pad(logits.astype(jnp.float32), ((0, Mp - M), (0, 0)))
    lab = jnp.pad(labels.astype(jnp.int32), ((0, Mp - M),),
                  constant_values=-1).reshape(Mp, 1)
    loss, acc = pl.pallas_call(
        functools.partial(_ce_acc_kernel, n_valid=M),
        out_shape=(jax.ShapeDtypeStruct((1, 1), jnp.float32),
                   jax.ShapeDtypeStruct((1, 1), jnp.float32)),
        in_specs=[pl.BlockSpec(memory_space=pltpu.MemorySpace.VMEM),
                  pl.BlockSpec(memory_space=pltpu.MemorySpace.VMEM)],
        out_specs=(pl.BlockSpec(memory_space=pltpu.MemorySpace.VMEM),
                   pl.BlockSpec(memory_space=pltpu.MemorySpace.VMEM)),
    )(lp, lab)
    return loss[0, 0], acc[0, 0]


# ----------------------------------------------------------------------------
# Conv_Standard functional forward (Conv4), NHWC internally, NCHW interface.
# ----------------------------------------------------------------------------
def _im2col_nhwc(x):
    # x: (N, H, W, C) -> (N*H*W, C*9); feature order (c, kh, kw) to match
    # PyTorch's w.reshape(c_out, C*3*3).
    N, H, W, C = x.shape
    xp = jnp.pad(x, ((0, 0), (1, 1), (1, 1), (0, 0)))
    taps = [xp[:, i:i + H, j:j + W, :] for i in range(3) for j in range(3)]
    patches = jnp.stack(taps, axis=-1)                    # (N, H, W, C, 9)
    return patches.reshape(N * H * W, C * 9)


def _functional_conv_block(x, w, b, gamma, beta):
    # x: (N, H, W, C) NHWC, f32
    N, H, W, C = x.shape
    c_out = w.shape[0]
    # im2col built (and materialized) directly in bf16: halves the HBM
    # write+read of the largest intermediate tensor.
    # TODO(synk): full fix is a conv kernel with a 9-tap reduction grid axis
    # over shifted views of the padded activation so patches never reach HBM.
    patches = _im2col_nhwc(x.astype(jnp.bfloat16))        # (N*H*W, C*9) bf16
    w2 = w.reshape(c_out, -1).T.astype(jnp.bfloat16)      # (C*9, c_out), tiny
    y = pallas_matmul_bias(patches, w2, b)                # bias fused; f32 out
    y = y.reshape(N, H, W, c_out)
    # BatchNorm (training batch statistics, biased variance, eps=1e-5), f32.
    # TODO(synk): per-channel sum/sum-of-squares partials could be emitted from
    # the matmul epilogue to save one HBM read of y; kept in XLA so the
    # custom_vjp stays a plain matmul and BN gradients come from jax.grad.
    mean = jnp.mean(y, axis=(0, 1, 2), keepdims=True)
    var = jnp.var(y, axis=(0, 1, 2), keepdims=True)
    y = (y - mean) * jax.lax.rsqrt(var + 1e-5)
    y = y * gamma[None, None, None, :] + beta[None, None, None, :]
    y = jnp.maximum(y, 0.0)                               # ReLU
    # MaxPool 2x2 stride 2 (floor, like PyTorch).
    Hc, Wc = (H // 2) * 2, (W // 2) * 2
    y = y[:, :Hc, :Wc, :]
    y = y.reshape(N, Hc // 2, 2, Wc // 2, 2, c_out).max(axis=(2, 4))
    return y


def functional_forward(x_nchw, weights):
    x = x_nchw.transpose(0, 2, 3, 1)                      # NCHW -> NHWC once
    for blk in range(4):
        x = _functional_conv_block(
            x,
            weights[f'net.{blk}.0.weight'], weights[f'net.{blk}.0.bias'],
            weights[f'net.{blk}.1.weight'], weights[f'net.{blk}.1.bias'])
    # Flatten in PyTorch (N, C, H, W) order so logits.weight layout matches.
    x = x.transpose(0, 3, 1, 2).reshape(x.shape[0], -1)
    logits = pallas_matmul_bias(
        x.astype(jnp.bfloat16),
        weights['logits.weight'].T.astype(jnp.bfloat16),
        weights['logits.bias'])
    return logits


def _cross_entropy(logits, labels):
    # Differentiable CE for the inner loop (grads w.r.t. fast weights).
    logp = jax.nn.log_softmax(logits, axis=1)
    picked = jnp.take_along_axis(logp, labels[:, None], axis=1)
    return -jnp.mean(picked)


# ----------------------------------------------------------------------------
# MAML.forward  (args.train=True, args.mix=False branch)
# ----------------------------------------------------------------------------
def maml_forward(params, xs, ys, xq, yq, *, num_updates, update_lr):
    fast = dict(params)

    def support_loss(w):
        return _cross_entropy(functional_forward(xs, w), ys)

    for _ in range(num_updates):
        grads = jax.grad(support_loss)(fast)
        fast = {k: fast[k] - update_lr * grads[k] for k in fast}

    query_logits = functional_forward(xq, fast)
    query_loss, query_acc = pallas_ce_acc(query_logits, yq)
    return query_loss, query_acc

# NOTE: inner-loop gradients flow through bf16-cast operands (patches, w2, g);
# fast weights can drift slightly from an f32 PyTorch reference after several
# SGD steps — keep the dB path in f32 if exact parity is required.
# TODO(synk): forward_metamix (args.mix=True), forward_anil and forward_maml
# variants are not implemented (Conv_Standard internals not given).


# ----------------------------------------------------------------------------
# Deterministic parameter init (shapes implied by Conv_Standard / nn.Linear).
# ----------------------------------------------------------------------------
def init_params(key, num_filters, num_classes, in_channels, final_size):
    params = {}
    keys = jax.random.split(key, 5)
    c_in = in_channels
    for blk in range(4):
        fan_in = c_in * 9
        params[f'net.{blk}.0.weight'] = (
            jax.random.normal(keys[blk], (num_filters, c_in, 3, 3), jnp.float32)
            / jnp.sqrt(float(fan_in)))
        params[f'net.{blk}.0.bias'] = jnp.zeros((num_filters,), jnp.float32)
        params[f'net.{blk}.1.weight'] = jnp.ones((num_filters,), jnp.float32)
        params[f'net.{blk}.1.bias'] = jnp.zeros((num_filters,), jnp.float32)
        c_in = num_filters
    params['logits.weight'] = (
        jax.random.normal(keys[4], (num_classes, final_size), jnp.float32)
        / jnp.sqrt(float(final_size)))
    params['logits.bias'] = jnp.zeros((num_classes,), jnp.float32)
    return params


if __name__ == "__main__":
    num_classes = 5
    num_filters = 8
    shots = 2
    H = W = 16
    n_support = n_query = num_classes * shots     # 10

    key = jax.random.PRNGKey(0)
    k1, k2, k3, k4, kp = jax.random.split(key, 5)
    xs = jax.random.normal(k1, (n_support, 3, H, W), jnp.float32)
    ys = jax.random.randint(k2, (n_support,), 0, num_classes, jnp.int32)
    xq = jax.random.normal(k3, (n_query, 3, H, W), jnp.float32)
    yq = jax.random.randint(k4, (n_query,), 0, num_classes, jnp.int32)

    spatial = H
    for _ in range(4):
        spatial //= 2
    final_size = num_filters * spatial * spatial   # analog of fully_connected=1600

    params = init_params(kp, num_filters, num_classes, 3, final_size)

    fwd = jax.jit(functools.partial(
        maml_forward, num_updates=2, update_lr=0.01))
    query_loss, query_acc = fwd(params, xs, ys, xq, yq)
    jax.block_until_ready((query_loss, query_acc))
    print("KERNEL_OK")
</pallas_src>

<mosaic_0001>
module attributes {stable_mosaic.version = 11 : i64} {
  func.func @_mm_nn_kernel(%arg0: i32, %arg1: i32, %arg2: i32, %arg3: memref<2560x27xbf16, #tpu.memory_space<vmem>>, %arg4: memref<27x8xbf16, #tpu.memory_space<vmem>>, %arg5: memref<1x8xf32, #tpu.memory_space<vmem>>, %arg6: memref<2560x8xf32, #tpu.memory_space<vmem>>, %arg7: memref<2560x8xf32, #tpu.memory_space<vmem>>) attributes {dimension_semantics = [#tpu.dimension_semantics<parallel>, #tpu.dimension_semantics<parallel>, #tpu.dimension_semantics<arbitrary>], iteration_bounds = array<i64: 1, 1, 1>, scalar_prefetch = 0 : i64, scratch_operands = 1 : i64, tpu.core_type = #tpu.core_type<tc>, window_params = [{transform_indices = @transform_0, window_bounds = array<i64: 2560, 27>}, {transform_indices = @transform_1, window_bounds = array<i64: 27, 8>}, {transform_indices = @transform_2, window_bounds = array<i64: 1, 8>}, {transform_indices = @transform_3, window_bounds = array<i64: 2560, 8>}]} {
    %c0_i32 = arith.constant 0 : i32
    %0 = arith.cmpi eq, %arg2, %c0_i32 : i32
    %1 = arith.extui %0 : i1 to i32
    %c0_i32_0 = arith.constant 0 : i32
    %2 = arith.cmpi ne, %1, %c0_i32_0 : i32
    scf.if %2 {
      %cst_10 = arith.constant 0.000000e+00 : f32
      %12 = vector.broadcast %cst_10 : f32 to vector<2560x8xf32>
      %c0_11 = arith.constant 0 : index
      %c0_12 = arith.constant 0 : index
      %13 = vector.load %arg7[%c0_11, %c0_12] : memref<2560x8xf32, #tpu.memory_space<vmem>>, vector<2560x8xf32>
      tpu.vector_store %arg7[%c0_11, %c0_12], %12 {strides = array<i32>} : memref<2560x8xf32, #tpu.memory_space<vmem>>, vector<2560x8xf32>,
    } else {
    }
    %c0 = arith.constant 0 : index
    %c0_1 = arith.constant 0 : index
    %3 = vector.load %arg7[%c0, %c0_1] : memref<2560x8xf32, #tpu.memory_space<vmem>>, vector<2560x8xf32>
    %c0_2 = arith.constant 0 : index
    %c0_3 = arith.constant 0 : index
    %4 = vector.load %arg3[%c0_2, %c0_3] : memref<2560x27xbf16, #tpu.memory_space<vmem>>, vector<2560x27xbf16>
    %c0_4 = arith.constant 0 : index
    %c0_5 = arith.constant 0 : index
    %5 = vector.load %arg4[%c0_4, %c0_5] : memref<27x8xbf16, #tpu.memory_space<vmem>>, vector<27x8xbf16>
    %cst = arith.constant dense<0.000000e+00> : vector<2560x8xf32>
    %6 = tpu.matmul %4, %5, %cst {dimension_numbers = #tpu.dot_dimension_numbers<[1], [0], [0], [1], [0, 0, 1, 1], [], []>} : vector<2560x27xbf16>, vector<27x8xbf16>, vector<2560x8xf32> -> vector<2560x8xf32>
    %7 = arith.addf %3, %6 : vector<2560x8xf32>
    %c0_6 = arith.constant 0 : index
    %c0_7 = arith.constant 0 : index
    %8 = vector.load %arg7[%c0_6, %c0_7] : memref<2560x8xf32, #tpu.memory_space<vmem>>, vector<2560x8xf32>
    tpu.vector_store %arg7[%c0_6, %c0_7], %7 {strides = array<i32>} : memref<2560x8xf32, #tpu.memory_space<vmem>>, vector<2560x8xf32>,
    %c0_i32_8 = arith.constant 0 : i32
    %9 = arith.cmpi eq, %arg2, %c0_i32_8 : i32
    %10 = arith.extui %9 : i1 to i32
    %c0_i32_9 = arith.constant 0 : i32
    %11 = arith.cmpi ne, %10, %c0_i32_9 : i32
    scf.if %11 {
      %c0_10 = arith.constant 0 : index
      %c0_11 = arith.constant 0 : index
      %12 = vector.load %arg7[%c0_10, %c0_11] : memref<2560x8xf32, #tpu.memory_space<vmem>>, vector<2560x8xf32>
      %c0_12 = arith.constant 0 : index
      %c0_13 = arith.constant 0 : index
      %13 = vector.load %arg5[%c0_12, %c0_13] : memref<1x8xf32, #tpu.memory_space<vmem>>, vector<1x8xf32>
      %14 = vector.broadcast %13 : vector<1x8xf32> to vector<2560x8xf32>
      %15 = arith.addf %12, %14 : vector<2560x8xf32>
      %c0_14 = arith.constant 0 : index
      %c0_15 = arith.constant 0 : index
      %16 = vector.load %arg6[%c0_14, %c0_15] : memref<2560x8xf32, #tpu.memory_space<vmem>>, vector<2560x8xf32>
      tpu.vector_store %arg6[%c0_14, %c0_15], %15 {strides = array<i32>} : memref<2560x8xf32, #tpu.memory_space<vmem>>, vector<2560x8xf32>,
    } else {
    }
    return
  }
  func.func @transform_0(%arg0: i32, %arg1: i32, %arg2: i32) -> (i32, i32) {
    %c0_i32 = arith.constant 0 : i32
    return %arg0, %arg2 : i32, i32
  }
  func.func @transform_1(%arg0: i32, %arg1: i32, %arg2: i32) -> (i32, i32) {
    %c0_i32 = arith.constant 0 : i32
    return %arg2, %arg1 : i32, i32
  }
  func.func @transform_2(%arg0: i32, %arg1: i32, %arg2: i32) -> (i32, i32) {
    %c0_i32 = arith.constant 0 : i32
    %c0_i32_0 = arith.constant 0 : i32
    return %c0_i32, %arg1 : i32, i32
  }
  func.func @transform_3(%arg0: i32, %arg1: i32, %arg2: i32) -> (i32, i32) {
    %c0_i32 = arith.constant 0 : i32
    return %arg0, %arg1 : i32, i32
  }
}

module attributes {stable_mosaic.version = 11 : i64} {
  func.func @_mm_nn_kernel(%arg0: i32, %arg1: i32, %arg2: i32, %arg3: memref<640x72xbf16, #tpu.memory_space<vmem>>, %arg4: memref<72x8xbf16, #tpu.memory_space<vmem>>, %arg5: memref<1x8xf32, #tpu.memory_space<vmem>>, %arg6: memref<640x8xf32, #tpu.memory_space<vmem>>, %arg7: memref<640x8xf32, #tpu.memory_space<vmem>>) attributes {dimension_semantics = [#tpu.dimension_semantics<parallel>, #tpu.dimension_semantics<parallel>, #tpu.dimension_semantics<arbitrary>], iteration_bounds = array<i64: 1, 1, 1>, scalar_prefetch = 0 : i64, scratch_operands = 1 : i64, tpu.core_type = #tpu.core_type<tc>, window_params = [{transform_indices = @transform_0, window_bounds = array<i64: 640, 72>}, {transform_indices = @transform_1, window_bounds = array<i64: 72, 8>}, {transform_indices = @transform_2, window_bounds = array<i64: 1, 8>}, {transform_indices = @transform_3, window_bounds = array<i64: 640, 8>}]} {
    %c0_i32 = arith.constant 0 : i32
    %0 = arith.cmpi eq, %arg2, %c0_i32 : i32
    %1 = arith.extui %0 : i1 to i32
    %c0_i32_0 = arith.constant 0 : i32
    %2 = arith.cmpi ne, %1, %c0_i32_0 : i32
    scf.if %2 {
      %cst_10 = arith.constant 0.000000e+00 : f32
      %12 = vector.broadcast %cst_10 : f32 to vector<640x8xf32>
      %c0_11 = arith.constant 0 : index
      %c0_12 = arith.constant 0 : index
      %13 = vector.load %arg7[%c0_11, %c0_12] : memref<640x8xf32, #tpu.memory_space<vmem>>, vector<640x8xf32>
      tpu.vector_store %arg7[%c0_11, %c0_12], %12 {strides = array<i32>} : memref<640x8xf32, #tpu.memory_space<vmem>>, vector<640x8xf32>,
    } else {
    }
    %c0 = arith.constant 0 : index
    %c0_1 = arith.constant 0 : index
    %3 = vector.load %arg7[%c0, %c0_1] : memref<640x8xf32, #tpu.memory_space<vmem>>, vector<640x8xf32>
    %c0_2 = arith.constant 0 : index
    %c0_3 = arith.constant 0 : index
    %4 = vector.load %arg3[%c0_2, %c0_3] : memref<640x72xbf16, #tpu.memory_space<vmem>>, vector<640x72xbf16>
    %c0_4 = arith.constant 0 : index
    %c0_5 = arith.constant 0 : index
    %5 = vector.load %arg4[%c0_4, %c0_5] : memref<72x8xbf16, #tpu.memory_space<vmem>>, vector<72x8xbf16>
    %cst = arith.constant dense<0.000000e+00> : vector<640x8xf32>
    %6 = tpu.matmul %4, %5, %cst {dimension_numbers = #tpu.dot_dimension_numbers<[1], [0], [0], [1], [0, 0, 1, 1], [], []>} : vector<640x72xbf16>, vector<72x8xbf16>, vector<640x8xf32> -> vector<640x8xf32>
    %7 = arith.addf %3, %6 : vector<640x8xf32>
    %c0_6 = arith.constant 0 : index
    %c0_7 = arith.constant 0 : index
    %8 = vector.load %arg7[%c0_6, %c0_7] : memref<640x8xf32, #tpu.memory_space<vmem>>, vector<640x8xf32>
    tpu.vector_store %arg7[%c0_6, %c0_7], %7 {strides = array<i32>} : memref<640x8xf32, #tpu.memory_space<vmem>>, vector<640x8xf32>,
    %c0_i32_8 = arith.constant 0 : i32
    %9 = arith.cmpi eq, %arg2, %c0_i32_8 : i32
    %10 = arith.extui %9 : i1 to i32
    %c0_i32_9 = arith.constant 0 : i32
    %11 = arith.cmpi ne, %10, %c0_i32_9 : i32
    scf.if %11 {
      %c0_10 = arith.constant 0 : index
      %c0_11 = arith.constant 0 : index
      %12 = vector.load %arg7[%c0_10, %c0_11] : memref<640x8xf32, #tpu.memory_space<vmem>>, vector<640x8xf32>
      %c0_12 = arith.constant 0 : index
      %c0_13 = arith.constant 0 : index
      %13 = vector.load %arg5[%c0_12, %c0_13] : memref<1x8xf32, #tpu.memory_space<vmem>>, vector<1x8xf32>
      %14 = vector.broadcast %13 : vector<1x8xf32> to vector<640x8xf32>
      %15 = arith.addf %12, %14 : vector<640x8xf32>
      %c0_14 = arith.constant 0 : index
      %c0_15 = arith.constant 0 : index
      %16 = vector.load %arg6[%c0_14, %c0_15] : memref<640x8xf32, #tpu.memory_space<vmem>>, vector<640x8xf32>
      tpu.vector_store %arg6[%c0_14, %c0_15], %15 {strides = array<i32>} : memref<640x8xf32, #tpu.memory_space<vmem>>, vector<640x8xf32>,
    } else {
    }
    return
  }
  func.func @transform_0(%arg0: i32, %arg1: i32, %arg2: i32) -> (i32, i32) {
    %c0_i32 = arith.constant 0 : i32
    return %arg0, %arg2 : i32, i32
  }
  func.func @transform_1(%arg0: i32, %arg1: i32, %arg2: i32) -> (i32, i32) {
    %c0_i32 = arith.constant 0 : i32
    return %arg2, %arg1 : i32, i32
  }
  func.func @transform_2(%arg0: i32, %arg1: i32, %arg2: i32) -> (i32, i32) {
    %c0_i32 = arith.constant 0 : i32
    %c0_i32_0 = arith.constant 0 : i32
    return %c0_i32, %arg1 : i32, i32
  }
  func.func @transform_3(%arg0: i32, %arg1: i32, %arg2: i32) -> (i32, i32) {
    %c0_i32 = arith.constant 0 : i32
    return %arg0, %arg1 : i32, i32
  }
}

module attributes {stable_mosaic.version = 11 : i64} {
  func.func @_mm_nn_kernel(%arg0: i32, %arg1: i32, %arg2: i32, %arg3: memref<160x72xbf16, #tpu.memory_space<vmem>>, %arg4: memref<72x8xbf16, #tpu.memory_space<vmem>>, %arg5: memref<1x8xf32, #tpu.memory_space<vmem>>, %arg6: memref<160x8xf32, #tpu.memory_space<vmem>>, %arg7: memref<160x8xf32, #tpu.memory_space<vmem>>) attributes {dimension_semantics = [#tpu.dimension_semantics<parallel>, #tpu.dimension_semantics<parallel>, #tpu.dimension_semantics<arbitrary>], iteration_bounds = array<i64: 1, 1, 1>, scalar_prefetch = 0 : i64, scratch_operands = 1 : i64, tpu.core_type = #tpu.core_type<tc>, window_params = [{transform_indices = @transform_0, window_bounds = array<i64: 160, 72>}, {transform_indices = @transform_1, window_bounds = array<i64: 72, 8>}, {transform_indices = @transform_2, window_bounds = array<i64: 1, 8>}, {transform_indices = @transform_3, window_bounds = array<i64: 160, 8>}]} {
    %c0_i32 = arith.constant 0 : i32
    %0 = arith.cmpi eq, %arg2, %c0_i32 : i32
    %1 = arith.extui %0 : i1 to i32
    %c0_i32_0 = arith.constant 0 : i32
    %2 = arith.cmpi ne, %1, %c0_i32_0 : i32
    scf.if %2 {
      %cst_10 = arith.constant 0.000000e+00 : f32
      %12 = vector.broadcast %cst_10 : f32 to vector<160x8xf32>
      %c0_11 = arith.constant 0 : index
      %c0_12 = arith.constant 0 : index
      %13 = vector.load %arg7[%c0_11, %c0_12] : memref<160x8xf32, #tpu.memory_space<vmem>>, vector<160x8xf32>
      tpu.vector_store %arg7[%c0_11, %c0_12], %12 {strides = array<i32>} : memref<160x8xf32, #tpu.memory_space<vmem>>, vector<160x8xf32>,
    } else {
    }
    %c0 = arith.constant 0 : index
    %c0_1 = arith.constant 0 : index
    %3 = vector.load %arg7[%c0, %c0_1] : memref<160x8xf32, #tpu.memory_space<vmem>>, vector<160x8xf32>
    %c0_2 = arith.constant 0 : index
    %c0_3 = arith.constant 0 : index
    %4 = vector.load %arg3[%c0_2, %c0_3] : memref<160x72xbf16, #tpu.memory_space<vmem>>, vector<160x72xbf16>
    %c0_4 = arith.constant 0 : index
    %c0_5 = arith.constant 0 : index
    %5 = vector.load %arg4[%c0_4, %c0_5] : memref<72x8xbf16, #tpu.memory_space<vmem>>, vector<72x8xbf16>
    %cst = arith.constant dense<0.000000e+00> : vector<160x8xf32>
    %6 = tpu.matmul %4, %5, %cst {dimension_numbers = #tpu.dot_dimension_numbers<[1], [0], [0], [1], [0, 0, 1, 1], [], []>} : vector<160x72xbf16>, vector<72x8xbf16>, vector<160x8xf32> -> vector<160x8xf32>
    %7 = arith.addf %3, %6 : vector<160x8xf32>
    %c0_6 = arith.constant 0 : index
    %c0_7 = arith.constant 0 : index
    %8 = vector.load %arg7[%c0_6, %c0_7] : memref<160x8xf32, #tpu.memory_space<vmem>>, vector<160x8xf32>
    tpu.vector_store %arg7[%c0_6, %c0_7], %7 {strides = array<i32>} : memref<160x8xf32, #tpu.memory_space<vmem>>, vector<160x8xf32>,
    %c0_i32_8 = arith.constant 0 : i32
    %9 = arith.cmpi eq, %arg2, %c0_i32_8 : i32
    %10 = arith.extui %9 : i1 to i32
    %c0_i32_9 = arith.constant 0 : i32
    %11 = arith.cmpi ne, %10, %c0_i32_9 : i32
    scf.if %11 {
      %c0_10 = arith.constant 0 : index
      %c0_11 = arith.constant 0 : index
      %12 = vector.load %arg7[%c0_10, %c0_11] : memref<160x8xf32, #tpu.memory_space<vmem>>, vector<160x8xf32>
      %c0_12 = arith.constant 0 : index
      %c0_13 = arith.constant 0 : index
      %13 = vector.load %arg5[%c0_12, %c0_13] : memref<1x8xf32, #tpu.memory_space<vmem>>, vector<1x8xf32>
      %14 = vector.broadcast %13 : vector<1x8xf32> to vector<160x8xf32>
      %15 = arith.addf %12, %14 : vector<160x8xf32>
      %c0_14 = arith.constant 0 : index
      %c0_15 = arith.constant 0 : index
      %16 = vector.load %arg6[%c0_14, %c0_15] : memref<160x8xf32, #tpu.memory_space<vmem>>, vector<160x8xf32>
      tpu.vector_store %arg6[%c0_14, %c0_15], %15 {strides = array<i32>} : memref<160x8xf32, #tpu.memory_space<vmem>>, vector<160x8xf32>,
    } else {
    }
    return
  }
  func.func @transform_0(%arg0: i32, %arg1: i32, %arg2: i32) -> (i32, i32) {
    %c0_i32 = arith.constant 0 : i32
    return %arg0, %arg2 : i32, i32
  }
  func.func @transform_1(%arg0: i32, %arg1: i32, %arg2: i32) -> (i32, i32) {
    %c0_i32 = arith.constant 0 : i32
    return %arg2, %arg1 : i32, i32
  }
  func.func @transform_2(%arg0: i32, %arg1: i32, %arg2: i32) -> (i32, i32) {
    %c0_i32 = arith.constant 0 : i32
    %c0_i32_0 = arith.constant 0 : i32
    return %c0_i32, %arg1 : i32, i32
  }
  func.func @transform_3(%arg0: i32, %arg1: i32, %arg2: i32) -> (i32, i32) {
    %c0_i32 = arith.constant 0 : i32
    return %arg0, %arg1 : i32, i32
  }
}

module attributes {stable_mosaic.version = 11 : i64} {
  func.func @_mm_nn_kernel(%arg0: i32, %arg1: i32, %arg2: i32, %arg3: memref<40x72xbf16, #tpu.memory_space<vmem>>, %arg4: memref<72x8xbf16, #tpu.memory_space<vmem>>, %arg5: memref<1x8xf32, #tpu.memory_space<vmem>>, %arg6: memref<40x8xf32, #tpu.memory_space<vmem>>, %arg7: memref<40x8xf32, #tpu.memory_space<vmem>>) attributes {dimension_semantics = [#tpu.dimension_semantics<parallel>, #tpu.dimension_semantics<parallel>, #tpu.dimension_semantics<arbitrary>], iteration_bounds = array<i64: 1, 1, 1>, scalar_prefetch = 0 : i64, scratch_operands = 1 : i64, tpu.core_type = #tpu.core_type<tc>, window_params = [{transform_indices = @transform_0, window_bounds = array<i64: 40, 72>}, {transform_indices = @transform_1, window_bounds = array<i64: 72, 8>}, {transform_indices = @transform_2, window_bounds = array<i64: 1, 8>}, {transform_indices = @transform_3, window_bounds = array<i64: 40, 8>}]} {
    %c0_i32 = arith.constant 0 : i32
    %0 = arith.cmpi eq, %arg2, %c0_i32 : i32
    %1 = arith.extui %0 : i1 to i32
    %c0_i32_0 = arith.constant 0 : i32
    %2 = arith.cmpi ne, %1, %c0_i32_0 : i32
    scf.if %2 {
      %cst_10 = arith.constant 0.000000e+00 : f32
      %12 = vector.broadcast %cst_10 : f32 to vector<40x8xf32>
      %c0_11 = arith.constant 0 : index
      %c0_12 = arith.constant 0 : index
      %13 = vector.load %arg7[%c0_11, %c0_12] : memref<40x8xf32, #tpu.memory_space<vmem>>, vector<40x8xf32>
      tpu.vector_store %arg7[%c0_11, %c0_12], %12 {strides = array<i32>} : memref<40x8xf32, #tpu.memory_space<vmem>>, vector<40x8xf32>,
    } else {
    }
    %c0 = arith.constant 0 : index
    %c0_1 = arith.constant 0 : index
    %3 = vector.load %arg7[%c0, %c0_1] : memref<40x8xf32, #tpu.memory_space<vmem>>, vector<40x8xf32>
    %c0_2 = arith.constant 0 : index
    %c0_3 = arith.constant 0 : index
    %4 = vector.load %arg3[%c0_2, %c0_3] : memref<40x72xbf16, #tpu.memory_space<vmem>>, vector<40x72xbf16>
    %c0_4 = arith.constant 0 : index
    %c0_5 = arith.constant 0 : index
    %5 = vector.load %arg4[%c0_4, %c0_5] : memref<72x8xbf16, #tpu.memory_space<vmem>>, vector<72x8xbf16>
    %cst = arith.constant dense<0.000000e+00> : vector<40x8xf32>
    %6 = tpu.matmul %4, %5, %cst {dimension_numbers = #tpu.dot_dimension_numbers<[1], [0], [0], [1], [0, 0, 1, 1], [], []>} : vector<40x72xbf16>, vector<72x8xbf16>, vector<40x8xf32> -> vector<40x8xf32>
    %7 = arith.addf %3, %6 : vector<40x8xf32>
    %c0_6 = arith.constant 0 : index
    %c0_7 = arith.constant 0 : index
    %8 = vector.load %arg7[%c0_6, %c0_7] : memref<40x8xf32, #tpu.memory_space<vmem>>, vector<40x8xf32>
    tpu.vector_store %arg7[%c0_6, %c0_7], %7 {strides = array<i32>} : memref<40x8xf32, #tpu.memory_space<vmem>>, vector<40x8xf32>,
    %c0_i32_8 = arith.constant 0 : i32
    %9 = arith.cmpi eq, %arg2, %c0_i32_8 : i32
    %10 = arith.extui %9 : i1 to i32
    %c0_i32_9 = arith.constant 0 : i32
    %11 = arith.cmpi ne, %10, %c0_i32_9 : i32
    scf.if %11 {
      %c0_10 = arith.constant 0 : index
      %c0_11 = arith.constant 0 : index
      %12 = vector.load %arg7[%c0_10, %c0_11] : memref<40x8xf32, #tpu.memory_space<vmem>>, vector<40x8xf32>
      %c0_12 = arith.constant 0 : index
      %c0_13 = arith.constant 0 : index
      %13 = vector.load %arg5[%c0_12, %c0_13] : memref<1x8xf32, #tpu.memory_space<vmem>>, vector<1x8xf32>
      %14 = vector.broadcast %13 : vector<1x8xf32> to vector<40x8xf32>
      %15 = arith.addf %12, %14 : vector<40x8xf32>
      %c0_14 = arith.constant 0 : index
      %c0_15 = arith.constant 0 : index
      %16 = vector.load %arg6[%c0_14, %c0_15] : memref<40x8xf32, #tpu.memory_space<vmem>>, vector<40x8xf32>
      tpu.vector_store %arg6[%c0_14, %c0_15], %15 {strides = array<i32>} : memref<40x8xf32, #tpu.memory_space<vmem>>, vector<40x8xf32>,
    } else {
    }
    return
  }
  func.func @transform_0(%arg0: i32, %arg1: i32, %arg2: i32) -> (i32, i32) {
    %c0_i32 = arith.constant 0 : i32
    return %arg0, %arg2 : i32, i32
  }
  func.func @transform_1(%arg0: i32, %arg1: i32, %arg2: i32) -> (i32, i32) {
    %c0_i32 = arith.constant 0 : i32
    return %arg2, %arg1 : i32, i32
  }
  func.func @transform_2(%arg0: i32, %arg1: i32, %arg2: i32) -> (i32, i32) {
    %c0_i32 = arith.constant 0 : i32
    %c0_i32_0 = arith.constant 0 : i32
    return %c0_i32, %arg1 : i32, i32
  }
  func.func @transform_3(%arg0: i32, %arg1: i32, %arg2: i32) -> (i32, i32) {
    %c0_i32 = arith.constant 0 : i32
    return %arg0, %arg1 : i32, i32
  }
}

module attributes {stable_mosaic.version = 11 : i64} {
  func.func @_mm_nn_kernel(%arg0: i32, %arg1: i32, %arg2: i32, %arg3: memref<16x8xbf16, #tpu.memory_space<vmem>>, %arg4: memref<8x5xbf16, #tpu.memory_space<vmem>>, %arg5: memref<1x5xf32, #tpu.memory_space<vmem>>, %arg6: memref<16x5xf32, #tpu.memory_space<vmem>>, %arg7: memref<16x5xf32, #tpu.memory_space<vmem>>) attributes {dimension_semantics = [#tpu.dimension_semantics<parallel>, #tpu.dimension_semantics<parallel>, #tpu.dimension_semantics<arbitrary>], iteration_bounds = array<i64: 1, 1, 1>, scalar_prefetch = 0 : i64, scratch_operands = 1 : i64, tpu.core_type = #tpu.core_type<tc>, window_params = [{transform_indices = @transform_0, window_bounds = array<i64: 16, 8>}, {transform_indices = @transform_1, window_bounds = array<i64: 8, 5>}, {transform_indices = @transform_2, window_bounds = array<i64: 1, 5>}, {transform_indices = @transform_3, window_bounds = array<i64: 16, 5>}]} {
    %c0_i32 = arith.constant 0 : i32
    %0 = arith.cmpi eq, %arg2, %c0_i32 : i32
    %1 = arith.extui %0 : i1 to i32
    %c0_i32_0 = arith.constant 0 : i32
    %2 = arith.cmpi ne, %1, %c0_i32_0 : i32
    scf.if %2 {
      %cst_10 = arith.constant 0.000000e+00 : f32
      %12 = vector.broadcast %cst_10 : f32 to vector<16x5xf32>
      %c0_11 = arith.constant 0 : index
      %c0_12 = arith.constant 0 : index
      %13 = vector.load %arg7[%c0_11, %c0_12] : memref<16x5xf32, #tpu.memory_space<vmem>>, vector<16x5xf32>
      tpu.vector_store %arg7[%c0_11, %c0_12], %12 {strides = array<i32>} : memref<16x5xf32, #tpu.memory_space<vmem>>, vector<16x5xf32>,
    } else {
    }
    %c0 = arith.constant 0 : index
    %c0_1 = arith.constant 0 : index
    %3 = vector.load %arg7[%c0, %c0_1] : memref<16x5xf32, #tpu.memory_space<vmem>>, vector<16x5xf32>
    %c0_2 = arith.constant 0 : index
    %c0_3 = arith.constant 0 : index
    %4 = vector.load %arg3[%c0_2, %c0_3] : memref<16x8xbf16, #tpu.memory_space<vmem>>, vector<16x8xbf16>
    %c0_4 = arith.constant 0 : index
    %c0_5 = arith.constant 0 : index
    %5 = vector.load %arg4[%c0_4, %c0_5] : memref<8x5xbf16, #tpu.memory_space<vmem>>, vector<8x5xbf16>
    %cst = arith.constant dense<0.000000e+00> : vector<16x5xf32>
    %6 = tpu.matmul %4, %5, %cst {dimension_numbers = #tpu.dot_dimension_numbers<[1], [0], [0], [1], [0, 0, 1, 1], [], []>} : vector<16x8xbf16>, vector<8x5xbf16>, vector<16x5xf32> -> vector<16x5xf32>
    %7 = arith.addf %3, %6 : vector<16x5xf32>
    %c0_6 = arith.constant 0 : index
    %c0_7 = arith.constant 0 : index
    %8 = vector.load %arg7[%c0_6, %c0_7] : memref<16x5xf32, #tpu.memory_space<vmem>>, vector<16x5xf32>
    tpu.vector_store %arg7[%c0_6, %c0_7], %7 {strides = array<i32>} : memref<16x5xf32, #tpu.memory_space<vmem>>, vector<16x5xf32>,
    %c0_i32_8 = arith.constant 0 : i32
    %9 = arith.cmpi eq, %arg2, %c0_i32_8 : i32
    %10 = arith.extui %9 : i1 to i32
    %c0_i32_9 = arith.constant 0 : i32
    %11 = arith.cmpi ne, %10, %c0_i32_9 : i32
    scf.if %11 {
      %c0_10 = arith.constant 0 : index
      %c0_11 = arith.constant 0 : index
      %12 = vector.load %arg7[%c0_10, %c0_11] : memref<16x5xf32, #tpu.memory_space<vmem>>, vector<16x5xf32>
      %c0_12 = arith.constant 0 : index
      %c0_13 = arith.constant 0 : index
      %13 = vector.load %arg5[%c0_12, %c0_13] : memref<1x5xf32, #tpu.memory_space<vmem>>, vector<1x5xf32>
      %14 = vector.broadcast %13 : vector<1x5xf32> to vector<16x5xf32>
      %15 = arith.addf %12, %14 : vector<16x5xf32>
      %c0_14 = arith.constant 0 : index
      %c0_15 = arith.constant 0 : index
      %16 = vector.load %arg6[%c0_14, %c0_15] : memref<16x5xf32, #tpu.memory_space<vmem>>, vector<16x5xf32>
      tpu.vector_store %arg6[%c0_14, %c0_15], %15 {strides = array<i32>} : memref<16x5xf32, #tpu.memory_space<vmem>>, vector<16x5xf32>,
    } else {
    }
    return
  }
  func.func @transform_0(%arg0: i32, %arg1: i32, %arg2: i32) -> (i32, i32) {
    %c0_i32 = arith.constant 0 : i32
    return %arg0, %arg2 : i32, i32
  }
  func.func @transform_1(%arg0: i32, %arg1: i32, %arg2: i32) -> (i32, i32) {
    %c0_i32 = arith.constant 0 : i32
    return %arg2, %arg1 : i32, i32
  }
  func.func @transform_2(%arg0: i32, %arg1: i32, %arg2: i32) -> (i32, i32) {
    %c0_i32 = arith.constant 0 : i32
    %c0_i32_0 = arith.constant 0 : i32
    return %c0_i32, %arg1 : i32, i32
  }
  func.func @transform_3(%arg0: i32, %arg1: i32, %arg2: i32) -> (i32, i32) {
    %c0_i32 = arith.constant 0 : i32
    return %arg0, %arg1 : i32, i32
  }
}

module attributes {stable_mosaic.version = 11 : i64} {
  func.func @_mm_nt_kernel(%arg0: i32, %arg1: memref<16x5xbf16, #tpu.memory_space<vmem>>, %arg2: memref<8x5xbf16, #tpu.memory_space<vmem>>, %arg3: memref<16x8xbf16, #tpu.memory_space<vmem>>) attributes {dimension_semantics = [#tpu.dimension_semantics<parallel>], iteration_bounds = array<i64: 1>, scalar_prefetch = 0 : i64, scratch_operands = 0 : i64, tpu.core_type = #tpu.core_type<tc>, window_params = [{transform_indices = @transform_0, window_bounds = array<i64: 16, 5>}, {pipeline_mode = #tpu.pipeline_mode<synchronous>, transform_indices = @transform_1, window_bounds = array<i64: 8, 5>}, {transform_indices = @transform_2, window_bounds = array<i64: 16, 8>}]} {
    %c0 = arith.constant 0 : index
    %c0_0 = arith.constant 0 : index
    %0 = vector.load %arg1[%c0, %c0_0] : memref<16x5xbf16, #tpu.memory_space<vmem>>, vector<16x5xbf16>
    %c0_1 = arith.constant 0 : index
    %c0_2 = arith.constant 0 : index
    %1 = vector.load %arg2[%c0_1, %c0_2] : memref<8x5xbf16, #tpu.memory_space<vmem>>, vector<8x5xbf16>
    %cst = arith.constant dense<0.000000e+00> : vector<16x8xf32>
    %2 = tpu.matmul %0, %1, %cst {dimension_numbers = #tpu.dot_dimension_numbers<[1], [1], [0], [0], [0, 0, 1, 0], [], []>} : vector<16x5xbf16>, vector<8x5xbf16>, vector<16x8xf32> -> vector<16x8xf32>
    %3 = arith.truncf %2 : vector<16x8xf32> to vector<16x8xbf16>
    %c0_3 = arith.constant 0 : index
    %c0_4 = arith.constant 0 : index
    %4 = vector.load %arg3[%c0_3, %c0_4] : memref<16x8xbf16, #tpu.memory_space<vmem>>, vector<16x8xbf16>
    tpu.vector_store %arg3[%c0_3, %c0_4], %3 {strides = array<i32>} : memref<16x8xbf16, #tpu.memory_space<vmem>>, vector<16x8xbf16>,
    return
  }
  func.func @transform_0(%arg0: i32) -> (i32, i32) {
    %c0_i32 = arith.constant 0 : i32
    %c0_i32_0 = arith.constant 0 : i32
    return %arg0, %c0_i32 : i32, i32
  }
  func.func @transform_1(%arg0: i32) -> (i32, i32) {
    %c0_i32 = arith.constant 0 : i32
    %c0_i32_0 = arith.constant 0 : i32
    %c0_i32_1 = arith.constant 0 : i32
    return %c0_i32, %c0_i32_0 : i32, i32
  }
  func.func @transform_2(%arg0: i32) -> (i32, i32) {
    %c0_i32 = arith.constant 0 : i32
    %c0_i32_0 = arith.constant 0 : i32
    return %arg0, %c0_i32 : i32, i32
  }
}

module attributes {stable_mosaic.version = 11 : i64} {
  func.func @_mm_nt_kernel(%arg0: i32, %arg1: memref<40x8xbf16, #tpu.memory_space<vmem>>, %arg2: memref<72x8xbf16, #tpu.memory_space<vmem>>, %arg3: memref<40x72xbf16, #tpu.memory_space<vmem>>) attributes {dimension_semantics = [#tpu.dimension_semantics<parallel>], iteration_bounds = array<i64: 1>, scalar_prefetch = 0 : i64, scratch_operands = 0 : i64, tpu.core_type = #tpu.core_type<tc>, window_params = [{transform_indices = @transform_0, window_bounds = array<i64: 40, 8>}, {pipeline_mode = #tpu.pipeline_mode<synchronous>, transform_indices = @transform_1, window_bounds = array<i64: 72, 8>}, {transform_indices = @transform_2, window_bounds = array<i64: 40, 72>}]} {
    %c0 = arith.constant 0 : index
    %c0_0 = arith.constant 0 : index
    %0 = vector.load %arg1[%c0, %c0_0] : memref<40x8xbf16, #tpu.memory_space<vmem>>, vector<40x8xbf16>
    %c0_1 = arith.constant 0 : index
    %c0_2 = arith.constant 0 : index
    %1 = vector.load %arg2[%c0_1, %c0_2] : memref<72x8xbf16, #tpu.memory_space<vmem>>, vector<72x8xbf16>
    %cst = arith.constant dense<0.000000e+00> : vector<40x72xf32>
    %2 = tpu.matmul %0, %1, %cst {dimension_numbers = #tpu.dot_dimension_numbers<[1], [1], [0], [0], [0, 0, 1, 0], [], []>} : vector<40x8xbf16>, vector<72x8xbf16>, vector<40x72xf32> -> vector<40x72xf32>
    %3 = arith.truncf %2 : vector<40x72xf32> to vector<40x72xbf16>
    %c0_3 = arith.constant 0 : index
    %c0_4 = arith.constant 0 : index
    %4 = vector.load %arg3[%c0_3, %c0_4] : memref<40x72xbf16, #tpu.memory_space<vmem>>, vector<40x72xbf16>
    tpu.vector_store %arg3[%c0_3, %c0_4], %3 {strides = array<i32>} : memref<40x72xbf16, #tpu.memory_space<vmem>>, vector<40x72xbf16>,
    return
  }
  func.func @transform_0(%arg0: i32) -> (i32, i32) {
    %c0_i32 = arith.constant 0 : i32
    %c0_i32_0 = arith.constant 0 : i32
    return %arg0, %c0_i32 : i32, i32
  }
  func.func @transform_1(%arg0: i32) -> (i32, i32) {
    %c0_i32 = arith.constant 0 : i32
    %c0_i32_0 = arith.constant 0 : i32
    %c0_i32_1 = arith.constant 0 : i32
    return %c0_i32, %c0_i32_0 : i32, i32
  }
  func.func @transform_2(%arg0: i32) -> (i32, i32) {
    %c0_i32 = arith.constant 0 : i32
    %c0_i32_0 = arith.constant 0 : i32
    return %arg0, %c0_i32 : i32, i32
  }
}

module attributes {stable_mosaic.version = 11 : i64} {
  func.func @_mm_nt_kernel(%arg0: i32, %arg1: memref<160x8xbf16, #tpu.memory_space<vmem>>, %arg2: memref<72x8xbf16, #tpu.memory_space<vmem>>, %arg3: memref<160x72xbf16, #tpu.memory_space<vmem>>) attributes {dimension_semantics = [#tpu.dimension_semantics<parallel>], iteration_bounds = array<i64: 1>, scalar_prefetch = 0 : i64, scratch_operands = 0 : i64, tpu.core_type = #tpu.core_type<tc>, window_params = [{transform_indices = @transform_0, window_bounds = array<i64: 160, 8>}, {pipeline_mode = #tpu.pipeline_mode<synchronous>, transform_indices = @transform_1, window_bounds = array<i64: 72, 8>}, {transform_indices = @transform_2, window_bounds = array<i64: 160, 72>}]} {
    %c0 = arith.constant 0 : index
    %c0_0 = arith.constant 0 : index
    %0 = vector.load %arg1[%c0, %c0_0] : memref<160x8xbf16, #tpu.memory_space<vmem>>, vector<160x8xbf16>
    %c0_1 = arith.constant 0 : index
    %c0_2 = arith.constant 0 : index
    %1 = vector.load %arg2[%c0_1, %c0_2] : memref<72x8xbf16, #tpu.memory_space<vmem>>, vector<72x8xbf16>
    %cst = arith.constant dense<0.000000e+00> : vector<160x72xf32>
    %2 = tpu.matmul %0, %1, %cst {dimension_numbers = #tpu.dot_dimension_numbers<[1], [1], [0], [0], [0, 0, 1, 0], [], []>} : vector<160x8xbf16>, vector<72x8xbf16>, vector<160x72xf32> -> vector<160x72xf32>
    %3 = arith.truncf %2 : vector<160x72xf32> to vector<160x72xbf16>
    %c0_3 = arith.constant 0 : index
    %c0_4 = arith.constant 0 : index
    %4 = vector.load %arg3[%c0_3, %c0_4] : memref<160x72xbf16, #tpu.memory_space<vmem>>, vector<160x72xbf16>
    tpu.vector_store %arg3[%c0_3, %c0_4], %3 {strides = array<i32>} : memref<160x72xbf16, #tpu.memory_space<vmem>>, vector<160x72xbf16>,
    return
  }
  func.func @transform_0(%arg0: i32) -> (i32, i32) {
    %c0_i32 = arith.constant 0 : i32
    %c0_i32_0 = arith.constant 0 : i32
    return %arg0, %c0_i32 : i32, i32
  }
  func.func @transform_1(%arg0: i32) -> (i32, i32) {
    %c0_i32 = arith.constant 0 : i32
    %c0_i32_0 = arith.constant 0 : i32
    %c0_i32_1 = arith.constant 0 : i32
    return %c0_i32, %c0_i32_0 : i32, i32
  }
  func.func @transform_2(%arg0: i32) -> (i32, i32) {
    %c0_i32 = arith.constant 0 : i32
    %c0_i32_0 = arith.constant 0 : i32
    return %arg0, %c0_i32 : i32, i32
  }
}

module attributes {stable_mosaic.version = 11 : i64} {
  func.func @_mm_tn_kernel(%arg0: i32, %arg1: memref<640x72xbf16, #tpu.memory_space<vmem>>, %arg2: memref<640x8xbf16, #tpu.memory_space<vmem>>, %arg3: memref<72x8xbf16, #tpu.memory_space<vmem>>, %arg4: memref<1x8xf32, #tpu.memory_space<vmem>>, %arg5: memref<72x8xf32, #tpu.memory_space<vmem>>, %arg6: memref<1x8xf32, #tpu.memory_space<vmem>>) attributes {dimension_semantics = [#tpu.dimension_semantics<arbitrary>], iteration_bounds = array<i64: 1>, scalar_prefetch = 0 : i64, scratch_operands = 2 : i64, tpu.core_type = #tpu.core_type<tc>, window_params = [{transform_indices = @transform_0, window_bounds = array<i64: 640, 72>}, {transform_indices = @transform_1, window_bounds = array<i64: 640, 8>}, {pipeline_mode = #tpu.pipeline_mode<synchronous>, transform_indices = @transform_2, window_bounds = array<i64: 72, 8>}, {pipeline_mode = #tpu.pipeline_mode<synchronous>, transform_indices = @transform_3, window_bounds = array<i64: 1, 8>}]} {
    %c0_i32 = arith.constant 0 : i32
    %0 = arith.cmpi eq, %arg0, %c0_i32 : i32
    %1 = arith.extui %0 : i1 to i32
    %c0_i32_0 = arith.constant 0 : i32
    %2 = arith.cmpi ne, %1, %c0_i32_0 : i32
    scf.if %2 {
      %cst_15 = arith.constant 0.000000e+00 : f32
      %18 = vector.broadcast %cst_15 : f32 to vector<72x8xf32>
      %c0_16 = arith.constant 0 : index
      %c0_17 = arith.constant 0 : index
      %19 = vector.load %arg5[%c0_16, %c0_17] : memref<72x8xf32, #tpu.memory_space<vmem>>, vector<72x8xf32>
      tpu.vector_store %arg5[%c0_16, %c0_17], %18 {strides = array<i32>} : memref<72x8xf32, #tpu.memory_space<vmem>>, vector<72x8xf32>,
      %cst_18 = arith.constant 0.000000e+00 : f32
      %20 = vector.broadcast %cst_18 : f32 to vector<1x8xf32>
      %c0_19 = arith.constant 0 : index
      %c0_20 = arith.constant 0 : index
      %21 = vector.load %arg6[%c0_19, %c0_20] : memref<1x8xf32, #tpu.memory_space<vmem>>, vector<1x8xf32>
      tpu.vector_store %arg6[%c0_19, %c0_20], %20 {strides = array<i32>} : memref<1x8xf32, #tpu.memory_space<vmem>>, vector<1x8xf32>,
    } else {
    }
    %c0 = arith.constant 0 : index
    %c0_1 = arith.constant 0 : index
    %3 = vector.load %arg1[%c0, %c0_1] : memref<640x72xbf16, #tpu.memory_space<vmem>>, vector<640x72xbf16>
    %c0_2 = arith.constant 0 : index
    %c0_3 = arith.constant 0 : index
    %4 = vector.load %arg2[%c0_2, %c0_3] : memref<640x8xbf16, #tpu.memory_space<vmem>>, vector<640x8xbf16>
    %c0_4 = arith.constant 0 : index
    %c0_5 = arith.constant 0 : index
    %5 = vector.load %arg5[%c0_4, %c0_5] : memref<72x8xf32, #tpu.memory_space<vmem>>, vector<72x8xf32>
    %cst = arith.constant dense<0.000000e+00> : vector<72x8xf32>
    %6 = tpu.matmul %3, %4, %cst {dimension_numbers = #tpu.dot_dimension_numbers<[0], [0], [1], [1], [0, 1, 1, 1], [], []>} : vector<640x72xbf16>, vector<640x8xbf16>, vector<72x8xf32> -> vector<72x8xf32>
    %7 = arith.addf %5, %6 : vector<72x8xf32>
    %c0_6 = arith.constant 0 : index
    %c0_7 = arith.constant 0 : index
    %8 = vector.load %arg5[%c0_6, %c0_7] : memref<72x8xf32, #tpu.memory_space<vmem>>, vector<72x8xf32>
    tpu.vector_store %arg5[%c0_6, %c0_7], %7 {strides = array<i32>} : memref<72x8xf32, #tpu.memory_space<vmem>>, vector<72x8xf32>,
    %c0_8 = arith.constant 0 : index
    %c0_9 = arith.constant 0 : index
    %9 = vector.load %arg6[%c0_8, %c0_9] : memref<1x8xf32, #tpu.memory_space<vmem>>, vector<1x8xf32>
    %10 = arith.extf %4 : vector<640x8xbf16> to vector<640x8xf32>
    %cst_10 = arith.constant dense<0.000000e+00> : vector<8xf32>
    %11 = vector.multi_reduction <add>, %10, %cst_10 [0] : vector<640x8xf32> to vector<8xf32>
    %12 = vector.shape_cast %11 : vector<8xf32> to vector<1x8xf32>
    %13 = arith.addf %9, %12 : vector<1x8xf32>
    %c0_11 = arith.constant 0 : index
    %c0_12 = arith.constant 0 : index
    %14 = vector.load %arg6[%c0_11, %c0_12] : memref<1x8xf32, #tpu.memory_space<vmem>>, vector<1x8xf32>
    tpu.vector_store %arg6[%c0_11, %c0_12], %13 {strides = array<i32>} : memref<1x8xf32, #tpu.memory_space<vmem>>, vector<1x8xf32>,
    %c0_i32_13 = arith.constant 0 : i32
    %15 = arith.cmpi eq, %arg0, %c0_i32_13 : i32
    %16 = arith.extui %15 : i1 to i32
    %c0_i32_14 = arith.constant 0 : i32
    %17 = arith.cmpi ne, %16, %c0_i32_14 : i32
    scf.if %17 {
      %c0_15 = arith.constant 0 : index
      %c0_16 = arith.constant 0 : index
      %18 = vector.load %arg5[%c0_15, %c0_16] : memref<72x8xf32, #tpu.memory_space<vmem>>, vector<72x8xf32>
      %19 = arith.truncf %18 : vector<72x8xf32> to vector<72x8xbf16>
      %c0_17 = arith.constant 0 : index
      %c0_18 = arith.constant 0 : index
      %20 = vector.load %arg3[%c0_17, %c0_18] : memref<72x8xbf16, #tpu.memory_space<vmem>>, vector<72x8xbf16>
      tpu.vector_store %arg3[%c0_17, %c0_18], %19 {strides = array<i32>} : memref<72x8xbf16, #tpu.memory_space<vmem>>, vector<72x8xbf16>,
      %c0_19 = arith.constant 0 : index
      %c0_20 = arith.constant 0 : index
      %21 = vector.load %arg6[%c0_19, %c0_20] : memref<1x8xf32, #tpu.memory_space<vmem>>, vector<1x8xf32>
      %c0_21 = arith.constant 0 : index
      %c0_22 = arith.constant 0 : index
      %22 = vector.load %arg4[%c0_21, %c0_22] : memref<1x8xf32, #tpu.memory_space<vmem>>, vector<1x8xf32>
      tpu.vector_store %arg4[%c0_21, %c0_22], %21 {strides = array<i32>} : memref<1x8xf32, #tpu.memory_space<vmem>>, vector<1x8xf32>,
    } else {
    }
    return
  }
  func.func @transform_0(%arg0: i32) -> (i32, i32) {
    %c0_i32 = arith.constant 0 : i32
    %c0_i32_0 = arith.constant 0 : i32
    return %arg0, %c0_i32 : i32, i32
  }
  func.func @transform_1(%arg0: i32) -> (i32, i32) {
    %c0_i32 = arith.constant 0 : i32
    %c0_i32_0 = arith.constant 0 : i32
    return %arg0, %c0_i32 : i32, i32
  }
  func.func @transform_2(%arg0: i32) -> (i32, i32) {
    %c0_i32 = arith.constant 0 : i32
    %c0_i32_0 = arith.constant 0 : i32
    %c0_i32_1 = arith.constant 0 : i32
    return %c0_i32, %c0_i32_0 : i32, i32
  }
  func.func @transform_3(%arg0: i32) -> (i32, i32) {
    %c0_i32 = arith.constant 0 : i32
    %c0_i32_0 = arith.constant 0 : i32
    %c0_i32_1 = arith.constant 0 : i32
    return %c0_i32, %c0_i32_0 : i32, i32
  }
}

module attributes {stable_mosaic.version = 11 : i64} {
  func.func @_mm_nt_kernel(%arg0: i32, %arg1: memref<640x8xbf16, #tpu.memory_space<vmem>>, %arg2: memref<72x8xbf16, #tpu.memory_space<vmem>>, %arg3: memref<640x72xbf16, #tpu.memory_space<vmem>>) attributes {dimension_semantics = [#tpu.dimension_semantics<parallel>], iteration_bounds = array<i64: 1>, scalar_prefetch = 0 : i64, scratch_operands = 0 : i64, tpu.core_type = #tpu.core_type<tc>, window_params = [{transform_indices = @transform_0, window_bounds = array<i64: 640, 8>}, {pipeline_mode = #tpu.pipeline_mode<synchronous>, transform_indices = @transform_1, window_bounds = array<i64: 72, 8>}, {transform_indices = @transform_2, window_bounds = array<i64: 640, 72>}]} {
    %c0 = arith.constant 0 : index
    %c0_0 = arith.constant 0 : index
    %0 = vector.load %arg1[%c0, %c0_0] : memref<640x8xbf16, #tpu.memory_space<vmem>>, vector<640x8xbf16>
    %c0_1 = arith.constant 0 : index
    %c0_2 = arith.constant 0 : index
    %1 = vector.load %arg2[%c0_1, %c0_2] : memref<72x8xbf16, #tpu.memory_space<vmem>>, vector<72x8xbf16>
    %cst = arith.constant dense<0.000000e+00> : vector<640x72xf32>
    %2 = tpu.matmul %0, %1, %cst {dimension_numbers = #tpu.dot_dimension_numbers<[1], [1], [0], [0], [0, 0, 1, 0], [], []>} : vector<640x8xbf16>, vector<72x8xbf16>, vector<640x72xf32> -> vector<640x72xf32>
    %3 = arith.truncf %2 : vector<640x72xf32> to vector<640x72xbf16>
    %c0_3 = arith.constant 0 : index
    %c0_4 = arith.constant 0 : index
    %4 = vector.load %arg3[%c0_3, %c0_4] : memref<640x72xbf16, #tpu.memory_space<vmem>>, vector<640x72xbf16>
    tpu.vector_store %arg3[%c0_3, %c0_4], %3 {strides = array<i32>} : memref<640x72xbf16, #tpu.memory_space<vmem>>, vector<640x72xbf16>,
    return
  }
  func.func @transform_0(%arg0: i32) -> (i32, i32) {
    %c0_i32 = arith.constant 0 : i32
    %c0_i32_0 = arith.constant 0 : i32
    return %arg0, %c0_i32 : i32, i32
  }
  func.func @transform_1(%arg0: i32) -> (i32, i32) {
    %c0_i32 = arith.constant 0 : i32
    %c0_i32_0 = arith.constant 0 : i32
    %c0_i32_1 = arith.constant 0 : i32
    return %c0_i32, %c0_i32_0 : i32, i32
  }
  func.func @transform_2(%arg0: i32) -> (i32, i32) {
    %c0_i32 = arith.constant 0 : i32
    %c0_i32_0 = arith.constant 0 : i32
    return %arg0, %c0_i32 : i32, i32
  }
}

module attributes {stable_mosaic.version = 11 : i64} {
  func.func @_mm_tn_kernel(%arg0: i32, %arg1: memref<2560x27xbf16, #tpu.memory_space<vmem>>, %arg2: memref<2560x8xbf16, #tpu.memory_space<vmem>>, %arg3: memref<27x8xbf16, #tpu.memory_space<vmem>>, %arg4: memref<1x8xf32, #tpu.memory_space<vmem>>, %arg5: memref<27x8xf32, #tpu.memory_space<vmem>>, %arg6: memref<1x8xf32, #tpu.memory_space<vmem>>) attributes {dimension_semantics = [#tpu.dimension_semantics<arbitrary>], iteration_bounds = array<i64: 1>, scalar_prefetch = 0 : i64, scratch_operands = 2 : i64, tpu.core_type = #tpu.core_type<tc>, window_params = [{transform_indices = @transform_0, window_bounds = array<i64: 2560, 27>}, {transform_indices = @transform_1, window_bounds = array<i64: 2560, 8>}, {pipeline_mode = #tpu.pipeline_mode<synchronous>, transform_indices = @transform_2, window_bounds = array<i64: 27, 8>}, {pipeline_mode = #tpu.pipeline_mode<synchronous>, transform_indices = @transform_3, window_bounds = array<i64: 1, 8>}]} {
    %c0_i32 = arith.constant 0 : i32
    %0 = arith.cmpi eq, %arg0, %c0_i32 : i32
    %1 = arith.extui %0 : i1 to i32
    %c0_i32_0 = arith.constant 0 : i32
    %2 = arith.cmpi ne, %1, %c0_i32_0 : i32
    scf.if %2 {
      %cst_15 = arith.constant 0.000000e+00 : f32
      %18 = vector.broadcast %cst_15 : f32 to vector<27x8xf32>
      %c0_16 = arith.constant 0 : index
      %c0_17 = arith.constant 0 : index
      %19 = vector.load %arg5[%c0_16, %c0_17] : memref<27x8xf32, #tpu.memory_space<vmem>>, vector<27x8xf32>
      tpu.vector_store %arg5[%c0_16, %c0_17], %18 {strides = array<i32>} : memref<27x8xf32, #tpu.memory_space<vmem>>, vector<27x8xf32>,
      %cst_18 = arith.constant 0.000000e+00 : f32
      %20 = vector.broadcast %cst_18 : f32 to vector<1x8xf32>
      %c0_19 = arith.constant 0 : index
      %c0_20 = arith.constant 0 : index
      %21 = vector.load %arg6[%c0_19, %c0_20] : memref<1x8xf32, #tpu.memory_space<vmem>>, vector<1x8xf32>
      tpu.vector_store %arg6[%c0_19, %c0_20], %20 {strides = array<i32>} : memref<1x8xf32, #tpu.memory_space<vmem>>, vector<1x8xf32>,
    } else {
    }
    %c0 = arith.constant 0 : index
    %c0_1 = arith.constant 0 : index
    %3 = vector.load %arg1[%c0, %c0_1] : memref<2560x27xbf16, #tpu.memory_space<vmem>>, vector<2560x27xbf16>
    %c0_2 = arith.constant 0 : index
    %c0_3 = arith.constant 0 : index
    %4 = vector.load %arg2[%c0_2, %c0_3] : memref<2560x8xbf16, #tpu.memory_space<vmem>>, vector<2560x8xbf16>
    %c0_4 = arith.constant 0 : index
    %c0_5 = arith.constant 0 : index
    %5 = vector.load %arg5[%c0_4, %c0_5] : memref<27x8xf32, #tpu.memory_space<vmem>>, vector<27x8xf32>
    %cst = arith.constant dense<0.000000e+00> : vector<27x8xf32>
    %6 = tpu.matmul %3, %4, %cst {dimension_numbers = #tpu.dot_dimension_numbers<[0], [0], [1], [1], [0, 1, 1, 1], [], []>} : vector<2560x27xbf16>, vector<2560x8xbf16>, vector<27x8xf32> -> vector<27x8xf32>
    %7 = arith.addf %5, %6 : vector<27x8xf32>
    %c0_6 = arith.constant 0 : index
    %c0_7 = arith.constant 0 : index
    %8 = vector.load %arg5[%c0_6, %c0_7] : memref<27x8xf32, #tpu.memory_space<vmem>>, vector<27x8xf32>
    tpu.vector_store %arg5[%c0_6, %c0_7], %7 {strides = array<i32>} : memref<27x8xf32, #tpu.memory_space<vmem>>, vector<27x8xf32>,
    %c0_8 = arith.constant 0 : index
    %c0_9 = arith.constant 0 : index
    %9 = vector.load %arg6[%c0_8, %c0_9] : memref<1x8xf32, #tpu.memory_space<vmem>>, vector<1x8xf32>
    %10 = arith.extf %4 : vector<2560x8xbf16> to vector<2560x8xf32>
    %cst_10 = arith.constant dense<0.000000e+00> : vector<8xf32>
    %11 = vector.multi_reduction <add>, %10, %cst_10 [0] : vector<2560x8xf32> to vector<8xf32>
    %12 = vector.shape_cast %11 : vector<8xf32> to vector<1x8xf32>
    %13 = arith.addf %9, %12 : vector<1x8xf32>
    %c0_11 = arith.constant 0 : index
    %c0_12 = arith.constant 0 : index
    %14 = vector.load %arg6[%c0_11, %c0_12] : memref<1x8xf32, #tpu.memory_space<vmem>>, vector<1x8xf32>
    tpu.vector_store %arg6[%c0_11, %c0_12], %13 {strides = array<i32>} : memref<1x8xf32, #tpu.memory_space<vmem>>, vector<1x8xf32>,
    %c0_i32_13 = arith.constant 0 : i32
    %15 = arith.cmpi eq, %arg0, %c0_i32_13 : i32
    %16 = arith.extui %15 : i1 to i32
    %c0_i32_14 = arith.constant 0 : i32
    %17 = arith.cmpi ne, %16, %c0_i32_14 : i32
    scf.if %17 {
      %c0_15 = arith.constant 0 : index
      %c0_16 = arith.constant 0 : index
      %18 = vector.load %arg5[%c0_15, %c0_16] : memref<27x8xf32, #tpu.memory_space<vmem>>, vector<27x8xf32>
      %19 = arith.truncf %18 : vector<27x8xf32> to vector<27x8xbf16>
      %c0_17 = arith.constant 0 : index
      %c0_18 = arith.constant 0 : index
      %20 = vector.load %arg3[%c0_17, %c0_18] : memref<27x8xbf16, #tpu.memory_space<vmem>>, vector<27x8xbf16>
      tpu.vector_store %arg3[%c0_17, %c0_18], %19 {strides = array<i32>} : memref<27x8xbf16, #tpu.memory_space<vmem>>, vector<27x8xbf16>,
      %c0_19 = arith.constant 0 : index
      %c0_20 = arith.constant 0 : index
      %21 = vector.load %arg6[%c0_19, %c0_20] : memref<1x8xf32, #tpu.memory_space<vmem>>, vector<1x8xf32>
      %c0_21 = arith.constant 0 : index
      %c0_22 = arith.constant 0 : index
      %22 = vector.load %arg4[%c0_21, %c0_22] : memref<1x8xf32, #tpu.memory_space<vmem>>, vector<1x8xf32>
      tpu.vector_store %arg4[%c0_21, %c0_22], %21 {strides = array<i32>} : memref<1x8xf32, #tpu.memory_space<vmem>>, vector<1x8xf32>,
    } else {
    }
    return
  }
  func.func @transform_0(%arg0: i32) -> (i32, i32) {
    %c0_i32 = arith.constant 0 : i32
    %c0_i32_0 = arith.constant 0 : i32
    return %arg0, %c0_i32 : i32, i32
  }
  func.func @transform_1(%arg0: i32) -> (i32, i32) {
    %c0_i32 = arith.constant 0 : i32
    %c0_i32_0 = arith.constant 0 : i32
    return %arg0, %c0_i32 : i32, i32
  }
  func.func @transform_2(%arg0: i32) -> (i32, i32) {
    %c0_i32 = arith.constant 0 : i32
    %c0_i32_0 = arith.constant 0 : i32
    %c0_i32_1 = arith.constant 0 : i32
    return %c0_i32, %c0_i32_0 : i32, i32
  }
  func.func @transform_3(%arg0: i32) -> (i32, i32) {
    %c0_i32 = arith.constant 0 : i32
    %c0_i32_0 = arith.constant 0 : i32
    %c0_i32_1 = arith.constant 0 : i32
    return %c0_i32, %c0_i32_0 : i32, i32
  }
}

module attributes {stable_mosaic.version = 11 : i64} {
  func.func @_mm_tn_kernel(%arg0: i32, %arg1: memref<160x72xbf16, #tpu.memory_space<vmem>>, %arg2: memref<160x8xbf16, #tpu.memory_space<vmem>>, %arg3: memref<72x8xbf16, #tpu.memory_space<vmem>>, %arg4: memref<1x8xf32, #tpu.memory_space<vmem>>, %arg5: memref<72x8xf32, #tpu.memory_space<vmem>>, %arg6: memref<1x8xf32, #tpu.memory_space<vmem>>) attributes {dimension_semantics = [#tpu.dimension_semantics<arbitrary>], iteration_bounds = array<i64: 1>, scalar_prefetch = 0 : i64, scratch_operands = 2 : i64, tpu.core_type = #tpu.core_type<tc>, window_params = [{transform_indices = @transform_0, window_bounds = array<i64: 160, 72>}, {transform_indices = @transform_1, window_bounds = array<i64: 160, 8>}, {pipeline_mode = #tpu.pipeline_mode<synchronous>, transform_indices = @transform_2, window_bounds = array<i64: 72, 8>}, {pipeline_mode = #tpu.pipeline_mode<synchronous>, transform_indices = @transform_3, window_bounds = array<i64: 1, 8>}]} {
    %c0_i32 = arith.constant 0 : i32
    %0 = arith.cmpi eq, %arg0, %c0_i32 : i32
    %1 = arith.extui %0 : i1 to i32
    %c0_i32_0 = arith.constant 0 : i32
    %2 = arith.cmpi ne, %1, %c0_i32_0 : i32
    scf.if %2 {
      %cst_15 = arith.constant 0.000000e+00 : f32
      %18 = vector.broadcast %cst_15 : f32 to vector<72x8xf32>
      %c0_16 = arith.constant 0 : index
      %c0_17 = arith.constant 0 : index
      %19 = vector.load %arg5[%c0_16, %c0_17] : memref<72x8xf32, #tpu.memory_space<vmem>>, vector<72x8xf32>
      tpu.vector_store %arg5[%c0_16, %c0_17], %18 {strides = array<i32>} : memref<72x8xf32, #tpu.memory_space<vmem>>, vector<72x8xf32>,
      %cst_18 = arith.constant 0.000000e+00 : f32
      %20 = vector.broadcast %cst_18 : f32 to vector<1x8xf32>
      %c0_19 = arith.constant 0 : index
      %c0_20 = arith.constant 0 : index
      %21 = vector.load %arg6[%c0_19, %c0_20] : memref<1x8xf32, #tpu.memory_space<vmem>>, vector<1x8xf32>
      tpu.vector_store %arg6[%c0_19, %c0_20], %20 {strides = array<i32>} : memref<1x8xf32, #tpu.memory_space<vmem>>, vector<1x8xf32>,
    } else {
    }
    %c0 = arith.constant 0 : index
    %c0_1 = arith.constant 0 : index
    %3 = vector.load %arg1[%c0, %c0_1] : memref<160x72xbf16, #tpu.memory_space<vmem>>, vector<160x72xbf16>
    %c0_2 = arith.constant 0 : index
    %c0_3 = arith.constant 0 : index
    %4 = vector.load %arg2[%c0_2, %c0_3] : memref<160x8xbf16, #tpu.memory_space<vmem>>, vector<160x8xbf16>
    %c0_4 = arith.constant 0 : index
    %c0_5 = arith.constant 0 : index
    %5 = vector.load %arg5[%c0_4, %c0_5] : memref<72x8xf32, #tpu.memory_space<vmem>>, vector<72x8xf32>
    %cst = arith.constant dense<0.000000e+00> : vector<72x8xf32>
    %6 = tpu.matmul %3, %4, %cst {dimension_numbers = #tpu.dot_dimension_numbers<[0], [0], [1], [1], [0, 1, 1, 1], [], []>} : vector<160x72xbf16>, vector<160x8xbf16>, vector<72x8xf32> -> vector<72x8xf32>
    %7 = arith.addf %5, %6 : vector<72x8xf32>
    %c0_6 = arith.constant 0 : index
    %c0_7 = arith.constant 0 : index
    %8 = vector.load %arg5[%c0_6, %c0_7] : memref<72x8xf32, #tpu.memory_space<vmem>>, vector<72x8xf32>
    tpu.vector_store %arg5[%c0_6, %c0_7], %7 {strides = array<i32>} : memref<72x8xf32, #tpu.memory_space<vmem>>, vector<72x8xf32>,
    %c0_8 = arith.constant 0 : index
    %c0_9 = arith.constant 0 : index
    %9 = vector.load %arg6[%c0_8, %c0_9] : memref<1x8xf32, #tpu.memory_space<vmem>>, vector<1x8xf32>
    %10 = arith.extf %4 : vector<160x8xbf16> to vector<160x8xf32>
    %cst_10 = arith.constant dense<0.000000e+00> : vector<8xf32>
    %11 = vector.multi_reduction <add>, %10, %cst_10 [0] : vector<160x8xf32> to vector<8xf32>
    %12 = vector.shape_cast %11 : vector<8xf32> to vector<1x8xf32>
    %13 = arith.addf %9, %12 : vector<1x8xf32>
    %c0_11 = arith.constant 0 : index
    %c0_12 = arith.constant 0 : index
    %14 = vector.load %arg6[%c0_11, %c0_12] : memref<1x8xf32, #tpu.memory_space<vmem>>, vector<1x8xf32>
    tpu.vector_store %arg6[%c0_11, %c0_12], %13 {strides = array<i32>} : memref<1x8xf32, #tpu.memory_space<vmem>>, vector<1x8xf32>,
    %c0_i32_13 = arith.constant 0 : i32
    %15 = arith.cmpi eq, %arg0, %c0_i32_13 : i32
    %16 = arith.extui %15 : i1 to i32
    %c0_i32_14 = arith.constant 0 : i32
    %17 = arith.cmpi ne, %16, %c0_i32_14 : i32
    scf.if %17 {
      %c0_15 = arith.constant 0 : index
      %c0_16 = arith.constant 0 : index
      %18 = vector.load %arg5[%c0_15, %c0_16] : memref<72x8xf32, #tpu.memory_space<vmem>>, vector<72x8xf32>
      %19 = arith.truncf %18 : vector<72x8xf32> to vector<72x8xbf16>
      %c0_17 = arith.constant 0 : index
      %c0_18 = arith.constant 0 : index
      %20 = vector.load %arg3[%c0_17, %c0_18] : memref<72x8xbf16, #tpu.memory_space<vmem>>, vector<72x8xbf16>
      tpu.vector_store %arg3[%c0_17, %c0_18], %19 {strides = array<i32>} : memref<72x8xbf16, #tpu.memory_space<vmem>>, vector<72x8xbf16>,
      %c0_19 = arith.constant 0 : index
      %c0_20 = arith.constant 0 : index
      %21 = vector.load %arg6[%c0_19, %c0_20] : memref<1x8xf32, #tpu.memory_space<vmem>>, vector<1x8xf32>
      %c0_21 = arith.constant 0 : index
      %c0_22 = arith.constant 0 : index
      %22 = vector.load %arg4[%c0_21, %c0_22] : memref<1x8xf32, #tpu.memory_space<vmem>>, vector<1x8xf32>
      tpu.vector_store %arg4[%c0_21, %c0_22], %21 {strides = array<i32>} : memref<1x8xf32, #tpu.memory_space<vmem>>, vector<1x8xf32>,
    } else {
    }
    return
  }
  func.func @transform_0(%arg0: i32) -> (i32, i32) {
    %c0_i32 = arith.constant 0 : i32
    %c0_i32_0 = arith.constant 0 : i32
    return %arg0, %c0_i32 : i32, i32
  }
  func.func @transform_1(%arg0: i32) -> (i32, i32) {
    %c0_i32 = arith.constant 0 : i32
    %c0_i32_0 = arith.constant 0 : i32
    return %arg0, %c0_i32 : i32, i32
  }
  func.func @transform_2(%arg0: i32) -> (i32, i32) {
    %c0_i32 = arith.constant 0 : i32
    %c0_i32_0 = arith.constant 0 : i32
    %c0_i32_1 = arith.constant 0 : i32
    return %c0_i32, %c0_i32_0 : i32, i32
  }
  func.func @transform_3(%arg0: i32) -> (i32, i32) {
    %c0_i32 = arith.constant 0 : i32
    %c0_i32_0 = arith.constant 0 : i32
    %c0_i32_1 = arith.constant 0 : i32
    return %c0_i32, %c0_i32_0 : i32, i32
  }
}

module attributes {stable_mosaic.version = 11 : i64} {
  func.func @_mm_tn_kernel(%arg0: i32, %arg1: memref<40x72xbf16, #tpu.memory_space<vmem>>, %arg2: memref<40x8xbf16, #tpu.memory_space<vmem>>, %arg3: memref<72x8xbf16, #tpu.memory_space<vmem>>, %arg4: memref<1x8xf32, #tpu.memory_space<vmem>>, %arg5: memref<72x8xf32, #tpu.memory_space<vmem>>, %arg6: memref<1x8xf32, #tpu.memory_space<vmem>>) attributes {dimension_semantics = [#tpu.dimension_semantics<arbitrary>], iteration_bounds = array<i64: 1>, scalar_prefetch = 0 : i64, scratch_operands = 2 : i64, tpu.core_type = #tpu.core_type<tc>, window_params = [{transform_indices = @transform_0, window_bounds = array<i64: 40, 72>}, {transform_indices = @transform_1, window_bounds = array<i64: 40, 8>}, {pipeline_mode = #tpu.pipeline_mode<synchronous>, transform_indices = @transform_2, window_bounds = array<i64: 72, 8>}, {pipeline_mode = #tpu.pipeline_mode<synchronous>, transform_indices = @transform_3, window_bounds = array<i64: 1, 8>}]} {
    %c0_i32 = arith.constant 0 : i32
    %0 = arith.cmpi eq, %arg0, %c0_i32 : i32
    %1 = arith.extui %0 : i1 to i32
    %c0_i32_0 = arith.constant 0 : i32
    %2 = arith.cmpi ne, %1, %c0_i32_0 : i32
    scf.if %2 {
      %cst_15 = arith.constant 0.000000e+00 : f32
      %18 = vector.broadcast %cst_15 : f32 to vector<72x8xf32>
      %c0_16 = arith.constant 0 : index
      %c0_17 = arith.constant 0 : index
      %19 = vector.load %arg5[%c0_16, %c0_17] : memref<72x8xf32, #tpu.memory_space<vmem>>, vector<72x8xf32>
      tpu.vector_store %arg5[%c0_16, %c0_17], %18 {strides = array<i32>} : memref<72x8xf32, #tpu.memory_space<vmem>>, vector<72x8xf32>,
      %cst_18 = arith.constant 0.000000e+00 : f32
      %20 = vector.broadcast %cst_18 : f32 to vector<1x8xf32>
      %c0_19 = arith.constant 0 : index
      %c0_20 = arith.constant 0 : index
      %21 = vector.load %arg6[%c0_19, %c0_20] : memref<1x8xf32, #tpu.memory_space<vmem>>, vector<1x8xf32>
      tpu.vector_store %arg6[%c0_19, %c0_20], %20 {strides = array<i32>} : memref<1x8xf32, #tpu.memory_space<vmem>>, vector<1x8xf32>,
    } else {
    }
    %c0 = arith.constant 0 : index
    %c0_1 = arith.constant 0 : index
    %3 = vector.load %arg1[%c0, %c0_1] : memref<40x72xbf16, #tpu.memory_space<vmem>>, vector<40x72xbf16>
    %c0_2 = arith.constant 0 : index
    %c0_3 = arith.constant 0 : index
    %4 = vector.load %arg2[%c0_2, %c0_3] : memref<40x8xbf16, #tpu.memory_space<vmem>>, vector<40x8xbf16>
    %c0_4 = arith.constant 0 : index
    %c0_5 = arith.constant 0 : index
    %5 = vector.load %arg5[%c0_4, %c0_5] : memref<72x8xf32, #tpu.memory_space<vmem>>, vector<72x8xf32>
    %cst = arith.constant dense<0.000000e+00> : vector<72x8xf32>
    %6 = tpu.matmul %3, %4, %cst {dimension_numbers = #tpu.dot_dimension_numbers<[0], [0], [1], [1], [0, 1, 1, 1], [], []>} : vector<40x72xbf16>, vector<40x8xbf16>, vector<72x8xf32> -> vector<72x8xf32>
    %7 = arith.addf %5, %6 : vector<72x8xf32>
    %c0_6 = arith.constant 0 : index
    %c0_7 = arith.constant 0 : index
    %8 = vector.load %arg5[%c0_6, %c0_7] : memref<72x8xf32, #tpu.memory_space<vmem>>, vector<72x8xf32>
    tpu.vector_store %arg5[%c0_6, %c0_7], %7 {strides = array<i32>} : memref<72x8xf32, #tpu.memory_space<vmem>>, vector<72x8xf32>,
    %c0_8 = arith.constant 0 : index
    %c0_9 = arith.constant 0 : index
    %9 = vector.load %arg6[%c0_8, %c0_9] : memref<1x8xf32, #tpu.memory_space<vmem>>, vector<1x8xf32>
    %10 = arith.extf %4 : vector<40x8xbf16> to vector<40x8xf32>
    %cst_10 = arith.constant dense<0.000000e+00> : vector<8xf32>
    %11 = vector.multi_reduction <add>, %10, %cst_10 [0] : vector<40x8xf32> to vector<8xf32>
    %12 = vector.shape_cast %11 : vector<8xf32> to vector<1x8xf32>
    %13 = arith.addf %9, %12 : vector<1x8xf32>
    %c0_11 = arith.constant 0 : index
    %c0_12 = arith.constant 0 : index
    %14 = vector.load %arg6[%c0_11, %c0_12] : memref<1x8xf32, #tpu.memory_space<vmem>>, vector<1x8xf32>
    tpu.vector_store %arg6[%c0_11, %c0_12], %13 {strides = array<i32>} : memref<1x8xf32, #tpu.memory_space<vmem>>, vector<1x8xf32>,
    %c0_i32_13 = arith.constant 0 : i32
    %15 = arith.cmpi eq, %arg0, %c0_i32_13 : i32
    %16 = arith.extui %15 : i1 to i32
    %c0_i32_14 = arith.constant 0 : i32
    %17 = arith.cmpi ne, %16, %c0_i32_14 : i32
    scf.if %17 {
      %c0_15 = arith.constant 0 : index
      %c0_16 = arith.constant 0 : index
      %18 = vector.load %arg5[%c0_15, %c0_16] : memref<72x8xf32, #tpu.memory_space<vmem>>, vector<72x8xf32>
      %19 = arith.truncf %18 : vector<72x8xf32> to vector<72x8xbf16>
      %c0_17 = arith.constant 0 : index
      %c0_18 = arith.constant 0 : index
      %20 = vector.load %arg3[%c0_17, %c0_18] : memref<72x8xbf16, #tpu.memory_space<vmem>>, vector<72x8xbf16>
      tpu.vector_store %arg3[%c0_17, %c0_18], %19 {strides = array<i32>} : memref<72x8xbf16, #tpu.memory_space<vmem>>, vector<72x8xbf16>,
      %c0_19 = arith.constant 0 : index
      %c0_20 = arith.constant 0 : index
      %21 = vector.load %arg6[%c0_19, %c0_20] : memref<1x8xf32, #tpu.memory_space<vmem>>, vector<1x8xf32>
      %c0_21 = arith.constant 0 : index
      %c0_22 = arith.constant 0 : index
      %22 = vector.load %arg4[%c0_21, %c0_22] : memref<1x8xf32, #tpu.memory_space<vmem>>, vector<1x8xf32>
      tpu.vector_store %arg4[%c0_21, %c0_22], %21 {strides = array<i32>} : memref<1x8xf32, #tpu.memory_space<vmem>>, vector<1x8xf32>,
    } else {
    }
    return
  }
  func.func @transform_0(%arg0: i32) -> (i32, i32) {
    %c0_i32 = arith.constant 0 : i32
    %c0_i32_0 = arith.constant 0 : i32
    return %arg0, %c0_i32 : i32, i32
  }
  func.func @transform_1(%arg0: i32) -> (i32, i32) {
    %c0_i32 = arith.constant 0 : i32
    %c0_i32_0 = arith.constant 0 : i32
    return %arg0, %c0_i32 : i32, i32
  }
  func.func @transform_2(%arg0: i32) -> (i32, i32) {
    %c0_i32 = arith.constant 0 : i32
    %c0_i32_0 = arith.constant 0 : i32
    %c0_i32_1 = arith.constant 0 : i32
    return %c0_i32, %c0_i32_0 : i32, i32
  }
  func.func @transform_3(%arg0: i32) -> (i32, i32) {
    %c0_i32 = arith.constant 0 : i32
    %c0_i32_0 = arith.constant 0 : i32
    %c0_i32_1 = arith.constant 0 : i32
    return %c0_i32, %c0_i32_0 : i32, i32
  }
}

module attributes {stable_mosaic.version = 11 : i64} {
  func.func @_mm_tn_kernel(%arg0: i32, %arg1: memref<16x8xbf16, #tpu.memory_space<vmem>>, %arg2: memref<16x5xbf16, #tpu.memory_space<vmem>>, %arg3: memref<8x5xbf16, #tpu.memory_space<vmem>>, %arg4: memref<1x5xf32, #tpu.memory_space<vmem>>, %arg5: memref<8x5xf32, #tpu.memory_space<vmem>>, %arg6: memref<1x5xf32, #tpu.memory_space<vmem>>) attributes {dimension_semantics = [#tpu.dimension_semantics<arbitrary>], iteration_bounds = array<i64: 1>, scalar_prefetch = 0 : i64, scratch_operands = 2 : i64, tpu.core_type = #tpu.core_type<tc>, window_params = [{transform_indices = @transform_0, window_bounds = array<i64: 16, 8>}, {transform_indices = @transform_1, window_bounds = array<i64: 16, 5>}, {pipeline_mode = #tpu.pipeline_mode<synchronous>, transform_indices = @transform_2, window_bounds = array<i64: 8, 5>}, {pipeline_mode = #tpu.pipeline_mode<synchronous>, transform_indices = @transform_3, window_bounds = array<i64: 1, 5>}]} {
    %c0_i32 = arith.constant 0 : i32
    %0 = arith.cmpi eq, %arg0, %c0_i32 : i32
    %1 = arith.extui %0 : i1 to i32
    %c0_i32_0 = arith.constant 0 : i32
    %2 = arith.cmpi ne, %1, %c0_i32_0 : i32
    scf.if %2 {
      %cst = arith.constant 0.000000e+00 : f32
      %12 = vector.broadcast %cst : f32 to vector<8x5xf32>
      %c0 = arith.constant 0 : index
      %c0_7 = arith.constant 0 : index
      %13 = vector.load %arg5[%c0, %c0_7] : memref<8x5xf32, #tpu.memory_space<vmem>>, vector<8x5xf32>
      tpu.vector_store %arg5[%c0, %c0_7], %12 {strides = array<i32>} : memref<8x5xf32, #tpu.memory_space<vmem>>, vector<8x5xf32>,
      %cst_8 = arith.constant 0.000000e+00 : f32
      %14 = vector.broadcast %cst_8 : f32 to vector<1x5xf32>
      %c0_9 = arith.constant 0 : index
      %c0_10 = arith.constant 0 : index
      %15 = vector.load %arg6[%c0_9, %c0_10] : memref<1x5xf32, #tpu.memory_space<vmem>>, vector<1x5xf32>
      tpu.vector_store %arg6[%c0_9, %c0_10], %14 {strides = array<i32>} : memref<1x5xf32, #tpu.memory_space<vmem>>, vector<1x5xf32>,
    } else {
    }
    %c0_i32_1 = arith.constant 0 : i32
    %3 = arith.cmpi ne, %arg0, %c0_i32_1 : i32
    %4 = arith.extui %3 : i1 to i32
    %c0_i32_2 = arith.constant 0 : i32
    %5 = arith.cmpi ne, %4, %c0_i32_2 : i32
    scf.if %5 {
      %c0 = arith.constant 0 : index
      %c0_7 = arith.constant 0 : index
      %12 = vector.load %arg1[%c0, %c0_7] : memref<16x8xbf16, #tpu.memory_space<vmem>>, vector<16x8xbf16>
      %c0_8 = arith.constant 0 : index
      %c0_9 = arith.constant 0 : index
      %13 = vector.load %arg2[%c0_8, %c0_9] : memref<16x5xbf16, #tpu.memory_space<vmem>>, vector<16x5xbf16>
      %c0_10 = arith.constant 0 : index
      %c0_11 = arith.constant 0 : index
      %14 = vector.load %arg5[%c0_10, %c0_11] : memref<8x5xf32, #tpu.memory_space<vmem>>, vector<8x5xf32>
      %cst = arith.constant dense<0.000000e+00> : vector<8x5xf32>
      %15 = tpu.matmul %12, %13, %cst {dimension_numbers = #tpu.dot_dimension_numbers<[0], [0], [1], [1], [0, 1, 1, 1], [], []>} : vector<16x8xbf16>, vector<16x5xbf16>, vector<8x5xf32> -> vector<8x5xf32>
      %16 = arith.addf %14, %15 : vector<8x5xf32>
      %c0_12 = arith.constant 0 : index
      %c0_13 = arith.constant 0 : index
      %17 = vector.load %arg5[%c0_12, %c0_13] : memref<8x5xf32, #tpu.memory_space<vmem>>, vector<8x5xf32>
      tpu.vector_store %arg5[%c0_12, %c0_13], %16 {strides = array<i32>} : memref<8x5xf32, #tpu.memory_space<vmem>>, vector<8x5xf32>,
      %c0_14 = arith.constant 0 : index
      %c0_15 = arith.constant 0 : index
      %18 = vector.load %arg6[%c0_14, %c0_15] : memref<1x5xf32, #tpu.memory_space<vmem>>, vector<1x5xf32>
      %19 = arith.extf %13 : vector<16x5xbf16> to vector<16x5xf32>
      %cst_16 = arith.constant dense<0.000000e+00> : vector<5xf32>
      %20 = vector.multi_reduction <add>, %19, %cst_16 [0] : vector<16x5xf32> to vector<5xf32>
      %21 = vector.shape_cast %20 : vector<5xf32> to vector<1x5xf32>
      %22 = arith.addf %18, %21 : vector<1x5xf32>
      %c0_17 = arith.constant 0 : index
      %c0_18 = arith.constant 0 : index
      %23 = vector.load %arg6[%c0_17, %c0_18] : memref<1x5xf32, #tpu.memory_space<vmem>>, vector<1x5xf32>
      tpu.vector_store %arg6[%c0_17, %c0_18], %22 {strides = array<i32>} : memref<1x5xf32, #tpu.memory_space<vmem>>, vector<1x5xf32>,
    } else {
    }
    %c0_i32_3 = arith.constant 0 : i32
    %6 = arith.cmpi eq, %arg0, %c0_i32_3 : i32
    %7 = arith.extui %6 : i1 to i32
    %c0_i32_4 = arith.constant 0 : i32
    %8 = arith.cmpi ne, %7, %c0_i32_4 : i32
    scf.if %8 {
      %c0 = arith.constant 0 : index
      %c0_7 = arith.constant 0 : index
      %12 = vector.load %arg1[%c0, %c0_7] : memref<16x8xbf16, #tpu.memory_space<vmem>>, vector<16x8xbf16>
      %13 = tpu.iota {dimensions = array<i32: 0>} : vector<16x8xi32>
      %c16_i32 = arith.constant 16 : i32
      %14 = arith.muli %arg0, %c16_i32 : i32
      %15 = vector.broadcast %14 : i32 to vector<16x8xi32>
      %16 = arith.addi %13, %15 : vector<16x8xi32>
      %c10_i32 = arith.constant 10 : i32
      %17 = vector.broadcast %c10_i32 : i32 to vector<16x8xi32>
      %18 = arith.cmpi slt, %16, %17 : vector<16x8xi32>
      %cst = arith.constant 0.000000e+00 : bf16
      %19 = vector.broadcast %cst : bf16 to vector<16x8xbf16>
      %20 = arith.select %18, %12, %19 : vector<16x8xi1>, vector<16x8xbf16>
      %c0_8 = arith.constant 0 : index
      %c0_9 = arith.constant 0 : index
      %21 = vector.load %arg2[%c0_8, %c0_9] : memref<16x5xbf16, #tpu.memory_space<vmem>>, vector<16x5xbf16>
      %22 = tpu.iota {dimensions = array<i32: 0>} : vector<16x5xi32>
      %c16_i32_10 = arith.constant 16 : i32
      %23 = arith.muli %arg0, %c16_i32_10 : i32
      %24 = vector.broadcast %23 : i32 to vector<16x5xi32>
      %25 = arith.addi %22, %24 : vector<16x5xi32>
      %c10_i32_11 = arith.constant 10 : i32
      %26 = vector.broadcast %c10_i32_11 : i32 to vector<16x5xi32>
      %27 = arith.cmpi slt, %25, %26 : vector<16x5xi32>
      %cst_12 = arith.constant 0.000000e+00 : bf16
      %28 = vector.broadcast %cst_12 : bf16 to vector<16x5xbf16>
      %29 = arith.select %27, %21, %28 : vector<16x5xi1>, vector<16x5xbf16>
      %c0_13 = arith.constant 0 : index
      %c0_14 = arith.constant 0 : index
      %30 = vector.load %arg5[%c0_13, %c0_14] : memref<8x5xf32, #tpu.memory_space<vmem>>, vector<8x5xf32>
      %cst_15 = arith.constant dense<0.000000e+00> : vector<8x5xf32>
      %31 = tpu.matmul %20, %29, %cst_15 {dimension_numbers = #tpu.dot_dimension_numbers<[0], [0], [1], [1], [0, 1, 1, 1], [], []>} : vector<16x8xbf16>, vector<16x5xbf16>, vector<8x5xf32> -> vector<8x5xf32>
      %32 = arith.addf %30, %31 : vector<8x5xf32>
      %c0_16 = arith.constant 0 : index
      %c0_17 = arith.constant 0 : index
      %33 = vector.load %arg5[%c0_16, %c0_17] : memref<8x5xf32, #tpu.memory_space<vmem>>, vector<8x5xf32>
      tpu.vector_store %arg5[%c0_16, %c0_17], %32 {strides = array<i32>} : memref<8x5xf32, #tpu.memory_space<vmem>>, vector<8x5xf32>,
      %c0_18 = arith.constant 0 : index
      %c0_19 = arith.constant 0 : index
      %34 = vector.load %arg6[%c0_18, %c0_19] : memref<1x5xf32, #tpu.memory_space<vmem>>, vector<1x5xf32>
      %35 = arith.extf %29 : vector<16x5xbf16> to vector<16x5xf32>
      %cst_20 = arith.constant dense<0.000000e+00> : vector<5xf32>
      %36 = vector.multi_reduction <add>, %35, %cst_20 [0] : vector<16x5xf32> to vector<5xf32>
      %37 = vector.shape_cast %36 : vector<5xf32> to vector<1x5xf32>
      %38 = arith.addf %34, %37 : vector<1x5xf32>
      %c0_21 = arith.constant 0 : index
      %c0_22 = arith.constant 0 : index
      %39 = vector.load %arg6[%c0_21, %c0_22] : memref<1x5xf32, #tpu.memory_space<vmem>>, vector<1x5xf32>
      tpu.vector_store %arg6[%c0_21, %c0_22], %38 {strides = array<i32>} : memref<1x5xf32, #tpu.memory_space<vmem>>, vector<1x5xf32>,
    } else {
    }
    %c0_i32_5 = arith.constant 0 : i32
    %9 = arith.cmpi eq, %arg0, %c0_i32_5 : i32
    %10 = arith.extui %9 : i1 to i32
    %c0_i32_6 = arith.constant 0 : i32
    %11 = arith.cmpi ne, %10, %c0_i32_6 : i32
    scf.if %11 {
      %c0 = arith.constant 0 : index
      %c0_7 = arith.constant 0 : index
      %12 = vector.load %arg5[%c0, %c0_7] : memref<8x5xf32, #tpu.memory_space<vmem>>, vector<8x5xf32>
      %13 = arith.truncf %12 : vector<8x5xf32> to vector<8x5xbf16>
      %c0_8 = arith.constant 0 : index
      %c0_9 = arith.constant 0 : index
      %14 = vector.load %arg3[%c0_8, %c0_9] : memref<8x5xbf16, #tpu.memory_space<vmem>>, vector<8x5xbf16>
      tpu.vector_store %arg3[%c0_8, %c0_9], %13 {strides = array<i32>} : memref<8x5xbf16, #tpu.memory_space<vmem>>, vector<8x5xbf16>,
      %c0_10 = arith.constant 0 : index
      %c0_11 = arith.constant 0 : index
      %15 = vector.load %arg6[%c0_10, %c0_11] : memref<1x5xf32, #tpu.memory_space<vmem>>, vector<1x5xf32>
      %c0_12 = arith.constant 0 : index
      %c0_13 = arith.constant 0 : index
      %16 = vector.load %arg4[%c0_12, %c0_13] : memref<1x5xf32, #tpu.memory_space<vmem>>, vector<1x5xf32>
      tpu.vector_store %arg4[%c0_12, %c0_13], %15 {strides = array<i32>} : memref<1x5xf32, #tpu.memory_space<vmem>>, vector<1x5xf32>,
    } else {
    }
    return
  }
  func.func @transform_0(%arg0: i32) -> (i32, i32) {
    %c0_i32 = arith.constant 0 : i32
    %c0_i32_0 = arith.constant 0 : i32
    return %arg0, %c0_i32 : i32, i32
  }
  func.func @transform_1(%arg0: i32) -> (i32, i32) {
    %c0_i32 = arith.constant 0 : i32
    %c0_i32_0 = arith.constant 0 : i32
    return %arg0, %c0_i32 : i32, i32
  }
  func.func @transform_2(%arg0: i32) -> (i32, i32) {
    %c0_i32 = arith.constant 0 : i32
    %c0_i32_0 = arith.constant 0 : i32
    %c0_i32_1 = arith.constant 0 : i32
    return %c0_i32, %c0_i32_0 : i32, i32
  }
  func.func @transform_3(%arg0: i32) -> (i32, i32) {
    %c0_i32 = arith.constant 0 : i32
    %c0_i32_0 = arith.constant 0 : i32
    %c0_i32_1 = arith.constant 0 : i32
    return %c0_i32, %c0_i32_0 : i32, i32
  }
}

module attributes {stable_mosaic.version = 11 : i64} {
  func.func @_ce_acc_kernel(%arg0: memref<16x5xf32, #tpu.memory_space<vmem>>, %arg1: memref<16x1xi32, #tpu.memory_space<vmem>>, %arg2: memref<1x1xf32, #tpu.memory_space<vmem>>, %arg3: memref<1x1xf32, #tpu.memory_space<vmem>>) attributes {dimension_semantics = [], scalar_prefetch = 0 : i64, scratch_operands = 0 : i64, tpu.core_type = #tpu.core_type<tc>} {
    %c0 = arith.constant 0 : index
    %c0_0 = arith.constant 0 : index
    %0 = vector.load %arg0[%c0, %c0_0] : memref<16x5xf32, #tpu.memory_space<vmem>>, vector<16x5xf32>
    %c0_1 = arith.constant 0 : index
    %c0_2 = arith.constant 0 : index
    %1 = vector.load %arg1[%c0_1, %c0_2] : memref<16x1xi32, #tpu.memory_space<vmem>>, vector<16x1xi32>
    %2 = tpu.iota {dimensions = array<i32: 1>} : vector<16x5xi32>
    %3 = vector.broadcast %1 : vector<16x1xi32> to vector<16x5xi32>
    %4 = arith.cmpi eq, %2, %3 : vector<16x5xi32>
    %5 = arith.extui %4 : vector<16x5xi1> to vector<16x5xi32>
    %6 = arith.sitofp %5 : vector<16x5xi32> to vector<16x5xf32>
    %cst = arith.constant dense<0xFF800000> : vector<16xf32>
    %7 = vector.multi_reduction <maximumf>, %0, %cst [1] : vector<16x5xf32> to vector<16xf32>
    %8 = vector.shape_cast %7 : vector<16xf32> to vector<16x1xf32>
    %9 = vector.broadcast %8 : vector<16x1xf32> to vector<16x5xf32>
    %10 = arith.subf %0, %9 : vector<16x5xf32>
    %11 = math.exp %10 : vector<16x5xf32>
    %cst_3 = arith.constant dense<0.000000e+00> : vector<16xf32>
    %12 = vector.multi_reduction <add>, %11, %cst_3 [1] : vector<16x5xf32> to vector<16xf32>
    %13 = vector.shape_cast %12 : vector<16xf32> to vector<16x1xf32>
    %14 = math.log %13 : vector<16x1xf32>
    %15 = vector.broadcast %14 : vector<16x1xf32> to vector<16x5xf32>
    %16 = arith.subf %10, %15 : vector<16x5xf32>
    %17 = arith.mulf %6, %16 : vector<16x5xf32>
    %cst_4 = arith.constant dense<0.000000e+00> : vector<16xf32>
    %18 = vector.multi_reduction <add>, %17, %cst_4 [1] : vector<16x5xf32> to vector<16xf32>
    %19 = vector.shape_cast %18 : vector<16xf32> to vector<16x1xf32>
    %cst_5 = arith.constant 0.000000e+00 : f32
    %20 = vector.broadcast %cst_5 : f32 to vector<16x1xf32>
    %21 = arith.subf %20, %19 : vector<16x1xf32>
    %22 = vector.broadcast %8 : vector<16x1xf32> to vector<16x5xf32>
    %23 = arith.cmpf oge, %0, %22 : vector<16x5xf32>
    %24 = arith.sitofp %2 : vector<16x5xi32> to vector<16x5xf32>
    %cst_6 = arith.constant 5.000000e+00 : f32
    %25 = vector.broadcast %cst_6 : f32 to vector<16x5xf32>
    %26 = arith.select %23, %24, %25 : vector<16x5xi1>, vector<16x5xf32>
    %cst_7 = arith.constant dense<0x7F800000> : vector<16xf32>
    %27 = vector.multi_reduction <minimumf>, %26, %cst_7 [1] : vector<16x5xf32> to vector<16xf32>
    %28 = vector.shape_cast %27 : vector<16xf32> to vector<16x1xf32>
    %29 = arith.sitofp %1 : vector<16x1xi32> to vector<16x1xf32>
    %30 = arith.cmpf oeq, %28, %29 : vector<16x1xf32>
    %31 = arith.extui %30 : vector<16x1xi1> to vector<16x1xi32>
    %32 = arith.sitofp %31 : vector<16x1xi32> to vector<16x1xf32>
    %cst_8 = arith.constant dense<0.000000e+00> : vector<1xf32>
    %33 = vector.multi_reduction <add>, %21, %cst_8 [0] : vector<16x1xf32> to vector<1xf32>
    %34 = vector.shape_cast %33 : vector<1xf32> to vector<1x1xf32>
    %cst_9 = arith.constant 1.000000e-01 : f32
    %35 = vector.broadcast %cst_9 : f32 to vector<1x1xf32>
    %36 = arith.mulf %34, %35 : vector<1x1xf32>
    %c0_10 = arith.constant 0 : index
    %c0_11 = arith.constant 0 : index
    %37 = vector.load %arg2[%c0_10, %c0_11] : memref<1x1xf32, #tpu.memory_space<vmem>>, vector<1x1xf32>
    tpu.vector_store %arg2[%c0_10, %c0_11], %36 {strides = array<i32>} : memref<1x1xf32, #tpu.memory_space<vmem>>, vector<1x1xf32>,
    %cst_12 = arith.constant dense<0.000000e+00> : vector<1xf32>
    %38 = vector.multi_reduction <add>, %32, %cst_12 [0] : vector<16x1xf32> to vector<1xf32>
    %39 = vector.shape_cast %38 : vector<1xf32> to vector<1x1xf32>
    %cst_13 = arith.constant 1.000000e-01 : f32
    %40 = vector.broadcast %cst_13 : f32 to vector<1x1xf32>
    %41 = arith.mulf %39, %40 : vector<1x1xf32>
    %c0_14 = arith.constant 0 : index
    %c0_15 = arith.constant 0 : index
    %42 = vector.load %arg3[%c0_14, %c0_15] : memref<1x1xf32, #tpu.memory_space<vmem>>, vector<1x1xf32>
    tpu.vector_store %arg3[%c0_14, %c0_15], %41 {strides = array<i32>} : memref<1x1xf32, #tpu.memory_space<vmem>>, vector<1x1xf32>,
    return
  }
}

</mosaic_0001>

<llo_original>
// kernel: jvp__.10
$region0: #{jvp__.10}
  #allocation0 [shape = 'u32[]', space=smem, size = 0x4, offset = 0x4, fixed_abs, tag = 'smem constant byte address 0x4 - core index']
  #allocation1 [shape = 'u32[144,128]{1,0:T(1,128)}', space=vmem, size = 0x12000, scoped, tag = 'internal scratch']
  #allocation2 [shape = 'f32[2560,8]{1,0:T(8,128)}', space=vmem, size = 0x140000, scoped, tag = 'scratch operand']
  %s0 = inlined_call_operand.vmem [shape: bf16[2560,27], index: 0, kind: input, shape index: {}]
  %s1 = inlined_call_operand.vmem [shape: bf16[27,8], index: 1, kind: input, shape index: {}]
  %s2 = inlined_call_operand.vmem [shape: f32[1,8], index: 2, kind: input, shape index: {}]
  %s3 = inlined_call_operand.vmem [shape: f32[2560,8], index: 3, kind: output, shape index: {}]
  %s4 = sld [smem:[#allocation0]]
  $region30: #{jvp__.10} parent=0
    _
  %s6 = ssub.s32 1, %s4
  %s7 = scalar_select 0, %s6, %s4
  // Predicated region
  $region2: #{jvp__.10} parent=0 // pred_check
    _
  $region3: #{jvp__.10} parent=0 // pred_check_branch
    %9 = sbr.rel (0) target = $region5
  $region4: #{jvp__.10} parent=0 // pred_region
    _
  $region5: #{jvp__.10} parent=0 // pred_fallthru
    _
  // Predicated region
  $region6: #{jvp__.10} parent=0 // pred_check
    _
  $region7: #{jvp__.10} parent=0 // pred_check_branch
    %11 = sbr.rel (0) target = $region9
  $region8: #{jvp__.10} parent=0 // pred_region
    _
  $region9: #{jvp__.10} parent=0 // pred_fallthru
    _
  // Predicated region
  $region10: #{jvp__.10} parent=0 // pred_check
    _
  $region11: #{jvp__.10} parent=0 // pred_check_branch
    %13 = sbr.rel (0) target = $region13
  $region12: #{jvp__.10} parent=0 // pred_region
    _
  $region13: #{jvp__.10} parent=0 // pred_fallthru
    _
  %p15 = scmp.eq.s32.totalorder 0, 0
  // Predicated region
  $region14: #{jvp__.10} parent=0 // pred_check
    %p16 = pneg %p15
  $region15: #{jvp__.10} parent=0 // pred_check_branch
    %18 = sbr.rel (%p16) target = $region17
  $region16: #{jvp__.10} parent=0 // pred_region
    %vm19 = vcmask 64512
    %20 = vst.msk [vmem:[#allocation2] sm:$0xff] %vm19, 0.0
    %21 = vst.msk [vmem:[#allocation2 + $0x8] sm:$0xff] %vm19, 0.0
    %22 = vst.msk [vmem:[#allocation2 + $0x10] sm:$0xff] %vm19, 0.0
    %23 = vst.msk [vmem:[#allocation2 + $0x18] sm:$0xff] %vm19, 0.0
    %24 = vst.msk [vmem:[#allocation2 + $0x20] sm:$0xff] %vm19, 0.0
    %25 = vst.msk [vmem:[#allocation2 + $0x28] sm:$0xff] %vm19, 0.0
    %26 = vst.msk [vmem:[#allocation2 + $0x30] sm:$0xff] %vm19, 0.0
    %27 = vst.msk [vmem:[#allocation2 + $0x38] sm:$0xff] %vm19, 0.0
    %28 = vst.msk [vmem:[#allocation2 + $0x40] sm:$0xff] %vm19, 0.0
    %29 = vst.msk [vmem:[#allocation2 + $0x48] sm:$0xff] %vm19, 0.0
    %30 = vst.msk [vmem:[#allocation2 + $0x50] sm:$0xff] %vm19, 0.0
    %31 = vst.msk [vmem:[#allocation2 + $0x58] sm:$0xff] %vm19, 0.0
    %32 = vst.msk [vmem:[#allocation2 + $0x60] sm:$0xff] %vm19, 0.0
    %33 = vst.msk [vmem:[#allocation2 + $0x68] sm:$0xff] %vm19, 0.0
    %34 = vst.msk [vmem:[#allocation2 + $0x70] sm:$0xff] %vm19, 0.0
    %35 = vst.msk [vmem:[#allocation2 + $0x78] sm:$0xff] %vm19, 0.0
    %36 = vst.msk [vmem:[#allocation2 + $0x80] sm:$0xff] %vm19, 0.0
    %37 = vst.msk [vmem:[#allocation2 + $0x88] sm:$0xff] %vm19, 0.0
    %38 = vst.msk [vmem:[#allocation2 + $0x90] sm:$0xff] %vm19, 0.0
    %39 = vst.msk [vmem:[#allocation2 + $0x98] sm:$0xff] %vm19, 0.0
    %40 = vst.msk [vmem:[#allocation2 + $0xa0] sm:$0xff] %vm19, 0.0
    %41 = vst.msk [vmem:[#allocation2 + $0xa8] sm:$0xff] %vm19, 0.0
    %42 = vst.msk [vmem:[#allocation2 + $0xb0] sm:$0xff] %vm19, 0.0
    %43 = vst.msk [vmem:[#allocation2 + $0xb8] sm:$0xff] %vm19, 0.0
    %44 = vst.msk [vmem:[#allocation2 + $0xc0] sm:$0xff] %vm19, 0.0
    %45 = vst.msk [vmem:[#allocation2 + $0xc8] sm:$0xff] %vm19, 0.0
    %46 = vst.msk [vmem:[#allocation2 + $0xd0] sm:$0xff] %vm19, 0.0
    %47 = vst.msk [vmem:[#allocation2 + $0xd8] sm:$0xff] %vm19, 0.0
    %48 = vst.msk [vmem:[#allocation2 + $0xe0] sm:$0xff] %vm19, 0.0
    %49 = vst.msk [vmem:[#allocation2 + $0xe8] sm:$0xff] %vm19, 0.0
    %50 = vst.msk [vmem:[#allocation2 + $0xf0] sm:$0xff] %vm19, 0.0
    %51 = vst.msk [vmem:[#allocation2 + $0xf8] sm:$0xff] %vm19, 0.0
    %52 = vst.msk [vmem:[#allocation2 + $0x100] sm:$0xff] %vm19, 0.0
    %53 = vst.msk [vmem:[#allocation2 + $0x108] sm:$0xff] %vm19, 0.0
    %54 = vst.msk [vmem:[#allocation2 + $0x110] sm:$0xff] %vm19, 0.0
    %55 = vst.msk [vmem:[#allocation2 + $0x118] sm:$0xff] %vm19, 0.0
    %56 = vst.msk [vmem:[#allocation2 + $0x120] sm:$0xff] %vm19, 0.0
    %57 = vst.msk [vmem:[#allocation2 + $0x128] sm:$0xff] %vm19, 0.0
    %58 = vst.msk [vmem:[#allocation2 + $0x130] sm:$0xff] %vm19, 0.0
    %59 = vst.msk [vmem:[#allocation2 + $0x138] sm:$0xff] %vm19, 0.0
    %60 = vst.msk [vmem:[#allocation2 + $0x140] sm:$0xff] %vm19, 0.0
    %61 = vst.msk [vmem:[#allocation2 + $0x148] sm:$0xff] %vm19, 0.0
    %62 = vst.msk [vmem:[#allocation2 + $0x150] sm:$0xff] %vm19, 0.0
    %63 = vst.msk [vmem:[#allocation2 + $0x158] sm:$0xff] %vm19, 0.0
    %64 = vst.msk [vmem:[#allocation2 + $0x160] sm:$0xff] %vm19, 0.0
    %65 = vst.msk [vmem:[#allocation2 + $0x168] sm:$0xff] %vm19, 0.0
    %66 = vst.msk [vmem:[#allocation2 + $0x170] sm:$0xff] %vm19, 0.0
    %67 = vst.msk [vmem:[#allocation2 + $0x178] sm:$0xff] %vm19, 0.0
    %68 = vst.msk [vmem:[#allocation2 + $0x180] sm:$0xff] %vm19, 0.0
    %69 = vst.msk [vmem:[#allocation2 + $0x188] sm:$0xff] %vm19, 0.0
    %70 = vst.msk [vmem:[#allocation2 + $0x190] sm:$0xff] %vm19, 0.0
    %71 = vst.msk [vmem:[#allocation2 + $0x198] sm:$0xff] %vm19, 0.0
    %72 = vst.msk [vmem:[#allocation2 + $0x1a0] sm:$0xff] %vm19, 0.0
    %73 = vst.msk [vmem:[#allocation2 + $0x1a8] sm:$0xff] %vm19, 0.0
    %74 = vst.msk [vmem:[#allocation2 + $0x1b0] sm:$0xff] %vm19, 0.0
    %75 = vst.msk [vmem:[#allocation2 + $0x1b8] sm:$0xff] %vm19, 0.0
    %76 = vst.msk [vmem:[#allocation2 + $0x1c0] sm:$0xff] %vm19, 0.0
    %77 = vst.msk [vmem:[#allocation2 + $0x1c8] sm:$0xff] %vm19, 0.0
    %78 = vst.msk [vmem:[#allocation2 + $0x1d0] sm:$0xff] %vm19, 0.0
    %79 = vst.msk [vmem:[#allocation2 + $0x1d8] sm:$0xff] %vm19, 0.0
    %80 = vst.msk [vmem:[#allocation2 + $0x1e0] sm:$0xff] %vm19, 0.0
    %81 = vst.msk [vmem:[#allocation2 + $0x1e8] sm:$0xff] %vm19, 0.0
    %82 = vst.msk [vmem:[#allocation2 + $0x1f0] sm:$0xff] %vm19, 0.0
    %83 = vst.msk [vmem:[#allocation2 + $0x1f8] sm:$0xff] %vm19, 0.0
    %84 = vst.msk [vmem:[#allocation2 + $0x200] sm:$0xff] %vm19, 0.0
    %85 = vst.msk [vmem:[#allocation2 + $0x208] sm:$0xff] %vm19, 0.0
    %86 = vst.msk [vmem:[#allocation2 + $0x210] sm:$0xff] %vm19, 0.0
    %87 = vst.msk [vmem:[#allocation2 + $0x218] sm:$0xff] %vm19, 0.0
    %88 = vst.msk [vmem:[#allocation2 + $0x220] sm:$0xff] %vm19, 0.0
    %89 = vst.msk [vmem:[#allocation2 + $0x228] sm:$0xff] %vm19, 0.0
    %90 = vst.msk [vmem:[#allocation2 + $0x230] sm:$0xff] %vm19, 0.0
    %91 = vst.msk [vmem:[#allocation2 + $0x238] sm:$0xff] %vm19, 0.0
    %92 = vst.msk [vmem:[#allocation2 + $0x240] sm:$0xff] %vm19, 0.0
    %93 = vst.msk [vmem:[#allocation2 + $0x248] sm:$0xff] %vm19, 0.0
    %94 = vst.msk [vmem:[#allocation2 + $0x250] sm:$0xff] %vm19, 0.0
    %95 = vst.msk [vmem:[#allocation2 + $0x258] sm:$0xff] %vm19, 0.0
    %96 = vst.msk [vmem:[#allocation2 + $0x260] sm:$0xff] %vm19, 0.0
    %97 = vst.msk [vmem:[#allocation2 + $0x268] sm:$0xff] %vm19, 0.0
    %98 = vst.msk [vmem:[#allocation2 + $0x270] sm:$0xff] %vm19, 0.0
    %99 = vst.msk [vmem:[#allocation2 + $0x278] sm:$0xff] %vm19, 0.0
    %100 = vst.msk [vmem:[#allocation2 + $0x280] sm:$0xff] %vm19, 0.0
    %101 = vst.msk [vmem:[#allocation2 + $0x288] sm:$0xff] %vm19, 0.0
    %102 = vst.msk [vmem:[#allocation2 + $0x290] sm:$0xff] %vm19, 0.0
    %103 = vst.msk [vmem:[#allocation2 + $0x298] sm:$0xff] %vm19, 0.0
    %104 = vst.msk [vmem:[#allocation2 + $0x2a0] sm:$0xff] %vm19, 0.0
    %105 = vst.msk [vmem:[#allocation2 + $0x2a8] sm:$0xff] %vm19, 0.0
    %106 = vst.msk [vmem:[#allocation2 + $0x2b0] sm:$0xff] %vm19, 0.0
    %107 = vst.msk [vmem:[#allocation2 + $0x2b8] sm:$0xff] %vm19, 0.0
    %108 = vst.msk [vmem:[#allocation2 + $0x2c0] sm:$0xff] %vm19, 0.0
    %109 = vst.msk [vmem:[#allocation2 + $0x2c8] sm:$0xff] %vm19, 0.0
    %110 = vst.msk [vmem:[#allocation2 + $0x2d0] sm:$0xff] %vm19, 0.0
    %111 = vst.msk [vmem:[#allocation2 + $0x2d8] sm:$0xff] %vm19, 0.0
    %112 = vst.msk [vmem:[#allocation2 + $0x2e0] sm:$0xff] %vm19, 0.0
    %113 = vst.msk [vmem:[#allocation2 + $0x2e8] sm:$0xff] %vm19, 0.0
    %114 = vst.msk [vmem:[#allocation2 + $0x2f0] sm:$0xff] %vm19, 0.0
    %115 = vst.msk [vmem:[#allocation2 + $0x2f8] sm:$0xff] %vm19, 0.0
    %116 = vst.msk [vmem:[#allocation2 + $0x300] sm:$0xff] %vm19, 0.0
    %117 = vst.msk [vmem:[#allocation2 + $0x308] sm:$0xff] %vm19, 0.0
    %118 = vst.msk [vmem:[#allocation2 + $0x310] sm:$0xff] %vm19, 0.0
    %119 = vst.msk [vmem:[#allocation2 + $0x318] sm:$0xff] %vm19, 0.0
    %120 = vst.msk [vmem:[#allocation2 + $0x320] sm:$0xff] %vm19, 0.0
    %121 = vst.msk [vmem:[#allocation2 + $0x328] sm:$0xff] %vm19, 0.0
    %122 = vst.msk [vmem:[#allocation2 + $0x330] sm:$0xff] %vm19, 0.0
    %123 = vst.msk [vmem:[#allocation2 + $0x338] sm:$0xff] %vm19, 0.0
    %124 = vst.msk [vmem:[#allocation2 + $0x340] sm:$0xff] %vm19, 0.0
    %125 = vst.msk [vmem:[#allocation2 + $0x348] sm:$0xff] %vm19, 0.0
    %126 = vst.msk [vmem:[#allocation2 + $0x350] sm:$0xff] %vm19, 0.0
    %127 = vst.msk [vmem:[#allocation2 + $0x358] sm:$0xff] %vm19, 0.0
    %128 = vst.msk [vmem:[#allocation2 + $0x360] sm:$0xff] %vm19, 0.0
    %129 = vst.msk [vmem:[#allocation2 + $0x368] sm:$0xff] %vm19, 0.0
    %130 = vst.msk [vmem:[#allocation2 + $0x370] sm:$0xff] %vm19, 0.0
    %131 = vst.msk [vmem:[#allocation2 + $0x378] sm:$0xff] %vm19, 0.0
    %132 = vst.msk [vmem:[#allocation2 + $0x380] sm:$0xff] %vm19, 0.0
    %133 = vst.msk [vmem:[#allocation2 + $0x388] sm:$0xff] %vm19, 0.0
    %134 = vst.msk [vmem:[#allocation2 + $0x390] sm:$0xff] %vm19, 0.0
    %135 = vst.msk [vmem:[#allocation2 + $0x398] sm:$0xff] %vm19, 0.0
    %136 = vst.msk [vmem:[#allocation2 + $0x3a0] sm:$0xff] %vm19, 0.0
    %137 = vst.msk [vmem:[#allocation2 + $0x3a8] sm:$0xff] %vm19, 0.0
    %138 = vst.msk [vmem:[#allocation2 + $0x3b0] sm:$0xff] %vm19, 0.0
    %139 = vst.msk [vmem:[#allocation2 + $0x3b8] sm:$0xff] %vm19, 0.0
    %140 = vst.msk [vmem:[#allocation2 + $0x3c0] sm:$0xff] %vm19, 0.0
    %141 = vst.msk [vmem:[#allocation2 + $0x3c8] sm:$0xff] %vm19, 0.0
    %142 = vst.msk [vmem:[#allocation2 + $0x3d0] sm:$0xff] %vm19, 0.0
    %143 = vst.msk [vmem:[#allocation2 + $0x3d8] sm:$0xff] %vm19, 0.0
    %144 = vst.msk [vmem:[#allocation2 + $0x3e0] sm:$0xff] %vm19, 0.0
    %145 = vst.msk [vmem:[#allocation2 + $0x3e8] sm:$0xff] %vm19, 0.0
    %146 = vst.msk [vmem:[#allocation2 + $0x3f0] sm:$0xff] %vm19, 0.0
    %147 = vst.msk [vmem:[#allocation2 + $0x3f8] sm:$0xff] %vm19, 0.0
    %148 = vst.msk [vmem:[#allocation2 + $0x400] sm:$0xff] %vm19, 0.0
    %149 = vst.msk [vmem:[#allocation2 + $0x408] sm:$0xff] %vm19, 0.0
    %150 = vst.msk [vmem:[#allocation2 + $0x410] sm:$0xff] %vm19, 0.0
    %151 = vst.msk [vmem:[#allocation2 + $0x418] sm:$0xff] %vm19, 0.0
    %152 = vst.msk [vmem:[#allocation2 + $0x420] sm:$0xff] %vm19, 0.0
    %153 = vst.msk [vmem:[#allocation2 + $0x428] sm:$0xff] %vm19, 0.0
    %154 = vst.msk [vmem:[#allocation2 + $0x430] sm:$0xff] %vm19, 0.0
    %155 = vst.msk [vmem:[#allocation2 + $0x438] sm:$0xff] %vm19, 0.0
    %156 = vst.msk [vmem:[#allocation2 + $0x440] sm:$0xff] %vm19, 0.0
    %157 = vst.msk [vmem:[#allocation2 + $0x448] sm:$0xff] %vm19, 0.0
    %158 = vst.msk [vmem:[#allocation2 + $0x450] sm:$0xff] %vm19, 0.0
    %159 = vst.msk [vmem:[#allocation2 + $0x458] sm:$0xff] %vm19, 0.0
    %160 = vst.msk [vmem:[#allocation2 + $0x460] sm:$0xff] %vm19, 0.0
    %161 = vst.msk [vmem:[#allocation2 + $0x468] sm:$0xff] %vm19, 0.0
    %162 = vst.msk [vmem:[#allocation2 + $0x470] sm:$0xff] %vm19, 0.0
    %163 = vst.msk [vmem:[#allocation2 + $0x478] sm:$0xff] %vm19, 0.0
    %164 = vst.msk [vmem:[#allocation2 + $0x480] sm:$0xff] %vm19, 0.0
    %165 = vst.msk [vmem:[#allocation2 + $0x488] sm:$0xff] %vm19, 0.0
    %166 = vst.msk [vmem:[#allocation2 + $0x490] sm:$0xff] %vm19, 0.0
    %167 = vst.msk [vmem:[#allocation2 + $0x498] sm:$0xff] %vm19, 0.0
    %168 = vst.msk [vmem:[#allocation2 + $0x4a0] sm:$0xff] %vm19, 0.0
    %169 = vst.msk [vmem:[#allocation2 + $0x4a8] sm:$0xff] %vm19, 0.0
    %170 = vst.msk [vmem:[#allocation2 + $0x4b0] sm:$0xff] %vm19, 0.0
    %171 = vst.msk [vmem:[#allocation2 + $0x4b8] sm:$0xff] %vm19, 0.0
    %172 = vst.msk [vmem:[#allocation2 + $0x4c0] sm:$0xff] %vm19, 0.0
    %173 = vst.msk [vmem:[#allocation2 + $0x4c8] sm:$0xff] %vm19, 0.0
    %174 = vst.msk [vmem:[#allocation2 + $0x4d0] sm:$0xff] %vm19, 0.0
    %175 = vst.msk [vmem:[#allocation2 + $0x4d8] sm:$0xff] %vm19, 0.0
    %176 = vst.msk [vmem:[#allocation2 + $0x4e0] sm:$0xff] %vm19, 0.0
    %177 = vst.msk [vmem:[#allocation2 + $0x4e8] sm:$0xff] %vm19, 0.0
    %178 = vst.msk [vmem:[#allocation2 + $0x4f0] sm:$0xff] %vm19, 0.0
    %179 = vst.msk [vmem:[#allocation2 + $0x4f8] sm:$0xff] %vm19, 0.0
    %180 = vst.msk [vmem:[#allocation2 + $0x500] sm:$0xff] %vm19, 0.0
    %181 = vst.msk [vmem:[#allocation2 + $0x508] sm:$0xff] %vm19, 0.0
    %182 = vst.msk [vmem:[#allocation2 + $0x510] sm:$0xff] %vm19, 0.0
    %183 = vst.msk [vmem:[#allocation2 + $0x518] sm:$0xff] %vm19, 0.0
    %184 = vst.msk [vmem:[#allocation2 + $0x520] sm:$0xff] %vm19, 0.0
    %185 = vst.msk [vmem:[#allocation2 + $0x528] sm:$0xff] %vm19, 0.0
    %186 = vst.msk [vmem:[#allocation2 + $0x530] sm:$0xff] %vm19, 0.0
    %187 = vst.msk [vmem:[#allocation2 + $0x538] sm:$0xff] %vm19, 0.0
    %188 = vst.msk [vmem:[#allocation2 + $0x540] sm:$0xff] %vm19, 0.0
    %189 = vst.msk [vmem:[#allocation2 + $0x548] sm:$0xff] %vm19, 0.0
    %190 = vst.msk [vmem:[#allocation2 + $0x550] sm:$0xff] %vm19, 0.0
    %191 = vst.msk [vmem:[#allocation2 + $0x558] sm:$0xff] %vm19, 0.0
    %192 = vst.msk [vmem:[#allocation2 + $0x560] sm:$0xff] %vm19, 0.0
    %193 = vst.msk [vmem:[#allocation2 + $0x568] sm:$0xff] %vm19, 0.0
    %194 = vst.msk [vmem:[#allocation2 + $0x570] sm:$0xff] %vm19, 0.0
    %195 = vst.msk [vmem:[#allocation2 + $0x578] sm:$0xff] %vm19, 0.0
    %196 = vst.msk [vmem:[#allocation2 + $0x580] sm:$0xff] %vm19, 0.0
    %197 = vst.msk [vmem:[#allocation2 + $0x588] sm:$0xff] %vm19, 0.0
    %198 = vst.msk [vmem:[#allocation2 + $0x590] sm:$0xff] %vm19, 0.0
    %199 = vst.msk [vmem:[#allocation2 + $0x598] sm:$0xff] %vm19, 0.0
    %200 = vst.msk [vmem:[#allocation2 + $0x5a0] sm:$0xff] %vm19, 0.0
    %201 = vst.msk [vmem:[#allocation2 + $0x5a8] sm:$0xff] %vm19, 0.0
    %202 = vst.msk [vmem:[#allocation2 + $0x5b0] sm:$0xff] %vm19, 0.0
    %203 = vst.msk [vmem:[#allocation2 + $0x5b8] sm:$0xff] %vm19, 0.0
    %204 = vst.msk [vmem:[#allocation2 + $0x5c0] sm:$0xff] %vm19, 0.0
    %205 = vst.msk [vmem:[#allocation2 + $0x5c8] sm:$0xff] %vm19, 0.0
    %206 = vst.msk [vmem:[#allocation2 + $0x5d0] sm:$0xff] %vm19, 0.0
    %207 = vst.msk [vmem:[#allocation2 + $0x5d8] sm:$0xff] %vm19, 0.0
    %208 = vst.msk [vmem:[#allocation2 + $0x5e0] sm:$0xff] %vm19, 0.0
    %209 = vst.msk [vmem:[#allocation2 + $0x5e8] sm:$0xff] %vm19, 0.0
    %210 = vst.msk [vmem:[#allocation2 + $0x5f0] sm:$0xff] %vm19, 0.0
    %211 = vst.msk [vmem:[#allocation2 + $0x5f8] sm:$0xff] %vm19, 0.0
    %212 = vst.msk [vmem:[#allocation2 + $0x600] sm:$0xff] %vm19, 0.0
    %213 = vst.msk [vmem:[#allocation2 + $0x608] sm:$0xff] %vm19, 0.0
    %214 = vst.msk [vmem:[#allocation2 + $0x610] sm:$0xff] %vm19, 0.0
    %215 = vst.msk [vmem:[#allocation2 + $0x618] sm:$0xff] %vm19, 0.0
    %216 = vst.msk [vmem:[#allocation2 + $0x620] sm:$0xff] %vm19, 0.0
    %217 = vst.msk [vmem:[#allocation2 + $0x628] sm:$0xff] %vm19, 0.0
    %218 = vst.msk [vmem:[#allocation2 + $0x630] sm:$0xff] %vm19, 0.0
    %219 = vst.msk [vmem:[#allocation2 + $0x638] sm:$0xff] %vm19, 0.0
    %220 = vst.msk [vmem:[#allocation2 + $0x640] sm:$0xff] %vm19, 0.0
    %221 = vst.msk [vmem:[#allocation2 + $0x648] sm:$0xff] %vm19, 0.0
    %222 = vst.msk [vmem:[#allocation2 + $0x650] sm:$0xff] %vm19, 0.0
    %223 = vst.msk [vmem:[#allocation2 + $0x658] sm:$0xff] %vm19, 0.0
    %224 = vst.msk [vmem:[#allocation2 + $0x660] sm:$0xff] %vm19, 0.0
    %225 = vst.msk [vmem:[#allocation2 + $0x668] sm:$0xff] %vm19, 0.0
    %226 = vst.msk [vmem:[#allocation2 + $0x670] sm:$0xff] %vm19, 0.0
    %227 = vst.msk [vmem:[#allocation2 + $0x678] sm:$0xff] %vm19, 0.0
    %228 = vst.msk [vmem:[#allocation2 + $0x680] sm:$0xff] %vm19, 0.0
    %229 = vst.msk [vmem:[#allocation2 + $0x688] sm:$0xff] %vm19, 0.0
    %230 = vst.msk [vmem:[#allocation2 + $0x690] sm:$0xff] %vm19, 0.0
    %231 = vst.msk [vmem:[#allocation2 + $0x698] sm:$0xff] %vm19, 0.0
    %232 = vst.msk [vmem:[#allocation2 + $0x6a0] sm:$0xff] %vm19, 0.0
    %233 = vst.msk [vmem:[#allocation2 + $0x6a8] sm:$0xff] %vm19, 0.0
    %234 = vst.msk [vmem:[#allocation2 + $0x6b0] sm:$0xff] %vm19, 0.0
    %235 = vst.msk [vmem:[#allocation2 + $0x6b8] sm:$0xff] %vm19, 0.0
    %236 = vst.msk [vmem:[#allocation2 + $0x6c0] sm:$0xff] %vm19, 0.0
    %237 = vst.msk [vmem:[#allocation2 + $0x6c8] sm:$0xff] %vm19, 0.0
    %238 = vst.msk [vmem:[#allocation2 + $0x6d0] sm:$0xff] %vm19, 0.0
    %239 = vst.msk [vmem:[#allocation2 + $0x6d8] sm:$0xff] %vm19, 0.0
    %240 = vst.msk [vmem:[#allocation2 + $0x6e0] sm:$0xff] %vm19, 0.0
    %241 = vst.msk [vmem:[#allocation2 + $0x6e8] sm:$0xff] %vm19, 0.0
    %242 = vst.msk [vmem:[#allocation2 + $0x6f0] sm:$0xff] %vm19, 0.0
    %243 = vst.msk [vmem:[#allocation2 + $0x6f8] sm:$0xff] %vm19, 0.0
    %244 = vst.msk [vmem:[#allocation2 + $0x700] sm:$0xff] %vm19, 0.0
    %245 = vst.msk [vmem:[#allocation2 + $0x708] sm:$0xff] %vm19, 0.0
    %246 = vst.msk [vmem:[#allocation2 + $0x710] sm:$0xff] %vm19, 0.0
    %247 = vst.msk [vmem:[#allocation2 + $0x718] sm:$0xff] %vm19, 0.0
    %248 = vst.msk [vmem:[#allocation2 + $0x720] sm:$0xff] %vm19, 0.0
    %249 = vst.msk [vmem:[#allocation2 + $0x728] sm:$0xff] %vm19, 0.0
    %250 = vst.msk [vmem:[#allocation2 + $0x730] sm:$0xff] %vm19, 0.0
    %251 = vst.msk [vmem:[#allocation2 + $0x738] sm:$0xff] %vm19, 0.0
    %252 = vst.msk [vmem:[#allocation2 + $0x740] sm:$0xff] %vm19, 0.0
    %253 = vst.msk [vmem:[#allocation2 + $0x748] sm:$0xff] %vm19, 0.0
    %254 = vst.msk [vmem:[#allocation2 + $0x750] sm:$0xff] %vm19, 0.0
    %255 = vst.msk [vmem:[#allocation2 + $0x758] sm:$0xff] %vm19, 0.0
    %256 = vst.msk [vmem:[#allocation2 + $0x760] sm:$0xff] %vm19, 0.0
    %257 = vst.msk [vmem:[#allocation2 + $0x768] sm:$0xff] %vm19, 0.0
    %258 = vst.msk [vmem:[#allocation2 + $0x770] sm:$0xff] %vm19, 0.0
    %259 = vst.msk [vmem:[#allocation2 + $0x778] sm:$0xff] %vm19, 0.0
    %260 = vst.msk [vmem:[#allocation2 + $0x780] sm:$0xff] %vm19, 0.0
    %261 = vst.msk [vmem:[#allocation2 + $0x788] sm:$0xff] %vm19, 0.0
    %262 = vst.msk [vmem:[#allocation2 + $0x790] sm:$0xff] %vm19, 0.0
    %263 = vst.msk [vmem:[#allocation2 + $0x798] sm:$0xff] %vm19, 0.0
    %264 = vst.msk [vmem:[#allocation2 + $0x7a0] sm:$0xff] %vm19, 0.0
    %265 = vst.msk [vmem:[#allocation2 + $0x7a8] sm:$0xff] %vm19, 0.0
    %266 = vst.msk [vmem:[#allocation2 + $0x7b0] sm:$0xff] %vm19, 0.0
    %267 = vst.msk [vmem:[#allocation2 + $0x7b8] sm:$0xff] %vm19, 0.0
    %268 = vst.msk [vmem:[#allocation2 + $0x7c0] sm:$0xff] %vm19, 0.0
    %269 = vst.msk [vmem:[#allocation2 + $0x7c8] sm:$0xff] %vm19, 0.0
    %270 = vst.msk [vmem:[#allocation2 + $0x7d0] sm:$0xff] %vm19, 0.0
    %271 = vst.msk [vmem:[#allocation2 + $0x7d8] sm:$0xff] %vm19, 0.0
    %272 = vst.msk [vmem:[#allocation2 + $0x7e0] sm:$0xff] %vm19, 0.0
    %273 = vst.msk [vmem:[#allocation2 + $0x7e8] sm:$0xff] %vm19, 0.0
    %274 = vst.msk [vmem:[#allocation2 + $0x7f0] sm:$0xff] %vm19, 0.0
    %275 = vst.msk [vmem:[#allocation2 + $0x7f8] sm:$0xff] %vm19, 0.0
    %276 = vst.msk [vmem:[#allocation2 + $0x800] sm:$0xff] %vm19, 0.0
    %277 = vst.msk [vmem:[#allocation2 + $0x808] sm:$0xff] %vm19, 0.0
    %278 = vst.msk [vmem:[#allocation2 + $0x810] sm:$0xff] %vm19, 0.0
    %279 = vst.msk [vmem:[#allocation2 + $0x818] sm:$0xff] %vm19, 0.0
    %280 = vst.msk [vmem:[#allocation2 + $0x820] sm:$0xff] %vm19, 0.0
    %281 = vst.msk [vmem:[#allocation2 + $0x828] sm:$0xff] %vm19, 0.0
    %282 = vst.msk [vmem:[#allocation2 + $0x830] sm:$0xff] %vm19, 0.0
    %283 = vst.msk [vmem:[#allocation2 + $0x838] sm:$0xff] %vm19, 0.0
    %284 = vst.msk [vmem:[#allocation2 + $0x840] sm:$0xff] %vm19, 0.0
    %285 = vst.msk [vmem:[#allocation2 + $0x848] sm:$0xff] %vm19, 0.0
    %286 = vst.msk [vmem:[#allocation2 + $0x850] sm:$0xff] %vm19, 0.0
    %287 = vst.msk [vmem:[#allocation2 + $0x858] sm:$0xff] %vm19, 0.0
    %288 = vst.msk [vmem:[#allocation2 + $0x860] sm:$0xff] %vm19, 0.0
    %289 = vst.msk [vmem:[#allocation2 + $0x868] sm:$0xff] %vm19, 0.0
    %290 = vst.msk [vmem:[#allocation2 + $0x870] sm:$0xff] %vm19, 0.0
    %291 = vst.msk [vmem:[#allocation2 + $0x878] sm:$0xff] %vm19, 0.0
    %292 = vst.msk [vmem:[#allocation2 + $0x880] sm:$0xff] %vm19, 0.0
    %293 = vst.msk [vmem:[#allocation2 + $0x888] sm:$0xff] %vm19, 0.0
    %294 = vst.msk [vmem:[#allocation2 + $0x890] sm:$0xff] %vm19, 0.0
    %295 = vst.msk [vmem:[#allocation2 + $0x898] sm:$0xff] %vm19, 0.0
    %296 = vst.msk [vmem:[#allocation2 + $0x8a0] sm:$0xff] %vm19, 0.0
    %297 = vst.msk [vmem:[#allocation2 + $0x8a8] sm:$0xff] %vm19, 0.0
    %298 = vst.msk [vmem:[#allocation2 + $0x8b0] sm:$0xff] %vm19, 0.0
    %299 = vst.msk [vmem:[#allocation2 + $0x8b8] sm:$0xff] %vm19, 0.0
    %300 = vst.msk [vmem:[#allocation2 + $0x8c0] sm:$0xff] %vm19, 0.0
    %301 = vst.msk [vmem:[#allocation2 + $0x8c8] sm:$0xff] %vm19, 0.0
    %302 = vst.msk [vmem:[#allocation2 + $0x8d0] sm:$0xff] %vm19, 0.0
    %303 = vst.msk [vmem:[#allocation2 + $0x8d8] sm:$0xff] %vm19, 0.0
    %304 = vst.msk [vmem:[#allocation2 + $0x8e0] sm:$0xff] %vm19, 0.0
    %305 = vst.msk [vmem:[#allocation2 + $0x8e8] sm:$0xff] %vm19, 0.0
    %306 = vst.msk [vmem:[#allocation2 + $0x8f0] sm:$0xff] %vm19, 0.0
    %307 = vst.msk [vmem:[#allocation2 + $0x8f8] sm:$0xff] %vm19, 0.0
    %308 = vst.msk [vmem:[#allocation2 + $0x900] sm:$0xff] %vm19, 0.0
    %309 = vst.msk [vmem:[#allocation2 + $0x908] sm:$0xff] %vm19, 0.0
    %310 = vst.msk [vmem:[#allocation2 + $0x910] sm:$0xff] %vm19, 0.0
    %311 = vst.msk [vmem:[#allocation2 + $0x918] sm:$0xff] %vm19, 0.0
    %312 = vst.msk [vmem:[#allocation2 + $0x920] sm:$0xff] %vm19, 0.0
    %313 = vst.msk [vmem:[#allocation2 + $0x928] sm:$0xff] %vm19, 0.0
    %314 = vst.msk [vmem:[#allocation2 + $0x930] sm:$0xff] %vm19, 0.0
    %315 = vst.msk [vmem:[#allocation2 + $0x938] sm:$0xff] %vm19, 0.0
    %316 = vst.msk [vmem:[#allocation2 + $0x940] sm:$0xff] %vm19, 0.0
    %317 = vst.msk [vmem:[#allocation2 + $0x948] sm:$0xff] %vm19, 0.0
    %318 = vst.msk [vmem:[#allocation2 + $0x950] sm:$0xff] %vm19, 0.0
    %319 = vst.msk [vmem:[#allocation2 + $0x958] sm:$0xff] %vm19, 0.0
    %320 = vst.msk [vmem:[#allocation2 + $0x960] sm:$0xff] %vm19, 0.0
    %321 = vst.msk [vmem:[#allocation2 + $0x968] sm:$0xff] %vm19, 0.0
    %322 = vst.msk [vmem:[#allocation2 + $0x970] sm:$0xff] %vm19, 0.0
    %323 = vst.msk [vmem:[#allocation2 + $0x978] sm:$0xff] %vm19, 0.0
    %324 = vst.msk [vmem:[#allocation2 + $0x980] sm:$0xff] %vm19, 0.0
    %325 = vst.msk [vmem:[#allocation2 + $0x988] sm:$0xff] %vm19, 0.0
    %326 = vst.msk [vmem:[#allocation2 + $0x990] sm:$0xff] %vm19, 0.0
    %327 = vst.msk [vmem:[#allocation2 + $0x998] sm:$0xff] %vm19, 0.0
    %328 = vst.msk [vmem:[#allocation2 + $0x9a0] sm:$0xff] %vm19, 0.0
    %329 = vst.msk [vmem:[#allocation2 + $0x9a8] sm:$0xff] %vm19, 0.0
    %330 = vst.msk [vmem:[#allocation2 + $0x9b0] sm:$0xff] %vm19, 0.0
    %331 = vst.msk [vmem:[#allocation2 + $0x9b8] sm:$0xff] %vm19, 0.0
    %332 = vst.msk [vmem:[#allocation2 + $0x9c0] sm:$0xff] %vm19, 0.0
    %333 = vst.msk [vmem:[#allocation2 + $0x9c8] sm:$0xff] %vm19, 0.0
    %334 = vst.msk [vmem:[#allocation2 + $0x9d0] sm:$0xff] %vm19, 0.0
    %335 = vst.msk [vmem:[#allocation2 + $0x9d8] sm:$0xff] %vm19, 0.0
    %336 = vst.msk [vmem:[#allocation2 + $0x9e0] sm:$0xff] %vm19, 0.0
    %337 = vst.msk [vmem:[#allocation2 + $0x9e8] sm:$0xff] %vm19, 0.0
    %338 = vst.msk [vmem:[#allocation2 + $0x9f0] sm:$0xff] %vm19, 0.0
    %339 = vst.msk [vmem:[#allocation2 + $0x9f8] sm:$0xff] %vm19, 0.0
  $region17: #{jvp__.10} parent=0 // pred_fallthru
    _
  %v340 = vld [vmem:[#allocation2] sm:$0xff]
  %v341 = vld [vmem:[#allocation2 + $0x8] sm:$0xff]
  %v342 = vld [vmem:[#allocation2 + $0x10] sm:$0xff]
  %v343 = vld [vmem:[#allocation2 + $0x18] sm:$0xff]
  %v344 = vld [vmem:[#allocation2 + $0x20] sm:$0xff]
  %v345 = vld [vmem:[#allocation2 + $0x28] sm:$0xff]
  %v346 = vld [vmem:[#allocation2 + $0x30] sm:$0xff]
  %v347 = vld [vmem:[#allocation2 + $0x38] sm:$0xff]
  %v348 = vld [vmem:[#allocation2 + $0x40] sm:$0xff]
  %v349 = vld [vmem:[#allocation2 + $0x48] sm:$0xff]
  %v350 = vld [vmem:[#allocation2 + $0x50] sm:$0xff]
  %v351 = vld [vmem:[#allocation2 + $0x58] sm:$0xff]
  %v352 = vld [vmem:[#allocation2 + $0x60] sm:$0xff]
  %v353 = vld [vmem:[#allocation2 + $0x68] sm:$0xff]
  %v354 = vld [vmem:[#allocation2 + $0x70] sm:$0xff]
  %v355 = vld [vmem:[#allocation2 + $0x78] sm:$0xff]
  %v356 = vld [vmem:[#allocation2 + $0x80] sm:$0xff]
  %v357 = vld [vmem:[#allocation2 + $0x88] sm:$0xff]
  %v358 = vld [vmem:[#allocation2 + $0x90] sm:$0xff]
  %v359 = vld [vmem:[#allocation2 + $0x98] sm:$0xff]
  %v360 = vld [vmem:[#allocation2 + $0xa0] sm:$0xff]
  %v361 = vld [vmem:[#allocation2 + $0xa8] sm:$0xff]
  %v362 = vld [vmem:[#allocation2 + $0xb0] sm:$0xff]
  %v363 = vld [vmem:[#allocation2 + $0xb8] sm:$0xff]
  %v364 = vld [vmem:[#allocation2 + $0xc0] sm:$0xff]
  %v365 = vld [vmem:[#allocation2 + $0xc8] sm:$0xff]
  %v366 = vld [vmem:[#allocation2 + $0xd0] sm:$0xff]
  %v367 = vld [vmem:[#allocation2 + $0xd8] sm:$0xff]
  %v368 = vld [vmem:[#allocation2 + $0xe0] sm:$0xff]
  %v369 = vld [vmem:[#allocation2 + $0xe8] sm:$0xff]
  %v370 = vld [vmem:[#allocation2 + $0xf0] sm:$0xff]
  %v371 = vld [vmem:[#allocation2 + $0xf8] sm:$0xff]
  %v372 = vld [vmem:[#allocation2 + $0x100] sm:$0xff]
  %v373 = vld [vmem:[#allocation2 + $0x108] sm:$0xff]
  %v374 = vld [vmem:[#allocation2 + $0x110] sm:$0xff]
  %v375 = vld [vmem:[#allocation2 + $0x118] sm:$0xff]
  %v376 = vld [vmem:[#allocation2 + $0x120] sm:$0xff]
  %v377 = vld [vmem:[#allocation2 + $0x128] sm:$0xff]
  %v378 = vld [vmem:[#allocation2 + $0x130] sm:$0xff]
  %v379 = vld [vmem:[#allocation2 + $0x138] sm:$0xff]
  %v380 = vld [vmem:[#allocation2 + $0x140] sm:$0xff]
  %v381 = vld [vmem:[#allocation2 + $0x148] sm:$0xff]
  %v382 = vld [vmem:[#allocation2 + $0x150] sm:$0xff]
  %v383 = vld [vmem:[#allocation2 + $0x158] sm:$0xff]
  %v384 = vld [vmem:[#allocation2 + $0x160] sm:$0xff]
  %v385 = vld [vmem:[#allocation2 + $0x168] sm:$0xff]
  %v386 = vld [vmem:[#allocation2 + $0x170] sm:$0xff]
  %v387 = vld [vmem:[#allocation2 + $0x178] sm:$0xff]
  %v388 = vld [vmem:[#allocation2 + $0x180] sm:$0xff]
  %v389 = vld [vmem:[#allocation2 + $0x188] sm:$0xff]
  %v390 = vld [vmem:[#allocation2 + $0x190] sm:$0xff]
  %v391 = vld [vmem:[#allocation2 + $0x198] sm:$0xff]
  %v392 = vld [vmem:[#allocation2 + $0x1a0] sm:$0xff]
  %v393 = vld [vmem:[#allocation2 + $0x1a8] sm:$0xff]
  %v394 = vld [vmem:[#allocation2 + $0x1b0] sm:$0xff]
  %v395 = vld [vmem:[#allocation2 + $0x1b8] sm:$0xff]
  %v396 = vld [vmem:[#allocation2 + $0x1c0] sm:$0xff]
  %v397 = vld [vmem:[#allocation2 + $0x1c8] sm:$0xff]
  %v398 = vld [vmem:[#allocation2 + $0x1d0] sm:$0xff]
  %v399 = vld [vmem:[#allocation2 + $0x1d8] sm:$0xff]
  %v400 = vld [vmem:[#allocation2 + $0x1e0] sm:$0xff]
  %v401 = vld [vmem:[#allocation2 + $0x1e8] sm:$0xff]
  %v402 = vld [vmem:[#allocation2 + $0x1f0] sm:$0xff]
  %v403 = vld [vmem:[#allocation2 + $0x1f8] sm:$0xff]
  %v404 = vld [vmem:[#allocation2 + $0x200] sm:$0xff]
  %v405 = vld [vmem:[#allocation2 + $0x208] sm:$0xff]
  %v406 = vld [vmem:[#allocation2 + $0x210] sm:$0xff]
  %v407 = vld [vmem:[#allocation2 + $0x218] sm:$0xff]
  %v408 = vld [vmem:[#allocation2 + $0x220] sm:$0xff]
  %v409 = vld [vmem:[#allocation2 + $0x228] sm:$0xff]
  %v410 = vld [vmem:[#allocation2 + $0x230] sm:$0xff]
  %v411 = vld [vmem:[#allocation2 + $0x238] sm:$0xff]
  %v412 = vld [vmem:[#allocation2 + $0x240] sm:$0xff]
  %v413 = vld [vmem:[#allocation2 + $0x248] sm:$0xff]
  %v414 = vld [vmem:[#allocation2 + $0x250] sm:$0xff]
  %v415 = vld [vmem:[#allocation2 + $0x258] sm:$0xff]
  %v416 = vld [vmem:[#allocation2 + $0x260] sm:$0xff]
  %v417 = vld [vmem:[#allocation2 + $0x268] sm:$0xff]
  %v418 = vld [vmem:[#allocation2 + $0x270] sm:$0xff]
  %v419 = vld [vmem:[#allocation2 + $0x278] sm:$0xff]
  %v420 = vld [vmem:[#allocation2 + $0x280] sm:$0xff]
  %v421 = vld [vmem:[#allocation2 + $0x288] sm:$0xff]
  %v422 = vld [vmem:[#allocation2 + $0x290] sm:$0xff]
  %v423 = vld [vmem:[#allocation2 + $0x298] sm:$0xff]
  %v424 = vld [vmem:[#allocation2 + $0x2a0] sm:$0xff]
  %v425 = vld [vmem:[#allocation2 + $0x2a8] sm:$0xff]
  %v426 = vld [vmem:[#allocation2 + $0x2b0] sm:$0xff]
  %v427 = vld [vmem:[#allocation2 + $0x2b8] sm:$0xff]
  %v428 = vld [vmem:[#allocation2 + $0x2c0] sm:$0xff]
  %v429 = vld [vmem:[#allocation2 + $0x2c8] sm:$0xff]
  %v430 = vld [vmem:[#allocation2 + $0x2d0] sm:$0xff]
  %v431 = vld [vmem:[#allocation2 + $0x2d8] sm:$0xff]
  %v432 = vld [vmem:[#allocation2 + $0x2e0] sm:$0xff]
  %v433 = vld [vmem:[#allocation2 + $0x2e8] sm:$0xff]
  %v434 = vld [vmem:[#allocation2 + $0x2f0] sm:$0xff]
  %v435 = vld [vmem:[#allocation2 + $0x2f8] sm:$0xff]
  %v436 = vld [vmem:[#allocation2 + $0x300] sm:$0xff]
  %v437 = vld [vmem:[#allocation2 + $0x308] sm:$0xff]
  %v438 = vld [vmem:[#allocation2 + $0x310] sm:$0xff]
  %v439 = vld [vmem:[#allocation2 + $0x318] sm:$0xff]
  %v440 = vld [vmem:[#allocation2 + $0x320] sm:$0xff]
  %v441 = vld [vmem:[#allocation2 + $0x328] sm:$0xff]
  %v442 = vld [vmem:[#allocation2 + $0x330] sm:$0xff]
  %v443 = vld [vmem:[#allocation2 + $0x338] sm:$0xff]
  %v444 = vld [vmem:[#allocation2 + $0x340] sm:$0xff]
  %v445 = vld [vmem:[#allocation2 + $0x348] sm:$0xff]
  %v446 = vld [vmem:[#allocation2 + $0x350] sm:$0xff]
  %v447 = vld [vmem:[#allocation2 + $0x358] sm:$0xff]
  %v448 = vld [vmem:[#allocation2 + $0x360] sm:$0xff]
  %v449 = vld [vmem:[#allocation2 + $0x368] sm:$0xff]
  %v450 = vld [vmem:[#allocation2 + $0x370] sm:$0xff]
  %v451 = vld [vmem:[#allocation2 + $0x378] sm:$0xff]
  %v452 = vld [vmem:[#allocation2 + $0x380] sm:$0xff]
  %v453 = vld [vmem:[#allocation2 + $0x388] sm:$0xff]
  %v454 = vld [vmem:[#allocation2 + $0x390] sm:$0xff]
  %v455 = vld [vmem:[#allocation2 + $0x398] sm:$0xff]
  %v456 = vld [vmem:[#allocation2 + $0x3a0] sm:$0xff]
  %v457 = vld [vmem:[#allocation2 + $0x3a8] sm:$0xff]
  %v458 = vld [vmem:[#allocation2 + $0x3b0] sm:$0xff]
  %v459 = vld [vmem:[#allocation2 + $0x3b8] sm:$0xff]
  %v460 = vld [vmem:[#allocation2 + $0x3c0] sm:$0xff]
  %v461 = vld [vmem:[#allocation2 + $0x3c8] sm:$0xff]
  %v462 = vld [vmem:[#allocation2 + $0x3d0] sm:$0xff]
  %v463 = vld [vmem:[#allocation2 + $0x3d8] sm:$0xff]
  %v464 = vld [vmem:[#allocation2 + $0x3e0] sm:$0xff]
  %v465 = vld [vmem:[#allocation2 + $0x3e8] sm:$0xff]
  %v466 = vld [vmem:[#allocation2 + $0x3f0] sm:$0xff]
  %v467 = vld [vmem:[#allocation2 + $0x3f8] sm:$0xff]
  %v468 = vld [vmem:[#allocation2 + $0x400] sm:$0xff]
  %v469 = vld [vmem:[#allocation2 + $0x408] sm:$0xff]
  %v470 = vld [vmem:[#allocation2 + $0x410] sm:$0xff]
  %v471 = vld [vmem:[#allocation2 + $0x418] sm:$0xff]
  %v472 = vld [vmem:[#allocation2 + $0x420] sm:$0xff]
  %v473 = vld [vmem:[#allocation2 + $0x428] sm:$0xff]
  %v474 = vld [vmem:[#allocation2 + $0x430] sm:$0xff]
  %v475 = vld [vmem:[#allocation2 + $0x438] sm:$0xff]
  %v476 = vld [vmem:[#allocation2 + $0x440] sm:$0xff]
  %v477 = vld [vmem:[#allocation2 + $0x448] sm:$0xff]
  %v478 = vld [vmem:[#allocation2 + $0x450] sm:$0xff]
  %v479 = vld [vmem:[#allocation2 + $0x458] sm:$0xff]
  %v480 = vld [vmem:[#allocation2 + $0x460] sm:$0xff]
  %v481 = vld [vmem:[#allocation2 + $0x468] sm:$0xff]
  %v482 = vld [vmem:[#allocation2 + $0x470] sm:$0xff]
  %v483 = vld [vmem:[#allocation2 + $0x478] sm:$0xff]
  %v484 = vld [vmem:[#allocation2 + $0x480] sm:$0xff]
  %v485 = vld [vmem:[#allocation2 + $0x488] sm:$0xff]
  %v486 = vld [vmem:[#allocation2 + $0x490] sm:$0xff]
  %v487 = vld [vmem:[#allocation2 + $0x498] sm:$0xff]
  %v488 = vld [vmem:[#allocation2 + $0x4a0] sm:$0xff]
  %v489 = vld [vmem:[#allocation2 + $0x4a8] sm:$0xff]
  %v490 = vld [vmem:[#allocation2 + $0x4b0] sm:$0xff]
  %v491 = vld [vmem:[#allocation2 + $0x4b8] sm:$0xff]
  %v492 = vld [vmem:[#allocation2 + $0x4c0] sm:$0xff]
  %v493 = vld [vmem:[#allocation2 + $0x4c8] sm:$0xff]
  %v494 = vld [vmem:[#allocation2 + $0x4d0] sm:$0xff]
  %v495 = vld [vmem:[#allocation2 + $0x4d8] sm:$0xff]
  %v496 = vld [vmem:[#allocation2 + $0x4e0] sm:$0xff]
  %v497 = vld [vmem:[#allocation2 + $0x4e8] sm:$0xff]
  %v498 = vld [vmem:[#allocation2 + $0x4f0] sm:$0xff]
  %v499 = vld [vmem:[#allocation2 + $0x4f8] sm:$0xff]
  %v500 = vld [vmem:[#allocation2 + $0x500] sm:$0xff]
  %v501 = vld [vmem:[#allocation2 + $0x508] sm:$0xff]
  %v502 = vld [vmem:[#allocation2 + $0x510] sm:$0xff]
  %v503 = vld [vmem:[#allocation2 + $0x518] sm:$0xff]
  %v504 = vld [vmem:[#allocation2 + $0x520] sm:$0xff]
  %v505 = vld [vmem:[#allocation2 + $0x528] sm:$0xff]
  %v506 = vld [vmem:[#allocation2 + $0x530] sm:$0xff]
  %v507 = vld [vmem:[#allocation2 + $0x538] sm:$0xff]
  %v508 = vld [vmem:[#allocation2 + $0x540] sm:$0xff]
  %v509 = vld [vmem:[#allocation2 + $0x548] sm:$0xff]
  %v510 = vld [vmem:[#allocation2 + $0x550] sm:$0xff]
  %v511 = vld [vmem:[#allocation2 + $0x558] sm:$0xff]
  %v512 = vld [vmem:[#allocation2 + $0x560] sm:$0xff]
  %v513 = vld [vmem:[#allocation2 + $0x568] sm:$0xff]
  %v514 = vld [vmem:[#allocation2 + $0x570] sm:$0xff]
  %v515 = vld [vmem:[#allocation2 + $0x578] sm:$0xff]
  %v516 = vld [vmem:[#allocation2 + $0x580] sm:$0xff]
  %v517 = vld [vmem:[#allocation2 + $0x588] sm:$0xff]
  %v518 = vld [vmem:[#allocation2 + $0x590] sm:$0xff]
  %v519 = vld [vmem:[#allocation2 + $0x598] sm:$0xff]
  %v520 = vld [vmem:[#allocation2 + $0x5a0] sm:$0xff]
  %v521 = vld [vmem:[#allocation2 + $0x5a8] sm:$0xff]
  %v522 = vld [vmem:[#allocation2 + $0x5b0] sm:$0xff]
  %v523 = vld [vmem:[#allocation2 + $0x5b8] sm:$0xff]
  %v524 = vld [vmem:[#allocation2 + $0x5c0] sm:$0xff]
  %v525 = vld [vmem:[#allocation2 + $0x5c8] sm:$0xff]
  %v526 = vld [vmem:[#allocation2 + $0x5d0] sm:$0xff]
  %v527 = vld [vmem:[#allocation2 + $0x5d8] sm:$0xff]
  %v528 = vld [vmem:[#allocation2 + $0x5e0] sm:$0xff]
  %v529 = vld [vmem:[#allocation2 + $0x5e8] sm:$0xff]
  %v530 = vld [vmem:[#allocation2 + $0x5f0] sm:$0xff]
  %v531 = vld [vmem:[#allocation2 + $0x5f8] sm:$0xff]
  %v532 = vld [vmem:[#allocation2 + $0x600] sm:$0xff]
  %v533 = vld [vmem:[#allocation2 + $0x608] sm:$0xff]
  %v534 = vld [vmem:[#allocation2 + $0x610] sm:$0xff]
  %v535 = vld [vmem:[#allocation2 + $0x618] sm:$0xff]
  %v536 = vld [vmem:[#allocation2 + $0x620] sm:$0xff]
  %v537 = vld [vmem:[#allocation2 + $0x628] sm:$0xff]
  %v538 = vld [vmem:[#allocation2 + $0x630] sm:$0xff]
  %v539 = vld [vmem:[#allocation2 + $0x638] sm:$0xff]
  %v540 = vld [vmem:[#allocation2 + $0x640] sm:$0xff]
  %v541 = vld [vmem:[#allocation2 + $0x648] sm:$0xff]
  %v542 = vld [vmem:[#allocation2 + $0x650] sm:$0xff]
  %v543 = vld [vmem:[#allocation2 + $0x658] sm:$0xff]
  %v544 = vld [vmem:[#allocation2 + $0x660] sm:$0xff]
  %v545 = vld [vmem:[#allocation2 + $0x668] sm:$0xff]
  %v546 = vld [vmem:[#allocation2 + $0x670] sm:$0xff]
  %v547 = vld [vmem:[#allocation2 + $0x678] sm:$0xff]
  %v548 = vld [vmem:[#allocation2 + $0x680] sm:$0xff]
  %v549 = vld [vmem:[#allocation2 + $0x688] sm:$0xff]
  %v550 = vld [vmem:[#allocation2 + $0x690] sm:$0xff]
  %v551 = vld [vmem:[#allocation2 + $0x698] sm:$0xff]
  %v552 = vld [vmem:[#allocation2 + $0x6a0] sm:$0xff]
  %v553 = vld [vmem:[#allocation2 + $0x6a8] sm:$0xff]
  %v554 = vld [vmem:[#allocation2 + $0x6b0] sm:$0xff]
  %v555 = vld [vmem:[#allocation2 + $0x6b8] sm:$0xff]
  %v556 = vld [vmem:[#allocation2 + $0x6c0] sm:$0xff]
  %v557 = vld [vmem:[#allocation2 + $0x6c8] sm:$0xff]
  %v558 = vld [vmem:[#allocation2 + $0x6d0] sm:$0xff]
  %v559 = vld [vmem:[#allocation2 + $0x6d8] sm:$0xff]
  %v560 = vld [vmem:[#allocation2 + $0x6e0] sm:$0xff]
  %v561 = vld [vmem:[#allocation2 + $0x6e8] sm:$0xff]
  %v562 = vld [vmem:[#allocation2 + $0x6f0] sm:$0xff]
  %v563 = vld [vmem:[#allocation2 + $0x6f8] sm:$0xff]
  %v564 = vld [vmem:[#allocation2 + $0x700] sm:$0xff]
  %v565 = vld [vmem:[#allocation2 + $0x708] sm:$0xff]
  %v566 = vld [vmem:[#allocation2 + $0x710] sm:$0xff]
  %v567 = vld [vmem:[#allocation2 + $0x718] sm:$0xff]
  %v568 = vld [vmem:[#allocation2 + $0x720] sm:$0xff]
  %v569 = vld [vmem:[#allocation2 + $0x728] sm:$0xff]
  %v570 = vld [vmem:[#allocation2 + $0x730] sm:$0xff]
  %v571 = vld [vmem:[#allocation2 + $0x738] sm:$0xff]
  %v572 = vld [vmem:[#allocation2 + $0x740] sm:$0xff]
  %v573 = vld [vmem:[#allocation2 + $0x748] sm:$0xff]
  %v574 = vld [vmem:[#allocation2 + $0x750] sm:$0xff]
  %v575 = vld [vmem:[#allocation2 + $0x758] sm:$0xff]
  %v576 = vld [vmem:[#allocation2 + $0x760] sm:$0xff]
  %v577 = vld [vmem:[#allocation2 + $0x768] sm:$0xff]
  %v578 = vld [vmem:[#allocation2 + $0x770] sm:$0xff]
  %v579 = vld [vmem:[#allocation2 + $0x778] sm:$0xff]
  %v580 = vld [vmem:[#allocation2 + $0x780] sm:$0xff]
  %v581 = vld [vmem:[#allocation2 + $0x788] sm:$0xff]
  %v582 = vld [vmem:[#allocation2 + $0x790] sm:$0xff]
  %v583 = vld [vmem:[#allocation2 + $0x798] sm:$0xff]
  %v584 = vld [vmem:[#allocation2 + $0x7a0] sm:$0xff]
  %v585 = vld [vmem:[#allocation2 + $0x7a8] sm:$0xff]
  %v586 = vld [vmem:[#allocation2 + $0x7b0] sm:$0xff]
  %v587 = vld [vmem:[#allocation2 + $0x7b8] sm:$0xff]
  %v588 = vld [vmem:[#allocation2 + $0x7c0] sm:$0xff]
  %v589 = vld [vmem:[#allocation2 + $0x7c8] sm:$0xff]
  %v590 = vld [vmem:[#allocation2 + $0x7d0] sm:$0xff]
  %v591 = vld [vmem:[#allocation2 + $0x7d8] sm:$0xff]
  %v592 = vld [vmem:[#allocation2 + $0x7e0] sm:$0xff]
  %v593 = vld [vmem:[#allocation2 + $0x7e8] sm:$0xff]
  %v594 = vld [vmem:[#allocation2 + $0x7f0] sm:$0xff]
  %v595 = vld [vmem:[#allocation2 + $0x7f8] sm:$0xff]
  %v596 = vld [vmem:[#allocation2 + $0x800] sm:$0xff]
  %v597 = vld [vmem:[#allocation2 + $0x808] sm:$0xff]
  %v598 = vld [vmem:[#allocation2 + $0x810] sm:$0xff]
  %v599 = vld [vmem:[#allocation2 + $0x818] sm:$0xff]
  %v600 = vld [vmem:[#allocation2 + $0x820] sm:$0xff]
  %v601 = vld [vmem:[#allocation2 + $0x828] sm:$0xff]
  %v602 = vld [vmem:[#allocation2 + $0x830] sm:$0xff]
  %v603 = vld [vmem:[#allocation2 + $0x838] sm:$0xff]
  %v604 = vld [vmem:[#allocation2 + $0x840] sm:$0xff]
  %v605 = vld [vmem:[#allocation2 + $0x848] sm:$0xff]
  %v606 = vld [vmem:[#allocation2 + $0x850] sm:$0xff]
  %v607 = vld [vmem:[#allocation2 + $0x858] sm:$0xff]
  %v608 = vld [vmem:[#allocation2 + $0x860] sm:$0xff]
  %v609 = vld [vmem:[#allocation2 + $0x868] sm:$0xff]
  %v610 = vld [vmem:[#allocation2 + $0x870] sm:$0xff]
  %v611 = vld [vmem:[#allocation2 + $0x878] sm:$0xff]
  %v612 = vld [vmem:[#allocation2 + $0x880] sm:$0xff]
  %v613 = vld [vmem:[#allocation2 + $0x888] sm:$0xff]
  %v614 = vld [vmem:[#allocation2 + $0x890] sm:$0xff]
  %v615 = vld [vmem:[#allocation2 + $0x898] sm:$0xff]
  %v616 = vld [vmem:[#allocation2 + $0x8a0] sm:$0xff]
  %v617 = vld [vmem:[#allocation2 + $0x8a8] sm:$0xff]
  %v618 = vld [vmem:[#allocation2 + $0x8b0] sm:$0xff]
  %v619 = vld [vmem:[#allocation2 + $0x8b8] sm:$0xff]
  %v620 = vld [vmem:[#allocation2 + $0x8c0] sm:$0xff]
  %v621 = vld [vmem:[#allocation2 + $0x8c8] sm:$0xff]
  %v622 = vld [vmem:[#allocation2 + $0x8d0] sm:$0xff]
  %v623 = vld [vmem:[#allocation2 + $0x8d8] sm:$0xff]
  %v624 = vld [vmem:[#allocation2 + $0x8e0] sm:$0xff]
  %v625 = vld [vmem:[#allocation2 + $0x8e8] sm:$0xff]
  %v626 = vld [vmem:[#allocation2 + $0x8f0] sm:$0xff]
  %v627 = vld [vmem:[#allocation2 + $0x8f8] sm:$0xff]
  %v628 = vld [vmem:[#allocation2 + $0x900] sm:$0xff]
  %v629 = vld [vmem:[#allocation2 + $0x908] sm:$0xff]
  %v630 = vld [vmem:[#allocation2 + $0x910] sm:$0xff]
  %v631 = vld [vmem:[#allocation2 + $0x918] sm:$0xff]
  %v632 = vld [vmem:[#allocation2 + $0x920] sm:$0xff]
  %v633 = vld [vmem:[#allocation2 + $0x928] sm:$0xff]
  %v634 = vld [vmem:[#allocation2 + $0x930] sm:$0xff]
  %v635 = vld [vmem:[#allocation2 + $0x938] sm:$0xff]
  %v636 = vld [vmem:[#allocation2 + $0x940] sm:$0xff]
  %v637 = vld [vmem:[#allocation2 + $0x948] sm:$0xff]
  %v638 = vld [vmem:[#allocation2 + $0x950] sm:$0xff]
  %v639 = vld [vmem:[#allocation2 + $0x958] sm:$0xff]
  %v640 = vld [vmem:[#allocation2 + $0x960] sm:$0xff]
  %v641 = vld [vmem:[#allocation2 + $0x968] sm:$0xff]
  %v642 = vld [vmem:[#allocation2 + $0x970] sm:$0xff]
  %v643 = vld [vmem:[#allocation2 + $0x978] sm:$0xff]
  %v644 = vld [vmem:[#allocation2 + $0x980] sm:$0xff]
  %v645 = vld [vmem:[#allocation2 + $0x988] sm:$0xff]
  %v646 = vld [vmem:[#allocation2 + $0x990] sm:$0xff]
  %v647 = vld [vmem:[#allocation2 + $0x998] sm:$0xff]
  %v648 = vld [vmem:[#allocation2 + $0x9a0] sm:$0xff]
  %v649 = vld [vmem:[#allocation2 + $0x9a8] sm:$0xff]
  %v650 = vld [vmem:[#allocation2 + $0x9b0] sm:$0xff]
  %v651 = vld [vmem:[#allocation2 + $0x9b8] sm:$0xff]
  %v652 = vld [vmem:[#allocation2 + $0x9c0] sm:$0xff]
  %v653 = vld [vmem:[#allocation2 + $0x9c8] sm:$0xff]
  %v654 = vld [vmem:[#allocation2 + $0x9d0] sm:$0xff]
  %v655 = vld [vmem:[#allocation2 + $0x9d8] sm:$0xff]
  %v656 = vld [vmem:[#allocation2 + $0x9e0] sm:$0xff]
  %v657 = vld [vmem:[#allocation2 + $0x9e8] sm:$0xff]
  %v658 = vld [vmem:[#allocation2 + $0x9f0] sm:$0xff]
  %v659 = vld [vmem:[#allocation2 + $0x9f8] sm:$0xff]
  %v660 = vld [vmem:[%s0] sm:$0xf]
  %v661 = vld [vmem:[%s0 + $0x4] sm:$0xf]
  %v662 = vld [vmem:[%s0 + $0x8] sm:$0xf]
  %v663 = vld [vmem:[%s0 + $0xc] sm:$0xf]
  %v664 = vld [vmem:[%s0 + $0x10] sm:$0xf]
  %v665 = vld [vmem:[%s0 + $0x14] sm:$0xf]
  %v666 = vld [vmem:[%s0 + $0x18] sm:$0xf]
  %v667 = vld [vmem:[%s0 + $0x1c] sm:$0xf]
  %v668 = vld [vmem:[%s0 + $0x20] sm:$0xf]
  %v669 = vld [vmem:[%s0 + $0x24] sm:$0xf]
  %v670 = vld [vmem:[%s0 + $0x28] sm:$0xf]
  %v671 = vld [vmem:[%s0 + $0x2c] sm:$0xf]
  %v672 = vld [vmem:[%s0 + $0x30] sm:$0xf]
  %v673 = vld [vmem:[%s0 + $0x34] sm:$0xf]
  %v674 = vld [vmem:[%s0 + $0x38] sm:$0xf]
  %v675 = vld [vmem:[%s0 + $0x3c] sm:$0xf]
  %v676 = vld [vmem:[%s0 + $0x40] sm:$0xf]
  %v677 = vld [vmem:[%s0 + $0x44] sm:$0xf]
  %v678 = vld [vmem:[%s0 + $0x48] sm:$0xf]
  %v679 = vld [vmem:[%s0 + $0x4c] sm:$0xf]
  %v680 = vld [vmem:[%s0 + $0x50] sm:$0xf]
  %v681 = vld [vmem:[%s0 + $0x54] sm:$0xf]
  %v682 = vld [vmem:[%s0 + $0x58] sm:$0xf]
  %v683 = vld [vmem:[%s0 + $0x5c] sm:$0xf]
  %v684 = vld [vmem:[%s0 + $0x60] sm:$0xf]
  %v685 = vld [vmem:[%s0 + $0x64] sm:$0xf]
  %v686 = vld [vmem:[%s0 + $0x68] sm:$0xf]
  %v687 = vld [vmem:[%s0 + $0x6c] sm:$0xf]
  %v688 = vld [vmem:[%s0 + $0x70] sm:$0xf]
  %v689 = vld [vmem:[%s0 + $0x74] sm:$0xf]
  %v690 = vld [vmem:[%s0 + $0x78] sm:$0xf]
  %v691 = vld [vmem:[%s0 + $0x7c] sm:$0xf]
  %v692 = vld [vmem:[%s0 + $0x80] sm:$0xf]
  %v693 = vld [vmem:[%s0 + $0x84] sm:$0xf]
  %v694 = vld [vmem:[%s0 + $0x88] sm:$0xf]
  %v695 = vld [vmem:[%s0 + $0x8c] sm:$0xf]
  %v696 = vld [vmem:[%s0 + $0x90] sm:$0xf]
  %v697 = vld [vmem:[%s0 + $0x94] sm:$0xf]
  %v698 = vld [vmem:[%s0 + $0x98] sm:$0xf]
  %v699 = vld [vmem:[%s0 + $0x9c] sm:$0xf]
  %v700 = vld [vmem:[%s0 + $0xa0] sm:$0xf]
  %v701 = vld [vmem:[%s0 + $0xa4] sm:$0xf]
  %v702 = vld [vmem:[%s0 + $0xa8] sm:$0xf]
  %v703 = vld [vmem:[%s0 + $0xac] sm:$0xf]
  %v704 = vld [vmem:[%s0 + $0xb0] sm:$0xf]
  %v705 = vld [vmem:[%s0 + $0xb4] sm:$0xf]
  %v706 = vld [vmem:[%s0 + $0xb8] sm:$0xf]
  %v707 = vld [vmem:[%s0 + $0xbc] sm:$0xf]
  %v708 = vld [vmem:[%s0 + $0xc0] sm:$0xf]
  %v709 = vld [vmem:[%s0 + $0xc4] sm:$0xf]
  %v710 = vld [vmem:[%s0 + $0xc8] sm:$0xf]
  %v711 = vld [vmem:[%s0 + $0xcc] sm:$0xf]
  %v712 = vld [vmem:[%s0 + $0xd0] sm:$0xf]
  %v713 = vld [vmem:[%s0 + $0xd4] sm:$0xf]
  %v714 = vld [vmem:[%s0 + $0xd8] sm:$0xf]
  %v715 = vld [vmem:[%s0 + $0xdc] sm:$0xf]
  %v716 = vld [vmem:[%s0 + $0xe0] sm:$0xf]
  %v717 = vld [vmem:[%s0 + $0xe4] sm:$0xf]
  %v718 = vld [vmem:[%s0 + $0xe8] sm:$0xf]
  %v719 = vld [vmem:[%s0 + $0xec] sm:$0xf]
  %v720 = vld [vmem:[%s0 + $0xf0] sm:$0xf]
  %v721 = vld [vmem:[%s0 + $0xf4] sm:$0xf]
  %v722 = vld [vmem:[%s0 + $0xf8] sm:$0xf]
  %v723 = vld [vmem:[%s0 + $0xfc] sm:$0xf]
  %v724 = vld [vmem:[%s0 + $0x100] sm:$0xf]
  %v725 = vld [vmem:[%s0 + $0x104] sm:$0xf]
  %v726 = vld [vmem:[%s0 + $0x108] sm:$0xf]
  %v727 = vld [vmem:[%s0 + $0x10c] sm:$0xf]
  %v728 = vld [vmem:[%s0 + $0x110] sm:$0xf]
  %v729 = vld [vmem:[%s0 + $0x114] sm:$0xf]
  %v730 = vld [vmem:[%s0 + $0x118] sm:$0xf]
  %v731 = vld [vmem:[%s0 + $0x11c] sm:$0xf]
  %v732 = vld [vmem:[%s0 + $0x120] sm:$0xf]
  %v733 = vld [vmem:[%s0 + $0x124] sm:$0xf]
  %v734 = vld [vmem:[%s0 + $0x128] sm:$0xf]
  %v735 = vld [vmem:[%s0 + $0x12c] sm:$0xf]
  %v736 = vld [vmem:[%s0 + $0x130] sm:$0xf]
  %v737 = vld [vmem:[%s0 + $0x134] sm:$0xf]
  %v738 = vld [vmem:[%s0 + $0x138] sm:$0xf]
  %v739 = vld [vmem:[%s0 + $0x13c] sm:$0xf]
  %v740 = vld [vmem:[%s0 + $0x140] sm:$0xf]
  %v741 = vld [vmem:[%s0 + $0x144] sm:$0xf]
  %v742 = vld [vmem:[%s0 + $0x148] sm:$0xf]
  %v743 = vld [vmem:[%s0 + $0x14c] sm:$0xf]
  %v744 = vld [vmem:[%s0 + $0x150] sm:$0xf]
  %v745 = vld [vmem:[%s0 + $0x154] sm:$0xf]
  %v746 = vld [vmem:[%s0 + $0x158] sm:$0xf]
  %v747 = vld [vmem:[%s0 + $0x15c] sm:$0xf]
  %v748 = vld [vmem:[%s0 + $0x160] sm:$0xf]
  %v749 = vld [vmem:[%s0 + $0x164] sm:$0xf]
  %v750 = vld [vmem:[%s0 + $0x168] sm:$0xf]
  %v751 = vld [vmem:[%s0 + $0x16c] sm:$0xf]
  %v752 = vld [vmem:[%s0 + $0x170] sm:$0xf]
  %v753 = vld [vmem:[%s0 + $0x174] sm:$0xf]
  %v754 = vld [vmem:[%s0 + $0x178] sm:$0xf]
  %v755 = vld [vmem:[%s0 + $0x17c] sm:$0xf]
  %v756 = vld [vmem:[%s0 + $0x180] sm:$0xf]
  %v757 = vld [vmem:[%s0 + $0x184] sm:$0xf]
  %v758 = vld [vmem:[%s0 + $0x188] sm:$0xf]
  %v759 = vld [vmem:[%s0 + $0x18c] sm:$0xf]
  %v760 = vld [vmem:[%s0 + $0x190] sm:$0xf]
  %v761 = vld [vmem:[%s0 + $0x194] sm:$0xf]
  %v762 = vld [vmem:[%s0 + $0x198] sm:$0xf]
  %v763 = vld [vmem:[%s0 + $0x19c] sm:$0xf]
  %v764 = vld [vmem:[%s0 + $0x1a0] sm:$0xf]
  %v765 = vld [vmem:[%s0 + $0x1a4] sm:$0xf]
  %v766 = vld [vmem:[%s0 + $0x1a8] sm:$0xf]
  %v767 = vld [vmem:[%s0 + $0x1ac] sm:$0xf]
  %v768 = vld [vmem:[%s0 + $0x1b0] sm:$0xf]
  %v769 = vld [vmem:[%s0 + $0x1b4] sm:$0xf]
  %v770 = vld [vmem:[%s0 + $0x1b8] sm:$0xf]
  %v771 = vld [vmem:[%s0 + $0x1bc] sm:$0xf]
  %v772 = vld [vmem:[%s0 + $0x1c0] sm:$0xf]
  %v773 = vld [vmem:[%s0 + $0x1c4] sm:$0xf]
  %v774 = vld [vmem:[%s0 + $0x1c8] sm:$0xf]
  %v775 = vld [vmem:[%s0 + $0x1cc] sm:$0xf]
  %v776 = vld [vmem:[%s0 + $0x1d0] sm:$0xf]
  %v777 = vld [vmem:[%s0 + $0x1d4] sm:$0xf]
  %v778 = vld [vmem:[%s0 + $0x1d8] sm:$0xf]
  %v779 = vld [vmem:[%s0 + $0x1dc] sm:$0xf]
  %v780 = vld [vmem:[%s0 + $0x1e0] sm:$0xf]
  %v781 = vld [vmem:[%s0 + $0x1e4] sm:$0xf]
  %v782 = vld [vmem:[%s0 + $0x1e8] sm:$0xf]
  %v783 = vld [vmem:[%s0 + $0x1ec] sm:$0xf]
  %v784 = vld [vmem:[%s0 + $0x1f0] sm:$0xf]
  %v785 = vld [vmem:[%s0 + $0x1f4] sm:$0xf]
  %v786 = vld [vmem:[%s0 + $0x1f8] sm:$0xf]
  %v787 = vld [vmem:[%s0 + $0x1fc] sm:$0xf]
  %v788 = vld [vmem:[%s0 + $0x200] sm:$0xf]
  %v789 = vld [vmem:[%s0 + $0x204] sm:$0xf]
  %v790 = vld [vmem:[%s0 + $0x208] sm:$0xf]
  %v791 = vld [vmem:[%s0 + $0x20c] sm:$0xf]
  %v792 = vld [vmem:[%s0 + $0x210] sm:$0xf]
  %v793 = vld [vmem:[%s0 + $0x214] sm:$0xf]
  %v794 = vld [vmem:[%s0 + $0x218] sm:$0xf]
  %v795 = vld [vmem:[%s0 + $0x21c] sm:$0xf]
  %v796 = vld [vmem:[%s0 + $0x220] sm:$0xf]
  %v797 = vld [vmem:[%s0 + $0x224] sm:$0xf]
  %v798 = vld [vmem:[%s0 + $0x228] sm:$0xf]
  %v799 = vld [vmem:[%s0 + $0x22c] sm:$0xf]
  %v800 = vld [vmem:[%s0 + $0x230] sm:$0xf]
  %v801 = vld [vmem:[%s0 + $0x234] sm:$0xf]
  %v802 = vld [vmem:[%s0 + $0x238] sm:$0xf]
  %v803 = vld [vmem:[%s0 + $0x23c] sm:$0xf]
  %v804 = vld [vmem:[%s0 + $0x240] sm:$0xf]
  %v805 = vld [vmem:[%s0 + $0x244] sm:$0xf]
  %v806 = vld [vmem:[%s0 + $0x248] sm:$0xf]
  %v807 = vld [vmem:[%s0 + $0x24c] sm:$0xf]
  %v808 = vld [vmem:[%s0 + $0x250] sm:$0xf]
  %v809 = vld [vmem:[%s0 + $0x254] sm:$0xf]
  %v810 = vld [vmem:[%s0 + $0x258] sm:$0xf]
  %v811 = vld [vmem:[%s0 + $0x25c] sm:$0xf]
  %v812 = vld [vmem:[%s0 + $0x260] sm:$0xf]
  %v813 = vld [vmem:[%s0 + $0x264] sm:$0xf]
  %v814 = vld [vmem:[%s0 + $0x268] sm:$0xf]
  %v815 = vld [vmem:[%s0 + $0x26c] sm:$0xf]
  %v816 = vld [vmem:[%s0 + $0x270] sm:$0xf]
  %v817 = vld [vmem:[%s0 + $0x274] sm:$0xf]
  %v818 = vld [vmem:[%s0 + $0x278] sm:$0xf]
  %v819 = vld [vmem:[%s0 + $0x27c] sm:$0xf]
  %v820 = vld [vmem:[%s0 + $0x280] sm:$0xf]
  %v821 = vld [vmem:[%s0 + $0x284] sm:$0xf]
  %v822 = vld [vmem:[%s0 + $0x288] sm:$0xf]
  %v823 = vld [vmem:[%s0 + $0x28c] sm:$0xf]
  %v824 = vld [vmem:[%s0 + $0x290] sm:$0xf]
  %v825 = vld [vmem:[%s0 + $0x294] sm:$0xf]
  %v826 = vld [vmem:[%s0 + $0x298] sm:$0xf]
  %v827 = vld [vmem:[%s0 + $0x29c] sm:$0xf]
  %v828 = vld [vmem:[%s0 + $0x2a0] sm:$0xf]
  %v829 = vld [vmem:[%s0 + $0x2a4] sm:$0xf]
  %v830 = vld [vmem:[%s0 + $0x2a8] sm:$0xf]
  %v831 = vld [vmem:[%s0 + $0x2ac] sm:$0xf]
  %v832 = vld [vmem:[%s0 + $0x2b0] sm:$0xf]
  %v833 = vld [vmem:[%s0 + $0x2b4] sm:$0xf]
  %v834 = vld [vmem:[%s0 + $0x2b8] sm:$0xf]
  %v835 = vld [vmem:[%s0 + $0x2bc] sm:$0xf]
  %v836 = vld [vmem:[%s0 + $0x2c0] sm:$0xf]
  %v837 = vld [vmem:[%s0 + $0x2c4] sm:$0xf]
  %v838 = vld [vmem:[%s0 + $0x2c8] sm:$0xf]
  %v839 = vld [vmem:[%s0 + $0x2cc] sm:$0xf]
  %v840 = vld [vmem:[%s0 + $0x2d0] sm:$0xf]
  %v841 = vld [vmem:[%s0 + $0x2d4] sm:$0xf]
  %v842 = vld [vmem:[%s0 + $0x2d8] sm:$0xf]
  %v843 = vld [vmem:[%s0 + $0x2dc] sm:$0xf]
  %v844 = vld [vmem:[%s0 + $0x2e0] sm:$0xf]
  %v845 = vld [vmem:[%s0 + $0x2e4] sm:$0xf]
  %v846 = vld [vmem:[%s0 + $0x2e8] sm:$0xf]
  %v847 = vld [vmem:[%s0 + $0x2ec] sm:$0xf]
  %v848 = vld [vmem:[%s0 + $0x2f0] sm:$0xf]
  %v849 = vld [vmem:[%s0 + $0x2f4] sm:$0xf]
  %v850 = vld [vmem:[%s0 + $0x2f8] sm:$0xf]
  %v851 = vld [vmem:[%s0 + $0x2fc] sm:$0xf]
  %v852 = vld [vmem:[%s0 + $0x300] sm:$0xf]
  %v853 = vld [vmem:[%s0 + $0x304] sm:$0xf]
  %v854 = vld [vmem:[%s0 + $0x308] sm:$0xf]
  %v855 = vld [vmem:[%s0 + $0x30c] sm:$0xf]
  %v856 = vld [vmem:[%s0 + $0x310] sm:$0xf]
  %v857 = vld [vmem:[%s0 + $0x314] sm:$0xf]
  %v858 = vld [vmem:[%s0 + $0x318] sm:$0xf]
  %v859 = vld [vmem:[%s0 + $0x31c] sm:$0xf]
  %v860 = vld [vmem:[%s0 + $0x320] sm:$0xf]
  %v861 = vld [vmem:[%s0 + $0x324] sm:$0xf]
  %v862 = vld [vmem:[%s0 + $0x328] sm:$0xf]
  %v863 = vld [vmem:[%s0 + $0x32c] sm:$0xf]
  %v864 = vld [vmem:[%s0 + $0x330] sm:$0xf]
  %v865 = vld [vmem:[%s0 + $0x334] sm:$0xf]
  %v866 = vld [vmem:[%s0 + $0x338] sm:$0xf]
  %v867 = vld [vmem:[%s0 + $0x33c] sm:$0xf]
  %v868 = vld [vmem:[%s0 + $0x340] sm:$0xf]
  %v869 = vld [vmem:[%s0 + $0x344] sm:$0xf]
  %v870 = vld [vmem:[%s0 + $0x348] sm:$0xf]
  %v871 = vld [vmem:[%s0 + $0x34c] sm:$0xf]
  %v872 = vld [vmem:[%s0 + $0x350] sm:$0xf]
  %v873 = vld [vmem:[%s0 + $0x354] sm:$0xf]
  %v874 = vld [vmem:[%s0 + $0x358] sm:$0xf]
  %v875 = vld [vmem:[%s0 + $0x35c] sm:$0xf]
  %v876 = vld [vmem:[%s0 + $0x360] sm:$0xf]
  %v877 = vld [vmem:[%s0 + $0x364] sm:$0xf]
  %v878 = vld [vmem:[%s0 + $0x368] sm:$0xf]
  %v879 = vld [vmem:[%s0 + $0x36c] sm:$0xf]
  %v880 = vld [vmem:[%s0 + $0x370] sm:$0xf]
  %v881 = vld [vmem:[%s0 + $0x374] sm:$0xf]
  %v882 = vld [vmem:[%s0 + $0x378] sm:$0xf]
  %v883 = vld [vmem:[%s0 + $0x37c] sm:$0xf]
  %v884 = vld [vmem:[%s0 + $0x380] sm:$0xf]
  %v885 = vld [vmem:[%s0 + $0x384] sm:$0xf]
  %v886 = vld [vmem:[%s0 + $0x388] sm:$0xf]
  %v887 = vld [vmem:[%s0 + $0x38c] sm:$0xf]
  %v888 = vld [vmem:[%s0 + $0x390] sm:$0xf]
  %v889 = vld [vmem:[%s0 + $0x394] sm:$0xf]
  %v890 = vld [vmem:[%s0 + $0x398] sm:$0xf]
  %v891 = vld [vmem:[%s0 + $0x39c] sm:$0xf]
  %v892 = vld [vmem:[%s0 + $0x3a0] sm:$0xf]
  %v893 = vld [vmem:[%s0 + $0x3a4] sm:$0xf]
  %v894 = vld [vmem:[%s0 + $0x3a8] sm:$0xf]
  %v895 = vld [vmem:[%s0 + $0x3ac] sm:$0xf]
  %v896 = vld [vmem:[%s0 + $0x3b0] sm:$0xf]
  %v897 = vld [vmem:[%s0 + $0x3b4] sm:$0xf]
  %v898 = vld [vmem:[%s0 + $0x3b8] sm:$0xf]
  %v899 = vld [vmem:[%s0 + $0x3bc] sm:$0xf]
  %v900 = vld [vmem:[%s0 + $0x3c0] sm:$0xf]
  %v901 = vld [vmem:[%s0 + $0x3c4] sm:$0xf]
  %v902 = vld [vmem:[%s0 + $0x3c8] sm:$0xf]
  %v903 = vld [vmem:[%s0 + $0x3cc] sm:$0xf]
  %v904 = vld [vmem:[%s0 + $0x3d0] sm:$0xf]
  %v905 = vld [vmem:[%s0 + $0x3d4] sm:$0xf]
  %v906 = vld [vmem:[%s0 + $0x3d8] sm:$0xf]
  %v907 = vld [vmem:[%s0 + $0x3dc] sm:$0xf]
  %v908 = vld [vmem:[%s0 + $0x3e0] sm:$0xf]
  %v909 = vld [vmem:[%s0 + $0x3e4] sm:$0xf]
  %v910 = vld [vmem:[%s0 + $0x3e8] sm:$0xf]
  %v911 = vld [vmem:[%s0 + $0x3ec] sm:$0xf]
  %v912 = vld [vmem:[%s0 + $0x3f0] sm:$0xf]
  %v913 = vld [vmem:[%s0 + $0x3f4] sm:$0xf]
  %v914 = vld [vmem:[%s0 + $0x3f8] sm:$0xf]
  %v915 = vld [vmem:[%s0 + $0x3fc] sm:$0xf]
  %v916 = vld [vmem:[%s0 + $0x400] sm:$0xf]
  %v917 = vld [vmem:[%s0 + $0x404] sm:$0xf]
  %v918 = vld [vmem:[%s0 + $0x408] sm:$0xf]
  %v919 = vld [vmem:[%s0 + $0x40c] sm:$0xf]
  %v920 = vld [vmem:[%s0 + $0x410] sm:$0xf]
  %v921 = vld [vmem:[%s0 + $0x414] sm:$0xf]
  %v922 = vld [vmem:[%s0 + $0x418] sm:$0xf]
  %v923 = vld [vmem:[%s0 + $0x41c] sm:$0xf]
  %v924 = vld [vmem:[%s0 + $0x420] sm:$0xf]
  %v925 = vld [vmem:[%s0 + $0x424] sm:$0xf]
  %v926 = vld [vmem:[%s0 + $0x428] sm:$0xf]
  %v927 = vld [vmem:[%s0 + $0x42c] sm:$0xf]
  %v928 = vld [vmem:[%s0 + $0x430] sm:$0xf]
  %v929 = vld [vmem:[%s0 + $0x434] sm:$0xf]
  %v930 = vld [vmem:[%s0 + $0x438] sm:$0xf]
  %v931 = vld [vmem:[%s0 + $0x43c] sm:$0xf]
  %v932 = vld [vmem:[%s0 + $0x440] sm:$0xf]
  %v933 = vld [vmem:[%s0 + $0x444] sm:$0xf]
  %v934 = vld [vmem:[%s0 + $0x448] sm:$0xf]
  %v935 = vld [vmem:[%s0 + $0x44c] sm:$0xf]
  %v936 = vld [vmem:[%s0 + $0x450] sm:$0xf]
  %v937 = vld [vmem:[%s0 + $0x454] sm:$0xf]
  %v938 = vld [vmem:[%s0 + $0x458] sm:$0xf]
  %v939 = vld [vmem:[%s0 + $0x45c] sm:$0xf]
  %v940 = vld [vmem:[%s0 + $0x460] sm:$0xf]
  %v941 = vld [vmem:[%s0 + $0x464] sm:$0xf]
  %v942 = vld [vmem:[%s0 + $0x468] sm:$0xf]
  %v943 = vld [vmem:[%s0 + $0x46c] sm:$0xf]
  %v944 = vld [vmem:[%s0 + $0x470] sm:$0xf]
  %v945 = vld [vmem:[%s0 + $0x474] sm:$0xf]
  %v946 = vld [vmem:[%s0 + $0x478] sm:$0xf]
  %v947 = vld [vmem:[%s0 + $0x47c] sm:$0xf]
  %v948 = vld [vmem:[%s0 + $0x480] sm:$0xf]
  %v949 = vld [vmem:[%s0 + $0x484] sm:$0xf]
  %v950 = vld [vmem:[%s0 + $0x488] sm:$0xf]
  %v951 = vld [vmem:[%s0 + $0x48c] sm:$0xf]
  %v952 = vld [vmem:[%s0 + $0x490] sm:$0xf]
  %v953 = vld [vmem:[%s0 + $0x494] sm:$0xf]
  %v954 = vld [vmem:[%s0 + $0x498] sm:$0xf]
  %v955 = vld [vmem:[%s0 + $0x49c] sm:$0xf]
  %v956 = vld [vmem:[%s0 + $0x4a0] sm:$0xf]
  %v957 = vld [vmem:[%s0 + $0x4a4] sm:$0xf]
  %v958 = vld [vmem:[%s0 + $0x4a8] sm:$0xf]
  %v959 = vld [vmem:[%s0 + $0x4ac] sm:$0xf]
  %v960 = vld [vmem:[%s0 + $0x4b0] sm:$0xf]
  %v961 = vld [vmem:[%s0 + $0x4b4] sm:$0xf]
  %v962 = vld [vmem:[%s0 + $0x4b8] sm:$0xf]
  %v963 = vld [vmem:[%s0 + $0x4bc] sm:$0xf]
  %v964 = vld [vmem:[%s0 + $0x4c0] sm:$0xf]
  %v965 = vld [vmem:[%s0 + $0x4c4] sm:$0xf]
  %v966 = vld [vmem:[%s0 + $0x4c8] sm:$0xf]
  %v967 = vld [vmem:[%s0 + $0x4cc] sm:$0xf]
  %v968 = vld [vmem:[%s0 + $0x4d0] sm:$0xf]
  %v969 = vld [vmem:[%s0 + $0x4d4] sm:$0xf]
  %v970 = vld [vmem:[%s0 + $0x4d8] sm:$0xf]
  %v971 = vld [vmem:[%s0 + $0x4dc] sm:$0xf]
  %v972 = vld [vmem:[%s0 + $0x4e0] sm:$0xf]
  %v973 = vld [vmem:[%s0 + $0x4e4] sm:$0xf]
  %v974 = vld [vmem:[%s0 + $0x4e8] sm:$0xf]
  %v975 = vld [vmem:[%s0 + $0x4ec] sm:$0xf]
  %v976 = vld [vmem:[%s0 + $0x4f0] sm:$0xf]
  %v977 = vld [vmem:[%s0 + $0x4f4] sm:$0xf]
  %v978 = vld [vmem:[%s0 + $0x4f8] sm:$0xf]
  %v979 = vld [vmem:[%s0 + $0x4fc] sm:$0xf]
  %v980 = vld [vmem:[%s1] sm:$0xf]
  %v981 = vld [vmem:[%s1 + $0x4] sm:$0xf]
  %v982 = vld [vmem:[%s1 + $0x8] sm:$0xf]
  %v983 = vld [vmem:[%s1 + $0xc] sm:$0x3]
  %v1304 = vunpack.c.l.b16 %v660
  %v1305 = vunpack.c.l.b16 %v661
  %v1306 = vunpack.c.l.b16 %v662
  %v1307 = vunpack.c.l.b16 %v663
  %v1308 = vunpack.c.l.b16 %v664
  %v1309 = vunpack.c.l.b16 %v665
  %v1310 = vunpack.c.l.b16 %v666
  %v1311 = vunpack.c.l.b16 %v667
  %v1312 = vunpack.c.l.b16 %v668
  %v1313 = vunpack.c.l.b16 %v669
  %v1314 = vunpack.c.l.b16 %v670
  %v1315 = vunpack.c.l.b16 %v671
  %v1316 = vunpack.c.l.b16 %v672
  %v1317 = vunpack.c.l.b16 %v673
  %v1318 = vunpack.c.l.b16 %v674
  %v1319 = vunpack.c.l.b16 %v675
  %v1320 = vunpack.c.l.b16 %v676
  %v1321 = vunpack.c.l.b16 %v677
  %v1322 = vunpack.c.l.b16 %v678
  %v1323 = vunpack.c.l.b16 %v679
  %v1324 = vunpack.c.l.b16 %v680
  %v1325 = vunpack.c.l.b16 %v681
  %v1326 = vunpack.c.l.b16 %v682
  %v1327 = vunpack.c.l.b16 %v683
  %v1328 = vunpack.c.l.b16 %v684
  %v1329 = vunpack.c.l.b16 %v685
  %v1330 = vunpack.c.l.b16 %v686
  %v1331 = vunpack.c.l.b16 %v687
  %v1332 = vunpack.c.l.b16 %v688
  %v1333 = vunpack.c.l.b16 %v689
  %v1334 = vunpack.c.l.b16 %v690
  %v1335 = vunpack.c.l.b16 %v691
  %v1336 = vunpack.c.l.b16 %v692
  %v1337 = vunpack.c.l.b16 %v693
  %v1338 = vunpack.c.l.b16 %v694
  %v1339 = vunpack.c.l.b16 %v695
  %v1340 = vunpack.c.l.b16 %v696
  %v1341 = vunpack.c.l.b16 %v697
  %v1342 = vunpack.c.l.b16 %v698
  %v1343 = vunpack.c.l.b16 %v699
  %v1344 = vunpack.c.l.b16 %v700
  %v1345 = vunpack.c.l.b16 %v701
  %v1346 = vunpack.c.l.b16 %v702
  %v1347 = vunpack.c.l.b16 %v703
  %v1348 = vunpack.c.l.b16 %v704
  %v1349 = vunpack.c.l.b16 %v705
  %v1350 = vunpack.c.l.b16 %v706
  %v1351 = vunpack.c.l.b16 %v707
  %v1352 = vunpack.c.l.b16 %v708
  %v1353 = vunpack.c.l.b16 %v709
  %v1354 = vunpack.c.l.b16 %v710
  %v1355 = vunpack.c.l.b16 %v711
  %v1356 = vunpack.c.l.b16 %v712
  %v1357 = vunpack.c.l.b16 %v713
  %v1358 = vunpack.c.l.b16 %v714
  %v1359 = vunpack.c.l.b16 %v715
  %v1360 = vunpack.c.l.b16 %v716
  %v1361 = vunpack.c.l.b16 %v717
  %v1362 = vunpack.c.l.b16 %v718
  %v1363 = vunpack.c.l.b16 %v719
  %v1364 = vunpack.c.l.b16 %v720
  %v1365 = vunpack.c.l.b16 %v721
  %v1366 = vunpack.c.l.b16 %v722
  %v1367 = vunpack.c.l.b16 %v723
  %v1368 = vunpack.c.l.b16 %v724
  %v1369 = vunpack.c.l.b16 %v725
  %v1370 = vunpack.c.l.b16 %v726
  %v1371 = vunpack.c.l.b16 %v727
  %v1372 = vunpack.c.l.b16 %v728
  %v1373 = vunpack.c.l.b16 %v729
  %v1374 = vunpack.c.l.b16 %v730
  %v1375 = vunpack.c.l.b16 %v731
  %v1376 = vunpack.c.l.b16 %v732
  %v1377 = vunpack.c.l.b16 %v733
  %v1378 = vunpack.c.l.b16 %v734
  %v1379 = vunpack.c.l.b16 %v735
  %v1380 = vunpack.c.l.b16 %v736
  %v1381 = vunpack.c.l.b16 %v737
  %v1382 = vunpack.c.l.b16 %v738
  %v1383 = vunpack.c.l.b16 %v739
  %v1384 = vunpack.c.l.b16 %v740
  %v1385 = vunpack.c.l.b16 %v741
  %v1386 = vunpack.c.l.b16 %v742
  %v1387 = vunpack.c.l.b16 %v743
  %v1388 = vunpack.c.l.b16 %v744
  %v1389 = vunpack.c.l.b16 %v745
  %v1390 = vunpack.c.l.b16 %v746
  %v1391 = vunpack.c.l.b16 %v747
  %v1392 = vunpack.c.l.b16 %v748
  %v1393 = vunpack.c.l.b16 %v749
  %v1394 = vunpack.c.l.b16 %v750
  %v1395 = vunpack.c.l.b16 %v751
  %v1396 = vunpack.c.l.b16 %v752
  %v1397 = vunpack.c.l.b16 %v753
  %v1398 = vunpack.c.l.b16 %v754
  %v1399 = vunpack.c.l.b16 %v755
  %v1400 = vunpack.c.l.b16 %v756
  %v1401 = vunpack.c.l.b16 %v757
  %v1402 = vunpack.c.l.b16 %v758
  %v1403 = vunpack.c.l.b16 %v759
  %v1404 = vunpack.c.l.b16 %v760
  %v1405 = vunpack.c.l.b16 %v761
  %v1406 = vunpack.c.l.b16 %v762
  %v1407 = vunpack.c.l.b16 %v763
  %v1408 = vunpack.c.l.b16 %v764
  %v1409 = vunpack.c.l.b16 %v765
  %v1410 = vunpack.c.l.b16 %v766
  %v1411 = vunpack.c.l.b16 %v767
  %v1412 = vunpack.c.l.b16 %v768
  %v1413 = vunpack.c.l.b16 %v769
  %v1414 = vunpack.c.l.b16 %v770
  %v1415 = vunpack.c.l.b16 %v771
  %v1416 = vunpack.c.l.b16 %v772
  %v1417 = vunpack.c.l.b16 %v773
  %v1418 = vunpack.c.l.b16 %v774
  %v1419 = vunpack.c.l.b16 %v775
  %v1420 = vunpack.c.l.b16 %v776
  %v1421 = vunpack.c.l.b16 %v777
  %v1422 = vunpack.c.l.b16 %v778
  %v1423 = vunpack.c.l.b16 %v779
  %v1424 = vunpack.c.l.b16 %v780
  %v1425 = vunpack.c.l.b16 %v781
  %v1426 = vunpack.c.l.b16 %v782
  %v1427 = vunpack.c.l.b16 %v783
  %v1428 = vunpack.c.l.b16 %v784
  %v1429 = vunpack.c.l.b16 %v785
  %v1430 = vunpack.c.l.b16 %v786
  %v1431 = vunpack.c.l.b16 %v787
  %v1432 = vunpack.c.l.b16 %v788
  %v1433 = vunpack.c.l.b16 %v789
  %v1434 = vunpack.c.l.b16 %v790
  %v1435 = vunpack.c.l.b16 %v791
  %v1436 = vunpack.c.l.b16 %v792
  %v1437 = vunpack.c.l.b16 %v793
  %v1438 = vunpack.c.l.b16 %v794
  %v1439 = vunpack.c.l.b16 %v795
  %v1440 = vunpack.c.l.b16 %v796
  %v1441 = vunpack.c.l.b16 %v797
  %v1442 = vunpack.c.l.b16 %v798
  %v1443 = vunpack.c.l.b16 %v799
  %v1444 = vunpack.c.l.b16 %v800
  %v1445 = vunpack.c.l.b16 %v801
  %v1446 = vunpack.c.l.b16 %v802
  %v1447 = vunpack.c.l.b16 %v803
  %v1448 = vunpack.c.l.b16 %v804
  %v1449 = vunpack.c.l.b16 %v805
  %v1450 = vunpack.c.l.b16 %v806
  %v1451 = vunpack.c.l.b16 %v807
  %v1452 = vunpack.c.l.b16 %v808
  %v1453 = vunpack.c.l.b16 %v809
  %v1454 = vunpack.c.l.b16 %v810
  %v1455 = vunpack.c.l.b16 %v811
  %v1456 = vunpack.c.l.b16 %v812
  %v1457 = vunpack.c.l.b16 %v813
  %v1458 = vunpack.c.l.b16 %v814
  %v1459 = vunpack.c.l.b16 %v815
  %v1460 = vunpack.c.l.b16 %v816
  %v1461 = vunpack.c.l.b16 %v817
  %v1462 = vunpack.c.l.b16 %v818
  %v1463 = vunpack.c.l.b16 %v819
  %v1464 = vunpack.c.l.b16 %v820
  %v1465 = vunpack.c.l.b16 %v821
  %v1466 = vunpack.c.l.b16 %v822
  %v1467 = vunpack.c.l.b16 %v823
  %v1468 = vunpack.c.l.b16 %v824
  %v1469 = vunpack.c.l.b16 %v825
  %v1470 = vunpack.c.l.b16 %v826
  %v1471 = vunpack.c.l.b16 %v827
  %v1472 = vunpack.c.l.b16 %v828
  %v1473 = vunpack.c.l.b16 %v829
  %v1474 = vunpack.c.l.b16 %v830
  %v1475 = vunpack.c.l.b16 %v831
  %v1476 = vunpack.c.l.b16 %v832
  %v1477 = vunpack.c.l.b16 %v833
  %v1478 = vunpack.c.l.b16 %v834
  %v1479 = vunpack.c.l.b16 %v835
  %v1480 = vunpack.c.l.b16 %v836
  %v1481 = vunpack.c.l.b16 %v837
  %v1482 = vunpack.c.l.b16 %v838
  %v1483 = vunpack.c.l.b16 %v839
  %v1484 = vunpack.c.l.b16 %v840
  %v1485 = vunpack.c.l.b16 %v841
  %v1486 = vunpack.c.l.b16 %v842
  %v1487 = vunpack.c.l.b16 %v843
  %v1488 = vunpack.c.l.b16 %v844
  %v1489 = vunpack.c.l.b16 %v845
  %v1490 = vunpack.c.l.b16 %v846
  %v1491 = vunpack.c.l.b16 %v847
  %v1492 = vunpack.c.l.b16 %v848
  %v1493 = vunpack.c.l.b16 %v849
  %v1494 = vunpack.c.l.b16 %v850
  %v1495 = vunpack.c.l.b16 %v851
  %v1496 = vunpack.c.l.b16 %v852
  %v1497 = vunpack.c.l.b16 %v853
  %v1498 = vunpack.c.l.b16 %v854
  %v1499 = vunpack.c.l.b16 %v855
  %v1500 = vunpack.c.l.b16 %v856
  %v1501 = vunpack.c.l.b16 %v857
  %v1502 = vunpack.c.l.b16 %v858
  %v1503 = vunpack.c.l.b16 %v859
  %v1504 = vunpack.c.l.b16 %v860
  %v1505 = vunpack.c.l.b16 %v861
  %v1506 = vunpack.c.l.b16 %v862
  %v1507 = vunpack.c.l.b16 %v863
  %v1508 = vunpack.c.l.b16 %v864
  %v1509 = vunpack.c.l.b16 %v865
  %v1510 = vunpack.c.l.b16 %v866
  %v1511 = vunpack.c.l.b16 %v867
  %v1512 = vunpack.c.l.b16 %v868
  %v1513 = vunpack.c.l.b16 %v869
  %v1514 = vunpack.c.l.b16 %v870
  %v1515 = vunpack.c.l.b16 %v871
  %v1516 = vunpack.c.l.b16 %v872
  %v1517 = vunpack.c.l.b16 %v873
  %v1518 = vunpack.c.l.b16 %v874
  %v1519 = vunpack.c.l.b16 %v875
  %v1520 = vunpack.c.l.b16 %v876
  %v1521 = vunpack.c.l.b16 %v877
  %v1522 = vunpack.c.l.b16 %v878
  %v1523 = vunpack.c.l.b16 %v879
  %v1524 = vunpack.c.l.b16 %v880
  %v1525 = vunpack.c.l.b16 %v881
  %v1526 = vunpack.c.l.b16 %v882
  %v1527 = vunpack.c.l.b16 %v883
  %v1528 = vunpack.c.l.b16 %v884
  %v1529 = vunpack.c.l.b16 %v885
  %v1530 = vunpack.c.l.b16 %v886
  %v1531 = vunpack.c.l.b16 %v887
  %v1532 = vunpack.c.l.b16 %v888
  %v1533 = vunpack.c.l.b16 %v889
  %v1534 = vunpack.c.l.b16 %v890
  %v1535 = vunpack.c.l.b16 %v891
  %v1536 = vunpack.c.l.b16 %v892
  %v1537 = vunpack.c.l.b16 %v893
  %v1538 = vunpack.c.l.b16 %v894
  %v1539 = vunpack.c.l.b16 %v895
  %v1540 = vunpack.c.l.b16 %v896
  %v1541 = vunpack.c.l.b16 %v897
  %v1542 = vunpack.c.l.b16 %v898
  %v1543 = vunpack.c.l.b16 %v899
  %v1544 = vunpack.c.l.b16 %v900
  %v1545 = vunpack.c.l.b16 %v901
  %v1546 = vunpack.c.l.b16 %v902
  %v1547 = vunpack.c.l.b16 %v903
  %v1548 = vunpack.c.l.b16 %v904
  %v1549 = vunpack.c.l.b16 %v905
  %v1550 = vunpack.c.l.b16 %v906
  %v1551 = vunpack.c.l.b16 %v907
  %v1552 = vunpack.c.l.b16 %v908
  %v1553 = vunpack.c.l.b16 %v909
  %v1554 = vunpack.c.l.b16 %v910
  %v1555 = vunpack.c.l.b16 %v911
  %v1556 = vunpack.c.l.b16 %v912
  %v1557 = vunpack.c.l.b16 %v913
  %v1558 = vunpack.c.l.b16 %v914
  %v1559 = vunpack.c.l.b16 %v915
  %v1560 = vunpack.c.l.b16 %v916
  %v1561 = vunpack.c.l.b16 %v917
  %v1562 = vunpack.c.l.b16 %v918
  %v1563 = vunpack.c.l.b16 %v919
  %v1564 = vunpack.c.l.b16 %v920
  %v1565 = vunpack.c.l.b16 %v921
  %v1566 = vunpack.c.l.b16 %v922
  %v1567 = vunpack.c.l.b16 %v923
  %v1568 = vunpack.c.l.b16 %v924
  %v1569 = vunpack.c.l.b16 %v925
  %v1570 = vunpack.c.l.b16 %v926
  %v1571 = vunpack.c.l.b16 %v927
  %v1572 = vunpack.c.l.b16 %v928
  %v1573 = vunpack.c.l.b16 %v929
  %v1574 = vunpack.c.l.b16 %v930
  %v1575 = vunpack.c.l.b16 %v931
  %v1576 = vunpack.c.l.b16 %v932
  %v1577 = vunpack.c.l.b16 %v933
  %v1578 = vunpack.c.l.b16 %v934
  %v1579 = vunpack.c.l.b16 %v935
  %v1580 = vunpack.c.l.b16 %v936
  %v1581 = vunpack.c.l.b16 %v937
  %v1582 = vunpack.c.l.b16 %v938
  %v1583 = vunpack.c.l.b16 %v939
  %v1584 = vunpack.c.l.b16 %v940
  %v1585 = vunpack.c.l.b16 %v941
  %v1586 = vunpack.c.l.b16 %v942
  %v1587 = vunpack.c.l.b16 %v943
  %v1588 = vunpack.c.l.b16 %v944
  %v1589 = vunpack.c.l.b16 %v945
  %v1590 = vunpack.c.l.b16 %v946
  %v1591 = vunpack.c.l.b16 %v947
  %v1592 = vunpack.c.l.b16 %v948
  %v1593 = vunpack.c.l.b16 %v949
  %v1594 = vunpack.c.l.b16 %v950
  %v1595 = vunpack.c.l.b16 %v951
  %v1596 = vunpack.c.l.b16 %v952
  %v1597 = vunpack.c.l.b16 %v953
  %v1598 = vunpack.c.l.b16 %v954
  %v1599 = vunpack.c.l.b16 %v955
  %v1600 = vunpack.c.l.b16 %v956
  %v1601 = vunpack.c.l.b16 %v957
  %v1602 = vunpack.c.l.b16 %v958
  %v1603 = vunpack.c.l.b16 %v959
  %v1604 = vunpack.c.l.b16 %v960
  %v1605 = vunpack.c.l.b16 %v961
  %v1606 = vunpack.c.l.b16 %v962
  %v1607 = vunpack.c.l.b16 %v963
  %v1608 = vunpack.c.l.b16 %v964
  %v1609 = vunpack.c.l.b16 %v965
  %v1610 = vunpack.c.l.b16 %v966
  %v1611 = vunpack.c.l.b16 %v967
  %v1612 = vunpack.c.l.b16 %v968
  %v1613 = vunpack.c.l.b16 %v969
  %v1614 = vunpack.c.l.b16 %v970
  %v1615 = vunpack.c.l.b16 %v971
  %v1616 = vunpack.c.l.b16 %v972
  %v1617 = vunpack.c.l.b16 %v973
  %v1618 = vunpack.c.l.b16 %v974
  %v1619 = vunpack.c.l.b16 %v975
  %v1620 = vunpack.c.l.b16 %v976
  %v1621 = vunpack.c.l.b16 %v977
  %v1622 = vunpack.c.l.b16 %v978
  %v1623 = vunpack.c.l.b16 %v979
  %v1624 = vpack.c.b16 %v1305, %v1304
  %v1625 = vpack.c.b16 %v1307, %v1306
  %v1626 = vpack.c.b16 %v1309, %v1308
  %v1627 = vpack.c.b16 %v1311, %v1310
  %v1628 = vpack.c.b16 %v1313, %v1312
  %v1629 = vpack.c.b16 %v1315, %v1314
  %v1630 = vpack.c.b16 %v1317, %v1316
  %v1631 = vpack.c.b16 %v1319, %v1318
  %v1632 = vpack.c.b16 %v1321, %v1320
  %v1633 = vpack.c.b16 %v1323, %v1322
  %v1634 = vpack.c.b16 %v1325, %v1324
  %v1635 = vpack.c.b16 %v1327, %v1326
  %v1636 = vpack.c.b16 %v1329, %v1328
  %v1637 = vpack.c.b16 %v1331, %v1330
  %v1638 = vpack.c.b16 %v1333, %v1332
  %v1639 = vpack.c.b16 %v1335, %v1334
  %v1640 = vpack.c.b16 %v1337, %v1336
  %v1641 = vpack.c.b16 %v1339, %v1338
  %v1642 = vpack.c.b16 %v1341, %v1340
  %v1643 = vpack.c.b16 %v1343, %v1342
  %v1644 = vpack.c.b16 %v1345, %v1344
  %v1645 = vpack.c.b16 %v1347, %v1346
  %v1646 = vpack.c.b16 %v1349, %v1348
  %v1647 = vpack.c.b16 %v1351, %v1350
  %v1648 = vpack.c.b16 %v1353, %v1352
  %v1649 = vpack.c.b16 %v1355, %v1354
  %v1650 = vpack.c.b16 %v1357, %v1356
  %v1651 = vpack.c.b16 %v1359, %v1358
  %v1652 = vpack.c.b16 %v1361, %v1360
  %v1653 = vpack.c.b16 %v1363, %v1362
  %v1654 = vpack.c.b16 %v1365, %v1364
  %v1655 = vpack.c.b16 %v1367, %v1366
  %v1656 = vpack.c.b16 %v1369, %v1368
  %v1657 = vpack.c.b16 %v1371, %v1370
  %v1658 = vpack.c.b16 %v1373, %v1372
  %v1659 = vpack.c.b16 %v1375, %v1374
  %v1660 = vpack.c.b16 %v1377, %v1376
  %v1661 = vpack.c.b16 %v1379, %v1378
  %v1662 = vpack.c.b16 %v1381, %v1380
  %v1663 = vpack.c.b16 %v1383, %v1382
  %v1664 = vpack.c.b16 %v1385, %v1384
  %v1665 = vpack.c.b16 %v1387, %v1386
  %v1666 = vpack.c.b16 %v1389, %v1388
  %v1667 = vpack.c.b16 %v1391, %v1390
  %v1668 = vpack.c.b16 %v1393, %v1392
  %v1669 = vpack.c.b16 %v1395, %v1394
  %v1670 = vpack.c.b16 %v1397, %v1396
  %v1671 = vpack.c.b16 %v1399, %v1398
  %v1672 = vpack.c.b16 %v1401, %v1400
  %v1673 = vpack.c.b16 %v1403, %v1402
  %v1674 = vpack.c.b16 %v1405, %v1404
  %v1675 = vpack.c.b16 %v1407, %v1406
  %v1676 = vpack.c.b16 %v1409, %v1408
  %v1677 = vpack.c.b16 %v1411, %v1410
  %v1678 = vpack.c.b16 %v1413, %v1412
  %v1679 = vpack.c.b16 %v1415, %v1414
  %v1680 = vpack.c.b16 %v1417, %v1416
  %v1681 = vpack.c.b16 %v1419, %v1418
  %v1682 = vpack.c.b16 %v1421, %v1420
  %v1683 = vpack.c.b16 %v1423, %v1422
  %v1684 = vpack.c.b16 %v1425, %v1424
  %v1685 = vpack.c.b16 %v1427, %v1426
  %v1686 = vpack.c.b16 %v1429, %v1428
  %v1687 = vpack.c.b16 %v1431, %v1430
  %v1688 = vpack.c.b16 %v1433, %v1432
  %v1689 = vpack.c.b16 %v1435, %v1434
  %v1690 = vpack.c.b16 %v1437, %v1436
  %v1691 = vpack.c.b16 %v1439, %v1438
  %v1692 = vpack.c.b16 %v1441, %v1440
  %v1693 = vpack.c.b16 %v1443, %v1442
  %v1694 = vpack.c.b16 %v1445, %v1444
  %v1695 = vpack.c.b16 %v1447, %v1446
  %v1696 = vpack.c.b16 %v1449, %v1448
  %v1697 = vpack.c.b16 %v1451, %v1450
  %v1698 = vpack.c.b16 %v1453, %v1452
  %v1699 = vpack.c.b16 %v1455, %v1454
  %v1700 = vpack.c.b16 %v1457, %v1456
  %v1701 = vpack.c.b16 %v1459, %v1458
  %v1702 = vpack.c.b16 %v1461, %v1460
  %v1703 = vpack.c.b16 %v1463, %v1462
  %v1704 = vpack.c.b16 %v1465, %v1464
  %v1705 = vpack.c.b16 %v1467, %v1466
  %v1706 = vpack.c.b16 %v1469, %v1468
  %v1707 = vpack.c.b16 %v1471, %v1470
  %v1708 = vpack.c.b16 %v1473, %v1472
  %v1709 = vpack.c.b16 %v1475, %v1474
  %v1710 = vpack.c.b16 %v1477, %v1476
  %v1711 = vpack.c.b16 %v1479, %v1478
  %v1712 = vpack.c.b16 %v1481, %v1480
  %v1713 = vpack.c.b16 %v1483, %v1482
  %v1714 = vpack.c.b16 %v1485, %v1484
  %v1715 = vpack.c.b16 %v1487, %v1486
  %v1716 = vpack.c.b16 %v1489, %v1488
  %v1717 = vpack.c.b16 %v1491, %v1490
  %v1718 = vpack.c.b16 %v1493, %v1492
  %v1719 = vpack.c.b16 %v1495, %v1494
  %v1720 = vpack.c.b16 %v1497, %v1496
  %v1721 = vpack.c.b16 %v1499, %v1498
  %v1722 = vpack.c.b16 %v1501, %v1500
  %v1723 = vpack.c.b16 %v1503, %v1502
  %v1724 = vpack.c.b16 %v1505, %v1504
  %v1725 = vpack.c.b16 %v1507, %v1506
  %v1726 = vpack.c.b16 %v1509, %v1508
  %v1727 = vpack.c.b16 %v1511, %v1510
  %v1728 = vpack.c.b16 %v1513, %v1512
  %v1729 = vpack.c.b16 %v1515, %v1514
  %v1730 = vpack.c.b16 %v1517, %v1516
  %v1731 = vpack.c.b16 %v1519, %v1518
  %v1732 = vpack.c.b16 %v1521, %v1520
  %v1733 = vpack.c.b16 %v1523, %v1522
  %v1734 = vpack.c.b16 %v1525, %v1524
  %v1735 = vpack.c.b16 %v1527, %v1526
  %v1736 = vpack.c.b16 %v1529, %v1528
  %v1737 = vpack.c.b16 %v1531, %v1530
  %v1738 = vpack.c.b16 %v1533, %v1532
  %v1739 = vpack.c.b16 %v1535, %v1534
  %v1740 = vpack.c.b16 %v1537, %v1536
  %v1741 = vpack.c.b16 %v1539, %v1538
  %v1742 = vpack.c.b16 %v1541, %v1540
  %v1743 = vpack.c.b16 %v1543, %v1542
  %v1744 = vpack.c.b16 %v1545, %v1544
  %v1745 = vpack.c.b16 %v1547, %v1546
  %v1746 = vpack.c.b16 %v1549, %v1548
  %v1747 = vpack.c.b16 %v1551, %v1550
  %v1748 = vpack.c.b16 %v1553, %v1552
  %v1749 = vpack.c.b16 %v1555, %v1554
  %v1750 = vpack.c.b16 %v1557, %v1556
  %v1751 = vpack.c.b16 %v1559, %v1558
  %v1752 = vpack.c.b16 %v1561, %v1560
  %v1753 = vpack.c.b16 %v1563, %v1562
  %v1754 = vpack.c.b16 %v1565, %v1564
  %v1755 = vpack.c.b16 %v1567, %v1566
  %v1756 = vpack.c.b16 %v1569, %v1568
  %v1757 = vpack.c.b16 %v1571, %v1570
  %v1758 = vpack.c.b16 %v1573, %v1572
  %v1759 = vpack.c.b16 %v1575, %v1574
  %v1760 = vpack.c.b16 %v1577, %v1576
  %v1761 = vpack.c.b16 %v1579, %v1578
  %v1762 = vpack.c.b16 %v1581, %v1580
  %v1763 = vpack.c.b16 %v1583, %v1582
  %v1764 = vpack.c.b16 %v1585, %v1584
  %v1765 = vpack.c.b16 %v1587, %v1586
  %v1766 = vpack.c.b16 %v1589, %v1588
  %v1767 = vpack.c.b16 %v1591, %v1590
  %v1768 = vpack.c.b16 %v1593, %v1592
  %v1769 = vpack.c.b16 %v1595, %v1594
  %v1770 = vpack.c.b16 %v1597, %v1596
  %v1771 = vpack.c.b16 %v1599, %v1598
  %v1772 = vpack.c.b16 %v1601, %v1600
  %v1773 = vpack.c.b16 %v1603, %v1602
  %v1774 = vpack.c.b16 %v1605, %v1604
  %v1775 = vpack.c.b16 %v1607, %v1606
  %v1776 = vpack.c.b16 %v1609, %v1608
  %v1777 = vpack.c.b16 %v1611, %v1610
  %v1778 = vpack.c.b16 %v1613, %v1612
  %v1779 = vpack.c.b16 %v1615, %v1614
  %v1780 = vpack.c.b16 %v1617, %v1616
  %v1781 = vpack.c.b16 %v1619, %v1618
  %v1782 = vpack.c.b16 %v1621, %v1620
  %v1783 = vpack.c.b16 %v1623, %v1622
  %v1788 = vunpack.c.l.b16 %v980
  %v1789 = vunpack.c.l.b16 %v981
  %v1790 = vunpack.c.l.b16 %v982
  %v1791 = vunpack.c.l.b16 %v983
  %v1792 = vpack.c.b16 %v1789, %v1788
  %v1793 = vpack.c.b16 %v1791, %v1790
  %vm1795 = vcmask 220160
  %v1797 = vsel %vm1795, %v1624, 0
  %v1800 = vsel %vm1795, %v1625, 0
  %v1803 = vsel %vm1795, %v1626, 0
  %v1806 = vsel %vm1795, %v1627, 0
  %v1809 = vsel %vm1795, %v1628, 0
  %v1812 = vsel %vm1795, %v1629, 0
  %v1815 = vsel %vm1795, %v1630, 0
  %v1818 = vsel %vm1795, %v1631, 0
  %v1821 = vsel %vm1795, %v1632, 0
  %v1824 = vsel %vm1795, %v1633, 0
  %v1827 = vsel %vm1795, %v1634, 0
  %v1830 = vsel %vm1795, %v1635, 0
  %v1833 = vsel %vm1795, %v1636, 0
  %v1836 = vsel %vm1795, %v1637, 0
  %v1839 = vsel %vm1795, %v1638, 0
  %v1842 = vsel %vm1795, %v1639, 0
  %v1845 = vsel %vm1795, %v1640, 0
  %v1848 = vsel %vm1795, %v1641, 0
  %v1851 = vsel %vm1795, %v1642, 0
  %v1854 = vsel %vm1795, %v1643, 0
  %v1857 = vsel %vm1795, %v1644, 0
  %v1860 = vsel %vm1795, %v1645, 0
  %v1863 = vsel %vm1795, %v1646, 0
  %v1866 = vsel %vm1795, %v1647, 0
  %v1869 = vsel %vm1795, %v1648, 0
  %v1872 = vsel %vm1795, %v1649, 0
  %v1875 = vsel %vm1795, %v1650, 0
  %v1878 = vsel %vm1795, %v1651, 0
  %v1881 = vsel %vm1795, %v1652, 0
  %v1884 = vsel %vm1795, %v1653, 0
  %v1887 = vsel %vm1795, %v1654, 0
  %v1890 = vsel %vm1795, %v1655, 0
  %v1893 = vsel %vm1795, %v1656, 0
  %v1896 = vsel %vm1795, %v1657, 0
  %v1899 = vsel %vm1795, %v1658, 0
  %v1902 = vsel %vm1795, %v1659, 0
  %v1905 = vsel %vm1795, %v1660, 0
  %v1908 = vsel %vm1795, %v1661, 0
  %v1911 = vsel %vm1795, %v1662, 0
  %v1914 = vsel %vm1795, %v1663, 0
  %v1917 = vsel %vm1795, %v1664, 0
  %v1920 = vsel %vm1795, %v1665, 0
  %v1923 = vsel %vm1795, %v1666, 0
  %v1926 = vsel %vm1795, %v1667, 0
  %v1929 = vsel %vm1795, %v1668, 0
  %v1932 = vsel %vm1795, %v1669, 0
  %v1935 = vsel %vm1795, %v1670, 0
  %v1938 = vsel %vm1795, %v1671, 0
  %v1941 = vsel %vm1795, %v1672, 0
  %v1944 = vsel %vm1795, %v1673, 0
  %v1947 = vsel %vm1795, %v1674, 0
  %v1950 = vsel %vm1795, %v1675, 0
  %v1953 = vsel %vm1795, %v1676, 0
  %v1956 = vsel %vm1795, %v1677, 0
  %v1959 = vsel %vm1795, %v1678, 0
  %v1962 = vsel %vm1795, %v1679, 0
  %v1965 = vsel %vm1795, %v1680, 0
  %v1968 = vsel %vm1795, %v1681, 0
  %v1971 = vsel %vm1795, %v1682, 0
  %v1974 = vsel %vm1795, %v1683, 0
  %v1977 = vsel %vm1795, %v1684, 0
  %v1980 = vsel %vm1795, %v1685, 0
  %v1983 = vsel %vm1795, %v1686, 0
  %v1986 = vsel %vm1795, %v1687, 0
  %v1989 = vsel %vm1795, %v1688, 0
  %v1992 = vsel %vm1795, %v1689, 0
  %v1995 = vsel %vm1795, %v1690, 0
  %v1998 = vsel %vm1795, %v1691, 0
  %v2001 = vsel %vm1795, %v1692, 0
  %v2004 = vsel %vm1795, %v1693, 0
  %v2007 = vsel %vm1795, %v1694, 0
  %v2010 = vsel %vm1795, %v1695, 0
  %v2013 = vsel %vm1795, %v1696, 0
  %v2016 = vsel %vm1795, %v1697, 0
  %v2019 = vsel %vm1795, %v1698, 0
  %v2022 = vsel %vm1795, %v1699, 0
  %v2025 = vsel %vm1795, %v1700, 0
  %v2028 = vsel %vm1795, %v1701, 0
  %v2031 = vsel %vm1795, %v1702, 0
  %v2034 = vsel %vm1795, %v1703, 0
  %v2037 = vsel %vm1795, %v1704, 0
  %v2040 = vsel %vm1795, %v1705, 0
  %v2043 = vsel %vm1795, %v1706, 0
  %v2046 = vsel %vm1795, %v1707, 0
  %v2049 = vsel %vm1795, %v1708, 0
  %v2052 = vsel %vm1795, %v1709, 0
  %v2055 = vsel %vm1795, %v1710, 0
  %v2058 = vsel %vm1795, %v1711, 0
  %v2061 = vsel %vm1795, %v1712, 0
  %v2064 = vsel %vm1795, %v1713, 0
  %v2067 = vsel %vm1795, %v1714, 0
  %v2070 = vsel %vm1795, %v1715, 0
  %v2073 = vsel %vm1795, %v1716, 0
  %v2076 = vsel %vm1795, %v1717, 0
  %v2079 = vsel %vm1795, %v1718, 0
  %v2082 = vsel %vm1795, %v1719, 0
  %v2085 = vsel %vm1795, %v1720, 0
  %v2088 = vsel %vm1795, %v1721, 0
  %v2091 = vsel %vm1795, %v1722, 0
  %v2094 = vsel %vm1795, %v1723, 0
  %v2097 = vsel %vm1795, %v1724, 0
  %v2100 = vsel %vm1795, %v1725, 0
  %v2103 = vsel %vm1795, %v1726, 0
  %v2106 = vsel %vm1795, %v1727, 0
  %v2109 = vsel %vm1795, %v1728, 0
  %v2112 = vsel %vm1795, %v1729, 0
  %v2115 = vsel %vm1795, %v1730, 0
  %v2118 = vsel %vm1795, %v1731, 0
  %v2121 = vsel %vm1795, %v1732, 0
  %v2124 = vsel %vm1795, %v1733, 0
  %v2127 = vsel %vm1795, %v1734, 0
  %v2130 = vsel %vm1795, %v1735, 0
  %v2133 = vsel %vm1795, %v1736, 0
  %v2136 = vsel %vm1795, %v1737, 0
  %v2139 = vsel %vm1795, %v1738, 0
  %v2142 = vsel %vm1795, %v1739, 0
  %v2145 = vsel %vm1795, %v1740, 0
  %v2148 = vsel %vm1795, %v1741, 0
  %v2151 = vsel %vm1795, %v1742, 0
  %v2154 = vsel %vm1795, %v1743, 0
  %v2157 = vsel %vm1795, %v1744, 0
  %v2160 = vsel %vm1795, %v1745, 0
  %v2163 = vsel %vm1795, %v1746, 0
  %v2166 = vsel %vm1795, %v1747, 0
  %v2169 = vsel %vm1795, %v1748, 0
  %v2172 = vsel %vm1795, %v1749, 0
  %v2175 = vsel %vm1795, %v1750, 0
  %v2178 = vsel %vm1795, %v1751, 0
  %v2181 = vsel %vm1795, %v1752, 0
  %v2184 = vsel %vm1795, %v1753, 0
  %v2187 = vsel %vm1795, %v1754, 0
  %v2190 = vsel %vm1795, %v1755, 0
  %v2193 = vsel %vm1795, %v1756, 0
  %v2196 = vsel %vm1795, %v1757, 0
  %v2199 = vsel %vm1795, %v1758, 0
  %v2202 = vsel %vm1795, %v1759, 0
  %v2205 = vsel %vm1795, %v1760, 0
  %v2208 = vsel %vm1795, %v1761, 0
  %v2211 = vsel %vm1795, %v1762, 0
  %v2214 = vsel %vm1795, %v1763, 0
  %v2217 = vsel %vm1795, %v1764, 0
  %v2220 = vsel %vm1795, %v1765, 0
  %v2223 = vsel %vm1795, %v1766, 0
  %v2226 = vsel %vm1795, %v1767, 0
  %v2229 = vsel %vm1795, %v1768, 0
  %v2232 = vsel %vm1795, %v1769, 0
  %v2235 = vsel %vm1795, %v1770, 0
  %v2238 = vsel %vm1795, %v1771, 0
  %v2241 = vsel %vm1795, %v1772, 0
  %v2244 = vsel %vm1795, %v1773, 0
  %v2247 = vsel %vm1795, %v1774, 0
  %v2250 = vsel %vm1795, %v1775, 0
  %v2253 = vsel %vm1795, %v1776, 0
  %v2256 = vsel %vm1795, %v1777, 0
  %v2259 = vsel %vm1795, %v1778, 0
  %v2262 = vsel %vm1795, %v1779, 0
  %v2265 = vsel %vm1795, %v1780, 0
  %v2268 = vsel %vm1795, %v1781, 0
  %v2271 = vsel %vm1795, %v1782, 0
  %v2274 = vsel %vm1795, %v1783, 0
  %vm2276 = vcmask 1044480
  %vm2277 = vcmask 1045504
  %v2278 = vsel %vm2276, 4294967295, 65535
  %v2279 = vsel %vm2277, %v2278, 0
  %v2281 = vand.u32 %v1793, %v2279
  %2283 = vmatprep.subr.bf16.mxu0 0
  %2284 = vmatpush1.bf16.msra.mxu0 %v1792
  %2285 = vmatprep.subr.bf16.mxu0 0
  %2286 = vmatpush1.bf16.msra.mxu0 %v2281
  %2287 = vmatprep.subr.bf16.mxu0 0
  %2288 = vmatpush1.bf16.msra.mxu0 0
  %2289 = vmatprep.subr.bf16.mxu0 0
  %2290 = vmatpush1.bf16.msra.mxu0 0
  %2291 = vmatprep.subr.bf16.mxu0 0
  %2292 = vmatpush1.bf16.msra.mxu0 0
  %2293 = vmatprep.subr.bf16.mxu0 0
  %2294 = vmatpush1.bf16.msra.mxu0 0
  %2295 = vmatprep.subr.bf16.mxu0 0
  %2296 = vmatpush1.bf16.msra.mxu0 0
  %2297 = vmatprep.subr.bf16.mxu0 0
  %2298 = vmatpush1.bf16.msra.mxu0 0
  %2299 = vmatprep.subr.bf16.mxu0 0
  %2300 = vmatpush1.bf16.msra.mxu0 0
  %2301 = vmatprep.subr.bf16.mxu0 0
  %2302 = vmatpush1.bf16.msra.mxu0 0
  %2303 = vmatprep.subr.bf16.mxu0 0
  %2304 = vmatpush1.bf16.msra.mxu0 0
  %2305 = vmatprep.subr.bf16.mxu0 0
  %2306 = vmatpush1.bf16.msra.mxu0 0
  %2307 = vmatprep.subr.bf16.mxu0 0
  %2308 = vmatpush1.bf16.msra.mxu0 0
  %2309 = vmatprep.subr.bf16.mxu0 0
  %2310 = vmatpush1.bf16.msra.mxu0 0
  %2311 = vmatprep.subr.bf16.mxu0 0
  %2312 = vmatpush1.bf16.msra.mxu0 0
  %2313 = vmatprep.subr.bf16.mxu0 0
  %2314 = vmatpush1.bf16.msra.mxu0 0
  %2315 = vmatprep.mubr.bf16.mxu0 0
  %2316 = vmatmul.mubr.bf16.gmra.mrb[0].mxu0 %v1797
  %v2317 = vpop.f32.mrb[0].mxu0
  %v2318 = vadd.f32 0.0, %v2317
  %v2319 = vpop.f32.mrb[0].mxu0
  %v2320 = vpop.f32.mrb[0].mxu0
  %v2321 = vadd.f32 0.0, %v2320
  %v2322 = vpop.f32.mrb[0].mxu0
  %2323 = vmatprep.mubr.bf16.mxu0 0
  %2324 = vmatmul.mubr.bf16.gmra.mrb[0].mxu0 %v1800
  %v2325 = vpop.f32.mrb[0].mxu0
  %v2326 = vadd.f32 0.0, %v2325
  %v2327 = vpop.f32.mrb[0].mxu0
  %v2328 = vpop.f32.mrb[0].mxu0
  %v2329 = vadd.f32 0.0, %v2328
  %v2330 = vpop.f32.mrb[0].mxu0
  %2331 = vmatprep.mubr.bf16.mxu0 0
  %2332 = vmatmul.mubr.bf16.gmra.mrb[0].mxu0 %v1803
  %v2333 = vpop.f32.mrb[0].mxu0
  %v2334 = vadd.f32 0.0, %v2333
  %v2335 = vpop.f32.mrb[0].mxu0
  %v2336 = vpop.f32.mrb[0].mxu0
  %v2337 = vadd.f32 0.0, %v2336
  %v2338 = vpop.f32.mrb[0].mxu0
  %2339 = vmatprep.mubr.bf16.mxu0 0
  %2340 = vmatmul.mubr.bf16.gmra.mrb[0].mxu0 %v1806
  %v2341 = vpop.f32.mrb[0].mxu0
  %v2342 = vadd.f32 0.0, %v2341
  %v2343 = vpop.f32.mrb[0].mxu0
  %v2344 = vpop.f32.mrb[0].mxu0
  %v2345 = vadd.f32 0.0, %v2344
  %v2346 = vpop.f32.mrb[0].mxu0
  %2347 = vmatprep.mubr.bf16.mxu0 0
  %2348 = vmatmul.mubr.bf16.gmra.mrb[0].mxu0 %v1809
  %v2349 = vpop.f32.mrb[0].mxu0
  %v2350 = vadd.f32 0.0, %v2349
  %v2351 = vpop.f32.mrb[0].mxu0
  %v2352 = vpop.f32.mrb[0].mxu0
  %v2353 = vadd.f32 0.0, %v2352
  %v2354 = vpop.f32.mrb[0].mxu0
  %2355 = vmatprep.mubr.bf16.mxu0 0
  %2356 = vmatmul.mubr.bf16.gmra.mrb[0].mxu0 %v1812
  %v2357 = vpop.f32.mrb[0].mxu0
  %v2358 = vadd.f32 0.0, %v2357
  %v2359 = vpop.f32.mrb[0].mxu0
  %v2360 = vpop.f32.mrb[0].mxu0
  %v2361 = vadd.f32 0.0, %v2360
  %v2362 = vpop.f32.mrb[0].mxu0
  %2363 = vmatprep.mubr.bf16.mxu0 0
  %2364 = vmatmul.mubr.bf16.gmra.mrb[0].mxu0 %v1815
  %v2365 = vpop.f32.mrb[0].mxu0
  %v2366 = vadd.f32 0.0, %v2365
  %v2367 = vpop.f32.mrb[0].mxu0
  %v2368 = vpop.f32.mrb[0].mxu0
  %v2369 = vadd.f32 0.0, %v2368
  %v2370 = vpop.f32.mrb[0].mxu0
  %2371 = vmatprep.mubr.bf16.mxu0 0
  %2372 = vmatmul.mubr.bf16.gmra.mrb[0].mxu0 %v1818
  %v2373 = vpop.f32.mrb[0].mxu0
  %v2374 = vadd.f32 0.0, %v2373
  %v2375 = vpop.f32.mrb[0].mxu0
  %v2376 = vpop.f32.mrb[0].mxu0
  %v2377 = vadd.f32 0.0, %v2376
  %v2378 = vpop.f32.mrb[0].mxu0
  %2379 = vmatprep.mubr.bf16.mxu0 0
  %2380 = vmatmul.mubr.bf16.gmra.mrb[0].mxu0 %v1821
  %v2381 = vpop.f32.mrb[0].mxu0
  %v2382 = vadd.f32 0.0, %v2381
  %v2383 = vpop.f32.mrb[0].mxu0
  %v2384 = vpop.f32.mrb[0].mxu0
  %v2385 = vadd.f32 0.0, %v2384
  %v2386 = vpop.f32.mrb[0].mxu0
  %2387 = vmatprep.mubr.bf16.mxu0 0
  %2388 = vmatmul.mubr.bf16.gmra.mrb[0].mxu0 %v1824
  %v2389 = vpop.f32.mrb[0].mxu0
  %v2390 = vadd.f32 0.0, %v2389
  %v2391 = vpop.f32.mrb[0].mxu0
  %v2392 = vpop.f32.mrb[0].mxu0
  %v2393 = vadd.f32 0.0, %v2392
  %v2394 = vpop.f32.mrb[0].mxu0
  %2395 = vmatprep.mubr.bf16.mxu0 0
  %2396 = vmatmul.mubr.bf16.gmra.mrb[0].mxu0 %v1827
  %v2397 = vpop.f32.mrb[0].mxu0
  %v2398 = vadd.f32 0.0, %v2397
  %v2399 = vpop.f32.mrb[0].mxu0
  %v2400 = vpop.f32.mrb[0].mxu0
  %v2401 = vadd.f32 0.0, %v2400
  %v2402 = vpop.f32.mrb[0].mxu0
  %2403 = vmatprep.mubr.bf16.mxu0 0
  %2404 = vmatmul.mubr.bf16.gmra.mrb[0].mxu0 %v1830
  %v2405 = vpop.f32.mrb[0].mxu0
  %v2406 = vadd.f32 0.0, %v2405
  %v2407 = vpop.f32.mrb[0].mxu0
  %v2408 = vpop.f32.mrb[0].mxu0
  %v2409 = vadd.f32 0.0, %v2408
  %v2410 = vpop.f32.mrb[0].mxu0
  %2411 = vmatprep.mubr.bf16.mxu0 0
  %2412 = vmatmul.mubr.bf16.gmra.mrb[0].mxu0 %v1833
  %v2413 = vpop.f32.mrb[0].mxu0
  %v2414 = vadd.f32 0.0, %v2413
  %v2415 = vpop.f32.mrb[0].mxu0
  %v2416 = vpop.f32.mrb[0].mxu0
  %v2417 = vadd.f32 0.0, %v2416
  %v2418 = vpop.f32.mrb[0].mxu0
  %2419 = vmatprep.mubr.bf16.mxu0 0
  %2420 = vmatmul.mubr.bf16.gmra.mrb[0].mxu0 %v1836
  %v2421 = vpop.f32.mrb[0].mxu0
  %v2422 = vadd.f32 0.0, %v2421
  %v2423 = vpop.f32.mrb[0].mxu0
  %v2424 = vpop.f32.mrb[0].mxu0
  %v2425 = vadd.f32 0.0, %v2424
  %v2426 = vpop.f32.mrb[0].mxu0
  %2427 = vmatprep.mubr.bf16.mxu0 0
  %2428 = vmatmul.mubr.bf16.gmra.mrb[0].mxu0 %v1839
  %v2429 = vpop.f32.mrb[0].mxu0
  %v2430 = vadd.f32 0.0, %v2429
  %v2431 = vpop.f32.mrb[0].mxu0
  %v2432 = vpop.f32.mrb[0].mxu0
  %v2433 = vadd.f32 0.0, %v2432
  %v2434 = vpop.f32.mrb[0].mxu0
  %2435 = vmatprep.mubr.bf16.mxu0 0
  %2436 = vmatmul.mubr.bf16.gmra.mrb[0].mxu0 %v1842
  %v2437 = vpop.f32.mrb[0].mxu0
  %v2438 = vadd.f32 0.0, %v2437
  %v2439 = vpop.f32.mrb[0].mxu0
  %v2440 = vpop.f32.mrb[0].mxu0
  %v2441 = vadd.f32 0.0, %v2440
  %v2442 = vpop.f32.mrb[0].mxu0
  %2443 = vmatprep.mubr.bf16.mxu0 0
  %2444 = vmatmul.mubr.bf16.gmra.mrb[0].mxu0 %v1845
  %v2445 = vpop.f32.mrb[0].mxu0
  %v2446 = vadd.f32 0.0, %v2445
  %v2447 = vpop.f32.mrb[0].mxu0
  %v2448 = vpop.f32.mrb[0].mxu0
  %v2449 = vadd.f32 0.0, %v2448
  %v2450 = vpop.f32.mrb[0].mxu0
  %2451 = vmatprep.mubr.bf16.mxu0 0
  %2452 = vmatmul.mubr.bf16.gmra.mrb[0].mxu0 %v1848
  %v2453 = vpop.f32.mrb[0].mxu0
  %v2454 = vadd.f32 0.0, %v2453
  %v2455 = vpop.f32.mrb[0].mxu0
  %v2456 = vpop.f32.mrb[0].mxu0
  %v2457 = vadd.f32 0.0, %v2456
  %v2458 = vpop.f32.mrb[0].mxu0
  %2459 = vmatprep.mubr.bf16.mxu0 0
  %2460 = vmatmul.mubr.bf16.gmra.mrb[0].mxu0 %v1851
  %v2461 = vpop.f32.mrb[0].mxu0
  %v2462 = vadd.f32 0.0, %v2461
  %v2463 = vpop.f32.mrb[0].mxu0
  %v2464 = vpop.f32.mrb[0].mxu0
  %v2465 = vadd.f32 0.0, %v2464
  %v2466 = vpop.f32.mrb[0].mxu0
  %2467 = vmatprep.mubr.bf16.mxu0 0
  %2468 = vmatmul.mubr.bf16.gmra.mrb[0].mxu0 %v1854
  %v2469 = vpop.f32.mrb[0].mxu0
  %v2470 = vadd.f32 0.0, %v2469
  %v2471 = vpop.f32.mrb[0].mxu0
  %v2472 = vpop.f32.mrb[0].mxu0
  %v2473 = vadd.f32 0.0, %v2472
  %v2474 = vpop.f32.mrb[0].mxu0
  %2475 = vmatprep.mubr.bf16.mxu0 0
  %2476 = vmatmul.mubr.bf16.gmra.mrb[0].mxu0 %v1857
  %v2477 = vpop.f32.mrb[0].mxu0
  %v2478 = vadd.f32 0.0, %v2477
  %v2479 = vpop.f32.mrb[0].mxu0
  %v2480 = vpop.f32.mrb[0].mxu0
  %v2481 = vadd.f32 0.0, %v2480
  %v2482 = vpop.f32.mrb[0].mxu0
  %2483 = vmatprep.mubr.bf16.mxu0 0
  %2484 = vmatmul.mubr.bf16.gmra.mrb[0].mxu0 %v1860
  %v2485 = vpop.f32.mrb[0].mxu0
  %v2486 = vadd.f32 0.0, %v2485
  %v2487 = vpop.f32.mrb[0].mxu0
  %v2488 = vpop.f32.mrb[0].mxu0
  %v2489 = vadd.f32 0.0, %v2488
  %v2490 = vpop.f32.mrb[0].mxu0
  %2491 = vmatprep.mubr.bf16.mxu0 0
  %2492 = vmatmul.mubr.bf16.gmra.mrb[0].mxu0 %v1863
  %v2493 = vpop.f32.mrb[0].mxu0
  %v2494 = vadd.f32 0.0, %v2493
  %v2495 = vpop.f32.mrb[0].mxu0
  %v2496 = vpop.f32.mrb[0].mxu0
  %v2497 = vadd.f32 0.0, %v2496
  %v2498 = vpop.f32.mrb[0].mxu0
  %2499 = vmatprep.mubr.bf16.mxu0 0
  %2500 = vmatmul.mubr.bf16.gmra.mrb[0].mxu0 %v1866
  %v2501 = vpop.f32.mrb[0].mxu0
  %v2502 = vadd.f32 0.0, %v2501
  %v2503 = vpop.f32.mrb[0].mxu0
  %v2504 = vpop.f32.mrb[0].mxu0
  %v2505 = vadd.f32 0.0, %v2504
  %v2506 = vpop.f32.mrb[0].mxu0
  %2507 = vmatprep.mubr.bf16.mxu0 0
  %2508 = vmatmul.mubr.bf16.gmra.mrb[0].mxu0 %v1869
  %v2509 = vpop.f32.mrb[0].mxu0
  %v2510 = vadd.f32 0.0, %v2509
  %v2511 = vpop.f32.mrb[0].mxu0
  %v2512 = vpop.f32.mrb[0].mxu0
  %v2513 = vadd.f32 0.0, %v2512
  %v2514 = vpop.f32.mrb[0].mxu0
  %2515 = vmatprep.mubr.bf16.mxu0 0
  %2516 = vmatmul.mubr.bf16.gmra.mrb[0].mxu0 %v1872
  %v2517 = vpop.f32.mrb[0].mxu0
  %v2518 = vadd.f32 0.0, %v2517
  %v2519 = vpop.f32.mrb[0].mxu0
  %v2520 = vpop.f32.mrb[0].mxu0
  %v2521 = vadd.f32 0.0, %v2520
  %v2522 = vpop.f32.mrb[0].mxu0
  %2523 = vmatprep.mubr.bf16.mxu0 0
  %2524 = vmatmul.mubr.bf16.gmra.mrb[0].mxu0 %v1875
  %v2525 = vpop.f32.mrb[0].mxu0
  %v2526 = vadd.f32 0.0, %v2525
  %v2527 = vpop.f32.mrb[0].mxu0
  %v2528 = vpop.f32.mrb[0].mxu0
  %v2529 = vadd.f32 0.0, %v2528
  %v2530 = vpop.f32.mrb[0].mxu0
  %2531 = vmatprep.mubr.bf16.mxu0 0
  %2532 = vmatmul.mubr.bf16.gmra.mrb[0].mxu0 %v1878
  %v2533 = vpop.f32.mrb[0].mxu0
  %v2534 = vadd.f32 0.0, %v2533
  %v2535 = vpop.f32.mrb[0].mxu0
  %v2536 = vpop.f32.mrb[0].mxu0
  %v2537 = vadd.f32 0.0, %v2536
  %v2538 = vpop.f32.mrb[0].mxu0
  %2539 = vmatprep.mubr.bf16.mxu0 0
  %2540 = vmatmul.mubr.bf16.gmra.mrb[0].mxu0 %v1881
  %v2541 = vpop.f32.mrb[0].mxu0
  %v2542 = vadd.f32 0.0, %v2541
  %v2543 = vpop.f32.mrb[0].mxu0
  %v2544 = vpop.f32.mrb[0].mxu0
  %v2545 = vadd.f32 0.0, %v2544
  %v2546 = vpop.f32.mrb[0].mxu0
  %2547 = vmatprep.mubr.bf16.mxu0 0
  %2548 = vmatmul.mubr.bf16.gmra.mrb[0].mxu0 %v1884
  %v2549 = vpop.f32.mrb[0].mxu0
  %v2550 = vadd.f32 0.0, %v2549
  %v2551 = vpop.f32.mrb[0].mxu0
  %v2552 = vpop.f32.mrb[0].mxu0
  %v2553 = vadd.f32 0.0, %v2552
  %v2554 = vpop.f32.mrb[0].mxu0
  %2555 = vmatprep.mubr.bf16.mxu0 0
  %2556 = vmatmul.mubr.bf16.gmra.mrb[0].mxu0 %v1887
  %v2557 = vpop.f32.mrb[0].mxu0
  %v2558 = vadd.f32 0.0, %v2557
  %v2559 = vpop.f32.mrb[0].mxu0
  %v2560 = vpop.f32.mrb[0].mxu0
  %v2561 = vadd.f32 0.0, %v2560
  %v2562 = vpop.f32.mrb[0].mxu0
  %2563 = vmatprep.mubr.bf16.mxu0 0
  %2564 = vmatmul.mubr.bf16.gmra.mrb[0].mxu0 %v1890
  %v2565 = vpop.f32.mrb[0].mxu0
  %v2566 = vadd.f32 0.0, %v2565
  %v2567 = vpop.f32.mrb[0].mxu0
  %v2568 = vpop.f32.mrb[0].mxu0
  %v2569 = vadd.f32 0.0, %v2568
  %v2570 = vpop.f32.mrb[0].mxu0
  %2571 = vmatprep.mubr.bf16.mxu0 0
  %2572 = vmatmul.mubr.bf16.gmra.mrb[0].mxu0 %v1893
  %v2573 = vpop.f32.mrb[0].mxu0
  %v2574 = vadd.f32 0.0, %v2573
  %v2575 = vpop.f32.mrb[0].mxu0
  %v2576 = vpop.f32.mrb[0].mxu0
  %v2577 = vadd.f32 0.0, %v2576
  %v2578 = vpop.f32.mrb[0].mxu0
  %2579 = vmatprep.mubr.bf16.mxu0 0
  %2580 = vmatmul.mubr.bf16.gmra.mrb[0].mxu0 %v1896
  %v2581 = vpop.f32.mrb[0].mxu0
  %v2582 = vadd.f32 0.0, %v2581
  %v2583 = vpop.f32.mrb[0].mxu0
  %v2584 = vpop.f32.mrb[0].mxu0
  %v2585 = vadd.f32 0.0, %v2584
  %v2586 = vpop.f32.mrb[0].mxu0
  %2587 = vmatprep.mubr.bf16.mxu0 0
  %2588 = vmatmul.mubr.bf16.gmra.mrb[0].mxu0 %v1899
  %v2589 = vpop.f32.mrb[0].mxu0
  %v2590 = vadd.f32 0.0, %v2589
  %v2591 = vpop.f32.mrb[0].mxu0
  %v2592 = vpop.f32.mrb[0].mxu0
  %v2593 = vadd.f32 0.0, %v2592
  %v2594 = vpop.f32.mrb[0].mxu0
  %2595 = vmatprep.mubr.bf16.mxu0 0
  %2596 = vmatmul.mubr.bf16.gmra.mrb[0].mxu0 %v1902
  %v2597 = vpop.f32.mrb[0].mxu0
  %v2598 = vadd.f32 0.0, %v2597
  %v2599 = vpop.f32.mrb[0].mxu0
  %v2600 = vpop.f32.mrb[0].mxu0
  %v2601 = vadd.f32 0.0, %v2600
  %v2602 = vpop.f32.mrb[0].mxu0
  %2603 = vmatprep.mubr.bf16.mxu0 0
  %2604 = vmatmul.mubr.bf16.gmra.mrb[0].mxu0 %v1905
  %v2605 = vpop.f32.mrb[0].mxu0
  %v2606 = vadd.f32 0.0, %v2605
  %v2607 = vpop.f32.mrb[0].mxu0
  %v2608 = vpop.f32.mrb[0].mxu0
  %v2609 = vadd.f32 0.0, %v2608
  %v2610 = vpop.f32.mrb[0].mxu0
  %2611 = vmatprep.mubr.bf16.mxu0 0
  %2612 = vmatmul.mubr.bf16.gmra.mrb[0].mxu0 %v1908
  %v2613 = vpop.f32.mrb[0].mxu0
  %v2614 = vadd.f32 0.0, %v2613
  %v2615 = vpop.f32.mrb[0].mxu0
  %v2616 = vpop.f32.mrb[0].mxu0
  %v2617 = vadd.f32 0.0, %v2616
  %v2618 = vpop.f32.mrb[0].mxu0
  %2619 = vmatprep.mubr.bf16.mxu0 0
  %2620 = vmatmul.mubr.bf16.gmra.mrb[0].mxu0 %v1911
  %v2621 = vpop.f32.mrb[0].mxu0
  %v2622 = vadd.f32 0.0, %v2621
  %v2623 = vpop.f32.mrb[0].mxu0
  %v2624 = vpop.f32.mrb[0].mxu0
  %v2625 = vadd.f32 0.0, %v2624
  %v2626 = vpop.f32.mrb[0].mxu0
  %2627 = vmatprep.mubr.bf16.mxu0 0
  %2628 = vmatmul.mubr.bf16.gmra.mrb[0].mxu0 %v1914
  %v2629 = vpop.f32.mrb[0].mxu0
  %v2630 = vadd.f32 0.0, %v2629
  %v2631 = vpop.f32.mrb[0].mxu0
  %v2632 = vpop.f32.mrb[0].mxu0
  %v2633 = vadd.f32 0.0, %v2632
  %v2634 = vpop.f32.mrb[0].mxu0
  %2635 = vmatprep.mubr.bf16.mxu0 0
  %2636 = vmatmul.mubr.bf16.gmra.mrb[0].mxu0 %v1917
  %v2637 = vpop.f32.mrb[0].mxu0
  %v2638 = vadd.f32 0.0, %v2637
  %v2639 = vpop.f32.mrb[0].mxu0
  %v2640 = vpop.f32.mrb[0].mxu0
  %v2641 = vadd.f32 0.0, %v2640
  %v2642 = vpop.f32.mrb[0].mxu0
  %2643 = vmatprep.mubr.bf16.mxu0 0
  %2644 = vmatmul.mubr.bf16.gmra.mrb[0].mxu0 %v1920
  %v2645 = vpop.f32.mrb[0].mxu0
  %v2646 = vadd.f32 0.0, %v2645
  %v2647 = vpop.f32.mrb[0].mxu0
  %v2648 = vpop.f32.mrb[0].mxu0
  %v2649 = vadd.f32 0.0, %v2648
  %v2650 = vpop.f32.mrb[0].mxu0
  %2651 = vmatprep.mubr.bf16.mxu0 0
  %2652 = vmatmul.mubr.bf16.gmra.mrb[0].mxu0 %v1923
  %v2653 = vpop.f32.mrb[0].mxu0
  %v2654 = vadd.f32 0.0, %v2653
  %v2655 = vpop.f32.mrb[0].mxu0
  %v2656 = vpop.f32.mrb[0].mxu0
  %v2657 = vadd.f32 0.0, %v2656
  %v2658 = vpop.f32.mrb[0].mxu0
  %2659 = vmatprep.mubr.bf16.mxu0 0
  %2660 = vmatmul.mubr.bf16.gmra.mrb[0].mxu0 %v1926
  %v2661 = vpop.f32.mrb[0].mxu0
  %v2662 = vadd.f32 0.0, %v2661
  %v2663 = vpop.f32.mrb[0].mxu0
  %v2664 = vpop.f32.mrb[0].mxu0
  %v2665 = vadd.f32 0.0, %v2664
  %v2666 = vpop.f32.mrb[0].mxu0
  %2667 = vmatprep.mubr.bf16.mxu0 0
  %2668 = vmatmul.mubr.bf16.gmra.mrb[0].mxu0 %v1929
  %v2669 = vpop.f32.mrb[0].mxu0
  %v2670 = vadd.f32 0.0, %v2669
  %v2671 = vpop.f32.mrb[0].mxu0
  %v2672 = vpop.f32.mrb[0].mxu0
  %v2673 = vadd.f32 0.0, %v2672
  %v2674 = vpop.f32.mrb[0].mxu0
  %2675 = vmatprep.mubr.bf16.mxu0 0
  %2676 = vmatmul.mubr.bf16.gmra.mrb[0].mxu0 %v1932
  %v2677 = vpop.f32.mrb[0].mxu0
  %v2678 = vadd.f32 0.0, %v2677
  %v2679 = vpop.f32.mrb[0].mxu0
  %v2680 = vpop.f32.mrb[0].mxu0
  %v2681 = vadd.f32 0.0, %v2680
  %v2682 = vpop.f32.mrb[0].mxu0
  %2683 = vmatprep.mubr.bf16.mxu0 0
  %2684 = vmatmul.mubr.bf16.gmra.mrb[0].mxu0 %v1935
  %v2685 = vpop.f32.mrb[0].mxu0
  %v2686 = vadd.f32 0.0, %v2685
  %v2687 = vpop.f32.mrb[0].mxu0
  %v2688 = vpop.f32.mrb[0].mxu0
  %v2689 = vadd.f32 0.0, %v2688
  %v2690 = vpop.f32.mrb[0].mxu0
  %2691 = vmatprep.mubr.bf16.mxu0 0
  %2692 = vmatmul.mubr.bf16.gmra.mrb[0].mxu0 %v1938
  %v2693 = vpop.f32.mrb[0].mxu0
  %v2694 = vadd.f32 0.0, %v2693
  %v2695 = vpop.f32.mrb[0].mxu0
  %v2696 = vpop.f32.mrb[0].mxu0
  %v2697 = vadd.f32 0.0, %v2696
  %v2698 = vpop.f32.mrb[0].mxu0
  %2699 = vmatprep.mubr.bf16.mxu0 0
  %2700 = vmatmul.mubr.bf16.gmra.mrb[0].mxu0 %v1941
  %v2701 = vpop.f32.mrb[0].mxu0
  %v2702 = vadd.f32 0.0, %v2701
  %v2703 = vpop.f32.mrb[0].mxu0
  %v2704 = vpop.f32.mrb[0].mxu0
  %v2705 = vadd.f32 0.0, %v2704
  %v2706 = vpop.f32.mrb[0].mxu0
  %2707 = vmatprep.mubr.bf16.mxu0 0
  %2708 = vmatmul.mubr.bf16.gmra.mrb[0].mxu0 %v1944
  %v2709 = vpop.f32.mrb[0].mxu0
  %v2710 = vadd.f32 0.0, %v2709
  %v2711 = vpop.f32.mrb[0].mxu0
  %v2712 = vpop.f32.mrb[0].mxu0
  %v2713 = vadd.f32 0.0, %v2712
  %v2714 = vpop.f32.mrb[0].mxu0
  %2715 = vmatprep.mubr.bf16.mxu0 0
  %2716 = vmatmul.mubr.bf16.gmra.mrb[0].mxu0 %v1947
  %v2717 = vpop.f32.mrb[0].mxu0
  %v2718 = vadd.f32 0.0, %v2717
  %v2719 = vpop.f32.mrb[0].mxu0
  %v2720 = vpop.f32.mrb[0].mxu0
  %v2721 = vadd.f32 0.0, %v2720
  %v2722 = vpop.f32.mrb[0].mxu0
  %2723 = vmatprep.mubr.bf16.mxu0 0
  %2724 = vmatmul.mubr.bf16.gmra.mrb[0].mxu0 %v1950
  %v2725 = vpop.f32.mrb[0].mxu0
  %v2726 = vadd.f32 0.0, %v2725
  %v2727 = vpop.f32.mrb[0].mxu0
  %v2728 = vpop.f32.mrb[0].mxu0
  %v2729 = vadd.f32 0.0, %v2728
  %v2730 = vpop.f32.mrb[0].mxu0
  %2731 = vmatprep.mubr.bf16.mxu0 0
  %2732 = vmatmul.mubr.bf16.gmra.mrb[0].mxu0 %v1953
  %v2733 = vpop.f32.mrb[0].mxu0
  %v2734 = vadd.f32 0.0, %v2733
  %v2735 = vpop.f32.mrb[0].mxu0
  %v2736 = vpop.f32.mrb[0].mxu0
  %v2737 = vadd.f32 0.0, %v2736
  %v2738 = vpop.f32.mrb[0].mxu0
  %2739 = vmatprep.mubr.bf16.mxu0 0
  %2740 = vmatmul.mubr.bf16.gmra.mrb[0].mxu0 %v1956
  %v2741 = vpop.f32.mrb[0].mxu0
  %v2742 = vadd.f32 0.0, %v2741
  %v2743 = vpop.f32.mrb[0].mxu0
  %v2744 = vpop.f32.mrb[0].mxu0
  %v2745 = vadd.f32 0.0, %v2744
  %v2746 = vpop.f32.mrb[0].mxu0
  %2747 = vmatprep.mubr.bf16.mxu0 0
  %2748 = vmatmul.mubr.bf16.gmra.mrb[0].mxu0 %v1959
  %v2749 = vpop.f32.mrb[0].mxu0
  %v2750 = vadd.f32 0.0, %v2749
  %v2751 = vpop.f32.mrb[0].mxu0
  %v2752 = vpop.f32.mrb[0].mxu0
  %v2753 = vadd.f32 0.0, %v2752
  %v2754 = vpop.f32.mrb[0].mxu0
  %2755 = vmatprep.mubr.bf16.mxu0 0
  %2756 = vmatmul.mubr.bf16.gmra.mrb[0].mxu0 %v1962
  %v2757 = vpop.f32.mrb[0].mxu0
  %v2758 = vadd.f32 0.0, %v2757
  %v2759 = vpop.f32.mrb[0].mxu0
  %v2760 = vpop.f32.mrb[0].mxu0
  %v2761 = vadd.f32 0.0, %v2760
  %v2762 = vpop.f32.mrb[0].mxu0
  %2763 = vmatprep.mubr.bf16.mxu0 0
  %2764 = vmatmul.mubr.bf16.gmra.mrb[0].mxu0 %v1965
  %v2765 = vpop.f32.mrb[0].mxu0
  %v2766 = vadd.f32 0.0, %v2765
  %v2767 = vpop.f32.mrb[0].mxu0
  %v2768 = vpop.f32.mrb[0].mxu0
  %v2769 = vadd.f32 0.0, %v2768
  %v2770 = vpop.f32.mrb[0].mxu0
  %2771 = vmatprep.mubr.bf16.mxu0 0
  %2772 = vmatmul.mubr.bf16.gmra.mrb[0].mxu0 %v1968
  %v2773 = vpop.f32.mrb[0].mxu0
  %v2774 = vadd.f32 0.0, %v2773
  %v2775 = vpop.f32.mrb[0].mxu0
  %v2776 = vpop.f32.mrb[0].mxu0
  %v2777 = vadd.f32 0.0, %v2776
  %v2778 = vpop.f32.mrb[0].mxu0
  %2779 = vmatprep.mubr.bf16.mxu0 0
  %2780 = vmatmul.mubr.bf16.gmra.mrb[0].mxu0 %v1971
  %v2781 = vpop.f32.mrb[0].mxu0
  %v2782 = vadd.f32 0.0, %v2781
  %v2783 = vpop.f32.mrb[0].mxu0
  %v2784 = vpop.f32.mrb[0].mxu0
  %v2785 = vadd.f32 0.0, %v2784
  %v2786 = vpop.f32.mrb[0].mxu0
  %2787 = vmatprep.mubr.bf16.mxu0 0
  %2788 = vmatmul.mubr.bf16.gmra.mrb[0].mxu0 %v1974
  %v2789 = vpop.f32.mrb[0].mxu0
  %v2790 = vadd.f32 0.0, %v2789
  %v2791 = vpop.f32.mrb[0].mxu0
  %v2792 = vpop.f32.mrb[0].mxu0
  %v2793 = vadd.f32 0.0, %v2792
  %v2794 = vpop.f32.mrb[0].mxu0
  %2795 = vmatprep.mubr.bf16.mxu0 0
  %2796 = vmatmul.mubr.bf16.gmra.mrb[0].mxu0 %v1977
  %v2797 = vpop.f32.mrb[0].mxu0
  %v2798 = vadd.f32 0.0, %v2797
  %v2799 = vpop.f32.mrb[0].mxu0
  %v2800 = vpop.f32.mrb[0].mxu0
  %v2801 = vadd.f32 0.0, %v2800
  %v2802 = vpop.f32.mrb[0].mxu0
  %2803 = vmatprep.mubr.bf16.mxu0 0
  %2804 = vmatmul.mubr.bf16.gmra.mrb[0].mxu0 %v1980
  %v2805 = vpop.f32.mrb[0].mxu0
  %v2806 = vadd.f32 0.0, %v2805
  %v2807 = vpop.f32.mrb[0].mxu0
  %v2808 = vpop.f32.mrb[0].mxu0
  %v2809 = vadd.f32 0.0, %v2808
  %v2810 = vpop.f32.mrb[0].mxu0
  %2811 = vmatprep.mubr.bf16.mxu0 0
  %2812 = vmatmul.mubr.bf16.gmra.mrb[0].mxu0 %v1983
  %v2813 = vpop.f32.mrb[0].mxu0
  %v2814 = vadd.f32 0.0, %v2813
  %v2815 = vpop.f32.mrb[0].mxu0
  %v2816 = vpop.f32.mrb[0].mxu0
  %v2817 = vadd.f32 0.0, %v2816
  %v2818 = vpop.f32.mrb[0].mxu0
  %2819 = vmatprep.mubr.bf16.mxu0 0
  %2820 = vmatmul.mubr.bf16.gmra.mrb[0].mxu0 %v1986
  %v2821 = vpop.f32.mrb[0].mxu0
  %v2822 = vadd.f32 0.0, %v2821
  %v2823 = vpop.f32.mrb[0].mxu0
  %v2824 = vpop.f32.mrb[0].mxu0
  %v2825 = vadd.f32 0.0, %v2824
  %v2826 = vpop.f32.mrb[0].mxu0
  %2827 = vmatprep.mubr.bf16.mxu0 0
  %2828 = vmatmul.mubr.bf16.gmra.mrb[0].mxu0 %v1989
  %v2829 = vpop.f32.mrb[0].mxu0
  %v2830 = vadd.f32 0.0, %v2829
  %v2831 = vpop.f32.mrb[0].mxu0
  %v2832 = vpop.f32.mrb[0].mxu0
  %v2833 = vadd.f32 0.0, %v2832
  %v2834 = vpop.f32.mrb[0].mxu0
  %2835 = vmatprep.mubr.bf16.mxu0 0
  %2836 = vmatmul.mubr.bf16.gmra.mrb[0].mxu0 %v1992
  %v2837 = vpop.f32.mrb[0].mxu0
  %v2838 = vadd.f32 0.0, %v2837
  %v2839 = vpop.f32.mrb[0].mxu0
  %v2840 = vpop.f32.mrb[0].mxu0
  %v2841 = vadd.f32 0.0, %v2840
  %v2842 = vpop.f32.mrb[0].mxu0
  %2843 = vmatprep.mubr.bf16.mxu0 0
  %2844 = vmatmul.mubr.bf16.gmra.mrb[0].mxu0 %v1995
  %v2845 = vpop.f32.mrb[0].mxu0
  %v2846 = vadd.f32 0.0, %v2845
  %v2847 = vpop.f32.mrb[0].mxu0
  %v2848 = vpop.f32.mrb[0].mxu0
  %v2849 = vadd.f32 0.0, %v2848
  %v2850 = vpop.f32.mrb[0].mxu0
  %2851 = vmatprep.mubr.bf16.mxu0 0
  %2852 = vmatmul.mubr.bf16.gmra.mrb[0].mxu0 %v1998
  %v2853 = vpop.f32.mrb[0].mxu0
  %v2854 = vadd.f32 0.0, %v2853
  %v2855 = vpop.f32.mrb[0].mxu0
  %v2856 = vpop.f32.mrb[0].mxu0
  %v2857 = vadd.f32 0.0, %v2856
  %v2858 = vpop.f32.mrb[0].mxu0
  %2859 = vmatprep.mubr.bf16.mxu0 0
  %2860 = vmatmul.mubr.bf16.gmra.mrb[0].mxu0 %v2001
  %v2861 = vpop.f32.mrb[0].mxu0
  %v2862 = vadd.f32 0.0, %v2861
  %v2863 = vpop.f32.mrb[0].mxu0
  %v2864 = vpop.f32.mrb[0].mxu0
  %v2865 = vadd.f32 0.0, %v2864
  %v2866 = vpop.f32.mrb[0].mxu0
  %2867 = vmatprep.mubr.bf16.mxu0 0
  %2868 = vmatmul.mubr.bf16.gmra.mrb[0].mxu0 %v2004
  %v2869 = vpop.f32.mrb[0].mxu0
  %v2870 = vadd.f32 0.0, %v2869
  %v2871 = vpop.f32.mrb[0].mxu0
  %v2872 = vpop.f32.mrb[0].mxu0
  %v2873 = vadd.f32 0.0, %v2872
  %v2874 = vpop.f32.mrb[0].mxu0
  %2875 = vmatprep.mubr.bf16.mxu0 0
  %2876 = vmatmul.mubr.bf16.gmra.mrb[0].mxu0 %v2007
  %v2877 = vpop.f32.mrb[0].mxu0
  %v2878 = vadd.f32 0.0, %v2877
  %v2879 = vpop.f32.mrb[0].mxu0
  %v2880 = vpop.f32.mrb[0].mxu0
  %v2881 = vadd.f32 0.0, %v2880
  %v2882 = vpop.f32.mrb[0].mxu0
  %2883 = vmatprep.mubr.bf16.mxu0 0
  %2884 = vmatmul.mubr.bf16.gmra.mrb[0].mxu0 %v2010
  %v2885 = vpop.f32.mrb[0].mxu0
  %v2886 = vadd.f32 0.0, %v2885
  %v2887 = vpop.f32.mrb[0].mxu0
  %v2888 = vpop.f32.mrb[0].mxu0
  %v2889 = vadd.f32 0.0, %v2888
  %v2890 = vpop.f32.mrb[0].mxu0
  %2891 = vmatprep.mubr.bf16.mxu0 0
  %2892 = vmatmul.mubr.bf16.gmra.mrb[0].mxu0 %v2013
  %v2893 = vpop.f32.mrb[0].mxu0
  %v2894 = vadd.f32 0.0, %v2893
  %v2895 = vpop.f32.mrb[0].mxu0
  %v2896 = vpop.f32.mrb[0].mxu0
  %v2897 = vadd.f32 0.0, %v2896
  %v2898 = vpop.f32.mrb[0].mxu0
  %2899 = vmatprep.mubr.bf16.mxu0 0
  %2900 = vmatmul.mubr.bf16.gmra.mrb[0].mxu0 %v2016
  %v2901 = vpop.f32.mrb[0].mxu0
  %v2902 = vadd.f32 0.0, %v2901
  %v2903 = vpop.f32.mrb[0].mxu0
  %v2904 = vpop.f32.mrb[0].mxu0
  %v2905 = vadd.f32 0.0, %v2904
  %v2906 = vpop.f32.mrb[0].mxu0
  %2907 = vmatprep.mubr.bf16.mxu0 0
  %2908 = vmatmul.mubr.bf16.gmra.mrb[0].mxu0 %v2019
  %v2909 = vpop.f32.mrb[0].mxu0
  %v2910 = vadd.f32 0.0, %v2909
  %v2911 = vpop.f32.mrb[0].mxu0
  %v2912 = vpop.f32.mrb[0].mxu0
  %v2913 = vadd.f32 0.0, %v2912
  %v2914 = vpop.f32.mrb[0].mxu0
  %2915 = vmatprep.mubr.bf16.mxu0 0
  %2916 = vmatmul.mubr.bf16.gmra.mrb[0].mxu0 %v2022
  %v2917 = vpop.f32.mrb[0].mxu0
  %v2918 = vadd.f32 0.0, %v2917
  %v2919 = vpop.f32.mrb[0].mxu0
  %v2920 = vpop.f32.mrb[0].mxu0
  %v2921 = vadd.f32 0.0, %v2920
  %v2922 = vpop.f32.mrb[0].mxu0
  %2923 = vmatprep.mubr.bf16.mxu0 0
  %2924 = vmatmul.mubr.bf16.gmra.mrb[0].mxu0 %v2025
  %v2925 = vpop.f32.mrb[0].mxu0
  %v2926 = vadd.f32 0.0, %v2925
  %v2927 = vpop.f32.mrb[0].mxu0
  %v2928 = vpop.f32.mrb[0].mxu0
  %v2929 = vadd.f32 0.0, %v2928
  %v2930 = vpop.f32.mrb[0].mxu0
  %2931 = vmatprep.mubr.bf16.mxu0 0
  %2932 = vmatmul.mubr.bf16.gmra.mrb[0].mxu0 %v2028
  %v2933 = vpop.f32.mrb[0].mxu0
  %v2934 = vadd.f32 0.0, %v2933
  %v2935 = vpop.f32.mrb[0].mxu0
  %v2936 = vpop.f32.mrb[0].mxu0
  %v2937 = vadd.f32 0.0, %v2936
  %v2938 = vpop.f32.mrb[0].mxu0
  %2939 = vmatprep.mubr.bf16.mxu0 0
  %2940 = vmatmul.mubr.bf16.gmra.mrb[0].mxu0 %v2031
  %v2941 = vpop.f32.mrb[0].mxu0
  %v2942 = vadd.f32 0.0, %v2941
  %v2943 = vpop.f32.mrb[0].mxu0
  %v2944 = vpop.f32.mrb[0].mxu0
  %v2945 = vadd.f32 0.0, %v2944
  %v2946 = vpop.f32.mrb[0].mxu0
  %2947 = vmatprep.mubr.bf16.mxu0 0
  %2948 = vmatmul.mubr.bf16.gmra.mrb[0].mxu0 %v2034
  %v2949 = vpop.f32.mrb[0].mxu0
  %v2950 = vadd.f32 0.0, %v2949
  %v2951 = vpop.f32.mrb[0].mxu0
  %v2952 = vpop.f32.mrb[0].mxu0
  %v2953 = vadd.f32 0.0, %v2952
  %v2954 = vpop.f32.mrb[0].mxu0
  %2955 = vmatprep.mubr.bf16.mxu0 0
  %2956 = vmatmul.mubr.bf16.gmra.mrb[0].mxu0 %v2037
  %v2957 = vpop.f32.mrb[0].mxu0
  %v2958 = vadd.f32 0.0, %v2957
  %v2959 = vpop.f32.mrb[0].mxu0
  %v2960 = vpop.f32.mrb[0].mxu0
  %v2961 = vadd.f32 0.0, %v2960
  %v2962 = vpop.f32.mrb[0].mxu0
  %2963 = vmatprep.mubr.bf16.mxu0 0
  %2964 = vmatmul.mubr.bf16.gmra.mrb[0].mxu0 %v2040
  %v2965 = vpop.f32.mrb[0].mxu0
  %v2966 = vadd.f32 0.0, %v2965
  %v2967 = vpop.f32.mrb[0].mxu0
  %v2968 = vpop.f32.mrb[0].mxu0
  %v2969 = vadd.f32 0.0, %v2968
  %v2970 = vpop.f32.mrb[0].mxu0
  %2971 = vmatprep.mubr.bf16.mxu0 0
  %2972 = vmatmul.mubr.bf16.gmra.mrb[0].mxu0 %v2043
  %v2973 = vpop.f32.mrb[0].mxu0
  %v2974 = vadd.f32 0.0, %v2973
  %v2975 = vpop.f32.mrb[0].mxu0
  %v2976 = vpop.f32.mrb[0].mxu0
  %v2977 = vadd.f32 0.0, %v2976
  %v2978 = vpop.f32.mrb[0].mxu0
  %2979 = vmatprep.mubr.bf16.mxu0 0
  %2980 = vmatmul.mubr.bf16.gmra.mrb[0].mxu0 %v2046
  %v2981 = vpop.f32.mrb[0].mxu0
  %v2982 = vadd.f32 0.0, %v2981
  %v2983 = vpop.f32.mrb[0].mxu0
  %v2984 = vpop.f32.mrb[0].mxu0
  %v2985 = vadd.f32 0.0, %v2984
  %v2986 = vpop.f32.mrb[0].mxu0
  %2987 = vmatprep.mubr.bf16.mxu0 0
  %2988 = vmatmul.mubr.bf16.gmra.mrb[0].mxu0 %v2049
  %v2989 = vpop.f32.mrb[0].mxu0
  %v2990 = vadd.f32 0.0, %v2989
  %v2991 = vpop.f32.mrb[0].mxu0
  %v2992 = vpop.f32.mrb[0].mxu0
  %v2993 = vadd.f32 0.0, %v2992
  %v2994 = vpop.f32.mrb[0].mxu0
  %2995 = vmatprep.mubr.bf16.mxu0 0
  %2996 = vmatmul.mubr.bf16.gmra.mrb[0].mxu0 %v2052
  %v2997 = vpop.f32.mrb[0].mxu0
  %v2998 = vadd.f32 0.0, %v2997
  %v2999 = vpop.f32.mrb[0].mxu0
  %v3000 = vpop.f32.mrb[0].mxu0
  %v3001 = vadd.f32 0.0, %v3000
  %v3002 = vpop.f32.mrb[0].mxu0
  %3003 = vmatprep.mubr.bf16.mxu0 0
  %3004 = vmatmul.mubr.bf16.gmra.mrb[0].mxu0 %v2055
  %v3005 = vpop.f32.mrb[0].mxu0
  %v3006 = vadd.f32 0.0, %v3005
  %v3007 = vpop.f32.mrb[0].mxu0
  %v3008 = vpop.f32.mrb[0].mxu0
  %v3009 = vadd.f32 0.0, %v3008
  %v3010 = vpop.f32.mrb[0].mxu0
  %3011 = vmatprep.mubr.bf16.mxu0 0
  %3012 = vmatmul.mubr.bf16.gmra.mrb[0].mxu0 %v2058
  %v3013 = vpop.f32.mrb[0].mxu0
  %v3014 = vadd.f32 0.0, %v3013
  %v3015 = vpop.f32.mrb[0].mxu0
  %v3016 = vpop.f32.mrb[0].mxu0
  %v3017 = vadd.f32 0.0, %v3016
  %v3018 = vpop.f32.mrb[0].mxu0
  %3019 = vmatprep.mubr.bf16.mxu0 0
  %3020 = vmatmul.mubr.bf16.gmra.mrb[0].mxu0 %v2061
  %v3021 = vpop.f32.mrb[0].mxu0
  %v3022 = vadd.f32 0.0, %v3021
  %v3023 = vpop.f32.mrb[0].mxu0
  %v3024 = vpop.f32.mrb[0].mxu0
  %v3025 = vadd.f32 0.0, %v3024
  %v3026 = vpop.f32.mrb[0].mxu0
  %3027 = vmatprep.mubr.bf16.mxu0 0
  %3028 = vmatmul.mubr.bf16.gmra.mrb[0].mxu0 %v2064
  %v3029 = vpop.f32.mrb[0].mxu0
  %v3030 = vadd.f32 0.0, %v3029
  %v3031 = vpop.f32.mrb[0].mxu0
  %v3032 = vpop.f32.mrb[0].mxu0
  %v3033 = vadd.f32 0.0, %v3032
  %v3034 = vpop.f32.mrb[0].mxu0
  %3035 = vmatprep.mubr.bf16.mxu0 0
  %3036 = vmatmul.mubr.bf16.gmra.mrb[0].mxu0 %v2067
  %v3037 = vpop.f32.mrb[0].mxu0
  %v3038 = vadd.f32 0.0, %v3037
  %v3039 = vpop.f32.mrb[0].mxu0
  %v3040 = vpop.f32.mrb[0].mxu0
  %v3041 = vadd.f32 0.0, %v3040
  %v3042 = vpop.f32.mrb[0].mxu0
  %3043 = vmatprep.mubr.bf16.mxu0 0
  %3044 = vmatmul.mubr.bf16.gmra.mrb[0].mxu0 %v2070
  %v3045 = vpop.f32.mrb[0].mxu0
  %v3046 = vadd.f32 0.0, %v3045
  %v3047 = vpop.f32.mrb[0].mxu0
  %v3048 = vpop.f32.mrb[0].mxu0
  %v3049 = vadd.f32 0.0, %v3048
  %v3050 = vpop.f32.mrb[0].mxu0
  %3051 = vmatprep.mubr.bf16.mxu0 0
  %3052 = vmatmul.mubr.bf16.gmra.mrb[0].mxu0 %v2073
  %v3053 = vpop.f32.mrb[0].mxu0
  %v3054 = vadd.f32 0.0, %v3053
  %v3055 = vpop.f32.mrb[0].mxu0
  %v3056 = vpop.f32.mrb[0].mxu0
  %v3057 = vadd.f32 0.0, %v3056
  %v3058 = vpop.f32.mrb[0].mxu0
  %3059 = vmatprep.mubr.bf16.mxu0 0
  %3060 = vmatmul.mubr.bf16.gmra.mrb[0].mxu0 %v2076
  %v3061 = vpop.f32.mrb[0].mxu0
  %v3062 = vadd.f32 0.0, %v3061
  %v3063 = vpop.f32.mrb[0].mxu0
  %v3064 = vpop.f32.mrb[0].mxu0
  %v3065 = vadd.f32 0.0, %v3064
  %v3066 = vpop.f32.mrb[0].mxu0
  %3067 = vmatprep.mubr.bf16.mxu0 0
  %3068 = vmatmul.mubr.bf16.gmra.mrb[0].mxu0 %v2079
  %v3069 = vpop.f32.mrb[0].mxu0
  %v3070 = vadd.f32 0.0, %v3069
  %v3071 = vpop.f32.mrb[0].mxu0
  %v3072 = vpop.f32.mrb[0].mxu0
  %v3073 = vadd.f32 0.0, %v3072
  %v3074 = vpop.f32.mrb[0].mxu0
  %3075 = vmatprep.mubr.bf16.mxu0 0
  %3076 = vmatmul.mubr.bf16.gmra.mrb[0].mxu0 %v2082
  %v3077 = vpop.f32.mrb[0].mxu0
  %v3078 = vadd.f32 0.0, %v3077
  %v3079 = vpop.f32.mrb[0].mxu0
  %v3080 = vpop.f32.mrb[0].mxu0
  %v3081 = vadd.f32 0.0, %v3080
  %v3082 = vpop.f32.mrb[0].mxu0
  %3083 = vmatprep.mubr.bf16.mxu0 0
  %3084 = vmatmul.mubr.bf16.gmra.mrb[0].mxu0 %v2085
  %v3085 = vpop.f32.mrb[0].mxu0
  %v3086 = vadd.f32 0.0, %v3085
  %v3087 = vpop.f32.mrb[0].mxu0
  %v3088 = vpop.f32.mrb[0].mxu0
  %v3089 = vadd.f32 0.0, %v3088
  %v3090 = vpop.f32.mrb[0].mxu0
  %3091 = vmatprep.mubr.bf16.mxu0 0
  %3092 = vmatmul.mubr.bf16.gmra.mrb[0].mxu0 %v2088
  %v3093 = vpop.f32.mrb[0].mxu0
  %v3094 = vadd.f32 0.0, %v3093
  %v3095 = vpop.f32.mrb[0].mxu0
  %v3096 = vpop.f32.mrb[0].mxu0
  %v3097 = vadd.f32 0.0, %v3096
  %v3098 = vpop.f32.mrb[0].mxu0
  %3099 = vmatprep.mubr.bf16.mxu0 0
  %3100 = vmatmul.mubr.bf16.gmra.mrb[0].mxu0 %v2091
  %v3101 = vpop.f32.mrb[0].mxu0
  %v3102 = vadd.f32 0.0, %v3101
  %v3103 = vpop.f32.mrb[0].mxu0
  %v3104 = vpop.f32.mrb[0].mxu0
  %v3105 = vadd.f32 0.0, %v3104
  %v3106 = vpop.f32.mrb[0].mxu0
  %3107 = vmatprep.mubr.bf16.mxu0 0
  %3108 = vmatmul.mubr.bf16.gmra.mrb[0].mxu0 %v2094
  %v3109 = vpop.f32.mrb[0].mxu0
  %v3110 = vadd.f32 0.0, %v3109
  %v3111 = vpop.f32.mrb[0].mxu0
  %v3112 = vpop.f32.mrb[0].mxu0
  %v3113 = vadd.f32 0.0, %v3112
  %v3114 = vpop.f32.mrb[0].mxu0
  %3115 = vmatprep.mubr.bf16.mxu0 0
  %3116 = vmatmul.mubr.bf16.gmra.mrb[0].mxu0 %v2097
  %v3117 = vpop.f32.mrb[0].mxu0
  %v3118 = vadd.f32 0.0, %v3117
  %v3119 = vpop.f32.mrb[0].mxu0
  %v3120 = vpop.f32.mrb[0].mxu0
  %v3121 = vadd.f32 0.0, %v3120
  %v3122 = vpop.f32.mrb[0].mxu0
  %3123 = vmatprep.mubr.bf16.mxu0 0
  %3124 = vmatmul.mubr.bf16.gmra.mrb[0].mxu0 %v2100
  %v3125 = vpop.f32.mrb[0].mxu0
  %v3126 = vadd.f32 0.0, %v3125
  %v3127 = vpop.f32.mrb[0].mxu0
  %v3128 = vpop.f32.mrb[0].mxu0
  %v3129 = vadd.f32 0.0, %v3128
  %v3130 = vpop.f32.mrb[0].mxu0
  %3131 = vmatprep.mubr.bf16.mxu0 0
  %3132 = vmatmul.mubr.bf16.gmra.mrb[0].mxu0 %v2103
  %v3133 = vpop.f32.mrb[0].mxu0
  %v3134 = vadd.f32 0.0, %v3133
  %v3135 = vpop.f32.mrb[0].mxu0
  %v3136 = vpop.f32.mrb[0].mxu0
  %v3137 = vadd.f32 0.0, %v3136
  %v3138 = vpop.f32.mrb[0].mxu0
  %3139 = vmatprep.mubr.bf16.mxu0 0
  %3140 = vmatmul.mubr.bf16.gmra.mrb[0].mxu0 %v2106
  %v3141 = vpop.f32.mrb[0].mxu0
  %v3142 = vadd.f32 0.0, %v3141
  %v3143 = vpop.f32.mrb[0].mxu0
  %v3144 = vpop.f32.mrb[0].mxu0
  %v3145 = vadd.f32 0.0, %v3144
  %v3146 = vpop.f32.mrb[0].mxu0
  %3147 = vmatprep.mubr.bf16.mxu0 0
  %3148 = vmatmul.mubr.bf16.gmra.mrb[0].mxu0 %v2109
  %v3149 = vpop.f32.mrb[0].mxu0
  %v3150 = vadd.f32 0.0, %v3149
  %v3151 = vpop.f32.mrb[0].mxu0
  %v3152 = vpop.f32.mrb[0].mxu0
  %v3153 = vadd.f32 0.0, %v3152
  %v3154 = vpop.f32.mrb[0].mxu0
  %3155 = vmatprep.mubr.bf16.mxu0 0
  %3156 = vmatmul.mubr.bf16.gmra.mrb[0].mxu0 %v2112
  %v3157 = vpop.f32.mrb[0].mxu0
  %v3158 = vadd.f32 0.0, %v3157
  %v3159 = vpop.f32.mrb[0].mxu0
  %v3160 = vpop.f32.mrb[0].mxu0
  %v3161 = vadd.f32 0.0, %v3160
  %v3162 = vpop.f32.mrb[0].mxu0
  %3163 = vmatprep.mubr.bf16.mxu0 0
  %3164 = vmatmul.mubr.bf16.gmra.mrb[0].mxu0 %v2115
  %v3165 = vpop.f32.mrb[0].mxu0
  %v3166 = vadd.f32 0.0, %v3165
  %v3167 = vpop.f32.mrb[0].mxu0
  %v3168 = vpop.f32.mrb[0].mxu0
  %v3169 = vadd.f32 0.0, %v3168
  %v3170 = vpop.f32.mrb[0].mxu0
  %3171 = vmatprep.mubr.bf16.mxu0 0
  %3172 = vmatmul.mubr.bf16.gmra.mrb[0].mxu0 %v2118
  %v3173 = vpop.f32.mrb[0].mxu0
  %v3174 = vadd.f32 0.0, %v3173
  %v3175 = vpop.f32.mrb[0].mxu0
  %v3176 = vpop.f32.mrb[0].mxu0
  %v3177 = vadd.f32 0.0, %v3176
  %v3178 = vpop.f32.mrb[0].mxu0
  %3179 = vmatprep.mubr.bf16.mxu0 0
  %3180 = vmatmul.mubr.bf16.gmra.mrb[0].mxu0 %v2121
  %v3181 = vpop.f32.mrb[0].mxu0
  %v3182 = vadd.f32 0.0, %v3181
  %v3183 = vpop.f32.mrb[0].mxu0
  %v3184 = vpop.f32.mrb[0].mxu0
  %v3185 = vadd.f32 0.0, %v3184
  %v3186 = vpop.f32.mrb[0].mxu0
  %3187 = vmatprep.mubr.bf16.mxu0 0
  %3188 = vmatmul.mubr.bf16.gmra.mrb[0].mxu0 %v2124
  %v3189 = vpop.f32.mrb[0].mxu0
  %v3190 = vadd.f32 0.0, %v3189
  %v3191 = vpop.f32.mrb[0].mxu0
  %v3192 = vpop.f32.mrb[0].mxu0
  %v3193 = vadd.f32 0.0, %v3192
  %v3194 = vpop.f32.mrb[0].mxu0
  %3195 = vmatprep.mubr.bf16.mxu0 0
  %3196 = vmatmul.mubr.bf16.gmra.mrb[0].mxu0 %v2127
  %v3197 = vpop.f32.mrb[0].mxu0
  %v3198 = vadd.f32 0.0, %v3197
  %v3199 = vpop.f32.mrb[0].mxu0
  %v3200 = vpop.f32.mrb[0].mxu0
  %v3201 = vadd.f32 0.0, %v3200
  %v3202 = vpop.f32.mrb[0].mxu0
  %3203 = vmatprep.mubr.bf16.mxu0 0
  %3204 = vmatmul.mubr.bf16.gmra.mrb[0].mxu0 %v2130
  %v3205 = vpop.f32.mrb[0].mxu0
  %v3206 = vadd.f32 0.0, %v3205
  %v3207 = vpop.f32.mrb[0].mxu0
  %v3208 = vpop.f32.mrb[0].mxu0
  %v3209 = vadd.f32 0.0, %v3208
  %v3210 = vpop.f32.mrb[0].mxu0
  %3211 = vmatprep.mubr.bf16.mxu0 0
  %3212 = vmatmul.mubr.bf16.gmra.mrb[0].mxu0 %v2133
  %v3213 = vpop.f32.mrb[0].mxu0
  %v3214 = vadd.f32 0.0, %v3213
  %v3215 = vpop.f32.mrb[0].mxu0
  %v3216 = vpop.f32.mrb[0].mxu0
  %v3217 = vadd.f32 0.0, %v3216
  %v3218 = vpop.f32.mrb[0].mxu0
  %3219 = vmatprep.mubr.bf16.mxu0 0
  %3220 = vmatmul.mubr.bf16.gmra.mrb[0].mxu0 %v2136
  %v3221 = vpop.f32.mrb[0].mxu0
  %v3222 = vadd.f32 0.0, %v3221
  %v3223 = vpop.f32.mrb[0].mxu0
  %v3224 = vpop.f32.mrb[0].mxu0
  %v3225 = vadd.f32 0.0, %v3224
  %v3226 = vpop.f32.mrb[0].mxu0
  %3227 = vmatprep.mubr.bf16.mxu0 0
  %3228 = vmatmul.mubr.bf16.gmra.mrb[0].mxu0 %v2139
  %v3229 = vpop.f32.mrb[0].mxu0
  %v3230 = vadd.f32 0.0, %v3229
  %v3231 = vpop.f32.mrb[0].mxu0
  %v3232 = vpop.f32.mrb[0].mxu0
  %v3233 = vadd.f32 0.0, %v3232
  %v3234 = vpop.f32.mrb[0].mxu0
  %3235 = vmatprep.mubr.bf16.mxu0 0
  %3236 = vmatmul.mubr.bf16.gmra.mrb[0].mxu0 %v2142
  %v3237 = vpop.f32.mrb[0].mxu0
  %v3238 = vadd.f32 0.0, %v3237
  %v3239 = vpop.f32.mrb[0].mxu0
  %v3240 = vpop.f32.mrb[0].mxu0
  %v3241 = vadd.f32 0.0, %v3240
  %v3242 = vpop.f32.mrb[0].mxu0
  %3243 = vmatprep.mubr.bf16.mxu0 0
  %3244 = vmatmul.mubr.bf16.gmra.mrb[0].mxu0 %v2145
  %v3245 = vpop.f32.mrb[0].mxu0
  %v3246 = vadd.f32 0.0, %v3245
  %v3247 = vpop.f32.mrb[0].mxu0
  %v3248 = vpop.f32.mrb[0].mxu0
  %v3249 = vadd.f32 0.0, %v3248
  %v3250 = vpop.f32.mrb[0].mxu0
  %3251 = vmatprep.mubr.bf16.mxu0 0
  %3252 = vmatmul.mubr.bf16.gmra.mrb[0].mxu0 %v2148
  %v3253 = vpop.f32.mrb[0].mxu0
  %v3254 = vadd.f32 0.0, %v3253
  %v3255 = vpop.f32.mrb[0].mxu0
  %v3256 = vpop.f32.mrb[0].mxu0
  %v3257 = vadd.f32 0.0, %v3256
  %v3258 = vpop.f32.mrb[0].mxu0
  %3259 = vmatprep.mubr.bf16.mxu0 0
  %3260 = vmatmul.mubr.bf16.gmra.mrb[0].mxu0 %v2151
  %v3261 = vpop.f32.mrb[0].mxu0
  %v3262 = vadd.f32 0.0, %v3261
  %v3263 = vpop.f32.mrb[0].mxu0
  %v3264 = vpop.f32.mrb[0].mxu0
  %v3265 = vadd.f32 0.0, %v3264
  %v3266 = vpop.f32.mrb[0].mxu0
  %3267 = vmatprep.mubr.bf16.mxu0 0
  %3268 = vmatmul.mubr.bf16.gmra.mrb[0].mxu0 %v2154
  %v3269 = vpop.f32.mrb[0].mxu0
  %v3270 = vadd.f32 0.0, %v3269
  %v3271 = vpop.f32.mrb[0].mxu0
  %v3272 = vpop.f32.mrb[0].mxu0
  %v3273 = vadd.f32 0.0, %v3272
  %v3274 = vpop.f32.mrb[0].mxu0
  %3275 = vmatprep.mubr.bf16.mxu0 0
  %3276 = vmatmul.mubr.bf16.gmra.mrb[0].mxu0 %v2157
  %v3277 = vpop.f32.mrb[0].mxu0
  %v3278 = vadd.f32 0.0, %v3277
  %v3279 = vpop.f32.mrb[0].mxu0
  %v3280 = vpop.f32.mrb[0].mxu0
  %v3281 = vadd.f32 0.0, %v3280
  %v3282 = vpop.f32.mrb[0].mxu0
  %3283 = vmatprep.mubr.bf16.mxu0 0
  %3284 = vmatmul.mubr.bf16.gmra.mrb[0].mxu0 %v2160
  %v3285 = vpop.f32.mrb[0].mxu0
  %v3286 = vadd.f32 0.0, %v3285
  %v3287 = vpop.f32.mrb[0].mxu0
  %v3288 = vpop.f32.mrb[0].mxu0
  %v3289 = vadd.f32 0.0, %v3288
  %v3290 = vpop.f32.mrb[0].mxu0
  %3291 = vmatprep.mubr.bf16.mxu0 0
  %3292 = vmatmul.mubr.bf16.gmra.mrb[0].mxu0 %v2163
  %v3293 = vpop.f32.mrb[0].mxu0
  %v3294 = vadd.f32 0.0, %v3293
  %v3295 = vpop.f32.mrb[0].mxu0
  %v3296 = vpop.f32.mrb[0].mxu0
  %v3297 = vadd.f32 0.0, %v3296
  %v3298 = vpop.f32.mrb[0].mxu0
  %3299 = vmatprep.mubr.bf16.mxu0 0
  %3300 = vmatmul.mubr.bf16.gmra.mrb[0].mxu0 %v2166
  %v3301 = vpop.f32.mrb[0].mxu0
  %v3302 = vadd.f32 0.0, %v3301
  %v3303 = vpop.f32.mrb[0].mxu0
  %v3304 = vpop.f32.mrb[0].mxu0
  %v3305 = vadd.f32 0.0, %v3304
  %v3306 = vpop.f32.mrb[0].mxu0
  %3307 = vmatprep.mubr.bf16.mxu0 0
  %3308 = vmatmul.mubr.bf16.gmra.mrb[0].mxu0 %v2169
  %v3309 = vpop.f32.mrb[0].mxu0
  %v3310 = vadd.f32 0.0, %v3309
  %v3311 = vpop.f32.mrb[0].mxu0
  %v3312 = vpop.f32.mrb[0].mxu0
  %v3313 = vadd.f32 0.0, %v3312
  %v3314 = vpop.f32.mrb[0].mxu0
  %3315 = vmatprep.mubr.bf16.mxu0 0
  %3316 = vmatmul.mubr.bf16.gmra.mrb[0].mxu0 %v2172
  %v3317 = vpop.f32.mrb[0].mxu0
  %v3318 = vadd.f32 0.0, %v3317
  %v3319 = vpop.f32.mrb[0].mxu0
  %v3320 = vpop.f32.mrb[0].mxu0
  %v3321 = vadd.f32 0.0, %v3320
  %v3322 = vpop.f32.mrb[0].mxu0
  %3323 = vmatprep.mubr.bf16.mxu0 0
  %3324 = vmatmul.mubr.bf16.gmra.mrb[0].mxu0 %v2175
  %v3325 = vpop.f32.mrb[0].mxu0
  %v3326 = vadd.f32 0.0, %v3325
  %v3327 = vpop.f32.mrb[0].mxu0
  %v3328 = vpop.f32.mrb[0].mxu0
  %v3329 = vadd.f32 0.0, %v3328
  %v3330 = vpop.f32.mrb[0].mxu0
  %3331 = vmatprep.mubr.bf16.mxu0 0
  %3332 = vmatmul.mubr.bf16.gmra.mrb[0].mxu0 %v2178
  %v3333 = vpop.f32.mrb[0].mxu0
  %v3334 = vadd.f32 0.0, %v3333
  %v3335 = vpop.f32.mrb[0].mxu0
  %v3336 = vpop.f32.mrb[0].mxu0
  %v3337 = vadd.f32 0.0, %v3336
  %v3338 = vpop.f32.mrb[0].mxu0
  %3339 = vmatprep.mubr.bf16.mxu0 0
  %3340 = vmatmul.mubr.bf16.gmra.mrb[0].mxu0 %v2181
  %v3341 = vpop.f32.mrb[0].mxu0
  %v3342 = vadd.f32 0.0, %v3341
  %v3343 = vpop.f32.mrb[0].mxu0
  %v3344 = vpop.f32.mrb[0].mxu0
  %v3345 = vadd.f32 0.0, %v3344
  %v3346 = vpop.f32.mrb[0].mxu0
  %3347 = vmatprep.mubr.bf16.mxu0 0
  %3348 = vmatmul.mubr.bf16.gmra.mrb[0].mxu0 %v2184
  %v3349 = vpop.f32.mrb[0].mxu0
  %v3350 = vadd.f32 0.0, %v3349
  %v3351 = vpop.f32.mrb[0].mxu0
  %v3352 = vpop.f32.mrb[0].mxu0
  %v3353 = vadd.f32 0.0, %v3352
  %v3354 = vpop.f32.mrb[0].mxu0
  %3355 = vmatprep.mubr.bf16.mxu0 0
  %3356 = vmatmul.mubr.bf16.gmra.mrb[0].mxu0 %v2187
  %v3357 = vpop.f32.mrb[0].mxu0
  %v3358 = vadd.f32 0.0, %v3357
  %v3359 = vpop.f32.mrb[0].mxu0
  %v3360 = vpop.f32.mrb[0].mxu0
  %v3361 = vadd.f32 0.0, %v3360
  %v3362 = vpop.f32.mrb[0].mxu0
  %3363 = vmatprep.mubr.bf16.mxu0 0
  %3364 = vmatmul.mubr.bf16.gmra.mrb[0].mxu0 %v2190
  %v3365 = vpop.f32.mrb[0].mxu0
  %v3366 = vadd.f32 0.0, %v3365
  %v3367 = vpop.f32.mrb[0].mxu0
  %v3368 = vpop.f32.mrb[0].mxu0
  %v3369 = vadd.f32 0.0, %v3368
  %v3370 = vpop.f32.mrb[0].mxu0
  %3371 = vmatprep.mubr.bf16.mxu0 0
  %3372 = vmatmul.mubr.bf16.gmra.mrb[0].mxu0 %v2193
  %v3373 = vpop.f32.mrb[0].mxu0
  %v3374 = vadd.f32 0.0, %v3373
  %v3375 = vpop.f32.mrb[0].mxu0
  %v3376 = vpop.f32.mrb[0].mxu0
  %v3377 = vadd.f32 0.0, %v3376
  %v3378 = vpop.f32.mrb[0].mxu0
  %3379 = vmatprep.mubr.bf16.mxu0 0
  %3380 = vmatmul.mubr.bf16.gmra.mrb[0].mxu0 %v2196
  %v3381 = vpop.f32.mrb[0].mxu0
  %v3382 = vadd.f32 0.0, %v3381
  %v3383 = vpop.f32.mrb[0].mxu0
  %v3384 = vpop.f32.mrb[0].mxu0
  %v3385 = vadd.f32 0.0, %v3384
  %v3386 = vpop.f32.mrb[0].mxu0
  %3387 = vmatprep.mubr.bf16.mxu0 0
  %3388 = vmatmul.mubr.bf16.gmra.mrb[0].mxu0 %v2199
  %v3389 = vpop.f32.mrb[0].mxu0
  %v3390 = vadd.f32 0.0, %v3389
  %v3391 = vpop.f32.mrb[0].mxu0
  %v3392 = vpop.f32.mrb[0].mxu0
  %v3393 = vadd.f32 0.0, %v3392
  %v3394 = vpop.f32.mrb[0].mxu0
  %3395 = vmatprep.mubr.bf16.mxu0 0
  %3396 = vmatmul.mubr.bf16.gmra.mrb[0].mxu0 %v2202
  %v3397 = vpop.f32.mrb[0].mxu0
  %v3398 = vadd.f32 0.0, %v3397
  %v3399 = vpop.f32.mrb[0].mxu0
  %v3400 = vpop.f32.mrb[0].mxu0
  %v3401 = vadd.f32 0.0, %v3400
  %v3402 = vpop.f32.mrb[0].mxu0
  %3403 = vmatprep.mubr.bf16.mxu0 0
  %3404 = vmatmul.mubr.bf16.gmra.mrb[0].mxu0 %v2205
  %v3405 = vpop.f32.mrb[0].mxu0
  %v3406 = vadd.f32 0.0, %v3405
  %v3407 = vpop.f32.mrb[0].mxu0
  %v3408 = vpop.f32.mrb[0].mxu0
  %v3409 = vadd.f32 0.0, %v3408
  %v3410 = vpop.f32.mrb[0].mxu0
  %3411 = vmatprep.mubr.bf16.mxu0 0
  %3412 = vmatmul.mubr.bf16.gmra.mrb[0].mxu0 %v2208
  %v3413 = vpop.f32.mrb[0].mxu0
  %v3414 = vadd.f32 0.0, %v3413
  %v3415 = vpop.f32.mrb[0].mxu0
  %v3416 = vpop.f32.mrb[0].mxu0
  %v3417 = vadd.f32 0.0, %v3416
  %v3418 = vpop.f32.mrb[0].mxu0
  %3419 = vmatprep.mubr.bf16.mxu0 0
  %3420 = vmatmul.mubr.bf16.gmra.mrb[0].mxu0 %v2211
  %v3421 = vpop.f32.mrb[0].mxu0
  %v3422 = vadd.f32 0.0, %v3421
  %v3423 = vpop.f32.mrb[0].mxu0
  %v3424 = vpop.f32.mrb[0].mxu0
  %v3425 = vadd.f32 0.0, %v3424
  %v3426 = vpop.f32.mrb[0].mxu0
  %3427 = vmatprep.mubr.bf16.mxu0 0
  %3428 = vmatmul.mubr.bf16.gmra.mrb[0].mxu0 %v2214
  %v3429 = vpop.f32.mrb[0].mxu0
  %v3430 = vadd.f32 0.0, %v3429
  %v3431 = vpop.f32.mrb[0].mxu0
  %v3432 = vpop.f32.mrb[0].mxu0
  %v3433 = vadd.f32 0.0, %v3432
  %v3434 = vpop.f32.mrb[0].mxu0
  %3435 = vmatprep.mubr.bf16.mxu0 0
  %3436 = vmatmul.mubr.bf16.gmra.mrb[0].mxu0 %v2217
  %v3437 = vpop.f32.mrb[0].mxu0
  %v3438 = vadd.f32 0.0, %v3437
  %v3439 = vpop.f32.mrb[0].mxu0
  %v3440 = vpop.f32.mrb[0].mxu0
  %v3441 = vadd.f32 0.0, %v3440
  %v3442 = vpop.f32.mrb[0].mxu0
  %3443 = vmatprep.mubr.bf16.mxu0 0
  %3444 = vmatmul.mubr.bf16.gmra.mrb[0].mxu0 %v2220
  %v3445 = vpop.f32.mrb[0].mxu0
  %v3446 = vadd.f32 0.0, %v3445
  %v3447 = vpop.f32.mrb[0].mxu0
  %v3448 = vpop.f32.mrb[0].mxu0
  %v3449 = vadd.f32 0.0, %v3448
  %v3450 = vpop.f32.mrb[0].mxu0
  %3451 = vmatprep.mubr.bf16.mxu0 0
  %3452 = vmatmul.mubr.bf16.gmra.mrb[0].mxu0 %v2223
  %v3453 = vpop.f32.mrb[0].mxu0
  %v3454 = vadd.f32 0.0, %v3453
  %v3455 = vpop.f32.mrb[0].mxu0
  %v3456 = vpop.f32.mrb[0].mxu0
  %v3457 = vadd.f32 0.0, %v3456
  %v3458 = vpop.f32.mrb[0].mxu0
  %3459 = vmatprep.mubr.bf16.mxu0 0
  %3460 = vmatmul.mubr.bf16.gmra.mrb[0].mxu0 %v2226
  %v3461 = vpop.f32.mrb[0].mxu0
  %v3462 = vadd.f32 0.0, %v3461
  %v3463 = vpop.f32.mrb[0].mxu0
  %v3464 = vpop.f32.mrb[0].mxu0
  %v3465 = vadd.f32 0.0, %v3464
  %v3466 = vpop.f32.mrb[0].mxu0
  %3467 = vmatprep.mubr.bf16.mxu0 0
  %3468 = vmatmul.mubr.bf16.gmra.mrb[0].mxu0 %v2229
  %v3469 = vpop.f32.mrb[0].mxu0
  %v3470 = vadd.f32 0.0, %v3469
  %v3471 = vpop.f32.mrb[0].mxu0
  %v3472 = vpop.f32.mrb[0].mxu0
  %v3473 = vadd.f32 0.0, %v3472
  %v3474 = vpop.f32.mrb[0].mxu0
  %3475 = vmatprep.mubr.bf16.mxu0 0
  %3476 = vmatmul.mubr.bf16.gmra.mrb[0].mxu0 %v2232
  %v3477 = vpop.f32.mrb[0].mxu0
  %v3478 = vadd.f32 0.0, %v3477
  %v3479 = vpop.f32.mrb[0].mxu0
  %v3480 = vpop.f32.mrb[0].mxu0
  %v3481 = vadd.f32 0.0, %v3480
  %v3482 = vpop.f32.mrb[0].mxu0
  %3483 = vmatprep.mubr.bf16.mxu0 0
  %3484 = vmatmul.mubr.bf16.gmra.mrb[0].mxu0 %v2235
  %v3485 = vpop.f32.mrb[0].mxu0
  %v3486 = vadd.f32 0.0, %v3485
  %v3487 = vpop.f32.mrb[0].mxu0
  %v3488 = vpop.f32.mrb[0].mxu0
  %v3489 = vadd.f32 0.0, %v3488
  %v3490 = vpop.f32.mrb[0].mxu0
  %3491 = vmatprep.mubr.bf16.mxu0 0
  %3492 = vmatmul.mubr.bf16.gmra.mrb[0].mxu0 %v2238
  %v3493 = vpop.f32.mrb[0].mxu0
  %v3494 = vadd.f32 0.0, %v3493
  %v3495 = vpop.f32.mrb[0].mxu0
  %v3496 = vpop.f32.mrb[0].mxu0
  %v3497 = vadd.f32 0.0, %v3496
  %v3498 = vpop.f32.mrb[0].mxu0
  %3499 = vmatprep.mubr.bf16.mxu0 0
  %3500 = vmatmul.mubr.bf16.gmra.mrb[0].mxu0 %v2241
  %v3501 = vpop.f32.mrb[0].mxu0
  %v3502 = vadd.f32 0.0, %v3501
  %v3503 = vpop.f32.mrb[0].mxu0
  %v3504 = vpop.f32.mrb[0].mxu0
  %v3505 = vadd.f32 0.0, %v3504
  %v3506 = vpop.f32.mrb[0].mxu0
  %3507 = vmatprep.mubr.bf16.mxu0 0
  %3508 = vmatmul.mubr.bf16.gmra.mrb[0].mxu0 %v2244
  %v3509 = vpop.f32.mrb[0].mxu0
  %v3510 = vadd.f32 0.0, %v3509
  %v3511 = vpop.f32.mrb[0].mxu0
  %v3512 = vpop.f32.mrb[0].mxu0
  %v3513 = vadd.f32 0.0, %v3512
  %v3514 = vpop.f32.mrb[0].mxu0
  %3515 = vmatprep.mubr.bf16.mxu0 0
  %3516 = vmatmul.mubr.bf16.gmra.mrb[0].mxu0 %v2247
  %v3517 = vpop.f32.mrb[0].mxu0
  %v3518 = vadd.f32 0.0, %v3517
  %v3519 = vpop.f32.mrb[0].mxu0
  %v3520 = vpop.f32.mrb[0].mxu0
  %v3521 = vadd.f32 0.0, %v3520
  %v3522 = vpop.f32.mrb[0].mxu0
  %3523 = vmatprep.mubr.bf16.mxu0 0
  %3524 = vmatmul.mubr.bf16.gmra.mrb[0].mxu0 %v2250
  %v3525 = vpop.f32.mrb[0].mxu0
  %v3526 = vadd.f32 0.0, %v3525
  %v3527 = vpop.f32.mrb[0].mxu0
  %v3528 = vpop.f32.mrb[0].mxu0
  %v3529 = vadd.f32 0.0, %v3528
  %v3530 = vpop.f32.mrb[0].mxu0
  %3531 = vmatprep.mubr.bf16.mxu0 0
  %3532 = vmatmul.mubr.bf16.gmra.mrb[0].mxu0 %v2253
  %v3533 = vpop.f32.mrb[0].mxu0
  %v3534 = vadd.f32 0.0, %v3533
  %v3535 = vpop.f32.mrb[0].mxu0
  %v3536 = vpop.f32.mrb[0].mxu0
  %v3537 = vadd.f32 0.0, %v3536
  %v3538 = vpop.f32.mrb[0].mxu0
  %3539 = vmatprep.mubr.bf16.mxu0 0
  %3540 = vmatmul.mubr.bf16.gmra.mrb[0].mxu0 %v2256
  %v3541 = vpop.f32.mrb[0].mxu0
  %v3542 = vadd.f32 0.0, %v3541
  %v3543 = vpop.f32.mrb[0].mxu0
  %v3544 = vpop.f32.mrb[0].mxu0
  %v3545 = vadd.f32 0.0, %v3544
  %v3546 = vpop.f32.mrb[0].mxu0
  %3547 = vmatprep.mubr.bf16.mxu0 0
  %3548 = vmatmul.mubr.bf16.gmra.mrb[0].mxu0 %v2259
  %v3549 = vpop.f32.mrb[0].mxu0
  %v3550 = vadd.f32 0.0, %v3549
  %v3551 = vpop.f32.mrb[0].mxu0
  %v3552 = vpop.f32.mrb[0].mxu0
  %v3553 = vadd.f32 0.0, %v3552
  %v3554 = vpop.f32.mrb[0].mxu0
  %3555 = vmatprep.mubr.bf16.mxu0 0
  %3556 = vmatmul.mubr.bf16.gmra.mrb[0].mxu0 %v2262
  %v3557 = vpop.f32.mrb[0].mxu0
  %v3558 = vadd.f32 0.0, %v3557
  %v3559 = vpop.f32.mrb[0].mxu0
  %v3560 = vpop.f32.mrb[0].mxu0
  %v3561 = vadd.f32 0.0, %v3560
  %v3562 = vpop.f32.mrb[0].mxu0
  %3563 = vmatprep.mubr.bf16.mxu0 0
  %3564 = vmatmul.mubr.bf16.gmra.mrb[0].mxu0 %v2265
  %v3565 = vpop.f32.mrb[0].mxu0
  %v3566 = vadd.f32 0.0, %v3565
  %v3567 = vpop.f32.mrb[0].mxu0
  %v3568 = vpop.f32.mrb[0].mxu0
  %v3569 = vadd.f32 0.0, %v3568
  %v3570 = vpop.f32.mrb[0].mxu0
  %3571 = vmatprep.mubr.bf16.mxu0 0
  %3572 = vmatmul.mubr.bf16.gmra.mrb[0].mxu0 %v2268
  %v3573 = vpop.f32.mrb[0].mxu0
  %v3574 = vadd.f32 0.0, %v3573
  %v3575 = vpop.f32.mrb[0].mxu0
  %v3576 = vpop.f32.mrb[0].mxu0
  %v3577 = vadd.f32 0.0, %v3576
  %v3578 = vpop.f32.mrb[0].mxu0
  %3579 = vmatprep.mubr.bf16.mxu0 0
  %3580 = vmatmul.mubr.bf16.gmra.mrb[0].mxu0 %v2271
  %v3581 = vpop.f32.mrb[0].mxu0
  %v3582 = vadd.f32 0.0, %v3581
  %v3583 = vpop.f32.mrb[0].mxu0
  %v3584 = vpop.f32.mrb[0].mxu0
  %v3585 = vadd.f32 0.0, %v3584
  %v3586 = vpop.f32.mrb[0].mxu0
  %3587 = vmatprep.mubr.bf16.mxu0 0
  %3588 = vmatmul.mubr.bf16.gmra.mrb[0].mxu0 %v2274
  %v3589 = vpop.f32.mrb[0].mxu0
  %v3590 = vadd.f32 0.0, %v3589
  %v3591 = vpop.f32.mrb[0].mxu0
  %v3592 = vpop.f32.mrb[0].mxu0
  %v3593 = vadd.f32 0.0, %v3592
  %v3594 = vpop.f32.mrb[0].mxu0
  %3595 = vdwg.mxu0
  %v3596 = vadd.f32 %v340, %v2318
  %v3597 = vadd.f32 %v341, %v2321
  %v3598 = vadd.f32 %v342, %v2326
  %v3599 = vadd.f32 %v343, %v2329
  %v3600 = vadd.f32 %v344, %v2334
  %v3601 = vadd.f32 %v345, %v2337
  %v3602 = vadd.f32 %v346, %v2342
  %v3603 = vadd.f32 %v347, %v2345
  %v3604 = vadd.f32 %v348, %v2350
  %v3605 = vadd.f32 %v349, %v2353
  %v3606 = vadd.f32 %v350, %v2358
  %v3607 = vadd.f32 %v351, %v2361
  %v3608 = vadd.f32 %v352, %v2366
  %v3609 = vadd.f32 %v353, %v2369
  %v3610 = vadd.f32 %v354, %v2374
  %v3611 = vadd.f32 %v355, %v2377
  %v3612 = vadd.f32 %v356, %v2382
  %v3613 = vadd.f32 %v357, %v2385
  %v3614 = vadd.f32 %v358, %v2390
  %v3615 = vadd.f32 %v359, %v2393
  %v3616 = vadd.f32 %v360, %v2398
  %v3617 = vadd.f32 %v361, %v2401
  %v3618 = vadd.f32 %v362, %v2406
  %v3619 = vadd.f32 %v363, %v2409
  %v3620 = vadd.f32 %v364, %v2414
  %v3621 = vadd.f32 %v365, %v2417
  %v3622 = vadd.f32 %v366, %v2422
  %v3623 = vadd.f32 %v367, %v2425
  %v3624 = vadd.f32 %v368, %v2430
  %v3625 = vadd.f32 %v369, %v2433
  %v3626 = vadd.f32 %v370, %v2438
  %v3627 = vadd.f32 %v371, %v2441
  %v3628 = vadd.f32 %v372, %v2446
  %v3629 = vadd.f32 %v373, %v2449
  %v3630 = vadd.f32 %v374, %v2454
  %v3631 = vadd.f32 %v375, %v2457
  %v3632 = vadd.f32 %v376, %v2462
  %v3633 = vadd.f32 %v377, %v2465
  %v3634 = vadd.f32 %v378, %v2470
  %v3635 = vadd.f32 %v379, %v2473
  %v3636 = vadd.f32 %v380, %v2478
  %v3637 = vadd.f32 %v381, %v2481
  %v3638 = vadd.f32 %v382, %v2486
  %v3639 = vadd.f32 %v383, %v2489
  %v3640 = vadd.f32 %v384, %v2494
  %v3641 = vadd.f32 %v385, %v2497
  %v3642 = vadd.f32 %v386, %v2502
  %v3643 = vadd.f32 %v387, %v2505
  %v3644 = vadd.f32 %v388, %v2510
  %v3645 = vadd.f32 %v389, %v2513
  %v3646 = vadd.f32 %v390, %v2518
  %v3647 = vadd.f32 %v391, %v2521
  %v3648 = vadd.f32 %v392, %v2526
  %v3649 = vadd.f32 %v393, %v2529
  %v3650 = vadd.f32 %v394, %v2534
  %v3651 = vadd.f32 %v395, %v2537
  %v3652 = vadd.f32 %v396, %v2542
  %v3653 = vadd.f32 %v397, %v2545
  %v3654 = vadd.f32 %v398, %v2550
  %v3655 = vadd.f32 %v399, %v2553
  %v3656 = vadd.f32 %v400, %v2558
  %v3657 = vadd.f32 %v401, %v2561
  %v3658 = vadd.f32 %v402, %v2566
  %v3659 = vadd.f32 %v403, %v2569
  %v3660 = vadd.f32 %v404, %v2574
  %v3661 = vadd.f32 %v405, %v2577
  %v3662 = vadd.f32 %v406, %v2582
  %v3663 = vadd.f32 %v407, %v2585
  %v3664 = vadd.f32 %v408, %v2590
  %v3665 = vadd.f32 %v409, %v2593
  %v3666 = vadd.f32 %v410, %v2598
  %v3667 = vadd.f32 %v411, %v2601
  %v3668 = vadd.f32 %v412, %v2606
  %v3669 = vadd.f32 %v413, %v2609
  %v3670 = vadd.f32 %v414, %v2614
  %v3671 = vadd.f32 %v415, %v2617
  %v3672 = vadd.f32 %v416, %v2622
  %v3673 = vadd.f32 %v417, %v2625
  %v3674 = vadd.f32 %v418, %v2630
  %v3675 = vadd.f32 %v419, %v2633
  %v3676 = vadd.f32 %v420, %v2638
  %v3677 = vadd.f32 %v421, %v2641
  %v3678 = vadd.f32 %v422, %v2646
  %v3679 = vadd.f32 %v423, %v2649
  %v3680 = vadd.f32 %v424, %v2654
  %v3681 = vadd.f32 %v425, %v2657
  %v3682 = vadd.f32 %v426, %v2662
  %v3683 = vadd.f32 %v427, %v2665
  %v3684 = vadd.f32 %v428, %v2670
  %v3685 = vadd.f32 %v429, %v2673
  %v3686 = vadd.f32 %v430, %v2678
  %v3687 = vadd.f32 %v431, %v2681
  %v3688 = vadd.f32 %v432, %v2686
  %v3689 = vadd.f32 %v433, %v2689
  %v3690 = vadd.f32 %v434, %v2694
  %v3691 = vadd.f32 %v435, %v2697
  %v3692 = vadd.f32 %v436, %v2702
  %v3693 = vadd.f32 %v437, %v2705
  %v3694 = vadd.f32 %v438, %v2710
  %v3695 = vadd.f32 %v439, %v2713
  %v3696 = vadd.f32 %v440, %v2718
  %v3697 = vadd.f32 %v441, %v2721
  %v3698 = vadd.f32 %v442, %v2726
  %v3699 = vadd.f32 %v443, %v2729
  %v3700 = vadd.f32 %v444, %v2734
  %v3701 = vadd.f32 %v445, %v2737
  %v3702 = vadd.f32 %v446, %v2742
  %v3703 = vadd.f32 %v447, %v2745
  %v3704 = vadd.f32 %v448, %v2750
  %v3705 = vadd.f32 %v449, %v2753
  %v3706 = vadd.f32 %v450, %v2758
  %v3707 = vadd.f32 %v451, %v2761
  %v3708 = vadd.f32 %v452, %v2766
  %v3709 = vadd.f32 %v453, %v2769
  %v3710 = vadd.f32 %v454, %v2774
  %v3711 = vadd.f32 %v455, %v2777
  %v3712 = vadd.f32 %v456, %v2782
  %v3713 = vadd.f32 %v457, %v2785
  %v3714 = vadd.f32 %v458, %v2790
  %v3715 = vadd.f32 %v459, %v2793
  %v3716 = vadd.f32 %v460, %v2798
  %v3717 = vadd.f32 %v461, %v2801
  %v3718 = vadd.f32 %v462, %v2806
  %v3719 = vadd.f32 %v463, %v2809
  %v3720 = vadd.f32 %v464, %v2814
  %v3721 = vadd.f32 %v465, %v2817
  %v3722 = vadd.f32 %v466, %v2822
  %v3723 = vadd.f32 %v467, %v2825
  %v3724 = vadd.f32 %v468, %v2830
  %v3725 = vadd.f32 %v469, %v2833
  %v3726 = vadd.f32 %v470, %v2838
  %v3727 = vadd.f32 %v471, %v2841
  %v3728 = vadd.f32 %v472, %v2846
  %v3729 = vadd.f32 %v473, %v2849
  %v3730 = vadd.f32 %v474, %v2854
  %v3731 = vadd.f32 %v475, %v2857
  %v3732 = vadd.f32 %v476, %v2862
  %v3733 = vadd.f32 %v477, %v2865
  %v3734 = vadd.f32 %v478, %v2870
  %v3735 = vadd.f32 %v479, %v2873
  %v3736 = vadd.f32 %v480, %v2878
  %v3737 = vadd.f32 %v481, %v2881
  %v3738 = vadd.f32 %v482, %v2886
  %v3739 = vadd.f32 %v483, %v2889
  %v3740 = vadd.f32 %v484, %v2894
  %v3741 = vadd.f32 %v485, %v2897
  %v3742 = vadd.f32 %v486, %v2902
  %v3743 = vadd.f32 %v487, %v2905
  %v3744 = vadd.f32 %v488, %v2910
  %v3745 = vadd.f32 %v489, %v2913
  %v3746 = vadd.f32 %v490, %v2918
  %v3747 = vadd.f32 %v491, %v2921
  %v3748 = vadd.f32 %v492, %v2926
  %v3749 = vadd.f32 %v493, %v2929
  %v3750 = vadd.f32 %v494, %v2934
  %v3751 = vadd.f32 %v495, %v2937
  %v3752 = vadd.f32 %v496, %v2942
  %v3753 = vadd.f32 %v497, %v2945
  %v3754 = vadd.f32 %v498, %v2950
  %v3755 = vadd.f32 %v499, %v2953
  %v3756 = vadd.f32 %v500, %v2958
  %v3757 = vadd.f32 %v501, %v2961
  %v3758 = vadd.f32 %v502, %v2966
  %v3759 = vadd.f32 %v503, %v2969
  %v3760 = vadd.f32 %v504, %v2974
  %v3761 = vadd.f32 %v505, %v2977
  %v3762 = vadd.f32 %v506, %v2982
  %v3763 = vadd.f32 %v507, %v2985
  %v3764 = vadd.f32 %v508, %v2990
  %v3765 = vadd.f32 %v509, %v2993
  %v3766 = vadd.f32 %v510, %v2998
  %v3767 = vadd.f32 %v511, %v3001
  %v3768 = vadd.f32 %v512, %v3006
  %v3769 = vadd.f32 %v513, %v3009
  %v3770 = vadd.f32 %v514, %v3014
  %v3771 = vadd.f32 %v515, %v3017
  %v3772 = vadd.f32 %v516, %v3022
  %v3773 = vadd.f32 %v517, %v3025
  %v3774 = vadd.f32 %v518, %v3030
  %v3775 = vadd.f32 %v519, %v3033
  %v3776 = vadd.f32 %v520, %v3038
  %v3777 = vadd.f32 %v521, %v3041
  %v3778 = vadd.f32 %v522, %v3046
  %v3779 = vadd.f32 %v523, %v3049
  %v3780 = vadd.f32 %v524, %v3054
  %v3781 = vadd.f32 %v525, %v3057
  %v3782 = vadd.f32 %v526, %v3062
  %v3783 = vadd.f32 %v527, %v3065
  %v3784 = vadd.f32 %v528, %v3070
  %v3785 = vadd.f32 %v529, %v3073
  %v3786 = vadd.f32 %v530, %v3078
  %v3787 = vadd.f32 %v531, %v3081
  %v3788 = vadd.f32 %v532, %v3086
  %v3789 = vadd.f32 %v533, %v3089
  %v3790 = vadd.f32 %v534, %v3094
  %v3791 = vadd.f32 %v535, %v3097
  %v3792 = vadd.f32 %v536, %v3102
  %v3793 = vadd.f32 %v537, %v3105
  %v3794 = vadd.f32 %v538, %v3110
  %v3795 = vadd.f32 %v539, %v3113
  %v3796 = vadd.f32 %v540, %v3118
  %v3797 = vadd.f32 %v541, %v3121
  %v3798 = vadd.f32 %v542, %v3126
  %v3799 = vadd.f32 %v543, %v3129
  %v3800 = vadd.f32 %v544, %v3134
  %v3801 = vadd.f32 %v545, %v3137
  %v3802 = vadd.f32 %v546, %v3142
  %v3803 = vadd.f32 %v547, %v3145
  %v3804 = vadd.f32 %v548, %v3150
  %v3805 = vadd.f32 %v549, %v3153
  %v3806 = vadd.f32 %v550, %v3158
  %v3807 = vadd.f32 %v551, %v3161
  %v3808 = vadd.f32 %v552, %v3166
  %v3809 = vadd.f32 %v553, %v3169
  %v3810 = vadd.f32 %v554, %v3174
  %v3811 = vadd.f32 %v555, %v3177
  %v3812 = vadd.f32 %v556, %v3182
  %v3813 = vadd.f32 %v557, %v3185
  %v3814 = vadd.f32 %v558, %v3190
  %v3815 = vadd.f32 %v559, %v3193
  %v3816 = vadd.f32 %v560, %v3198
  %v3817 = vadd.f32 %v561, %v3201
  %v3818 = vadd.f32 %v562, %v3206
  %v3819 = vadd.f32 %v563, %v3209
  %v3820 = vadd.f32 %v564, %v3214
  %v3821 = vadd.f32 %v565, %v3217
  %v3822 = vadd.f32 %v566, %v3222
  %v3823 = vadd.f32 %v567, %v3225
  %v3824 = vadd.f32 %v568, %v3230
  %v3825 = vadd.f32 %v569, %v3233
  %v3826 = vadd.f32 %v570, %v3238
  %v3827 = vadd.f32 %v571, %v3241
  %v3828 = vadd.f32 %v572, %v3246
  %v3829 = vadd.f32 %v573, %v3249
  %v3830 = vadd.f32 %v574, %v3254
  %v3831 = vadd.f32 %v575, %v3257
  %v3832 = vadd.f32 %v576, %v3262
  %v3833 = vadd.f32 %v577, %v3265
  %v3834 = vadd.f32 %v578, %v3270
  %v3835 = vadd.f32 %v579, %v3273
  %v3836 = vadd.f32 %v580, %v3278
  %v3837 = vadd.f32 %v581, %v3281
  %v3838 = vadd.f32 %v582, %v3286
  %v3839 = vadd.f32 %v583, %v3289
  %v3840 = vadd.f32 %v584, %v3294
  %v3841 = vadd.f32 %v585, %v3297
  %v3842 = vadd.f32 %v586, %v3302
  %v3843 = vadd.f32 %v587, %v3305
  %v3844 = vadd.f32 %v588, %v3310
  %v3845 = vadd.f32 %v589, %v3313
  %v3846 = vadd.f32 %v590, %v3318
  %v3847 = vadd.f32 %v591, %v3321
  %v3848 = vadd.f32 %v592, %v3326
  %v3849 = vadd.f32 %v593, %v3329
  %v3850 = vadd.f32 %v594, %v3334
  %v3851 = vadd.f32 %v595, %v3337
  %v3852 = vadd.f32 %v596, %v3342
  %v3853 = vadd.f32 %v597, %v3345
  %v3854 = vadd.f32 %v598, %v3350
  %v3855 = vadd.f32 %v599, %v3353
  %v3856 = vadd.f32 %v600, %v3358
  %v3857 = vadd.f32 %v601, %v3361
  %v3858 = vadd.f32 %v602, %v3366
  %v3859 = vadd.f32 %v603, %v3369
  %v3860 = vadd.f32 %v604, %v3374
  %v3861 = vadd.f32 %v605, %v3377
  %v3862 = vadd.f32 %v606, %v3382
  %v3863 = vadd.f32 %v607, %v3385
  %v3864 = vadd.f32 %v608, %v3390
  %v3865 = vadd.f32 %v609, %v3393
  %v3866 = vadd.f32 %v610, %v3398
  %v3867 = vadd.f32 %v611, %v3401
  %v3868 = vadd.f32 %v612, %v3406
  %v3869 = vadd.f32 %v613, %v3409
  %v3870 = vadd.f32 %v614, %v3414
  %v3871 = vadd.f32 %v615, %v3417
  %v3872 = vadd.f32 %v616, %v3422
  %v3873 = vadd.f32 %v617, %v3425
  %v3874 = vadd.f32 %v618, %v3430
  %v3875 = vadd.f32 %v619, %v3433
  %v3876 = vadd.f32 %v620, %v3438
  %v3877 = vadd.f32 %v621, %v3441
  %v3878 = vadd.f32 %v622, %v3446
  %v3879 = vadd.f32 %v623, %v3449
  %v3880 = vadd.f32 %v624, %v3454
  %v3881 = vadd.f32 %v625, %v3457
  %v3882 = vadd.f32 %v626, %v3462
  %v3883 = vadd.f32 %v627, %v3465
  %v3884 = vadd.f32 %v628, %v3470
  %v3885 = vadd.f32 %v629, %v3473
  %v3886 = vadd.f32 %v630, %v3478
  %v3887 = vadd.f32 %v631, %v3481
  %v3888 = vadd.f32 %v632, %v3486
  %v3889 = vadd.f32 %v633, %v3489
  %v3890 = vadd.f32 %v634, %v3494
  %v3891 = vadd.f32 %v635, %v3497
  %v3892 = vadd.f32 %v636, %v3502
  %v3893 = vadd.f32 %v637, %v3505
  %v3894 = vadd.f32 %v638, %v3510
  %v3895 = vadd.f32 %v639, %v3513
  %v3896 = vadd.f32 %v640, %v3518
  %v3897 = vadd.f32 %v641, %v3521
  %v3898 = vadd.f32 %v642, %v3526
  %v3899 = vadd.f32 %v643, %v3529
  %v3900 = vadd.f32 %v644, %v3534
  %v3901 = vadd.f32 %v645, %v3537
  %v3902 = vadd.f32 %v646, %v3542
  %v3903 = vadd.f32 %v647, %v3545
  %v3904 = vadd.f32 %v648, %v3550
  %v3905 = vadd.f32 %v649, %v3553
  %v3906 = vadd.f32 %v650, %v3558
  %v3907 = vadd.f32 %v651, %v3561
  %v3908 = vadd.f32 %v652, %v3566
  %v3909 = vadd.f32 %v653, %v3569
  %v3910 = vadd.f32 %v654, %v3574
  %v3911 = vadd.f32 %v655, %v3577
  %v3912 = vadd.f32 %v656, %v3582
  %v3913 = vadd.f32 %v657, %v3585
  %v3914 = vadd.f32 %v658, %v3590
  %v3915 = vadd.f32 %v659, %v3593
  %vm3916 = vcmask 64512
  %3917 = vst.msk [vmem:[#allocation2] sm:$0xff] %vm3916, %v3596
  %3918 = vst.msk [vmem:[#allocation2 + $0x8] sm:$0xff] %vm3916, %v3597
  %3919 = vst.msk [vmem:[#allocation2 + $0x10] sm:$0xff] %vm3916, %v3598
  %3920 = vst.msk [vmem:[#allocation2 + $0x18] sm:$0xff] %vm3916, %v3599
  %3921 = vst.msk [vmem:[#allocation2 + $0x20] sm:$0xff] %vm3916, %v3600
  %3922 = vst.msk [vmem:[#allocation2 + $0x28] sm:$0xff] %vm3916, %v3601
  %3923 = vst.msk [vmem:[#allocation2 + $0x30] sm:$0xff] %vm3916, %v3602
  %3924 = vst.msk [vmem:[#allocation2 + $0x38] sm:$0xff] %vm3916, %v3603
  %3925 = vst.msk [vmem:[#allocation2 + $0x40] sm:$0xff] %vm3916, %v3604
  %3926 = vst.msk [vmem:[#allocation2 + $0x48] sm:$0xff] %vm3916, %v3605
  %3927 = vst.msk [vmem:[#allocation2 + $0x50] sm:$0xff] %vm3916, %v3606
  %3928 = vst.msk [vmem:[#allocation2 + $0x58] sm:$0xff] %vm3916, %v3607
  %3929 = vst.msk [vmem:[#allocation2 + $0x60] sm:$0xff] %vm3916, %v3608
  %3930 = vst.msk [vmem:[#allocation2 + $0x68] sm:$0xff] %vm3916, %v3609
  %3931 = vst.msk [vmem:[#allocation2 + $0x70] sm:$0xff] %vm3916, %v3610
  %3932 = vst.msk [vmem:[#allocation2 + $0x78] sm:$0xff] %vm3916, %v3611
  %3933 = vst.msk [vmem:[#allocation2 + $0x80] sm:$0xff] %vm3916, %v3612
  %3934 = vst.msk [vmem:[#allocation2 + $0x88] sm:$0xff] %vm3916, %v3613
  %3935 = vst.msk [vmem:[#allocation2 + $0x90] sm:$0xff] %vm3916, %v3614
  %3936 = vst.msk [vmem:[#allocation2 + $0x98] sm:$0xff] %vm3916, %v3615
  %3937 = vst.msk [vmem:[#allocation2 + $0xa0] sm:$0xff] %vm3916, %v3616
  %3938 = vst.msk [vmem:[#allocation2 + $0xa8] sm:$0xff] %vm3916, %v3617
  %3939 = vst.msk [vmem:[#allocation2 + $0xb0] sm:$0xff] %vm3916, %v3618
  %3940 = vst.msk [vmem:[#allocation2 + $0xb8] sm:$0xff] %vm3916, %v3619
  %3941 = vst.msk [vmem:[#allocation2 + $0xc0] sm:$0xff] %vm3916, %v3620
  %3942 = vst.msk [vmem:[#allocation2 + $0xc8] sm:$0xff] %vm3916, %v3621
  %3943 = vst.msk [vmem:[#allocation2 + $0xd0] sm:$0xff] %vm3916, %v3622
  %3944 = vst.msk [vmem:[#allocation2 + $0xd8] sm:$0xff] %vm3916, %v3623
  %3945 = vst.msk [vmem:[#allocation2 + $0xe0] sm:$0xff] %vm3916, %v3624
  %3946 = vst.msk [vmem:[#allocation2 + $0xe8] sm:$0xff] %vm3916, %v3625
  %3947 = vst.msk [vmem:[#allocation2 + $0xf0] sm:$0xff] %vm3916, %v3626
  %3948 = vst.msk [vmem:[#allocation2 + $0xf8] sm:$0xff] %vm3916, %v3627
  %3949 = vst.msk [vmem:[#allocation2 + $0x100] sm:$0xff] %vm3916, %v3628
  %3950 = vst.msk [vmem:[#allocation2 + $0x108] sm:$0xff] %vm3916, %v3629
  %3951 = vst.msk [vmem:[#allocation2 + $0x110] sm:$0xff] %vm3916, %v3630
  %3952 = vst.msk [vmem:[#allocation2 + $0x118] sm:$0xff] %vm3916, %v3631
  %3953 = vst.msk [vmem:[#allocation2 + $0x120] sm:$0xff] %vm3916, %v3632
  %3954 = vst.msk [vmem:[#allocation2 + $0x128] sm:$0xff] %vm3916, %v3633
  %3955 = vst.msk [vmem:[#allocation2 + $0x130] sm:$0xff] %vm3916, %v3634
  %3956 = vst.msk [vmem:[#allocation2 + $0x138] sm:$0xff] %vm3916, %v3635
  %3957 = vst.msk [vmem:[#allocation2 + $0x140] sm:$0xff] %vm3916, %v3636
  %3958 = vst.msk [vmem:[#allocation2 + $0x148] sm:$0xff] %vm3916, %v3637
  %3959 = vst.msk [vmem:[#allocation2 + $0x150] sm:$0xff] %vm3916, %v3638
  %3960 = vst.msk [vmem:[#allocation2 + $0x158] sm:$0xff] %vm3916, %v3639
  %3961 = vst.msk [vmem:[#allocation2 + $0x160] sm:$0xff] %vm3916, %v3640
  %3962 = vst.msk [vmem:[#allocation2 + $0x168] sm:$0xff] %vm3916, %v3641
  %3963 = vst.msk [vmem:[#allocation2 + $0x170] sm:$0xff] %vm3916, %v3642
  %3964 = vst.msk [vmem:[#allocation2 + $0x178] sm:$0xff] %vm3916, %v3643
  %3965 = vst.msk [vmem:[#allocation2 + $0x180] sm:$0xff] %vm3916, %v3644
  %3966 = vst.msk [vmem:[#allocation2 + $0x188] sm:$0xff] %vm3916, %v3645
  %3967 = vst.msk [vmem:[#allocation2 + $0x190] sm:$0xff] %vm3916, %v3646
  %3968 = vst.msk [vmem:[#allocation2 + $0x198] sm:$0xff] %vm3916, %v3647
  %3969 = vst.msk [vmem:[#allocation2 + $0x1a0] sm:$0xff] %vm3916, %v3648
  %3970 = vst.msk [vmem:[#allocation2 + $0x1a8] sm:$0xff] %vm3916, %v3649
  %3971 = vst.msk [vmem:[#allocation2 + $0x1b0] sm:$0xff] %vm3916, %v3650
  %3972 = vst.msk [vmem:[#allocation2 + $0x1b8] sm:$0xff] %vm3916, %v3651
  %3973 = vst.msk [vmem:[#allocation2 + $0x1c0] sm:$0xff] %vm3916, %v3652
  %3974 = vst.msk [vmem:[#allocation2 + $0x1c8] sm:$0xff] %vm3916, %v3653
  %3975 = vst.msk [vmem:[#allocation2 + $0x1d0] sm:$0xff] %vm3916, %v3654
  %3976 = vst.msk [vmem:[#allocation2 + $0x1d8] sm:$0xff] %vm3916, %v3655
  %3977 = vst.msk [vmem:[#allocation2 + $0x1e0] sm:$0xff] %vm3916, %v3656
  %3978 = vst.msk [vmem:[#allocation2 + $0x1e8] sm:$0xff] %vm3916, %v3657
  %3979 = vst.msk [vmem:[#allocation2 + $0x1f0] sm:$0xff] %vm3916, %v3658
  %3980 = vst.msk [vmem:[#allocation2 + $0x1f8] sm:$0xff] %vm3916, %v3659
  %3981 = vst.msk [vmem:[#allocation2 + $0x200] sm:$0xff] %vm3916, %v3660
  %3982 = vst.msk [vmem:[#allocation2 + $0x208] sm:$0xff] %vm3916, %v3661
  %3983 = vst.msk [vmem:[#allocation2 + $0x210] sm:$0xff] %vm3916, %v3662
  %3984 = vst.msk [vmem:[#allocation2 + $0x218] sm:$0xff] %vm3916, %v3663
  %3985 = vst.msk [vmem:[#allocation2 + $0x220] sm:$0xff] %vm3916, %v3664
  %3986 = vst.msk [vmem:[#allocation2 + $0x228] sm:$0xff] %vm3916, %v3665
  %3987 = vst.msk [vmem:[#allocation2 + $0x230] sm:$0xff] %vm3916, %v3666
  %3988 = vst.msk [vmem:[#allocation2 + $0x238] sm:$0xff] %vm3916, %v3667
  %3989 = vst.msk [vmem:[#allocation2 + $0x240] sm:$0xff] %vm3916, %v3668
  %3990 = vst.msk [vmem:[#allocation2 + $0x248] sm:$0xff] %vm3916, %v3669
  %3991 = vst.msk [vmem:[#allocation2 + $0x250] sm:$0xff] %vm3916, %v3670
  %3992 = vst.msk [vmem:[#allocation2 + $0x258] sm:$0xff] %vm3916, %v3671
  %3993 = vst.msk [vmem:[#allocation2 + $0x260] sm:$0xff] %vm3916, %v3672
  %3994 = vst.msk [vmem:[#allocation2 + $0x268] sm:$0xff] %vm3916, %v3673
  %3995 = vst.msk [vmem:[#allocation2 + $0x270] sm:$0xff] %vm3916, %v3674
  %3996 = vst.msk [vmem:[#allocation2 + $0x278] sm:$0xff] %vm3916, %v3675
  %3997 = vst.msk [vmem:[#allocation2 + $0x280] sm:$0xff] %vm3916, %v3676
  %3998 = vst.msk [vmem:[#allocation2 + $0x288] sm:$0xff] %vm3916, %v3677
  %3999 = vst.msk [vmem:[#allocation2 + $0x290] sm:$0xff] %vm3916, %v3678
  %4000 = vst.msk [vmem:[#allocation2 + $0x298] sm:$0xff] %vm3916, %v3679
  %4001 = vst.msk [vmem:[#allocation2 + $0x2a0] sm:$0xff] %vm3916, %v3680
  %4002 = vst.msk [vmem:[#allocation2 + $0x2a8] sm:$0xff] %vm3916, %v3681
  %4003 = vst.msk [vmem:[#allocation2 + $0x2b0] sm:$0xff] %vm3916, %v3682
  %4004 = vst.msk [vmem:[#allocation2 + $0x2b8] sm:$0xff] %vm3916, %v3683
  %4005 = vst.msk [vmem:[#allocation2 + $0x2c0] sm:$0xff] %vm3916, %v3684
  %4006 = vst.msk [vmem:[#allocation2 + $0x2c8] sm:$0xff] %vm3916, %v3685
  %4007 = vst.msk [vmem:[#allocation2 + $0x2d0] sm:$0xff] %vm3916, %v3686
  %4008 = vst.msk [vmem:[#allocation2 + $0x2d8] sm:$0xff] %vm3916, %v3687
  %4009 = vst.msk [vmem:[#allocation2 + $0x2e0] sm:$0xff] %vm3916, %v3688
  %4010 = vst.msk [vmem:[#allocation2 + $0x2e8] sm:$0xff] %vm3916, %v3689
  %4011 = vst.msk [vmem:[#allocation2 + $0x2f0] sm:$0xff] %vm3916, %v3690
  %4012 = vst.msk [vmem:[#allocation2 + $0x2f8] sm:$0xff] %vm3916, %v3691
  %4013 = vst.msk [vmem:[#allocation2 + $0x300] sm:$0xff] %vm3916, %v3692
  %4014 = vst.msk [vmem:[#allocation2 + $0x308] sm:$0xff] %vm3916, %v3693
  %4015 = vst.msk [vmem:[#allocation2 + $0x310] sm:$0xff] %vm3916, %v3694
  %4016 = vst.msk [vmem:[#allocation2 + $0x318] sm:$0xff] %vm3916, %v3695
  %4017 = vst.msk [vmem:[#allocation2 + $0x320] sm:$0xff] %vm3916, %v3696
  %4018 = vst.msk [vmem:[#allocation2 + $0x328] sm:$0xff] %vm3916, %v3697
  %4019 = vst.msk [vmem:[#allocation2 + $0x330] sm:$0xff] %vm3916, %v3698
  %4020 = vst.msk [vmem:[#allocation2 + $0x338] sm:$0xff] %vm3916, %v3699
  %4021 = vst.msk [vmem:[#allocation2 + $0x340] sm:$0xff] %vm3916, %v3700
  %4022 = vst.msk [vmem:[#allocation2 + $0x348] sm:$0xff] %vm3916, %v3701
  %4023 = vst.msk [vmem:[#allocation2 + $0x350] sm:$0xff] %vm3916, %v3702
  %4024 = vst.msk [vmem:[#allocation2 + $0x358] sm:$0xff] %vm3916, %v3703
  %4025 = vst.msk [vmem:[#allocation2 + $0x360] sm:$0xff] %vm3916, %v3704
  %4026 = vst.msk [vmem:[#allocation2 + $0x368] sm:$0xff] %vm3916, %v3705
  %4027 = vst.msk [vmem:[#allocation2 + $0x370] sm:$0xff] %vm3916, %v3706
  %4028 = vst.msk [vmem:[#allocation2 + $0x378] sm:$0xff] %vm3916, %v3707
  %4029 = vst.msk [vmem:[#allocation2 + $0x380] sm:$0xff] %vm3916, %v3708
  %4030 = vst.msk [vmem:[#allocation2 + $0x388] sm:$0xff] %vm3916, %v3709
  %4031 = vst.msk [vmem:[#allocation2 + $0x390] sm:$0xff] %vm3916, %v3710
  %4032 = vst.msk [vmem:[#allocation2 + $0x398] sm:$0xff] %vm3916, %v3711
  %4033 = vst.msk [vmem:[#allocation2 + $0x3a0] sm:$0xff] %vm3916, %v3712
  %4034 = vst.msk [vmem:[#allocation2 + $0x3a8] sm:$0xff] %vm3916, %v3713
  %4035 = vst.msk [vmem:[#allocation2 + $0x3b0] sm:$0xff] %vm3916, %v3714
  %4036 = vst.msk [vmem:[#allocation2 + $0x3b8] sm:$0xff] %vm3916, %v3715
  %4037 = vst.msk [vmem:[#allocation2 + $0x3c0] sm:$0xff] %vm3916, %v3716
  %4038 = vst.msk [vmem:[#allocation2 + $0x3c8] sm:$0xff] %vm3916, %v3717
  %4039 = vst.msk [vmem:[#allocation2 + $0x3d0] sm:$0xff] %vm3916, %v3718
  %4040 = vst.msk [vmem:[#allocation2 + $0x3d8] sm:$0xff] %vm3916, %v3719
  %4041 = vst.msk [vmem:[#allocation2 + $0x3e0] sm:$0xff] %vm3916, %v3720
  %4042 = vst.msk [vmem:[#allocation2 + $0x3e8] sm:$0xff] %vm3916, %v3721
  %4043 = vst.msk [vmem:[#allocation2 + $0x3f0] sm:$0xff] %vm3916, %v3722
  %4044 = vst.msk [vmem:[#allocation2 + $0x3f8] sm:$0xff] %vm3916, %v3723
  %4045 = vst.msk [vmem:[#allocation2 + $0x400] sm:$0xff] %vm3916, %v3724
  %4046 = vst.msk [vmem:[#allocation2 + $0x408] sm:$0xff] %vm3916, %v3725
  %4047 = vst.msk [vmem:[#allocation2 + $0x410] sm:$0xff] %vm3916, %v3726
  %4048 = vst.msk [vmem:[#allocation2 + $0x418] sm:$0xff] %vm3916, %v3727
  %4049 = vst.msk [vmem:[#allocation2 + $0x420] sm:$0xff] %vm3916, %v3728
  %4050 = vst.msk [vmem:[#allocation2 + $0x428] sm:$0xff] %vm3916, %v3729
  %4051 = vst.msk [vmem:[#allocation2 + $0x430] sm:$0xff] %vm3916, %v3730
  %4052 = vst.msk [vmem:[#allocation2 + $0x438] sm:$0xff] %vm3916, %v3731
  %4053 = vst.msk [vmem:[#allocation2 + $0x440] sm:$0xff] %vm3916, %v3732
  %4054 = vst.msk [vmem:[#allocation2 + $0x448] sm:$0xff] %vm3916, %v3733
  %4055 = vst.msk [vmem:[#allocation2 + $0x450] sm:$0xff] %vm3916, %v3734
  %4056 = vst.msk [vmem:[#allocation2 + $0x458] sm:$0xff] %vm3916, %v3735
  %4057 = vst.msk [vmem:[#allocation2 + $0x460] sm:$0xff] %vm3916, %v3736
  %4058 = vst.msk [vmem:[#allocation2 + $0x468] sm:$0xff] %vm3916, %v3737
  %4059 = vst.msk [vmem:[#allocation2 + $0x470] sm:$0xff] %vm3916, %v3738
  %4060 = vst.msk [vmem:[#allocation2 + $0x478] sm:$0xff] %vm3916, %v3739
  %4061 = vst.msk [vmem:[#allocation2 + $0x480] sm:$0xff] %vm3916, %v3740
  %4062 = vst.msk [vmem:[#allocation2 + $0x488] sm:$0xff] %vm3916, %v3741
  %4063 = vst.msk [vmem:[#allocation2 + $0x490] sm:$0xff] %vm3916, %v3742
  %4064 = vst.msk [vmem:[#allocation2 + $0x498] sm:$0xff] %vm3916, %v3743
  %4065 = vst.msk [vmem:[#allocation2 + $0x4a0] sm:$0xff] %vm3916, %v3744
  %4066 = vst.msk [vmem:[#allocation2 + $0x4a8] sm:$0xff] %vm3916, %v3745
  %4067 = vst.msk [vmem:[#allocation2 + $0x4b0] sm:$0xff] %vm3916, %v3746
  %4068 = vst.msk [vmem:[#allocation2 + $0x4b8] sm:$0xff] %vm3916, %v3747
  %4069 = vst.msk [vmem:[#allocation2 + $0x4c0] sm:$0xff] %vm3916, %v3748
  %4070 = vst.msk [vmem:[#allocation2 + $0x4c8] sm:$0xff] %vm3916, %v3749
  %4071 = vst.msk [vmem:[#allocation2 + $0x4d0] sm:$0xff] %vm3916, %v3750
  %4072 = vst.msk [vmem:[#allocation2 + $0x4d8] sm:$0xff] %vm3916, %v3751
  %4073 = vst.msk [vmem:[#allocation2 + $0x4e0] sm:$0xff] %vm3916, %v3752
  %4074 = vst.msk [vmem:[#allocation2 + $0x4e8] sm:$0xff] %vm3916, %v3753
  %4075 = vst.msk [vmem:[#allocation2 + $0x4f0] sm:$0xff] %vm3916, %v3754
  %4076 = vst.msk [vmem:[#allocation2 + $0x4f8] sm:$0xff] %vm3916, %v3755
  %4077 = vst.msk [vmem:[#allocation2 + $0x500] sm:$0xff] %vm3916, %v3756
  %4078 = vst.msk [vmem:[#allocation2 + $0x508] sm:$0xff] %vm3916, %v3757
  %4079 = vst.msk [vmem:[#allocation2 + $0x510] sm:$0xff] %vm3916, %v3758
  %4080 = vst.msk [vmem:[#allocation2 + $0x518] sm:$0xff] %vm3916, %v3759
  %4081 = vst.msk [vmem:[#allocation2 + $0x520] sm:$0xff] %vm3916, %v3760
  %4082 = vst.msk [vmem:[#allocation2 + $0x528] sm:$0xff] %vm3916, %v3761
  %4083 = vst.msk [vmem:[#allocation2 + $0x530] sm:$0xff] %vm3916, %v3762
  %4084 = vst.msk [vmem:[#allocation2 + $0x538] sm:$0xff] %vm3916, %v3763
  %4085 = vst.msk [vmem:[#allocation2 + $0x540] sm:$0xff] %vm3916, %v3764
  %4086 = vst.msk [vmem:[#allocation2 + $0x548] sm:$0xff] %vm3916, %v3765
  %4087 = vst.msk [vmem:[#allocation2 + $0x550] sm:$0xff] %vm3916, %v3766
  %4088 = vst.msk [vmem:[#allocation2 + $0x558] sm:$0xff] %vm3916, %v3767
  %4089 = vst.msk [vmem:[#allocation2 + $0x560] sm:$0xff] %vm3916, %v3768
  %4090 = vst.msk [vmem:[#allocation2 + $0x568] sm:$0xff] %vm3916, %v3769
  %4091 = vst.msk [vmem:[#allocation2 + $0x570] sm:$0xff] %vm3916, %v3770
  %4092 = vst.msk [vmem:[#allocation2 + $0x578] sm:$0xff] %vm3916, %v3771
  %4093 = vst.msk [vmem:[#allocation2 + $0x580] sm:$0xff] %vm3916, %v3772
  %4094 = vst.msk [vmem:[#allocation2 + $0x588] sm:$0xff] %vm3916, %v3773
  %4095 = vst.msk [vmem:[#allocation2 + $0x590] sm:$0xff] %vm3916, %v3774
  %4096 = vst.msk [vmem:[#allocation2 + $0x598] sm:$0xff] %vm3916, %v3775
  %4097 = vst.msk [vmem:[#allocation2 + $0x5a0] sm:$0xff] %vm3916, %v3776
  %4098 = vst.msk [vmem:[#allocation2 + $0x5a8] sm:$0xff] %vm3916, %v3777
  %4099 = vst.msk [vmem:[#allocation2 + $0x5b0] sm:$0xff] %vm3916, %v3778
  %4100 = vst.msk [vmem:[#allocation2 + $0x5b8] sm:$0xff] %vm3916, %v3779
  %4101 = vst.msk [vmem:[#allocation2 + $0x5c0] sm:$0xff] %vm3916, %v3780
  %4102 = vst.msk [vmem:[#allocation2 + $0x5c8] sm:$0xff] %vm3916, %v3781
  %4103 = vst.msk [vmem:[#allocation2 + $0x5d0] sm:$0xff] %vm3916, %v3782
  %4104 = vst.msk [vmem:[#allocation2 + $0x5d8] sm:$0xff] %vm3916, %v3783
  %4105 = vst.msk [vmem:[#allocation2 + $0x5e0] sm:$0xff] %vm3916, %v3784
  %4106 = vst.msk [vmem:[#allocation2 + $0x5e8] sm:$0xff] %vm3916, %v3785
  %4107 = vst.msk [vmem:[#allocation2 + $0x5f0] sm:$0xff] %vm3916, %v3786
  %4108 = vst.msk [vmem:[#allocation2 + $0x5f8] sm:$0xff] %vm3916, %v3787
  %4109 = vst.msk [vmem:[#allocation2 + $0x600] sm:$0xff] %vm3916, %v3788
  %4110 = vst.msk [vmem:[#allocation2 + $0x608] sm:$0xff] %vm3916, %v3789
  %4111 = vst.msk [vmem:[#allocation2 + $0x610] sm:$0xff] %vm3916, %v3790
  %4112 = vst.msk [vmem:[#allocation2 + $0x618] sm:$0xff] %vm3916, %v3791
  %4113 = vst.msk [vmem:[#allocation2 + $0x620] sm:$0xff] %vm3916, %v3792
  %4114 = vst.msk [vmem:[#allocation2 + $0x628] sm:$0xff] %vm3916, %v3793
  %4115 = vst.msk [vmem:[#allocation2 + $0x630] sm:$0xff] %vm3916, %v3794
  %4116 = vst.msk [vmem:[#allocation2 + $0x638] sm:$0xff] %vm3916, %v3795
  %4117 = vst.msk [vmem:[#allocation2 + $0x640] sm:$0xff] %vm3916, %v3796
  %4118 = vst.msk [vmem:[#allocation2 + $0x648] sm:$0xff] %vm3916, %v3797
  %4119 = vst.msk [vmem:[#allocation2 + $0x650] sm:$0xff] %vm3916, %v3798
  %4120 = vst.msk [vmem:[#allocation2 + $0x658] sm:$0xff] %vm3916, %v3799
  %4121 = vst.msk [vmem:[#allocation2 + $0x660] sm:$0xff] %vm3916, %v3800
  %4122 = vst.msk [vmem:[#allocation2 + $0x668] sm:$0xff] %vm3916, %v3801
  %4123 = vst.msk [vmem:[#allocation2 + $0x670] sm:$0xff] %vm3916, %v3802
  %4124 = vst.msk [vmem:[#allocation2 + $0x678] sm:$0xff] %vm3916, %v3803
  %4125 = vst.msk [vmem:[#allocation2 + $0x680] sm:$0xff] %vm3916, %v3804
  %4126 = vst.msk [vmem:[#allocation2 + $0x688] sm:$0xff] %vm3916, %v3805
  %4127 = vst.msk [vmem:[#allocation2 + $0x690] sm:$0xff] %vm3916, %v3806
  %4128 = vst.msk [vmem:[#allocation2 + $0x698] sm:$0xff] %vm3916, %v3807
  %4129 = vst.msk [vmem:[#allocation2 + $0x6a0] sm:$0xff] %vm3916, %v3808
  %4130 = vst.msk [vmem:[#allocation2 + $0x6a8] sm:$0xff] %vm3916, %v3809
  %4131 = vst.msk [vmem:[#allocation2 + $0x6b0] sm:$0xff] %vm3916, %v3810
  %4132 = vst.msk [vmem:[#allocation2 + $0x6b8] sm:$0xff] %vm3916, %v3811
  %4133 = vst.msk [vmem:[#allocation2 + $0x6c0] sm:$0xff] %vm3916, %v3812
  %4134 = vst.msk [vmem:[#allocation2 + $0x6c8] sm:$0xff] %vm3916, %v3813
  %4135 = vst.msk [vmem:[#allocation2 + $0x6d0] sm:$0xff] %vm3916, %v3814
  %4136 = vst.msk [vmem:[#allocation2 + $0x6d8] sm:$0xff] %vm3916, %v3815
  %4137 = vst.msk [vmem:[#allocation2 + $0x6e0] sm:$0xff] %vm3916, %v3816
  %4138 = vst.msk [vmem:[#allocation2 + $0x6e8] sm:$0xff] %vm3916, %v3817
  %4139 = vst.msk [vmem:[#allocation2 + $0x6f0] sm:$0xff] %vm3916, %v3818
  %4140 = vst.msk [vmem:[#allocation2 + $0x6f8] sm:$0xff] %vm3916, %v3819
  %4141 = vst.msk [vmem:[#allocation2 + $0x700] sm:$0xff] %vm3916, %v3820
  %4142 = vst.msk [vmem:[#allocation2 + $0x708] sm:$0xff] %vm3916, %v3821
  %4143 = vst.msk [vmem:[#allocation2 + $0x710] sm:$0xff] %vm3916, %v3822
  %4144 = vst.msk [vmem:[#allocation2 + $0x718] sm:$0xff] %vm3916, %v3823
  %4145 = vst.msk [vmem:[#allocation2 + $0x720] sm:$0xff] %vm3916, %v3824
  %4146 = vst.msk [vmem:[#allocation2 + $0x728] sm:$0xff] %vm3916, %v3825
  %4147 = vst.msk [vmem:[#allocation2 + $0x730] sm:$0xff] %vm3916, %v3826
  %4148 = vst.msk [vmem:[#allocation2 + $0x738] sm:$0xff] %vm3916, %v3827
  %4149 = vst.msk [vmem:[#allocation2 + $0x740] sm:$0xff] %vm3916, %v3828
  %4150 = vst.msk [vmem:[#allocation2 + $0x748] sm:$0xff] %vm3916, %v3829
  %4151 = vst.msk [vmem:[#allocation2 + $0x750] sm:$0xff] %vm3916, %v3830
  %4152 = vst.msk [vmem:[#allocation2 + $0x758] sm:$0xff] %vm3916, %v3831
  %4153 = vst.msk [vmem:[#allocation2 + $0x760] sm:$0xff] %vm3916, %v3832
  %4154 = vst.msk [vmem:[#allocation2 + $0x768] sm:$0xff] %vm3916, %v3833
  %4155 = vst.msk [vmem:[#allocation2 + $0x770] sm:$0xff] %vm3916, %v3834
  %4156 = vst.msk [vmem:[#allocation2 + $0x778] sm:$0xff] %vm3916, %v3835
  %4157 = vst.msk [vmem:[#allocation2 + $0x780] sm:$0xff] %vm3916, %v3836
  %4158 = vst.msk [vmem:[#allocation2 + $0x788] sm:$0xff] %vm3916, %v3837
  %4159 = vst.msk [vmem:[#allocation2 + $0x790] sm:$0xff] %vm3916, %v3838
  %4160 = vst.msk [vmem:[#allocation2 + $0x798] sm:$0xff] %vm3916, %v3839
  %4161 = vst.msk [vmem:[#allocation2 + $0x7a0] sm:$0xff] %vm3916, %v3840
  %4162 = vst.msk [vmem:[#allocation2 + $0x7a8] sm:$0xff] %vm3916, %v3841
  %4163 = vst.msk [vmem:[#allocation2 + $0x7b0] sm:$0xff] %vm3916, %v3842
  %4164 = vst.msk [vmem:[#allocation2 + $0x7b8] sm:$0xff] %vm3916, %v3843
  %4165 = vst.msk [vmem:[#allocation2 + $0x7c0] sm:$0xff] %vm3916, %v3844
  %4166 = vst.msk [vmem:[#allocation2 + $0x7c8] sm:$0xff] %vm3916, %v3845
  %4167 = vst.msk [vmem:[#allocation2 + $0x7d0] sm:$0xff] %vm3916, %v3846
  %4168 = vst.msk [vmem:[#allocation2 + $0x7d8] sm:$0xff] %vm3916, %v3847
  %4169 = vst.msk [vmem:[#allocation2 + $0x7e0] sm:$0xff] %vm3916, %v3848
  %4170 = vst.msk [vmem:[#allocation2 + $0x7e8] sm:$0xff] %vm3916, %v3849
  %4171 = vst.msk [vmem:[#allocation2 + $0x7f0] sm:$0xff] %vm3916, %v3850
  %4172 = vst.msk [vmem:[#allocation2 + $0x7f8] sm:$0xff] %vm3916, %v3851
  %4173 = vst.msk [vmem:[#allocation2 + $0x800] sm:$0xff] %vm3916, %v3852
  %4174 = vst.msk [vmem:[#allocation2 + $0x808] sm:$0xff] %vm3916, %v3853
  %4175 = vst.msk [vmem:[#allocation2 + $0x810] sm:$0xff] %vm3916, %v3854
  %4176 = vst.msk [vmem:[#allocation2 + $0x818] sm:$0xff] %vm3916, %v3855
  %4177 = vst.msk [vmem:[#allocation2 + $0x820] sm:$0xff] %vm3916, %v3856
  %4178 = vst.msk [vmem:[#allocation2 + $0x828] sm:$0xff] %vm3916, %v3857
  %4179 = vst.msk [vmem:[#allocation2 + $0x830] sm:$0xff] %vm3916, %v3858
  %4180 = vst.msk [vmem:[#allocation2 + $0x838] sm:$0xff] %vm3916, %v3859
  %4181 = vst.msk [vmem:[#allocation2 + $0x840] sm:$0xff] %vm3916, %v3860
  %4182 = vst.msk [vmem:[#allocation2 + $0x848] sm:$0xff] %vm3916, %v3861
  %4183 = vst.msk [vmem:[#allocation2 + $0x850] sm:$0xff] %vm3916, %v3862
  %4184 = vst.msk [vmem:[#allocation2 + $0x858] sm:$0xff] %vm3916, %v3863
  %4185 = vst.msk [vmem:[#allocation2 + $0x860] sm:$0xff] %vm3916, %v3864
  %4186 = vst.msk [vmem:[#allocation2 + $0x868] sm:$0xff] %vm3916, %v3865
  %4187 = vst.msk [vmem:[#allocation2 + $0x870] sm:$0xff] %vm3916, %v3866
  %4188 = vst.msk [vmem:[#allocation2 + $0x878] sm:$0xff] %vm3916, %v3867
  %4189 = vst.msk [vmem:[#allocation2 + $0x880] sm:$0xff] %vm3916, %v3868
  %4190 = vst.msk [vmem:[#allocation2 + $0x888] sm:$0xff] %vm3916, %v3869
  %4191 = vst.msk [vmem:[#allocation2 + $0x890] sm:$0xff] %vm3916, %v3870
  %4192 = vst.msk [vmem:[#allocation2 + $0x898] sm:$0xff] %vm3916, %v3871
  %4193 = vst.msk [vmem:[#allocation2 + $0x8a0] sm:$0xff] %vm3916, %v3872
  %4194 = vst.msk [vmem:[#allocation2 + $0x8a8] sm:$0xff] %vm3916, %v3873
  %4195 = vst.msk [vmem:[#allocation2 + $0x8b0] sm:$0xff] %vm3916, %v3874
  %4196 = vst.msk [vmem:[#allocation2 + $0x8b8] sm:$0xff] %vm3916, %v3875
  %4197 = vst.msk [vmem:[#allocation2 + $0x8c0] sm:$0xff] %vm3916, %v3876
  %4198 = vst.msk [vmem:[#allocation2 + $0x8c8] sm:$0xff] %vm3916, %v3877
  %4199 = vst.msk [vmem:[#allocation2 + $0x8d0] sm:$0xff] %vm3916, %v3878
  %4200 = vst.msk [vmem:[#allocation2 + $0x8d8] sm:$0xff] %vm3916, %v3879
  %4201 = vst.msk [vmem:[#allocation2 + $0x8e0] sm:$0xff] %vm3916, %v3880
  %4202 = vst.msk [vmem:[#allocation2 + $0x8e8] sm:$0xff] %vm3916, %v3881
  %4203 = vst.msk [vmem:[#allocation2 + $0x8f0] sm:$0xff] %vm3916, %v3882
  %4204 = vst.msk [vmem:[#allocation2 + $0x8f8] sm:$0xff] %vm3916, %v3883
  %4205 = vst.msk [vmem:[#allocation2 + $0x900] sm:$0xff] %vm3916, %v3884
  %4206 = vst.msk [vmem:[#allocation2 + $0x908] sm:$0xff] %vm3916, %v3885
  %4207 = vst.msk [vmem:[#allocation2 + $0x910] sm:$0xff] %vm3916, %v3886
  %4208 = vst.msk [vmem:[#allocation2 + $0x918] sm:$0xff] %vm3916, %v3887
  %4209 = vst.msk [vmem:[#allocation2 + $0x920] sm:$0xff] %vm3916, %v3888
  %4210 = vst.msk [vmem:[#allocation2 + $0x928] sm:$0xff] %vm3916, %v3889
  %4211 = vst.msk [vmem:[#allocation2 + $0x930] sm:$0xff] %vm3916, %v3890
  %4212 = vst.msk [vmem:[#allocation2 + $0x938] sm:$0xff] %vm3916, %v3891
  %4213 = vst.msk [vmem:[#allocation2 + $0x940] sm:$0xff] %vm3916, %v3892
  %4214 = vst.msk [vmem:[#allocation2 + $0x948] sm:$0xff] %vm3916, %v3893
  %4215 = vst.msk [vmem:[#allocation2 + $0x950] sm:$0xff] %vm3916, %v3894
  %4216 = vst.msk [vmem:[#allocation2 + $0x958] sm:$0xff] %vm3916, %v3895
  %4217 = vst.msk [vmem:[#allocation2 + $0x960] sm:$0xff] %vm3916, %v3896
  %4218 = vst.msk [vmem:[#allocation2 + $0x968] sm:$0xff] %vm3916, %v3897
  %4219 = vst.msk [vmem:[#allocation2 + $0x970] sm:$0xff] %vm3916, %v3898
  %4220 = vst.msk [vmem:[#allocation2 + $0x978] sm:$0xff] %vm3916, %v3899
  %4221 = vst.msk [vmem:[#allocation2 + $0x980] sm:$0xff] %vm3916, %v3900
  %4222 = vst.msk [vmem:[#allocation2 + $0x988] sm:$0xff] %vm3916, %v3901
  %4223 = vst.msk [vmem:[#allocation2 + $0x990] sm:$0xff] %vm3916, %v3902
  %4224 = vst.msk [vmem:[#allocation2 + $0x998] sm:$0xff] %vm3916, %v3903
  %4225 = vst.msk [vmem:[#allocation2 + $0x9a0] sm:$0xff] %vm3916, %v3904
  %4226 = vst.msk [vmem:[#allocation2 + $0x9a8] sm:$0xff] %vm3916, %v3905
  %4227 = vst.msk [vmem:[#allocation2 + $0x9b0] sm:$0xff] %vm3916, %v3906
  %4228 = vst.msk [vmem:[#allocation2 + $0x9b8] sm:$0xff] %vm3916, %v3907
  %4229 = vst.msk [vmem:[#allocation2 + $0x9c0] sm:$0xff] %vm3916, %v3908
  %4230 = vst.msk [vmem:[#allocation2 + $0x9c8] sm:$0xff] %vm3916, %v3909
  %4231 = vst.msk [vmem:[#allocation2 + $0x9d0] sm:$0xff] %vm3916, %v3910
  %4232 = vst.msk [vmem:[#allocation2 + $0x9d8] sm:$0xff] %vm3916, %v3911
  %4233 = vst.msk [vmem:[#allocation2 + $0x9e0] sm:$0xff] %vm3916, %v3912
  %4234 = vst.msk [vmem:[#allocation2 + $0x9e8] sm:$0xff] %vm3916, %v3913
  %4235 = vst.msk [vmem:[#allocation2 + $0x9f0] sm:$0xff] %vm3916, %v3914
  %4236 = vst.msk [vmem:[#allocation2 + $0x9f8] sm:$0xff] %vm3916, %v3915
  // Predicated region
  $region18: #{jvp__.10} parent=0 // pred_check
    %p4237 = pneg %p15
  $region19: #{jvp__.10} parent=0 // pred_check_branch
    %4239 = sbr.rel (%p4237) target = $region21
  $region20: #{jvp__.10} parent=0 // pred_region
    %v4240 = vld [vmem:[#allocation2] sm:$0xff]
    %v4241 = vld [vmem:[#allocation2 + $0x8] sm:$0xff]
    %v4242 = vld [vmem:[#allocation2 + $0x10] sm:$0xff]
    %v4243 = vld [vmem:[#allocation2 + $0x18] sm:$0xff]
    %v4244 = vld [vmem:[#allocation2 + $0x20] sm:$0xff]
    %v4245 = vld [vmem:[#allocation2 + $0x28] sm:$0xff]
    %v4246 = vld [vmem:[#allocation2 + $0x30] sm:$0xff]
    %v4247 = vld [vmem:[#allocation2 + $0x38] sm:$0xff]
    %v4248 = vld [vmem:[#allocation2 + $0x40] sm:$0xff]
    %v4249 = vld [vmem:[#allocation2 + $0x48] sm:$0xff]
    %v4250 = vld [vmem:[#allocation2 + $0x50] sm:$0xff]
    %v4251 = vld [vmem:[#allocation2 + $0x58] sm:$0xff]
    %v4252 = vld [vmem:[#allocation2 + $0x60] sm:$0xff]
    %v4253 = vld [vmem:[#allocation2 + $0x68] sm:$0xff]
    %v4254 = vld [vmem:[#allocation2 + $0x70] sm:$0xff]
    %v4255 = vld [vmem:[#allocation2 + $0x78] sm:$0xff]
    %v4256 = vld [vmem:[#allocation2 + $0x80] sm:$0xff]
    %v4257 = vld [vmem:[#allocation2 + $0x88] sm:$0xff]
    %v4258 = vld [vmem:[#allocation2 + $0x90] sm:$0xff]
    %v4259 = vld [vmem:[#allocation2 + $0x98] sm:$0xff]
    %v4260 = vld [vmem:[#allocation2 + $0xa0] sm:$0xff]
    %v4261 = vld [vmem:[#allocation2 + $0xa8] sm:$0xff]
    %v4262 = vld [vmem:[#allocation2 + $0xb0] sm:$0xff]
    %v4263 = vld [vmem:[#allocation2 + $0xb8] sm:$0xff]
    %v4264 = vld [vmem:[#allocation2 + $0xc0] sm:$0xff]
    %v4265 = vld [vmem:[#allocation2 + $0xc8] sm:$0xff]
    %v4266 = vld [vmem:[#allocation2 + $0xd0] sm:$0xff]
    %v4267 = vld [vmem:[#allocation2 + $0xd8] sm:$0xff]
    %v4268 = vld [vmem:[#allocation2 + $0xe0] sm:$0xff]
    %v4269 = vld [vmem:[#allocation2 + $0xe8] sm:$0xff]
    %v4270 = vld [vmem:[#allocation2 + $0xf0] sm:$0xff]
    %v4271 = vld [vmem:[#allocation2 + $0xf8] sm:$0xff]
    %v4272 = vld [vmem:[#allocation2 + $0x100] sm:$0xff]
    %v4273 = vld [vmem:[#allocation2 + $0x108] sm:$0xff]
    %v4274 = vld [vmem:[#allocation2 + $0x110] sm:$0xff]
    %v4275 = vld [vmem:[#allocation2 + $0x118] sm:$0xff]
    %v4276 = vld [vmem:[#allocation2 + $0x120] sm:$0xff]
    %v4277 = vld [vmem:[#allocation2 + $0x128] sm:$0xff]
    %v4278 = vld [vmem:[#allocation2 + $0x130] sm:$0xff]
    %v4279 = vld [vmem:[#allocation2 + $0x138] sm:$0xff]
    %v4280 = vld [vmem:[#allocation2 + $0x140] sm:$0xff]
    %v4281 = vld [vmem:[#allocation2 + $0x148] sm:$0xff]
    %v4282 = vld [vmem:[#allocation2 + $0x150] sm:$0xff]
    %v4283 = vld [vmem:[#allocation2 + $0x158] sm:$0xff]
    %v4284 = vld [vmem:[#allocation2 + $0x160] sm:$0xff]
    %v4285 = vld [vmem:[#allocation2 + $0x168] sm:$0xff]
    %v4286 = vld [vmem:[#allocation2 + $0x170] sm:$0xff]
    %v4287 = vld [vmem:[#allocation2 + $0x178] sm:$0xff]
    %v4288 = vld [vmem:[#allocation2 + $0x180] sm:$0xff]
    %v4289 = vld [vmem:[#allocation2 + $0x188] sm:$0xff]
    %v4290 = vld [vmem:[#allocation2 + $0x190] sm:$0xff]
    %v4291 = vld [vmem:[#allocation2 + $0x198] sm:$0xff]
    %v4292 = vld [vmem:[#allocation2 + $0x1a0] sm:$0xff]
    %v4293 = vld [vmem:[#allocation2 + $0x1a8] sm:$0xff]
    %v4294 = vld [vmem:[#allocation2 + $0x1b0] sm:$0xff]
    %v4295 = vld [vmem:[#allocation2 + $0x1b8] sm:$0xff]
    %v4296 = vld [vmem:[#allocation2 + $0x1c0] sm:$0xff]
    %v4297 = vld [vmem:[#allocation2 + $0x1c8] sm:$0xff]
    %v4298 = vld [vmem:[#allocation2 + $0x1d0] sm:$0xff]
    %v4299 = vld [vmem:[#allocation2 + $0x1d8] sm:$0xff]
    %v4300 = vld [vmem:[#allocation2 + $0x1e0] sm:$0xff]
    %v4301 = vld [vmem:[#allocation2 + $0x1e8] sm:$0xff]
    %v4302 = vld [vmem:[#allocation2 + $0x1f0] sm:$0xff]
    %v4303 = vld [vmem:[#allocation2 + $0x1f8] sm:$0xff]
    %v4304 = vld [vmem:[#allocation2 + $0x200] sm:$0xff]
    %v4305 = vld [vmem:[#allocation2 + $0x208] sm:$0xff]
    %v4306 = vld [vmem:[#allocation2 + $0x210] sm:$0xff]
    %v4307 = vld [vmem:[#allocation2 + $0x218] sm:$0xff]
    %v4308 = vld [vmem:[#allocation2 + $0x220] sm:$0xff]
    %v4309 = vld [vmem:[#allocation2 + $0x228] sm:$0xff]
    %v4310 = vld [vmem:[#allocation2 + $0x230] sm:$0xff]
    %v4311 = vld [vmem:[#allocation2 + $0x238] sm:$0xff]
    %v4312 = vld [vmem:[#allocation2 + $0x240] sm:$0xff]
    %v4313 = vld [vmem:[#allocation2 + $0x248] sm:$0xff]
    %v4314 = vld [vmem:[#allocation2 + $0x250] sm:$0xff]
    %v4315 = vld [vmem:[#allocation2 + $0x258] sm:$0xff]
    %v4316 = vld [vmem:[#allocation2 + $0x260] sm:$0xff]
    %v4317 = vld [vmem:[#allocation2 + $0x268] sm:$0xff]
    %v4318 = vld [vmem:[#allocation2 + $0x270] sm:$0xff]
    %v4319 = vld [vmem:[#allocation2 + $0x278] sm:$0xff]
    %v4320 = vld [vmem:[#allocation2 + $0x280] sm:$0xff]
    %v4321 = vld [vmem:[#allocation2 + $0x288] sm:$0xff]
    %v4322 = vld [vmem:[#allocation2 + $0x290] sm:$0xff]
    %v4323 = vld [vmem:[#allocation2 + $0x298] sm:$0xff]
    %v4324 = vld [vmem:[#allocation2 + $0x2a0] sm:$0xff]
    %v4325 = vld [vmem:[#allocation2 + $0x2a8] sm:$0xff]
    %v4326 = vld [vmem:[#allocation2 + $0x2b0] sm:$0xff]
    %v4327 = vld [vmem:[#allocation2 + $0x2b8] sm:$0xff]
    %v4328 = vld [vmem:[#allocation2 + $0x2c0] sm:$0xff]
    %v4329 = vld [vmem:[#allocation2 + $0x2c8] sm:$0xff]
    %v4330 = vld [vmem:[#allocation2 + $0x2d0] sm:$0xff]
    %v4331 = vld [vmem:[#allocation2 + $0x2d8] sm:$0xff]
    %v4332 = vld [vmem:[#allocation2 + $0x2e0] sm:$0xff]
    %v4333 = vld [vmem:[#allocation2 + $0x2e8] sm:$0xff]
    %v4334 = vld [vmem:[#allocation2 + $0x2f0] sm:$0xff]
    %v4335 = vld [vmem:[#allocation2 + $0x2f8] sm:$0xff]
    %v4336 = vld [vmem:[#allocation2 + $0x300] sm:$0xff]
    %v4337 = vld [vmem:[#allocation2 + $0x308] sm:$0xff]
    %v4338 = vld [vmem:[#allocation2 + $0x310] sm:$0xff]
    %v4339 = vld [vmem:[#allocation2 + $0x318] sm:$0xff]
    %v4340 = vld [vmem:[#allocation2 + $0x320] sm:$0xff]
    %v4341 = vld [vmem:[#allocation2 + $0x328] sm:$0xff]
    %v4342 = vld [vmem:[#allocation2 + $0x330] sm:$0xff]
    %v4343 = vld [vmem:[#allocation2 + $0x338] sm:$0xff]
    %v4344 = vld [vmem:[#allocation2 + $0x340] sm:$0xff]
    %v4345 = vld [vmem:[#allocation2 + $0x348] sm:$0xff]
    %v4346 = vld [vmem:[#allocation2 + $0x350] sm:$0xff]
    %v4347 = vld [vmem:[#allocation2 + $0x358] sm:$0xff]
    %v4348 = vld [vmem:[#allocation2 + $0x360] sm:$0xff]
    %v4349 = vld [vmem:[#allocation2 + $0x368] sm:$0xff]
    %v4350 = vld [vmem:[#allocation2 + $0x370] sm:$0xff]
    %v4351 = vld [vmem:[#allocation2 + $0x378] sm:$0xff]
    %v4352 = vld [vmem:[#allocation2 + $0x380] sm:$0xff]
    %v4353 = vld [vmem:[#allocation2 + $0x388] sm:$0xff]
    %v4354 = vld [vmem:[#allocation2 + $0x390] sm:$0xff]
    %v4355 = vld [vmem:[#allocation2 + $0x398] sm:$0xff]
    %v4356 = vld [vmem:[#allocation2 + $0x3a0] sm:$0xff]
    %v4357 = vld [vmem:[#allocation2 + $0x3a8] sm:$0xff]
    %v4358 = vld [vmem:[#allocation2 + $0x3b0] sm:$0xff]
    %v4359 = vld [vmem:[#allocation2 + $0x3b8] sm:$0xff]
    %v4360 = vld [vmem:[#allocation2 + $0x3c0] sm:$0xff]
    %v4361 = vld [vmem:[#allocation2 + $0x3c8] sm:$0xff]
    %v4362 = vld [vmem:[#allocation2 + $0x3d0] sm:$0xff]
    %v4363 = vld [vmem:[#allocation2 + $0x3d8] sm:$0xff]
    %v4364 = vld [vmem:[#allocation2 + $0x3e0] sm:$0xff]
    %v4365 = vld [vmem:[#allocation2 + $0x3e8] sm:$0xff]
    %v4366 = vld [vmem:[#allocation2 + $0x3f0] sm:$0xff]
    %v4367 = vld [vmem:[#allocation2 + $0x3f8] sm:$0xff]
    %v4368 = vld [vmem:[#allocation2 + $0x400] sm:$0xff]
    %v4369 = vld [vmem:[#allocation2 + $0x408] sm:$0xff]
    %v4370 = vld [vmem:[#allocation2 + $0x410] sm:$0xff]
    %v4371 = vld [vmem:[#allocation2 + $0x418] sm:$0xff]
    %v4372 = vld [vmem:[#allocation2 + $0x420] sm:$0xff]
    %v4373 = vld [vmem:[#allocation2 + $0x428] sm:$0xff]
    %v4374 = vld [vmem:[#allocation2 + $0x430] sm:$0xff]
    %v4375 = vld [vmem:[#allocation2 + $0x438] sm:$0xff]
    %v4376 = vld [vmem:[#allocation2 + $0x440] sm:$0xff]
    %v4377 = vld [vmem:[#allocation2 + $0x448] sm:$0xff]
    %v4378 = vld [vmem:[#allocation2 + $0x450] sm:$0xff]
    %v4379 = vld [vmem:[#allocation2 + $0x458] sm:$0xff]
    %v4380 = vld [vmem:[#allocation2 + $0x460] sm:$0xff]
    %v4381 = vld [vmem:[#allocation2 + $0x468] sm:$0xff]
    %v4382 = vld [vmem:[#allocation2 + $0x470] sm:$0xff]
    %v4383 = vld [vmem:[#allocation2 + $0x478] sm:$0xff]
    %v4384 = vld [vmem:[#allocation2 + $0x480] sm:$0xff]
    %v4385 = vld [vmem:[#allocation2 + $0x488] sm:$0xff]
    %v4386 = vld [vmem:[#allocation2 + $0x490] sm:$0xff]
    %v4387 = vld [vmem:[#allocation2 + $0x498] sm:$0xff]
    %v4388 = vld [vmem:[#allocation2 + $0x4a0] sm:$0xff]
    %v4389 = vld [vmem:[#allocation2 + $0x4a8] sm:$0xff]
    %v4390 = vld [vmem:[#allocation2 + $0x4b0] sm:$0xff]
    %v4391 = vld [vmem:[#allocation2 + $0x4b8] sm:$0xff]
    %v4392 = vld [vmem:[#allocation2 + $0x4c0] sm:$0xff]
    %v4393 = vld [vmem:[#allocation2 + $0x4c8] sm:$0xff]
    %v4394 = vld [vmem:[#allocation2 + $0x4d0] sm:$0xff]
    %v4395 = vld [vmem:[#allocation2 + $0x4d8] sm:$0xff]
    %v4396 = vld [vmem:[#allocation2 + $0x4e0] sm:$0xff]
    %v4397 = vld [vmem:[#allocation2 + $0x4e8] sm:$0xff]
    %v4398 = vld [vmem:[#allocation2 + $0x4f0] sm:$0xff]
    %v4399 = vld [vmem:[#allocation2 + $0x4f8] sm:$0xff]
    %v4400 = vld [vmem:[#allocation2 + $0x500] sm:$0xff]
    %v4401 = vld [vmem:[#allocation2 + $0x508] sm:$0xff]
    %v4402 = vld [vmem:[#allocation2 + $0x510] sm:$0xff]
    %v4403 = vld [vmem:[#allocation2 + $0x518] sm:$0xff]
    %v4404 = vld [vmem:[#allocation2 + $0x520] sm:$0xff]
    %v4405 = vld [vmem:[#allocation2 + $0x528] sm:$0xff]
    %v4406 = vld [vmem:[#allocation2 + $0x530] sm:$0xff]
    %v4407 = vld [vmem:[#allocation2 + $0x538] sm:$0xff]
    %v4408 = vld [vmem:[#allocation2 + $0x540] sm:$0xff]
    %v4409 = vld [vmem:[#allocation2 + $0x548] sm:$0xff]
    %v4410 = vld [vmem:[#allocation2 + $0x550] sm:$0xff]
    %v4411 = vld [vmem:[#allocation2 + $0x558] sm:$0xff]
    %v4412 = vld [vmem:[#allocation2 + $0x560] sm:$0xff]
    %v4413 = vld [vmem:[#allocation2 + $0x568] sm:$0xff]
    %v4414 = vld [vmem:[#allocation2 + $0x570] sm:$0xff]
    %v4415 = vld [vmem:[#allocation2 + $0x578] sm:$0xff]
    %v4416 = vld [vmem:[#allocation2 + $0x580] sm:$0xff]
    %v4417 = vld [vmem:[#allocation2 + $0x588] sm:$0xff]
    %v4418 = vld [vmem:[#allocation2 + $0x590] sm:$0xff]
    %v4419 = vld [vmem:[#allocation2 + $0x598] sm:$0xff]
    %v4420 = vld [vmem:[#allocation2 + $0x5a0] sm:$0xff]
    %v4421 = vld [vmem:[#allocation2 + $0x5a8] sm:$0xff]
    %v4422 = vld [vmem:[#allocation2 + $0x5b0] sm:$0xff]
    %v4423 = vld [vmem:[#allocation2 + $0x5b8] sm:$0xff]
    %v4424 = vld [vmem:[#allocation2 + $0x5c0] sm:$0xff]
    %v4425 = vld [vmem:[#allocation2 + $0x5c8] sm:$0xff]
    %v4426 = vld [vmem:[#allocation2 + $0x5d0] sm:$0xff]
    %v4427 = vld [vmem:[#allocation2 + $0x5d8] sm:$0xff]
    %v4428 = vld [vmem:[#allocation2 + $0x5e0] sm:$0xff]
    %v4429 = vld [vmem:[#allocation2 + $0x5e8] sm:$0xff]
    %v4430 = vld [vmem:[#allocation2 + $0x5f0] sm:$0xff]
    %v4431 = vld [vmem:[#allocation2 + $0x5f8] sm:$0xff]
    %v4432 = vld [vmem:[#allocation2 + $0x600] sm:$0xff]
    %v4433 = vld [vmem:[#allocation2 + $0x608] sm:$0xff]
    %v4434 = vld [vmem:[#allocation2 + $0x610] sm:$0xff]
    %v4435 = vld [vmem:[#allocation2 + $0x618] sm:$0xff]
    %v4436 = vld [vmem:[#allocation2 + $0x620] sm:$0xff]
    %v4437 = vld [vmem:[#allocation2 + $0x628] sm:$0xff]
    %v4438 = vld [vmem:[#allocation2 + $0x630] sm:$0xff]
    %v4439 = vld [vmem:[#allocation2 + $0x638] sm:$0xff]
    %v4440 = vld [vmem:[#allocation2 + $0x640] sm:$0xff]
    %v4441 = vld [vmem:[#allocation2 + $0x648] sm:$0xff]
    %v4442 = vld [vmem:[#allocation2 + $0x650] sm:$0xff]
    %v4443 = vld [vmem:[#allocation2 + $0x658] sm:$0xff]
    %v4444 = vld [vmem:[#allocation2 + $0x660] sm:$0xff]
    %v4445 = vld [vmem:[#allocation2 + $0x668] sm:$0xff]
    %v4446 = vld [vmem:[#allocation2 + $0x670] sm:$0xff]
    %v4447 = vld [vmem:[#allocation2 + $0x678] sm:$0xff]
    %v4448 = vld [vmem:[#allocation2 + $0x680] sm:$0xff]
    %v4449 = vld [vmem:[#allocation2 + $0x688] sm:$0xff]
    %v4450 = vld [vmem:[#allocation2 + $0x690] sm:$0xff]
    %v4451 = vld [vmem:[#allocation2 + $0x698] sm:$0xff]
    %v4452 = vld [vmem:[#allocation2 + $0x6a0] sm:$0xff]
    %v4453 = vld [vmem:[#allocation2 + $0x6a8] sm:$0xff]
    %v4454 = vld [vmem:[#allocation2 + $0x6b0] sm:$0xff]
    %v4455 = vld [vmem:[#allocation2 + $0x6b8] sm:$0xff]
    %v4456 = vld [vmem:[#allocation2 + $0x6c0] sm:$0xff]
    %v4457 = vld [vmem:[#allocation2 + $0x6c8] sm:$0xff]
    %v4458 = vld [vmem:[#allocation2 + $0x6d0] sm:$0xff]
    %v4459 = vld [vmem:[#allocation2 + $0x6d8] sm:$0xff]
    %v4460 = vld [vmem:[#allocation2 + $0x6e0] sm:$0xff]
    %v4461 = vld [vmem:[#allocation2 + $0x6e8] sm:$0xff]
    %v4462 = vld [vmem:[#allocation2 + $0x6f0] sm:$0xff]
    %v4463 = vld [vmem:[#allocation2 + $0x6f8] sm:$0xff]
    %v4464 = vld [vmem:[#allocation2 + $0x700] sm:$0xff]
    %v4465 = vld [vmem:[#allocation2 + $0x708] sm:$0xff]
    %v4466 = vld [vmem:[#allocation2 + $0x710] sm:$0xff]
    %v4467 = vld [vmem:[#allocation2 + $0x718] sm:$0xff]
    %v4468 = vld [vmem:[#allocation2 + $0x720] sm:$0xff]
    %v4469 = vld [vmem:[#allocation2 + $0x728] sm:$0xff]
    %v4470 = vld [vmem:[#allocation2 + $0x730] sm:$0xff]
    %v4471 = vld [vmem:[#allocation2 + $0x738] sm:$0xff]
    %v4472 = vld [vmem:[#allocation2 + $0x740] sm:$0xff]
    %v4473 = vld [vmem:[#allocation2 + $0x748] sm:$0xff]
    %v4474 = vld [vmem:[#allocation2 + $0x750] sm:$0xff]
    %v4475 = vld [vmem:[#allocation2 + $0x758] sm:$0xff]
    %v4476 = vld [vmem:[#allocation2 + $0x760] sm:$0xff]
    %v4477 = vld [vmem:[#allocation2 + $0x768] sm:$0xff]
    %v4478 = vld [vmem:[#allocation2 + $0x770] sm:$0xff]
    %v4479 = vld [vmem:[#allocation2 + $0x778] sm:$0xff]
    %v4480 = vld [vmem:[#allocation2 + $0x780] sm:$0xff]
    %v4481 = vld [vmem:[#allocation2 + $0x788] sm:$0xff]
    %v4482 = vld [vmem:[#allocation2 + $0x790] sm:$0xff]
    %v4483 = vld [vmem:[#allocation2 + $0x798] sm:$0xff]
    %v4484 = vld [vmem:[#allocation2 + $0x7a0] sm:$0xff]
    %v4485 = vld [vmem:[#allocation2 + $0x7a8] sm:$0xff]
    %v4486 = vld [vmem:[#allocation2 + $0x7b0] sm:$0xff]
    %v4487 = vld [vmem:[#allocation2 + $0x7b8] sm:$0xff]
    %v4488 = vld [vmem:[#allocation2 + $0x7c0] sm:$0xff]
    %v4489 = vld [vmem:[#allocation2 + $0x7c8] sm:$0xff]
    %v4490 = vld [vmem:[#allocation2 + $0x7d0] sm:$0xff]
    %v4491 = vld [vmem:[#allocation2 + $0x7d8] sm:$0xff]
    %v4492 = vld [vmem:[#allocation2 + $0x7e0] sm:$0xff]
    %v4493 = vld [vmem:[#allocation2 + $0x7e8] sm:$0xff]
    %v4494 = vld [vmem:[#allocation2 + $0x7f0] sm:$0xff]
    %v4495 = vld [vmem:[#allocation2 + $0x7f8] sm:$0xff]
    %v4496 = vld [vmem:[#allocation2 + $0x800] sm:$0xff]
    %v4497 = vld [vmem:[#allocation2 + $0x808] sm:$0xff]
    %v4498 = vld [vmem:[#allocation2 + $0x810] sm:$0xff]
    %v4499 = vld [vmem:[#allocation2 + $0x818] sm:$0xff]
    %v4500 = vld [vmem:[#allocation2 + $0x820] sm:$0xff]
    %v4501 = vld [vmem:[#allocation2 + $0x828] sm:$0xff]
    %v4502 = vld [vmem:[#allocation2 + $0x830] sm:$0xff]
    %v4503 = vld [vmem:[#allocation2 + $0x838] sm:$0xff]
    %v4504 = vld [vmem:[#allocation2 + $0x840] sm:$0xff]
    %v4505 = vld [vmem:[#allocation2 + $0x848] sm:$0xff]
    %v4506 = vld [vmem:[#allocation2 + $0x850] sm:$0xff]
    %v4507 = vld [vmem:[#allocation2 + $0x858] sm:$0xff]
    %v4508 = vld [vmem:[#allocation2 + $0x860] sm:$0xff]
    %v4509 = vld [vmem:[#allocation2 + $0x868] sm:$0xff]
    %v4510 = vld [vmem:[#allocation2 + $0x870] sm:$0xff]
    %v4511 = vld [vmem:[#allocation2 + $0x878] sm:$0xff]
    %v4512 = vld [vmem:[#allocation2 + $0x880] sm:$0xff]
    %v4513 = vld [vmem:[#allocation2 + $0x888] sm:$0xff]
    %v4514 = vld [vmem:[#allocation2 + $0x890] sm:$0xff]
    %v4515 = vld [vmem:[#allocation2 + $0x898] sm:$0xff]
    %v4516 = vld [vmem:[#allocation2 + $0x8a0] sm:$0xff]
    %v4517 = vld [vmem:[#allocation2 + $0x8a8] sm:$0xff]
    %v4518 = vld [vmem:[#allocation2 + $0x8b0] sm:$0xff]
    %v4519 = vld [vmem:[#allocation2 + $0x8b8] sm:$0xff]
    %v4520 = vld [vmem:[#allocation2 + $0x8c0] sm:$0xff]
    %v4521 = vld [vmem:[#allocation2 + $0x8c8] sm:$0xff]
    %v4522 = vld [vmem:[#allocation2 + $0x8d0] sm:$0xff]
    %v4523 = vld [vmem:[#allocation2 + $0x8d8] sm:$0xff]
    %v4524 = vld [vmem:[#allocation2 + $0x8e0] sm:$0xff]
    %v4525 = vld [vmem:[#allocation2 + $0x8e8] sm:$0xff]
    %v4526 = vld [vmem:[#allocation2 + $0x8f0] sm:$0xff]
    %v4527 = vld [vmem:[#allocation2 + $0x8f8] sm:$0xff]
    %v4528 = vld [vmem:[#allocation2 + $0x900] sm:$0xff]
    %v4529 = vld [vmem:[#allocation2 + $0x908] sm:$0xff]
    %v4530 = vld [vmem:[#allocation2 + $0x910] sm:$0xff]
    %v4531 = vld [vmem:[#allocation2 + $0x918] sm:$0xff]
    %v4532 = vld [vmem:[#allocation2 + $0x920] sm:$0xff]
    %v4533 = vld [vmem:[#allocation2 + $0x928] sm:$0xff]
    %v4534 = vld [vmem:[#allocation2 + $0x930] sm:$0xff]
    %v4535 = vld [vmem:[#allocation2 + $0x938] sm:$0xff]
    %v4536 = vld [vmem:[#allocation2 + $0x940] sm:$0xff]
    %v4537 = vld [vmem:[#allocation2 + $0x948] sm:$0xff]
    %v4538 = vld [vmem:[#allocation2 + $0x950] sm:$0xff]
    %v4539 = vld [vmem:[#allocation2 + $0x958] sm:$0xff]
    %v4540 = vld [vmem:[#allocation2 + $0x960] sm:$0xff]
    %v4541 = vld [vmem:[#allocation2 + $0x968] sm:$0xff]
    %v4542 = vld [vmem:[#allocation2 + $0x970] sm:$0xff]
    %v4543 = vld [vmem:[#allocation2 + $0x978] sm:$0xff]
    %v4544 = vld [vmem:[#allocation2 + $0x980] sm:$0xff]
    %v4545 = vld [vmem:[#allocation2 + $0x988] sm:$0xff]
    %v4546 = vld [vmem:[#allocation2 + $0x990] sm:$0xff]
    %v4547 = vld [vmem:[#allocation2 + $0x998] sm:$0xff]
    %v4548 = vld [vmem:[#allocation2 + $0x9a0] sm:$0xff]
    %v4549 = vld [vmem:[#allocation2 + $0x9a8] sm:$0xff]
    %v4550 = vld [vmem:[#allocation2 + $0x9b0] sm:$0xff]
    %v4551 = vld [vmem:[#allocation2 + $0x9b8] sm:$0xff]
    %v4552 = vld [vmem:[#allocation2 + $0x9c0] sm:$0xff]
    %v4553 = vld [vmem:[#allocation2 + $0x9c8] sm:$0xff]
    %v4554 = vld [vmem:[#allocation2 + $0x9d0] sm:$0xff]
    %v4555 = vld [vmem:[#allocation2 + $0x9d8] sm:$0xff]
    %v4556 = vld [vmem:[#allocation2 + $0x9e0] sm:$0xff]
    %v4557 = vld [vmem:[#allocation2 + $0x9e8] sm:$0xff]
    %v4558 = vld [vmem:[#allocation2 + $0x9f0] sm:$0xff]
    %v4559 = vld [vmem:[#allocation2 + $0x9f8] sm:$0xff]
    %v4560 = vld [vmem:[%s2] sm:$0x1]
    %v4562 = vlaneseq
    %v4563 = vshrl.u32 %v4562, 7
    %v4564 = vsub.s32 0, %v4563
    %v4565 = vrot.slane %v4560, %v4564
    %v4567 = vadd.f32 %v4240, %v4565
    %v4568 = vadd.f32 %v4241, %v4565
    %v4569 = vadd.f32 %v4242, %v4565
    %v4570 = vadd.f32 %v4243, %v4565
    %v4571 = vadd.f32 %v4244, %v4565
    %v4572 = vadd.f32 %v4245, %v4565
    %v4573 = vadd.f32 %v4246, %v4565
    %v4574 = vadd.f32 %v4247, %v4565
    %v4575 = vadd.f32 %v4248, %v4565
    %v4576 = vadd.f32 %v4249, %v4565
    %v4577 = vadd.f32 %v4250, %v4565
    %v4578 = vadd.f32 %v4251, %v4565
    %v4579 = vadd.f32 %v4252, %v4565
    %v4580 = vadd.f32 %v4253, %v4565
    %v4581 = vadd.f32 %v4254, %v4565
    %v4582 = vadd.f32 %v4255, %v4565
    %v4583 = vadd.f32 %v4256, %v4565
    %v4584 = vadd.f32 %v4257, %v4565
    %v4585 = vadd.f32 %v4258, %v4565
    %v4586 = vadd.f32 %v4259, %v4565
    %v4587 = vadd.f32 %v4260, %v4565
    %v4588 = vadd.f32 %v4261, %v4565
    %v4589 = vadd.f32 %v4262, %v4565
    %v4590 = vadd.f32 %v4263, %v4565
    %v4591 = vadd.f32 %v4264, %v4565
    %v4592 = vadd.f32 %v4265, %v4565
    %v4593 = vadd.f32 %v4266, %v4565
    %v4594 = vadd.f32 %v4267, %v4565
    %v4595 = vadd.f32 %v4268, %v4565
    %v4596 = vadd.f32 %v4269, %v4565
    %v4597 = vadd.f32 %v4270, %v4565
    %v4598 = vadd.f32 %v4271, %v4565
    %v4599 = vadd.f32 %v4272, %v4565
    %v4600 = vadd.f32 %v4273, %v4565
    %v4601 = vadd.f32 %v4274, %v4565
    %v4602 = vadd.f32 %v4275, %v4565
    %v4603 = vadd.f32 %v4276, %v4565
    %v4604 = vadd.f32 %v4277, %v4565
    %v4605 = vadd.f32 %v4278, %v4565
    %v4606 = vadd.f32 %v4279, %v4565
    %v4607 = vadd.f32 %v4280, %v4565
    %v4608 = vadd.f32 %v4281, %v4565
    %v4609 = vadd.f32 %v4282, %v4565
    %v4610 = vadd.f32 %v4283, %v4565
    %v4611 = vadd.f32 %v4284, %v4565
    %v4612 = vadd.f32 %v4285, %v4565
    %v4613 = vadd.f32 %v4286, %v4565
    %v4614 = vadd.f32 %v4287, %v4565
    %v4615 = vadd.f32 %v4288, %v4565
    %v4616 = vadd.f32 %v4289, %v4565
    %v4617 = vadd.f32 %v4290, %v4565
    %v4618 = vadd.f32 %v4291, %v4565
    %v4619 = vadd.f32 %v4292, %v4565
    %v4620 = vadd.f32 %v4293, %v4565
    %v4621 = vadd.f32 %v4294, %v4565
    %v4622 = vadd.f32 %v4295, %v4565
    %v4623 = vadd.f32 %v4296, %v4565
    %v4624 = vadd.f32 %v4297, %v4565
    %v4625 = vadd.f32 %v4298, %v4565
    %v4626 = vadd.f32 %v4299, %v4565
    %v4627 = vadd.f32 %v4300, %v4565
    %v4628 = vadd.f32 %v4301, %v4565
    %v4629 = vadd.f32 %v4302, %v4565
    %v4630 = vadd.f32 %v4303, %v4565
    %v4631 = vadd.f32 %v4304, %v4565
    %v4632 = vadd.f32 %v4305, %v4565
    %v4633 = vadd.f32 %v4306, %v4565
    %v4634 = vadd.f32 %v4307, %v4565
    %v4635 = vadd.f32 %v4308, %v4565
    %v4636 = vadd.f32 %v4309, %v4565
    %v4637 = vadd.f32 %v4310, %v4565
    %v4638 = vadd.f32 %v4311, %v4565
    %v4639 = vadd.f32 %v4312, %v4565
    %v4640 = vadd.f32 %v4313, %v4565
    %v4641 = vadd.f32 %v4314, %v4565
    %v4642 = vadd.f32 %v4315, %v4565
    %v4643 = vadd.f32 %v4316, %v4565
    %v4644 = vadd.f32 %v4317, %v4565
    %v4645 = vadd.f32 %v4318, %v4565
    %v4646 = vadd.f32 %v4319, %v4565
    %v4647 = vadd.f32 %v4320, %v4565
    %v4648 = vadd.f32 %v4321, %v4565
    %v4649 = vadd.f32 %v4322, %v4565
    %v4650 = vadd.f32 %v4323, %v4565
    %v4651 = vadd.f32 %v4324, %v4565
    %v4652 = vadd.f32 %v4325, %v4565
    %v4653 = vadd.f32 %v4326, %v4565
    %v4654 = vadd.f32 %v4327, %v4565
    %v4655 = vadd.f32 %v4328, %v4565
    %v4656 = vadd.f32 %v4329, %v4565
    %v4657 = vadd.f32 %v4330, %v4565
    %v4658 = vadd.f32 %v4331, %v4565
    %v4659 = vadd.f32 %v4332, %v4565
    %v4660 = vadd.f32 %v4333, %v4565
    %v4661 = vadd.f32 %v4334, %v4565
    %v4662 = vadd.f32 %v4335, %v4565
    %v4663 = vadd.f32 %v4336, %v4565
    %v4664 = vadd.f32 %v4337, %v4565
    %v4665 = vadd.f32 %v4338, %v4565
    %v4666 = vadd.f32 %v4339, %v4565
    %v4667 = vadd.f32 %v4340, %v4565
    %v4668 = vadd.f32 %v4341, %v4565
    %v4669 = vadd.f32 %v4342, %v4565
    %v4670 = vadd.f32 %v4343, %v4565
    %v4671 = vadd.f32 %v4344, %v4565
    %v4672 = vadd.f32 %v4345, %v4565
    %v4673 = vadd.f32 %v4346, %v4565
    %v4674 = vadd.f32 %v4347, %v4565
    %v4675 = vadd.f32 %v4348, %v4565
    %v4676 = vadd.f32 %v4349, %v4565
    %v4677 = vadd.f32 %v4350, %v4565
    %v4678 = vadd.f32 %v4351, %v4565
    %v4679 = vadd.f32 %v4352, %v4565
    %v4680 = vadd.f32 %v4353, %v4565
    %v4681 = vadd.f32 %v4354, %v4565
    %v4682 = vadd.f32 %v4355, %v4565
    %v4683 = vadd.f32 %v4356, %v4565
    %v4684 = vadd.f32 %v4357, %v4565
    %v4685 = vadd.f32 %v4358, %v4565
    %v4686 = vadd.f32 %v4359, %v4565
    %v4687 = vadd.f32 %v4360, %v4565
    %v4688 = vadd.f32 %v4361, %v4565
    %v4689 = vadd.f32 %v4362, %v4565
    %v4690 = vadd.f32 %v4363, %v4565
    %v4691 = vadd.f32 %v4364, %v4565
    %v4692 = vadd.f32 %v4365, %v4565
    %v4693 = vadd.f32 %v4366, %v4565
    %v4694 = vadd.f32 %v4367, %v4565
    %v4695 = vadd.f32 %v4368, %v4565
    %v4696 = vadd.f32 %v4369, %v4565
    %v4697 = vadd.f32 %v4370, %v4565
    %v4698 = vadd.f32 %v4371, %v4565
    %v4699 = vadd.f32 %v4372, %v4565
    %v4700 = vadd.f32 %v4373, %v4565
    %v4701 = vadd.f32 %v4374, %v4565
    %v4702 = vadd.f32 %v4375, %v4565
    %v4703 = vadd.f32 %v4376, %v4565
    %v4704 = vadd.f32 %v4377, %v4565
    %v4705 = vadd.f32 %v4378, %v4565
    %v4706 = vadd.f32 %v4379, %v4565
    %v4707 = vadd.f32 %v4380, %v4565
    %v4708 = vadd.f32 %v4381, %v4565
    %v4709 = vadd.f32 %v4382, %v4565
    %v4710 = vadd.f32 %v4383, %v4565
    %v4711 = vadd.f32 %v4384, %v4565
    %v4712 = vadd.f32 %v4385, %v4565
    %v4713 = vadd.f32 %v4386, %v4565
    %v4714 = vadd.f32 %v4387, %v4565
    %v4715 = vadd.f32 %v4388, %v4565
    %v4716 = vadd.f32 %v4389, %v4565
    %v4717 = vadd.f32 %v4390, %v4565
    %v4718 = vadd.f32 %v4391, %v4565
    %v4719 = vadd.f32 %v4392, %v4565
    %v4720 = vadd.f32 %v4393, %v4565
    %v4721 = vadd.f32 %v4394, %v4565
    %v4722 = vadd.f32 %v4395, %v4565
    %v4723 = vadd.f32 %v4396, %v4565
    %v4724 = vadd.f32 %v4397, %v4565
    %v4725 = vadd.f32 %v4398, %v4565
    %v4726 = vadd.f32 %v4399, %v4565
    %v4727 = vadd.f32 %v4400, %v4565
    %v4728 = vadd.f32 %v4401, %v4565
    %v4729 = vadd.f32 %v4402, %v4565
    %v4730 = vadd.f32 %v4403, %v4565
    %v4731 = vadd.f32 %v4404, %v4565
    %v4732 = vadd.f32 %v4405, %v4565
    %v4733 = vadd.f32 %v4406, %v4565
    %v4734 = vadd.f32 %v4407, %v4565
    %v4735 = vadd.f32 %v4408, %v4565
    %v4736 = vadd.f32 %v4409, %v4565
    %v4737 = vadd.f32 %v4410, %v4565
    %v4738 = vadd.f32 %v4411, %v4565
    %v4739 = vadd.f32 %v4412, %v4565
    %v4740 = vadd.f32 %v4413, %v4565
    %v4741 = vadd.f32 %v4414, %v4565
    %v4742 = vadd.f32 %v4415, %v4565
    %v4743 = vadd.f32 %v4416, %v4565
    %v4744 = vadd.f32 %v4417, %v4565
    %v4745 = vadd.f32 %v4418, %v4565
    %v4746 = vadd.f32 %v4419, %v4565
    %v4747 = vadd.f32 %v4420, %v4565
    %v4748 = vadd.f32 %v4421, %v4565
    %v4749 = vadd.f32 %v4422, %v4565
    %v4750 = vadd.f32 %v4423, %v4565
    %v4751 = vadd.f32 %v4424, %v4565
    %v4752 = vadd.f32 %v4425, %v4565
    %v4753 = vadd.f32 %v4426, %v4565
    %v4754 = vadd.f32 %v4427, %v4565
    %v4755 = vadd.f32 %v4428, %v4565
    %v4756 = vadd.f32 %v4429, %v4565
    %v4757 = vadd.f32 %v4430, %v4565
    %v4758 = vadd.f32 %v4431, %v4565
    %v4759 = vadd.f32 %v4432, %v4565
    %v4760 = vadd.f32 %v4433, %v4565
    %v4761 = vadd.f32 %v4434, %v4565
    %v4762 = vadd.f32 %v4435, %v4565
    %v4763 = vadd.f32 %v4436, %v4565
    %v4764 = vadd.f32 %v4437, %v4565
    %v4765 = vadd.f32 %v4438, %v4565
    %v4766 = vadd.f32 %v4439, %v4565
    %v4767 = vadd.f32 %v4440, %v4565
    %v4768 = vadd.f32 %v4441, %v4565
    %v4769 = vadd.f32 %v4442, %v4565
    %v4770 = vadd.f32 %v4443, %v4565
    %v4771 = vadd.f32 %v4444, %v4565
    %v4772 = vadd.f32 %v4445, %v4565
    %v4773 = vadd.f32 %v4446, %v4565
    %v4774 = vadd.f32 %v4447, %v4565
    %v4775 = vadd.f32 %v4448, %v4565
    %v4776 = vadd.f32 %v4449, %v4565
    %v4777 = vadd.f32 %v4450, %v4565
    %v4778 = vadd.f32 %v4451, %v4565
    %v4779 = vadd.f32 %v4452, %v4565
    %v4780 = vadd.f32 %v4453, %v4565
    %v4781 = vadd.f32 %v4454, %v4565
    %v4782 = vadd.f32 %v4455, %v4565
    %v4783 = vadd.f32 %v4456, %v4565
    %v4784 = vadd.f32 %v4457, %v4565
    %v4785 = vadd.f32 %v4458, %v4565
    %v4786 = vadd.f32 %v4459, %v4565
    %v4787 = vadd.f32 %v4460, %v4565
    %v4788 = vadd.f32 %v4461, %v4565
    %v4789 = vadd.f32 %v4462, %v4565
    %v4790 = vadd.f32 %v4463, %v4565
    %v4791 = vadd.f32 %v4464, %v4565
    %v4792 = vadd.f32 %v4465, %v4565
    %v4793 = vadd.f32 %v4466, %v4565
    %v4794 = vadd.f32 %v4467, %v4565
    %v4795 = vadd.f32 %v4468, %v4565
    %v4796 = vadd.f32 %v4469, %v4565
    %v4797 = vadd.f32 %v4470, %v4565
    %v4798 = vadd.f32 %v4471, %v4565
    %v4799 = vadd.f32 %v4472, %v4565
    %v4800 = vadd.f32 %v4473, %v4565
    %v4801 = vadd.f32 %v4474, %v4565
    %v4802 = vadd.f32 %v4475, %v4565
    %v4803 = vadd.f32 %v4476, %v4565
    %v4804 = vadd.f32 %v4477, %v4565
    %v4805 = vadd.f32 %v4478, %v4565
    %v4806 = vadd.f32 %v4479, %v4565
    %v4807 = vadd.f32 %v4480, %v4565
    %v4808 = vadd.f32 %v4481, %v4565
    %v4809 = vadd.f32 %v4482, %v4565
    %v4810 = vadd.f32 %v4483, %v4565
    %v4811 = vadd.f32 %v4484, %v4565
    %v4812 = vadd.f32 %v4485, %v4565
    %v4813 = vadd.f32 %v4486, %v4565
    %v4814 = vadd.f32 %v4487, %v4565
    %v4815 = vadd.f32 %v4488, %v4565
    %v4816 = vadd.f32 %v4489, %v4565
    %v4817 = vadd.f32 %v4490, %v4565
    %v4818 = vadd.f32 %v4491, %v4565
    %v4819 = vadd.f32 %v4492, %v4565
    %v4820 = vadd.f32 %v4493, %v4565
    %v4821 = vadd.f32 %v4494, %v4565
    %v4822 = vadd.f32 %v4495, %v4565
    %v4823 = vadd.f32 %v4496, %v4565
    %v4824 = vadd.f32 %v4497, %v4565
    %v4825 = vadd.f32 %v4498, %v4565
    %v4826 = vadd.f32 %v4499, %v4565
    %v4827 = vadd.f32 %v4500, %v4565
    %v4828 = vadd.f32 %v4501, %v4565
    %v4829 = vadd.f32 %v4502, %v4565
    %v4830 = vadd.f32 %v4503, %v4565
    %v4831 = vadd.f32 %v4504, %v4565
    %v4832 = vadd.f32 %v4505, %v4565
    %v4833 = vadd.f32 %v4506, %v4565
    %v4834 = vadd.f32 %v4507, %v4565
    %v4835 = vadd.f32 %v4508, %v4565
    %v4836 = vadd.f32 %v4509, %v4565
    %v4837 = vadd.f32 %v4510, %v4565
    %v4838 = vadd.f32 %v4511, %v4565
    %v4839 = vadd.f32 %v4512, %v4565
    %v4840 = vadd.f32 %v4513, %v4565
    %v4841 = vadd.f32 %v4514, %v4565
    %v4842 = vadd.f32 %v4515, %v4565
    %v4843 = vadd.f32 %v4516, %v4565
    %v4844 = vadd.f32 %v4517, %v4565
    %v4845 = vadd.f32 %v4518, %v4565
    %v4846 = vadd.f32 %v4519, %v4565
    %v4847 = vadd.f32 %v4520, %v4565
    %v4848 = vadd.f32 %v4521, %v4565
    %v4849 = vadd.f32 %v4522, %v4565
    %v4850 = vadd.f32 %v4523, %v4565
    %v4851 = vadd.f32 %v4524, %v4565
    %v4852 = vadd.f32 %v4525, %v4565
    %v4853 = vadd.f32 %v4526, %v4565
    %v4854 = vadd.f32 %v4527, %v4565
    %v4855 = vadd.f32 %v4528, %v4565
    %v4856 = vadd.f32 %v4529, %v4565
    %v4857 = vadd.f32 %v4530, %v4565
    %v4858 = vadd.f32 %v4531, %v4565
    %v4859 = vadd.f32 %v4532, %v4565
    %v4860 = vadd.f32 %v4533, %v4565
    %v4861 = vadd.f32 %v4534, %v4565
    %v4862 = vadd.f32 %v4535, %v4565
    %v4863 = vadd.f32 %v4536, %v4565
    %v4864 = vadd.f32 %v4537, %v4565
    %v4865 = vadd.f32 %v4538, %v4565
    %v4866 = vadd.f32 %v4539, %v4565
    %v4867 = vadd.f32 %v4540, %v4565
    %v4868 = vadd.f32 %v4541, %v4565
    %v4869 = vadd.f32 %v4542, %v4565
    %v4870 = vadd.f32 %v4543, %v4565
    %v4871 = vadd.f32 %v4544, %v4565
    %v4872 = vadd.f32 %v4545, %v4565
    %v4873 = vadd.f32 %v4546, %v4565
    %v4874 = vadd.f32 %v4547, %v4565
    %v4875 = vadd.f32 %v4548, %v4565
    %v4876 = vadd.f32 %v4549, %v4565
    %v4877 = vadd.f32 %v4550, %v4565
    %v4878 = vadd.f32 %v4551, %v4565
    %v4879 = vadd.f32 %v4552, %v4565
    %v4880 = vadd.f32 %v4553, %v4565
    %v4881 = vadd.f32 %v4554, %v4565
    %v4882 = vadd.f32 %v4555, %v4565
    %v4883 = vadd.f32 %v4556, %v4565
    %v4884 = vadd.f32 %v4557, %v4565
    %v4885 = vadd.f32 %v4558, %v4565
    %v4886 = vadd.f32 %v4559, %v4565
    %4887 = vst.msk [vmem:[%s3] sm:$0xff] %vm3916, %v4567
    %4888 = vst.msk [vmem:[%s3 + $0x8] sm:$0xff] %vm3916, %v4568
    %4889 = vst.msk [vmem:[%s3 + $0x10] sm:$0xff] %vm3916, %v4569
    %4890 = vst.msk [vmem:[%s3 + $0x18] sm:$0xff] %vm3916, %v4570
    %4891 = vst.msk [vmem:[%s3 + $0x20] sm:$0xff] %vm3916, %v4571
    %4892 = vst.msk [vmem:[%s3 + $0x28] sm:$0xff] %vm3916, %v4572
    %4893 = vst.msk [vmem:[%s3 + $0x30] sm:$0xff] %vm3916, %v4573
    %4894 = vst.msk [vmem:[%s3 + $0x38] sm:$0xff] %vm3916, %v4574
    %4895 = vst.msk [vmem:[%s3 + $0x40] sm:$0xff] %vm3916, %v4575
    %4896 = vst.msk [vmem:[%s3 + $0x48] sm:$0xff] %vm3916, %v4576
    %4897 = vst.msk [vmem:[%s3 + $0x50] sm:$0xff] %vm3916, %v4577
    %4898 = vst.msk [vmem:[%s3 + $0x58] sm:$0xff] %vm3916, %v4578
    %4899 = vst.msk [vmem:[%s3 + $0x60] sm:$0xff] %vm3916, %v4579
    %4900 = vst.msk [vmem:[%s3 + $0x68] sm:$0xff] %vm3916, %v4580
    %4901 = vst.msk [vmem:[%s3 + $0x70] sm:$0xff] %vm3916, %v4581
    %4902 = vst.msk [vmem:[%s3 + $0x78] sm:$0xff] %vm3916, %v4582
    %4903 = vst.msk [vmem:[%s3 + $0x80] sm:$0xff] %vm3916, %v4583
    %4904 = vst.msk [vmem:[%s3 + $0x88] sm:$0xff] %vm3916, %v4584
    %4905 = vst.msk [vmem:[%s3 + $0x90] sm:$0xff] %vm3916, %v4585
    %4906 = vst.msk [vmem:[%s3 + $0x98] sm:$0xff] %vm3916, %v4586
    %4907 = vst.msk [vmem:[%s3 + $0xa0] sm:$0xff] %vm3916, %v4587
    %4908 = vst.msk [vmem:[%s3 + $0xa8] sm:$0xff] %vm3916, %v4588
    %4909 = vst.msk [vmem:[%s3 + $0xb0] sm:$0xff] %vm3916, %v4589
    %4910 = vst.msk [vmem:[%s3 + $0xb8] sm:$0xff] %vm3916, %v4590
    %4911 = vst.msk [vmem:[%s3 + $0xc0] sm:$0xff] %vm3916, %v4591
    %4912 = vst.msk [vmem:[%s3 + $0xc8] sm:$0xff] %vm3916, %v4592
    %4913 = vst.msk [vmem:[%s3 + $0xd0] sm:$0xff] %vm3916, %v4593
    %4914 = vst.msk [vmem:[%s3 + $0xd8] sm:$0xff] %vm3916, %v4594
    %4915 = vst.msk [vmem:[%s3 + $0xe0] sm:$0xff] %vm3916, %v4595
    %4916 = vst.msk [vmem:[%s3 + $0xe8] sm:$0xff] %vm3916, %v4596
    %4917 = vst.msk [vmem:[%s3 + $0xf0] sm:$0xff] %vm3916, %v4597
    %4918 = vst.msk [vmem:[%s3 + $0xf8] sm:$0xff] %vm3916, %v4598
    %4919 = vst.msk [vmem:[%s3 + $0x100] sm:$0xff] %vm3916, %v4599
    %4920 = vst.msk [vmem:[%s3 + $0x108] sm:$0xff] %vm3916, %v4600
    %4921 = vst.msk [vmem:[%s3 + $0x110] sm:$0xff] %vm3916, %v4601
    %4922 = vst.msk [vmem:[%s3 + $0x118] sm:$0xff] %vm3916, %v4602
    %4923 = vst.msk [vmem:[%s3 + $0x120] sm:$0xff] %vm3916, %v4603
    %4924 = vst.msk [vmem:[%s3 + $0x128] sm:$0xff] %vm3916, %v4604
    %4925 = vst.msk [vmem:[%s3 + $0x130] sm:$0xff] %vm3916, %v4605
    %4926 = vst.msk [vmem:[%s3 + $0x138] sm:$0xff] %vm3916, %v4606
    %4927 = vst.msk [vmem:[%s3 + $0x140] sm:$0xff] %vm3916, %v4607
    %4928 = vst.msk [vmem:[%s3 + $0x148] sm:$0xff] %vm3916, %v4608
    %4929 = vst.msk [vmem:[%s3 + $0x150] sm:$0xff] %vm3916, %v4609
    %4930 = vst.msk [vmem:[%s3 + $0x158] sm:$0xff] %vm3916, %v4610
    %4931 = vst.msk [vmem:[%s3 + $0x160] sm:$0xff] %vm3916, %v4611
    %4932 = vst.msk [vmem:[%s3 + $0x168] sm:$0xff] %vm3916, %v4612
    %4933 = vst.msk [vmem:[%s3 + $0x170] sm:$0xff] %vm3916, %v4613
    %4934 = vst.msk [vmem:[%s3 + $0x178] sm:$0xff] %vm3916, %v4614
    %4935 = vst.msk [vmem:[%s3 + $0x180] sm:$0xff] %vm3916, %v4615
    %4936 = vst.msk [vmem:[%s3 + $0x188] sm:$0xff] %vm3916, %v4616
    %4937 = vst.msk [vmem:[%s3 + $0x190] sm:$0xff] %vm3916, %v4617
    %4938 = vst.msk [vmem:[%s3 + $0x198] sm:$0xff] %vm3916, %v4618
    %4939 = vst.msk [vmem:[%s3 + $0x1a0] sm:$0xff] %vm3916, %v4619
    %4940 = vst.msk [vmem:[%s3 + $0x1a8] sm:$0xff] %vm3916, %v4620
    %4941 = vst.msk [vmem:[%s3 + $0x1b0] sm:$0xff] %vm3916, %v4621
    %4942 = vst.msk [vmem:[%s3 + $0x1b8] sm:$0xff] %vm3916, %v4622
    %4943 = vst.msk [vmem:[%s3 + $0x1c0] sm:$0xff] %vm3916, %v4623
    %4944 = vst.msk [vmem:[%s3 + $0x1c8] sm:$0xff] %vm3916, %v4624
    %4945 = vst.msk [vmem:[%s3 + $0x1d0] sm:$0xff] %vm3916, %v4625
    %4946 = vst.msk [vmem:[%s3 + $0x1d8] sm:$0xff] %vm3916, %v4626
    %4947 = vst.msk [vmem:[%s3 + $0x1e0] sm:$0xff] %vm3916, %v4627
    %4948 = vst.msk [vmem:[%s3 + $0x1e8] sm:$0xff] %vm3916, %v4628
    %4949 = vst.msk [vmem:[%s3 + $0x1f0] sm:$0xff] %vm3916, %v4629
    %4950 = vst.msk [vmem:[%s3 + $0x1f8] sm:$0xff] %vm3916, %v4630
    %4951 = vst.msk [vmem:[%s3 + $0x200] sm:$0xff] %vm3916, %v4631
    %4952 = vst.msk [vmem:[%s3 + $0x208] sm:$0xff] %vm3916, %v4632
    %4953 = vst.msk [vmem:[%s3 + $0x210] sm:$0xff] %vm3916, %v4633
    %4954 = vst.msk [vmem:[%s3 + $0x218] sm:$0xff] %vm3916, %v4634
    %4955 = vst.msk [vmem:[%s3 + $0x220] sm:$0xff] %vm3916, %v4635
    %4956 = vst.msk [vmem:[%s3 + $0x228] sm:$0xff] %vm3916, %v4636
    %4957 = vst.msk [vmem:[%s3 + $0x230] sm:$0xff] %vm3916, %v4637
    %4958 = vst.msk [vmem:[%s3 + $0x238] sm:$0xff] %vm3916, %v4638
    %4959 = vst.msk [vmem:[%s3 + $0x240] sm:$0xff] %vm3916, %v4639
    %4960 = vst.msk [vmem:[%s3 + $0x248] sm:$0xff] %vm3916, %v4640
    %4961 = vst.msk [vmem:[%s3 + $0x250] sm:$0xff] %vm3916, %v4641
    %4962 = vst.msk [vmem:[%s3 + $0x258] sm:$0xff] %vm3916, %v4642
    %4963 = vst.msk [vmem:[%s3 + $0x260] sm:$0xff] %vm3916, %v4643
    %4964 = vst.msk [vmem:[%s3 + $0x268] sm:$0xff] %vm3916, %v4644
    %4965 = vst.msk [vmem:[%s3 + $0x270] sm:$0xff] %vm3916, %v4645
    %4966 = vst.msk [vmem:[%s3 + $0x278] sm:$0xff] %vm3916, %v4646
    %4967 = vst.msk [vmem:[%s3 + $0x280] sm:$0xff] %vm3916, %v4647
    %4968 = vst.msk [vmem:[%s3 + $0x288] sm:$0xff] %vm3916, %v4648
    %4969 = vst.msk [vmem:[%s3 + $0x290] sm:$0xff] %vm3916, %v4649
    %4970 = vst.msk [vmem:[%s3 + $0x298] sm:$0xff] %vm3916, %v4650
    %4971 = vst.msk [vmem:[%s3 + $0x2a0] sm:$0xff] %vm3916, %v4651
    %4972 = vst.msk [vmem:[%s3 + $0x2a8] sm:$0xff] %vm3916, %v4652
    %4973 = vst.msk [vmem:[%s3 + $0x2b0] sm:$0xff] %vm3916, %v4653
    %4974 = vst.msk [vmem:[%s3 + $0x2b8] sm:$0xff] %vm3916, %v4654
    %4975 = vst.msk [vmem:[%s3 + $0x2c0] sm:$0xff] %vm3916, %v4655
    %4976 = vst.msk [vmem:[%s3 + $0x2c8] sm:$0xff] %vm3916, %v4656
    %4977 = vst.msk [vmem:[%s3 + $0x2d0] sm:$0xff] %vm3916, %v4657
    %4978 = vst.msk [vmem:[%s3 + $0x2d8] sm:$0xff] %vm3916, %v4658
    %4979 = vst.msk [vmem:[%s3 + $0x2e0] sm:$0xff] %vm3916, %v4659
    %4980 = vst.msk [vmem:[%s3 + $0x2e8] sm:$0xff] %vm3916, %v4660
    %4981 = vst.msk [vmem:[%s3 + $0x2f0] sm:$0xff] %vm3916, %v4661
    %4982 = vst.msk [vmem:[%s3 + $0x2f8] sm:$0xff] %vm3916, %v4662
    %4983 = vst.msk [vmem:[%s3 + $0x300] sm:$0xff] %vm3916, %v4663
    %4984 = vst.msk [vmem:[%s3 + $0x308] sm:$0xff] %vm3916, %v4664
    %4985 = vst.msk [vmem:[%s3 + $0x310] sm:$0xff] %vm3916, %v4665
    %4986 = vst.msk [vmem:[%s3 + $0x318] sm:$0xff] %vm3916, %v4666
    %4987 = vst.msk [vmem:[%s3 + $0x320] sm:$0xff] %vm3916, %v4667
    %4988 = vst.msk [vmem:[%s3 + $0x328] sm:$0xff] %vm3916, %v4668
    %4989 = vst.msk [vmem:[%s3 + $0x330] sm:$0xff] %vm3916, %v4669
    %4990 = vst.msk [vmem:[%s3 + $0x338] sm:$0xff] %vm3916, %v4670
    %4991 = vst.msk [vmem:[%s3 + $0x340] sm:$0xff] %vm3916, %v4671
    %4992 = vst.msk [vmem:[%s3 + $0x348] sm:$0xff] %vm3916, %v4672
    %4993 = vst.msk [vmem:[%s3 + $0x350] sm:$0xff] %vm3916, %v4673
    %4994 = vst.msk [vmem:[%s3 + $0x358] sm:$0xff] %vm3916, %v4674
    %4995 = vst.msk [vmem:[%s3 + $0x360] sm:$0xff] %vm3916, %v4675
    %4996 = vst.msk [vmem:[%s3 + $0x368] sm:$0xff] %vm3916, %v4676
    %4997 = vst.msk [vmem:[%s3 + $0x370] sm:$0xff] %vm3916, %v4677
    %4998 = vst.msk [vmem:[%s3 + $0x378] sm:$0xff] %vm3916, %v4678
    %4999 = vst.msk [vmem:[%s3 + $0x380] sm:$0xff] %vm3916, %v4679
    %5000 = vst.msk [vmem:[%s3 + $0x388] sm:$0xff] %vm3916, %v4680
    %5001 = vst.msk [vmem:[%s3 + $0x390] sm:$0xff] %vm3916, %v4681
    %5002 = vst.msk [vmem:[%s3 + $0x398] sm:$0xff] %vm3916, %v4682
    %5003 = vst.msk [vmem:[%s3 + $0x3a0] sm:$0xff] %vm3916, %v4683
    %5004 = vst.msk [vmem:[%s3 + $0x3a8] sm:$0xff] %vm3916, %v4684
    %5005 = vst.msk [vmem:[%s3 + $0x3b0] sm:$0xff] %vm3916, %v4685
    %5006 = vst.msk [vmem:[%s3 + $0x3b8] sm:$0xff] %vm3916, %v4686
    %5007 = vst.msk [vmem:[%s3 + $0x3c0] sm:$0xff] %vm3916, %v4687
    %5008 = vst.msk [vmem:[%s3 + $0x3c8] sm:$0xff] %vm3916, %v4688
    %5009 = vst.msk [vmem:[%s3 + $0x3d0] sm:$0xff] %vm3916, %v4689
    %5010 = vst.msk [vmem:[%s3 + $0x3d8] sm:$0xff] %vm3916, %v4690
    %5011 = vst.msk [vmem:[%s3 + $0x3e0] sm:$0xff] %vm3916, %v4691
    %5012 = vst.msk [vmem:[%s3 + $0x3e8] sm:$0xff] %vm3916, %v4692
    %5013 = vst.msk [vmem:[%s3 + $0x3f0] sm:$0xff] %vm3916, %v4693
    %5014 = vst.msk [vmem:[%s3 + $0x3f8] sm:$0xff] %vm3916, %v4694
    %5015 = vst.msk [vmem:[%s3 + $0x400] sm:$0xff] %vm3916, %v4695
    %5016 = vst.msk [vmem:[%s3 + $0x408] sm:$0xff] %vm3916, %v4696
    %5017 = vst.msk [vmem:[%s3 + $0x410] sm:$0xff] %vm3916, %v4697
    %5018 = vst.msk [vmem:[%s3 + $0x418] sm:$0xff] %vm3916, %v4698
    %5019 = vst.msk [vmem:[%s3 + $0x420] sm:$0xff] %vm3916, %v4699
    %5020 = vst.msk [vmem:[%s3 + $0x428] sm:$0xff] %vm3916, %v4700
    %5021 = vst.msk [vmem:[%s3 + $0x430] sm:$0xff] %vm3916, %v4701
    %5022 = vst.msk [vmem:[%s3 + $0x438] sm:$0xff] %vm3916, %v4702
    %5023 = vst.msk [vmem:[%s3 + $0x440] sm:$0xff] %vm3916, %v4703
    %5024 = vst.msk [vmem:[%s3 + $0x448] sm:$0xff] %vm3916, %v4704
    %5025 = vst.msk [vmem:[%s3 + $0x450] sm:$0xff] %vm3916, %v4705
    %5026 = vst.msk [vmem:[%s3 + $0x458] sm:$0xff] %vm3916, %v4706
    %5027 = vst.msk [vmem:[%s3 + $0x460] sm:$0xff] %vm3916, %v4707
    %5028 = vst.msk [vmem:[%s3 + $0x468] sm:$0xff] %vm3916, %v4708
    %5029 = vst.msk [vmem:[%s3 + $0x470] sm:$0xff] %vm3916, %v4709
    %5030 = vst.msk [vmem:[%s3 + $0x478] sm:$0xff] %vm3916, %v4710
    %5031 = vst.msk [vmem:[%s3 + $0x480] sm:$0xff] %vm3916, %v4711
    %5032 = vst.msk [vmem:[%s3 + $0x488] sm:$0xff] %vm3916, %v4712
    %5033 = vst.msk [vmem:[%s3 + $0x490] sm:$0xff] %vm3916, %v4713
    %5034 = vst.msk [vmem:[%s3 + $0x498] sm:$0xff] %vm3916, %v4714
    %5035 = vst.msk [vmem:[%s3 + $0x4a0] sm:$0xff] %vm3916, %v4715
    %5036 = vst.msk [vmem:[%s3 + $0x4a8] sm:$0xff] %vm3916, %v4716
    %5037 = vst.msk [vmem:[%s3 + $0x4b0] sm:$0xff] %vm3916, %v4717
    %5038 = vst.msk [vmem:[%s3 + $0x4b8] sm:$0xff] %vm3916, %v4718
    %5039 = vst.msk [vmem:[%s3 + $0x4c0] sm:$0xff] %vm3916, %v4719
    %5040 = vst.msk [vmem:[%s3 + $0x4c8] sm:$0xff] %vm3916, %v4720
    %5041 = vst.msk [vmem:[%s3 + $0x4d0] sm:$0xff] %vm3916, %v4721
    %5042 = vst.msk [vmem:[%s3 + $0x4d8] sm:$0xff] %vm3916, %v4722
    %5043 = vst.msk [vmem:[%s3 + $0x4e0] sm:$0xff] %vm3916, %v4723
    %5044 = vst.msk [vmem:[%s3 + $0x4e8] sm:$0xff] %vm3916, %v4724
    %5045 = vst.msk [vmem:[%s3 + $0x4f0] sm:$0xff] %vm3916, %v4725
    %5046 = vst.msk [vmem:[%s3 + $0x4f8] sm:$0xff] %vm3916, %v4726
    %5047 = vst.msk [vmem:[%s3 + $0x500] sm:$0xff] %vm3916, %v4727
    %5048 = vst.msk [vmem:[%s3 + $0x508] sm:$0xff] %vm3916, %v4728
    %5049 = vst.msk [vmem:[%s3 + $0x510] sm:$0xff] %vm3916, %v4729
    %5050 = vst.msk [vmem:[%s3 + $0x518] sm:$0xff] %vm3916, %v4730
    %5051 = vst.msk [vmem:[%s3 + $0x520] sm:$0xff] %vm3916, %v4731
    %5052 = vst.msk [vmem:[%s3 + $0x528] sm:$0xff] %vm3916, %v4732
    %5053 = vst.msk [vmem:[%s3 + $0x530] sm:$0xff] %vm3916, %v4733
    %5054 = vst.msk [vmem:[%s3 + $0x538] sm:$0xff] %vm3916, %v4734
    %5055 = vst.msk [vmem:[%s3 + $0x540] sm:$0xff] %vm3916, %v4735
    %5056 = vst.msk [vmem:[%s3 + $0x548] sm:$0xff] %vm3916, %v4736
    %5057 = vst.msk [vmem:[%s3 + $0x550] sm:$0xff] %vm3916, %v4737
    %5058 = vst.msk [vmem:[%s3 + $0x558] sm:$0xff] %vm3916, %v4738
    %5059 = vst.msk [vmem:[%s3 + $0x560] sm:$0xff] %vm3916, %v4739
    %5060 = vst.msk [vmem:[%s3 + $0x568] sm:$0xff] %vm3916, %v4740
    %5061 = vst.msk [vmem:[%s3 + $0x570] sm:$0xff] %vm3916, %v4741
    %5062 = vst.msk [vmem:[%s3 + $0x578] sm:$0xff] %vm3916, %v4742
    %5063 = vst.msk [vmem:[%s3 + $0x580] sm:$0xff] %vm3916, %v4743
    %5064 = vst.msk [vmem:[%s3 + $0x588] sm:$0xff] %vm3916, %v4744
    %5065 = vst.msk [vmem:[%s3 + $0x590] sm:$0xff] %vm3916, %v4745
    %5066 = vst.msk [vmem:[%s3 + $0x598] sm:$0xff] %vm3916, %v4746
    %5067 = vst.msk [vmem:[%s3 + $0x5a0] sm:$0xff] %vm3916, %v4747
    %5068 = vst.msk [vmem:[%s3 + $0x5a8] sm:$0xff] %vm3916, %v4748
    %5069 = vst.msk [vmem:[%s3 + $0x5b0] sm:$0xff] %vm3916, %v4749
    %5070 = vst.msk [vmem:[%s3 + $0x5b8] sm:$0xff] %vm3916, %v4750
    %5071 = vst.msk [vmem:[%s3 + $0x5c0] sm:$0xff] %vm3916, %v4751
    %5072 = vst.msk [vmem:[%s3 + $0x5c8] sm:$0xff] %vm3916, %v4752
    %5073 = vst.msk [vmem:[%s3 + $0x5d0] sm:$0xff] %vm3916, %v4753
    %5074 = vst.msk [vmem:[%s3 + $0x5d8] sm:$0xff] %vm3916, %v4754
    %5075 = vst.msk [vmem:[%s3 + $0x5e0] sm:$0xff] %vm3916, %v4755
    %5076 = vst.msk [vmem:[%s3 + $0x5e8] sm:$0xff] %vm3916, %v4756
    %5077 = vst.msk [vmem:[%s3 + $0x5f0] sm:$0xff] %vm3916, %v4757
    %5078 = vst.msk [vmem:[%s3 + $0x5f8] sm:$0xff] %vm3916, %v4758
    %5079 = vst.msk [vmem:[%s3 + $0x600] sm:$0xff] %vm3916, %v4759
    %5080 = vst.msk [vmem:[%s3 + $0x608] sm:$0xff] %vm3916, %v4760
    %5081 = vst.msk [vmem:[%s3 + $0x610] sm:$0xff] %vm3916, %v4761
    %5082 = vst.msk [vmem:[%s3 + $0x618] sm:$0xff] %vm3916, %v4762
    %5083 = vst.msk [vmem:[%s3 + $0x620] sm:$0xff] %vm3916, %v4763
    %5084 = vst.msk [vmem:[%s3 + $0x628] sm:$0xff] %vm3916, %v4764
    %5085 = vst.msk [vmem:[%s3 + $0x630] sm:$0xff] %vm3916, %v4765
    %5086 = vst.msk [vmem:[%s3 + $0x638] sm:$0xff] %vm3916, %v4766
    %5087 = vst.msk [vmem:[%s3 + $0x640] sm:$0xff] %vm3916, %v4767
    %5088 = vst.msk [vmem:[%s3 + $0x648] sm:$0xff] %vm3916, %v4768
    %5089 = vst.msk [vmem:[%s3 + $0x650] sm:$0xff] %vm3916, %v4769
    %5090 = vst.msk [vmem:[%s3 + $0x658] sm:$0xff] %vm3916, %v4770
    %5091 = vst.msk [vmem:[%s3 + $0x660] sm:$0xff] %vm3916, %v4771
    %5092 = vst.msk [vmem:[%s3 + $0x668] sm:$0xff] %vm3916, %v4772
    %5093 = vst.msk [vmem:[%s3 + $0x670] sm:$0xff] %vm3916, %v4773
    %5094 = vst.msk [vmem:[%s3 + $0x678] sm:$0xff] %vm3916, %v4774
    %5095 = vst.msk [vmem:[%s3 + $0x680] sm:$0xff] %vm3916, %v4775
    %5096 = vst.msk [vmem:[%s3 + $0x688] sm:$0xff] %vm3916, %v4776
    %5097 = vst.msk [vmem:[%s3 + $0x690] sm:$0xff] %vm3916, %v4777
    %5098 = vst.msk [vmem:[%s3 + $0x698] sm:$0xff] %vm3916, %v4778
    %5099 = vst.msk [vmem:[%s3 + $0x6a0] sm:$0xff] %vm3916, %v4779
    %5100 = vst.msk [vmem:[%s3 + $0x6a8] sm:$0xff] %vm3916, %v4780
    %5101 = vst.msk [vmem:[%s3 + $0x6b0] sm:$0xff] %vm3916, %v4781
    %5102 = vst.msk [vmem:[%s3 + $0x6b8] sm:$0xff] %vm3916, %v4782
    %5103 = vst.msk [vmem:[%s3 + $0x6c0] sm:$0xff] %vm3916, %v4783
    %5104 = vst.msk [vmem:[%s3 + $0x6c8] sm:$0xff] %vm3916, %v4784
    %5105 = vst.msk [vmem:[%s3 + $0x6d0] sm:$0xff] %vm3916, %v4785
    %5106 = vst.msk [vmem:[%s3 + $0x6d8] sm:$0xff] %vm3916, %v4786
    %5107 = vst.msk [vmem:[%s3 + $0x6e0] sm:$0xff] %vm3916, %v4787
    %5108 = vst.msk [vmem:[%s3 + $0x6e8] sm:$0xff] %vm3916, %v4788
    %5109 = vst.msk [vmem:[%s3 + $0x6f0] sm:$0xff] %vm3916, %v4789
    %5110 = vst.msk [vmem:[%s3 + $0x6f8] sm:$0xff] %vm3916, %v4790
    %5111 = vst.msk [vmem:[%s3 + $0x700] sm:$0xff] %vm3916, %v4791
    %5112 = vst.msk [vmem:[%s3 + $0x708] sm:$0xff] %vm3916, %v4792
    %5113 = vst.msk [vmem:[%s3 + $0x710] sm:$0xff] %vm3916, %v4793
    %5114 = vst.msk [vmem:[%s3 + $0x718] sm:$0xff] %vm3916, %v4794
    %5115 = vst.msk [vmem:[%s3 + $0x720] sm:$0xff] %vm3916, %v4795
    %5116 = vst.msk [vmem:[%s3 + $0x728] sm:$0xff] %vm3916, %v4796
    %5117 = vst.msk [vmem:[%s3 + $0x730] sm:$0xff] %vm3916, %v4797
    %5118 = vst.msk [vmem:[%s3 + $0x738] sm:$0xff] %vm3916, %v4798
    %5119 = vst.msk [vmem:[%s3 + $0x740] sm:$0xff] %vm3916, %v4799
    %5120 = vst.msk [vmem:[%s3 + $0x748] sm:$0xff] %vm3916, %v4800
    %5121 = vst.msk [vmem:[%s3 + $0x750] sm:$0xff] %vm3916, %v4801
    %5122 = vst.msk [vmem:[%s3 + $0x758] sm:$0xff] %vm3916, %v4802
    %5123 = vst.msk [vmem:[%s3 + $0x760] sm:$0xff] %vm3916, %v4803
    %5124 = vst.msk [vmem:[%s3 + $0x768] sm:$0xff] %vm3916, %v4804
    %5125 = vst.msk [vmem:[%s3 + $0x770] sm:$0xff] %vm3916, %v4805
    %5126 = vst.msk [vmem:[%s3 + $0x778] sm:$0xff] %vm3916, %v4806
    %5127 = vst.msk [vmem:[%s3 + $0x780] sm:$0xff] %vm3916, %v4807
    %5128 = vst.msk [vmem:[%s3 + $0x788] sm:$0xff] %vm3916, %v4808
    %5129 = vst.msk [vmem:[%s3 + $0x790] sm:$0xff] %vm3916, %v4809
    %5130 = vst.msk [vmem:[%s3 + $0x798] sm:$0xff] %vm3916, %v4810
    %5131 = vst.msk [vmem:[%s3 + $0x7a0] sm:$0xff] %vm3916, %v4811
    %5132 = vst.msk [vmem:[%s3 + $0x7a8] sm:$0xff] %vm3916, %v4812
    %5133 = vst.msk [vmem:[%s3 + $0x7b0] sm:$0xff] %vm3916, %v4813
    %5134 = vst.msk [vmem:[%s3 + $0x7b8] sm:$0xff] %vm3916, %v4814
    %5135 = vst.msk [vmem:[%s3 + $0x7c0] sm:$0xff] %vm3916, %v4815
    %5136 = vst.msk [vmem:[%s3 + $0x7c8] sm:$0xff] %vm3916, %v4816
    %5137 = vst.msk [vmem:[%s3 + $0x7d0] sm:$0xff] %vm3916, %v4817
    %5138 = vst.msk [vmem:[%s3 + $0x7d8] sm:$0xff] %vm3916, %v4818
    %5139 = vst.msk [vmem:[%s3 + $0x7e0] sm:$0xff] %vm3916, %v4819
    %5140 = vst.msk [vmem:[%s3 + $0x7e8] sm:$0xff] %vm3916, %v4820
    %5141 = vst.msk [vmem:[%s3 + $0x7f0] sm:$0xff] %vm3916, %v4821
    %5142 = vst.msk [vmem:[%s3 + $0x7f8] sm:$0xff] %vm3916, %v4822
    %5143 = vst.msk [vmem:[%s3 + $0x800] sm:$0xff] %vm3916, %v4823
    %5144 = vst.msk [vmem:[%s3 + $0x808] sm:$0xff] %vm3916, %v4824
    %5145 = vst.msk [vmem:[%s3 + $0x810] sm:$0xff] %vm3916, %v4825
    %5146 = vst.msk [vmem:[%s3 + $0x818] sm:$0xff] %vm3916, %v4826
    %5147 = vst.msk [vmem:[%s3 + $0x820] sm:$0xff] %vm3916, %v4827
    %5148 = vst.msk [vmem:[%s3 + $0x828] sm:$0xff] %vm3916, %v4828
    %5149 = vst.msk [vmem:[%s3 + $0x830] sm:$0xff] %vm3916, %v4829
    %5150 = vst.msk [vmem:[%s3 + $0x838] sm:$0xff] %vm3916, %v4830
    %5151 = vst.msk [vmem:[%s3 + $0x840] sm:$0xff] %vm3916, %v4831
    %5152 = vst.msk [vmem:[%s3 + $0x848] sm:$0xff] %vm3916, %v4832
    %5153 = vst.msk [vmem:[%s3 + $0x850] sm:$0xff] %vm3916, %v4833
    %5154 = vst.msk [vmem:[%s3 + $0x858] sm:$0xff] %vm3916, %v4834
    %5155 = vst.msk [vmem:[%s3 + $0x860] sm:$0xff] %vm3916, %v4835
    %5156 = vst.msk [vmem:[%s3 + $0x868] sm:$0xff] %vm3916, %v4836
    %5157 = vst.msk [vmem:[%s3 + $0x870] sm:$0xff] %vm3916, %v4837
    %5158 = vst.msk [vmem:[%s3 + $0x878] sm:$0xff] %vm3916, %v4838
    %5159 = vst.msk [vmem:[%s3 + $0x880] sm:$0xff] %vm3916, %v4839
    %5160 = vst.msk [vmem:[%s3 + $0x888] sm:$0xff] %vm3916, %v4840
    %5161 = vst.msk [vmem:[%s3 + $0x890] sm:$0xff] %vm3916, %v4841
    %5162 = vst.msk [vmem:[%s3 + $0x898] sm:$0xff] %vm3916, %v4842
    %5163 = vst.msk [vmem:[%s3 + $0x8a0] sm:$0xff] %vm3916, %v4843
    %5164 = vst.msk [vmem:[%s3 + $0x8a8] sm:$0xff] %vm3916, %v4844
    %5165 = vst.msk [vmem:[%s3 + $0x8b0] sm:$0xff] %vm3916, %v4845
    %5166 = vst.msk [vmem:[%s3 + $0x8b8] sm:$0xff] %vm3916, %v4846
    %5167 = vst.msk [vmem:[%s3 + $0x8c0] sm:$0xff] %vm3916, %v4847
    %5168 = vst.msk [vmem:[%s3 + $0x8c8] sm:$0xff] %vm3916, %v4848
    %5169 = vst.msk [vmem:[%s3 + $0x8d0] sm:$0xff] %vm3916, %v4849
    %5170 = vst.msk [vmem:[%s3 + $0x8d8] sm:$0xff] %vm3916, %v4850
    %5171 = vst.msk [vmem:[%s3 + $0x8e0] sm:$0xff] %vm3916, %v4851
    %5172 = vst.msk [vmem:[%s3 + $0x8e8] sm:$0xff] %vm3916, %v4852
    %5173 = vst.msk [vmem:[%s3 + $0x8f0] sm:$0xff] %vm3916, %v4853
    %5174 = vst.msk [vmem:[%s3 + $0x8f8] sm:$0xff] %vm3916, %v4854
    %5175 = vst.msk [vmem:[%s3 + $0x900] sm:$0xff] %vm3916, %v4855
    %5176 = vst.msk [vmem:[%s3 + $0x908] sm:$0xff] %vm3916, %v4856
    %5177 = vst.msk [vmem:[%s3 + $0x910] sm:$0xff] %vm3916, %v4857
    %5178 = vst.msk [vmem:[%s3 + $0x918] sm:$0xff] %vm3916, %v4858
    %5179 = vst.msk [vmem:[%s3 + $0x920] sm:$0xff] %vm3916, %v4859
    %5180 = vst.msk [vmem:[%s3 + $0x928] sm:$0xff] %vm3916, %v4860
    %5181 = vst.msk [vmem:[%s3 + $0x930] sm:$0xff] %vm3916, %v4861
    %5182 = vst.msk [vmem:[%s3 + $0x938] sm:$0xff] %vm3916, %v4862
    %5183 = vst.msk [vmem:[%s3 + $0x940] sm:$0xff] %vm3916, %v4863
    %5184 = vst.msk [vmem:[%s3 + $0x948] sm:$0xff] %vm3916, %v4864
    %5185 = vst.msk [vmem:[%s3 + $0x950] sm:$0xff] %vm3916, %v4865
    %5186 = vst.msk [vmem:[%s3 + $0x958] sm:$0xff] %vm3916, %v4866
    %5187 = vst.msk [vmem:[%s3 + $0x960] sm:$0xff] %vm3916, %v4867
    %5188 = vst.msk [vmem:[%s3 + $0x968] sm:$0xff] %vm3916, %v4868
    %5189 = vst.msk [vmem:[%s3 + $0x970] sm:$0xff] %vm3916, %v4869
    %5190 = vst.msk [vmem:[%s3 + $0x978] sm:$0xff] %vm3916, %v4870
    %5191 = vst.msk [vmem:[%s3 + $0x980] sm:$0xff] %vm3916, %v4871
    %5192 = vst.msk [vmem:[%s3 + $0x988] sm:$0xff] %vm3916, %v4872
    %5193 = vst.msk [vmem:[%s3 + $0x990] sm:$0xff] %vm3916, %v4873
    %5194 = vst.msk [vmem:[%s3 + $0x998] sm:$0xff] %vm3916, %v4874
    %5195 = vst.msk [vmem:[%s3 + $0x9a0] sm:$0xff] %vm3916, %v4875
    %5196 = vst.msk [vmem:[%s3 + $0x9a8] sm:$0xff] %vm3916, %v4876
    %5197 = vst.msk [vmem:[%s3 + $0x9b0] sm:$0xff] %vm3916, %v4877
    %5198 = vst.msk [vmem:[%s3 + $0x9b8] sm:$0xff] %vm3916, %v4878
    %5199 = vst.msk [vmem:[%s3 + $0x9c0] sm:$0xff] %vm3916, %v4879
    %5200 = vst.msk [vmem:[%s3 + $0x9c8] sm:$0xff] %vm3916, %v4880
    %5201 = vst.msk [vmem:[%s3 + $0x9d0] sm:$0xff] %vm3916, %v4881
    %5202 = vst.msk [vmem:[%s3 + $0x9d8] sm:$0xff] %vm3916, %v4882
    %5203 = vst.msk [vmem:[%s3 + $0x9e0] sm:$0xff] %vm3916, %v4883
    %5204 = vst.msk [vmem:[%s3 + $0x9e8] sm:$0xff] %vm3916, %v4884
    %5205 = vst.msk [vmem:[%s3 + $0x9f0] sm:$0xff] %vm3916, %v4885
    %5206 = vst.msk [vmem:[%s3 + $0x9f8] sm:$0xff] %vm3916, %v4886
  $region21: #{jvp__.10} parent=0 // pred_fallthru
    _
  // Predicated region
  $region22: #{jvp__.10} parent=0 // pred_check
    _
  $region23: #{jvp__.10} parent=0 // pred_check_branch
    %5208 = sbr.rel (0) target = $region25
  $region24: #{jvp__.10} parent=0 // pred_region
    _
  $region25: #{jvp__.10} parent=0 // pred_fallthru
    _
  // Predicated region
  $region26: #{jvp__.10} parent=0 // pred_check
    _
  $region27: #{jvp__.10} parent=0 // pred_check_branch
    %5210 = sbr.rel (0) target = $region29
  $region28: #{jvp__.10} parent=0 // pred_region
    _
  $region29: #{jvp__.10} parent=0 // pred_fallthru
    _

// kernel: jvp__.11
$region0: #{jvp__.11}
  #allocation0 [shape = 'u32[]', space=smem, size = 0x4, offset = 0x4, fixed_abs, tag = 'smem constant byte address 0x4 - core index']
  #allocation1 [shape = 'u32[144,128]{1,0:T(1,128)}', space=vmem, size = 0x12000, scoped, tag = 'internal scratch']
  #allocation2 [shape = 'f32[640,8]{1,0:T(8,128)}', space=vmem, size = 0x50000, scoped, tag = 'scratch operand']
  %s0 = inlined_call_operand.vmem [shape: bf16[640,72], index: 0, kind: input, shape index: {}]
  %s1 = inlined_call_operand.vmem [shape: bf16[72,8], index: 1, kind: input, shape index: {}]
  %s2 = inlined_call_operand.vmem [shape: f32[1,8], index: 2, kind: input, shape index: {}]
  %s3 = inlined_call_operand.vmem [shape: f32[640,8], index: 3, kind: output, shape index: {}]
  %s4 = sld [smem:[#allocation0]]
  $region30: #{jvp__.11} parent=0
    _
  %s6 = ssub.s32 1, %s4
  %s7 = scalar_select 0, %s6, %s4
  // Predicated region
  $region2: #{jvp__.11} parent=0 // pred_check
    _
  $region3: #{jvp__.11} parent=0 // pred_check_branch
    %9 = sbr.rel (0) target = $region5
  $region4: #{jvp__.11} parent=0 // pred_region
    _
  $region5: #{jvp__.11} parent=0 // pred_fallthru
    _
  // Predicated region
  $region6: #{jvp__.11} parent=0 // pred_check
    _
  $region7: #{jvp__.11} parent=0 // pred_check_branch
    %11 = sbr.rel (0) target = $region9
  $region8: #{jvp__.11} parent=0 // pred_region
    _
  $region9: #{jvp__.11} parent=0 // pred_fallthru
    _
  // Predicated region
  $region10: #{jvp__.11} parent=0 // pred_check
    _
  $region11: #{jvp__.11} parent=0 // pred_check_branch
    %13 = sbr.rel (0) target = $region13
  $region12: #{jvp__.11} parent=0 // pred_region
    _
  $region13: #{jvp__.11} parent=0 // pred_fallthru
    _
  %p15 = scmp.eq.s32.totalorder 0, 0
  // Predicated region
  $region14: #{jvp__.11} parent=0 // pred_check
    %p16 = pneg %p15
  $region15: #{jvp__.11} parent=0 // pred_check_branch
    %18 = sbr.rel (%p16) target = $region17
  $region16: #{jvp__.11} parent=0 // pred_region
    %vm19 = vcmask 64512
    %20 = vst.msk [vmem:[#allocation2] sm:$0xff] %vm19, 0.0
    %21 = vst.msk [vmem:[#allocation2 + $0x8] sm:$0xff] %vm19, 0.0
    %22 = vst.msk [vmem:[#allocation2 + $0x10] sm:$0xff] %vm19, 0.0
    %23 = vst.msk [vmem:[#allocation2 + $0x18] sm:$0xff] %vm19, 0.0
    %24 = vst.msk [vmem:[#allocation2 + $0x20] sm:$0xff] %vm19, 0.0
    %25 = vst.msk [vmem:[#allocation2 + $0x28] sm:$0xff] %vm19, 0.0
    %26 = vst.msk [vmem:[#allocation2 + $0x30] sm:$0xff] %vm19, 0.0
    %27 = vst.msk [vmem:[#allocation2 + $0x38] sm:$0xff] %vm19, 0.0
    %28 = vst.msk [vmem:[#allocation2 + $0x40] sm:$0xff] %vm19, 0.0
    %29 = vst.msk [vmem:[#allocation2 + $0x48] sm:$0xff] %vm19, 0.0
    %30 = vst.msk [vmem:[#allocation2 + $0x50] sm:$0xff] %vm19, 0.0
    %31 = vst.msk [vmem:[#allocation2 + $0x58] sm:$0xff] %vm19, 0.0
    %32 = vst.msk [vmem:[#allocation2 + $0x60] sm:$0xff] %vm19, 0.0
    %33 = vst.msk [vmem:[#allocation2 + $0x68] sm:$0xff] %vm19, 0.0
    %34 = vst.msk [vmem:[#allocation2 + $0x70] sm:$0xff] %vm19, 0.0
    %35 = vst.msk [vmem:[#allocation2 + $0x78] sm:$0xff] %vm19, 0.0
    %36 = vst.msk [vmem:[#allocation2 + $0x80] sm:$0xff] %vm19, 0.0
    %37 = vst.msk [vmem:[#allocation2 + $0x88] sm:$0xff] %vm19, 0.0
    %38 = vst.msk [vmem:[#allocation2 + $0x90] sm:$0xff] %vm19, 0.0
    %39 = vst.msk [vmem:[#allocation2 + $0x98] sm:$0xff] %vm19, 0.0
    %40 = vst.msk [vmem:[#allocation2 + $0xa0] sm:$0xff] %vm19, 0.0
    %41 = vst.msk [vmem:[#allocation2 + $0xa8] sm:$0xff] %vm19, 0.0
    %42 = vst.msk [vmem:[#allocation2 + $0xb0] sm:$0xff] %vm19, 0.0
    %43 = vst.msk [vmem:[#allocation2 + $0xb8] sm:$0xff] %vm19, 0.0
    %44 = vst.msk [vmem:[#allocation2 + $0xc0] sm:$0xff] %vm19, 0.0
    %45 = vst.msk [vmem:[#allocation2 + $0xc8] sm:$0xff] %vm19, 0.0
    %46 = vst.msk [vmem:[#allocation2 + $0xd0] sm:$0xff] %vm19, 0.0
    %47 = vst.msk [vmem:[#allocation2 + $0xd8] sm:$0xff] %vm19, 0.0
    %48 = vst.msk [vmem:[#allocation2 + $0xe0] sm:$0xff] %vm19, 0.0
    %49 = vst.msk [vmem:[#allocation2 + $0xe8] sm:$0xff] %vm19, 0.0
    %50 = vst.msk [vmem:[#allocation2 + $0xf0] sm:$0xff] %vm19, 0.0
    %51 = vst.msk [vmem:[#allocation2 + $0xf8] sm:$0xff] %vm19, 0.0
    %52 = vst.msk [vmem:[#allocation2 + $0x100] sm:$0xff] %vm19, 0.0
    %53 = vst.msk [vmem:[#allocation2 + $0x108] sm:$0xff] %vm19, 0.0
    %54 = vst.msk [vmem:[#allocation2 + $0x110] sm:$0xff] %vm19, 0.0
    %55 = vst.msk [vmem:[#allocation2 + $0x118] sm:$0xff] %vm19, 0.0
    %56 = vst.msk [vmem:[#allocation2 + $0x120] sm:$0xff] %vm19, 0.0
    %57 = vst.msk [vmem:[#allocation2 + $0x128] sm:$0xff] %vm19, 0.0
    %58 = vst.msk [vmem:[#allocation2 + $0x130] sm:$0xff] %vm19, 0.0
    %59 = vst.msk [vmem:[#allocation2 + $0x138] sm:$0xff] %vm19, 0.0
    %60 = vst.msk [vmem:[#allocation2 + $0x140] sm:$0xff] %vm19, 0.0
    %61 = vst.msk [vmem:[#allocation2 + $0x148] sm:$0xff] %vm19, 0.0
    %62 = vst.msk [vmem:[#allocation2 + $0x150] sm:$0xff] %vm19, 0.0
    %63 = vst.msk [vmem:[#allocation2 + $0x158] sm:$0xff] %vm19, 0.0
    %64 = vst.msk [vmem:[#allocation2 + $0x160] sm:$0xff] %vm19, 0.0
    %65 = vst.msk [vmem:[#allocation2 + $0x168] sm:$0xff] %vm19, 0.0
    %66 = vst.msk [vmem:[#allocation2 + $0x170] sm:$0xff] %vm19, 0.0
    %67 = vst.msk [vmem:[#allocation2 + $0x178] sm:$0xff] %vm19, 0.0
    %68 = vst.msk [vmem:[#allocation2 + $0x180] sm:$0xff] %vm19, 0.0
    %69 = vst.msk [vmem:[#allocation2 + $0x188] sm:$0xff] %vm19, 0.0
    %70 = vst.msk [vmem:[#allocation2 + $0x190] sm:$0xff] %vm19, 0.0
    %71 = vst.msk [vmem:[#allocation2 + $0x198] sm:$0xff] %vm19, 0.0
    %72 = vst.msk [vmem:[#allocation2 + $0x1a0] sm:$0xff] %vm19, 0.0
    %73 = vst.msk [vmem:[#allocation2 + $0x1a8] sm:$0xff] %vm19, 0.0
    %74 = vst.msk [vmem:[#allocation2 + $0x1b0] sm:$0xff] %vm19, 0.0
    %75 = vst.msk [vmem:[#allocation2 + $0x1b8] sm:$0xff] %vm19, 0.0
    %76 = vst.msk [vmem:[#allocation2 + $0x1c0] sm:$0xff] %vm19, 0.0
    %77 = vst.msk [vmem:[#allocation2 + $0x1c8] sm:$0xff] %vm19, 0.0
    %78 = vst.msk [vmem:[#allocation2 + $0x1d0] sm:$0xff] %vm19, 0.0
    %79 = vst.msk [vmem:[#allocation2 + $0x1d8] sm:$0xff] %vm19, 0.0
    %80 = vst.msk [vmem:[#allocation2 + $0x1e0] sm:$0xff] %vm19, 0.0
    %81 = vst.msk [vmem:[#allocation2 + $0x1e8] sm:$0xff] %vm19, 0.0
    %82 = vst.msk [vmem:[#allocation2 + $0x1f0] sm:$0xff] %vm19, 0.0
    %83 = vst.msk [vmem:[#allocation2 + $0x1f8] sm:$0xff] %vm19, 0.0
    %84 = vst.msk [vmem:[#allocation2 + $0x200] sm:$0xff] %vm19, 0.0
    %85 = vst.msk [vmem:[#allocation2 + $0x208] sm:$0xff] %vm19, 0.0
    %86 = vst.msk [vmem:[#allocation2 + $0x210] sm:$0xff] %vm19, 0.0
    %87 = vst.msk [vmem:[#allocation2 + $0x218] sm:$0xff] %vm19, 0.0
    %88 = vst.msk [vmem:[#allocation2 + $0x220] sm:$0xff] %vm19, 0.0
    %89 = vst.msk [vmem:[#allocation2 + $0x228] sm:$0xff] %vm19, 0.0
    %90 = vst.msk [vmem:[#allocation2 + $0x230] sm:$0xff] %vm19, 0.0
    %91 = vst.msk [vmem:[#allocation2 + $0x238] sm:$0xff] %vm19, 0.0
    %92 = vst.msk [vmem:[#allocation2 + $0x240] sm:$0xff] %vm19, 0.0
    %93 = vst.msk [vmem:[#allocation2 + $0x248] sm:$0xff] %vm19, 0.0
    %94 = vst.msk [vmem:[#allocation2 + $0x250] sm:$0xff] %vm19, 0.0
    %95 = vst.msk [vmem:[#allocation2 + $0x258] sm:$0xff] %vm19, 0.0
    %96 = vst.msk [vmem:[#allocation2 + $0x260] sm:$0xff] %vm19, 0.0
    %97 = vst.msk [vmem:[#allocation2 + $0x268] sm:$0xff] %vm19, 0.0
    %98 = vst.msk [vmem:[#allocation2 + $0x270] sm:$0xff] %vm19, 0.0
    %99 = vst.msk [vmem:[#allocation2 + $0x278] sm:$0xff] %vm19, 0.0
  $region17: #{jvp__.11} parent=0 // pred_fallthru
    _
  %v100 = vld [vmem:[#allocation2] sm:$0xff]
  %v101 = vld [vmem:[#allocation2 + $0x8] sm:$0xff]
  %v102 = vld [vmem:[#allocation2 + $0x10] sm:$0xff]
  %v103 = vld [vmem:[#allocation2 + $0x18] sm:$0xff]
  %v104 = vld [vmem:[#allocation2 + $0x20] sm:$0xff]
  %v105 = vld [vmem:[#allocation2 + $0x28] sm:$0xff]
  %v106 = vld [vmem:[#allocation2 + $0x30] sm:$0xff]
  %v107 = vld [vmem:[#allocation2 + $0x38] sm:$0xff]
  %v108 = vld [vmem:[#allocation2 + $0x40] sm:$0xff]
  %v109 = vld [vmem:[#allocation2 + $0x48] sm:$0xff]
  %v110 = vld [vmem:[#allocation2 + $0x50] sm:$0xff]
  %v111 = vld [vmem:[#allocation2 + $0x58] sm:$0xff]
  %v112 = vld [vmem:[#allocation2 + $0x60] sm:$0xff]
  %v113 = vld [vmem:[#allocation2 + $0x68] sm:$0xff]
  %v114 = vld [vmem:[#allocation2 + $0x70] sm:$0xff]
  %v115 = vld [vmem:[#allocation2 + $0x78] sm:$0xff]
  %v116 = vld [vmem:[#allocation2 + $0x80] sm:$0xff]
  %v117 = vld [vmem:[#allocation2 + $0x88] sm:$0xff]
  %v118 = vld [vmem:[#allocation2 + $0x90] sm:$0xff]
  %v119 = vld [vmem:[#allocation2 + $0x98] sm:$0xff]
  %v120 = vld [vmem:[#allocation2 + $0xa0] sm:$0xff]
  %v121 = vld [vmem:[#allocation2 + $0xa8] sm:$0xff]
  %v122 = vld [vmem:[#allocation2 + $0xb0] sm:$0xff]
  %v123 = vld [vmem:[#allocation2 + $0xb8] sm:$0xff]
  %v124 = vld [vmem:[#allocation2 + $0xc0] sm:$0xff]
  %v125 = vld [vmem:[#allocation2 + $0xc8] sm:$0xff]
  %v126 = vld [vmem:[#allocation2 + $0xd0] sm:$0xff]
  %v127 = vld [vmem:[#allocation2 + $0xd8] sm:$0xff]
  %v128 = vld [vmem:[#allocation2 + $0xe0] sm:$0xff]
  %v129 = vld [vmem:[#allocation2 + $0xe8] sm:$0xff]
  %v130 = vld [vmem:[#allocation2 + $0xf0] sm:$0xff]
  %v131 = vld [vmem:[#allocation2 + $0xf8] sm:$0xff]
  %v132 = vld [vmem:[#allocation2 + $0x100] sm:$0xff]
  %v133 = vld [vmem:[#allocation2 + $0x108] sm:$0xff]
  %v134 = vld [vmem:[#allocation2 + $0x110] sm:$0xff]
  %v135 = vld [vmem:[#allocation2 + $0x118] sm:$0xff]
  %v136 = vld [vmem:[#allocation2 + $0x120] sm:$0xff]
  %v137 = vld [vmem:[#allocation2 + $0x128] sm:$0xff]
  %v138 = vld [vmem:[#allocation2 + $0x130] sm:$0xff]
  %v139 = vld [vmem:[#allocation2 + $0x138] sm:$0xff]
  %v140 = vld [vmem:[#allocation2 + $0x140] sm:$0xff]
  %v141 = vld [vmem:[#allocation2 + $0x148] sm:$0xff]
  %v142 = vld [vmem:[#allocation2 + $0x150] sm:$0xff]
  %v143 = vld [vmem:[#allocation2 + $0x158] sm:$0xff]
  %v144 = vld [vmem:[#allocation2 + $0x160] sm:$0xff]
  %v145 = vld [vmem:[#allocation2 + $0x168] sm:$0xff]
  %v146 = vld [vmem:[#allocation2 + $0x170] sm:$0xff]
  %v147 = vld [vmem:[#allocation2 + $0x178] sm:$0xff]
  %v148 = vld [vmem:[#allocation2 + $0x180] sm:$0xff]
  %v149 = vld [vmem:[#allocation2 + $0x188] sm:$0xff]
  %v150 = vld [vmem:[#allocation2 + $0x190] sm:$0xff]
  %v151 = vld [vmem:[#allocation2 + $0x198] sm:$0xff]
  %v152 = vld [vmem:[#allocation2 + $0x1a0] sm:$0xff]
  %v153 = vld [vmem:[#allocation2 + $0x1a8] sm:$0xff]
  %v154 = vld [vmem:[#allocation2 + $0x1b0] sm:$0xff]
  %v155 = vld [vmem:[#allocation2 + $0x1b8] sm:$0xff]
  %v156 = vld [vmem:[#allocation2 + $0x1c0] sm:$0xff]
  %v157 = vld [vmem:[#allocation2 + $0x1c8] sm:$0xff]
  %v158 = vld [vmem:[#allocation2 + $0x1d0] sm:$0xff]
  %v159 = vld [vmem:[#allocation2 + $0x1d8] sm:$0xff]
  %v160 = vld [vmem:[#allocation2 + $0x1e0] sm:$0xff]
  %v161 = vld [vmem:[#allocation2 + $0x1e8] sm:$0xff]
  %v162 = vld [vmem:[#allocation2 + $0x1f0] sm:$0xff]
  %v163 = vld [vmem:[#allocation2 + $0x1f8] sm:$0xff]
  %v164 = vld [vmem:[#allocation2 + $0x200] sm:$0xff]
  %v165 = vld [vmem:[#allocation2 + $0x208] sm:$0xff]
  %v166 = vld [vmem:[#allocation2 + $0x210] sm:$0xff]
  %v167 = vld [vmem:[#allocation2 + $0x218] sm:$0xff]
  %v168 = vld [vmem:[#allocation2 + $0x220] sm:$0xff]
  %v169 = vld [vmem:[#allocation2 + $0x228] sm:$0xff]
  %v170 = vld [vmem:[#allocation2 + $0x230] sm:$0xff]
  %v171 = vld [vmem:[#allocation2 + $0x238] sm:$0xff]
  %v172 = vld [vmem:[#allocation2 + $0x240] sm:$0xff]
  %v173 = vld [vmem:[#allocation2 + $0x248] sm:$0xff]
  %v174 = vld [vmem:[#allocation2 + $0x250] sm:$0xff]
  %v175 = vld [vmem:[#allocation2 + $0x258] sm:$0xff]
  %v176 = vld [vmem:[#allocation2 + $0x260] sm:$0xff]
  %v177 = vld [vmem:[#allocation2 + $0x268] sm:$0xff]
  %v178 = vld [vmem:[#allocation2 + $0x270] sm:$0xff]
  %v179 = vld [vmem:[#allocation2 + $0x278] sm:$0xff]
  %v180 = vld [vmem:[%s0] sm:$0xf]
  %v181 = vld [vmem:[%s0 + $0x4] sm:$0xf]
  %v182 = vld [vmem:[%s0 + $0x8] sm:$0xf]
  %v183 = vld [vmem:[%s0 + $0xc] sm:$0xf]
  %v184 = vld [vmem:[%s0 + $0x10] sm:$0xf]
  %v185 = vld [vmem:[%s0 + $0x14] sm:$0xf]
  %v186 = vld [vmem:[%s0 + $0x18] sm:$0xf]
  %v187 = vld [vmem:[%s0 + $0x1c] sm:$0xf]
  %v188 = vld [vmem:[%s0 + $0x20] sm:$0xf]
  %v189 = vld [vmem:[%s0 + $0x24] sm:$0xf]
  %v190 = vld [vmem:[%s0 + $0x28] sm:$0xf]
  %v191 = vld [vmem:[%s0 + $0x2c] sm:$0xf]
  %v192 = vld [vmem:[%s0 + $0x30] sm:$0xf]
  %v193 = vld [vmem:[%s0 + $0x34] sm:$0xf]
  %v194 = vld [vmem:[%s0 + $0x38] sm:$0xf]
  %v195 = vld [vmem:[%s0 + $0x3c] sm:$0xf]
  %v196 = vld [vmem:[%s0 + $0x40] sm:$0xf]
  %v197 = vld [vmem:[%s0 + $0x44] sm:$0xf]
  %v198 = vld [vmem:[%s0 + $0x48] sm:$0xf]
  %v199 = vld [vmem:[%s0 + $0x4c] sm:$0xf]
  %v200 = vld [vmem:[%s0 + $0x50] sm:$0xf]
  %v201 = vld [vmem:[%s0 + $0x54] sm:$0xf]
  %v202 = vld [vmem:[%s0 + $0x58] sm:$0xf]
  %v203 = vld [vmem:[%s0 + $0x5c] sm:$0xf]
  %v204 = vld [vmem:[%s0 + $0x60] sm:$0xf]
  %v205 = vld [vmem:[%s0 + $0x64] sm:$0xf]
  %v206 = vld [vmem:[%s0 + $0x68] sm:$0xf]
  %v207 = vld [vmem:[%s0 + $0x6c] sm:$0xf]
  %v208 = vld [vmem:[%s0 + $0x70] sm:$0xf]
  %v209 = vld [vmem:[%s0 + $0x74] sm:$0xf]
  %v210 = vld [vmem:[%s0 + $0x78] sm:$0xf]
  %v211 = vld [vmem:[%s0 + $0x7c] sm:$0xf]
  %v212 = vld [vmem:[%s0 + $0x80] sm:$0xf]
  %v213 = vld [vmem:[%s0 + $0x84] sm:$0xf]
  %v214 = vld [vmem:[%s0 + $0x88] sm:$0xf]
  %v215 = vld [vmem:[%s0 + $0x8c] sm:$0xf]
  %v216 = vld [vmem:[%s0 + $0x90] sm:$0xf]
  %v217 = vld [vmem:[%s0 + $0x94] sm:$0xf]
  %v218 = vld [vmem:[%s0 + $0x98] sm:$0xf]
  %v219 = vld [vmem:[%s0 + $0x9c] sm:$0xf]
  %v220 = vld [vmem:[%s0 + $0xa0] sm:$0xf]
  %v221 = vld [vmem:[%s0 + $0xa4] sm:$0xf]
  %v222 = vld [vmem:[%s0 + $0xa8] sm:$0xf]
  %v223 = vld [vmem:[%s0 + $0xac] sm:$0xf]
  %v224 = vld [vmem:[%s0 + $0xb0] sm:$0xf]
  %v225 = vld [vmem:[%s0 + $0xb4] sm:$0xf]
  %v226 = vld [vmem:[%s0 + $0xb8] sm:$0xf]
  %v227 = vld [vmem:[%s0 + $0xbc] sm:$0xf]
  %v228 = vld [vmem:[%s0 + $0xc0] sm:$0xf]
  %v229 = vld [vmem:[%s0 + $0xc4] sm:$0xf]
  %v230 = vld [vmem:[%s0 + $0xc8] sm:$0xf]
  %v231 = vld [vmem:[%s0 + $0xcc] sm:$0xf]
  %v232 = vld [vmem:[%s0 + $0xd0] sm:$0xf]
  %v233 = vld [vmem:[%s0 + $0xd4] sm:$0xf]
  %v234 = vld [vmem:[%s0 + $0xd8] sm:$0xf]
  %v235 = vld [vmem:[%s0 + $0xdc] sm:$0xf]
  %v236 = vld [vmem:[%s0 + $0xe0] sm:$0xf]
  %v237 = vld [vmem:[%s0 + $0xe4] sm:$0xf]
  %v238 = vld [vmem:[%s0 + $0xe8] sm:$0xf]
  %v239 = vld [vmem:[%s0 + $0xec] sm:$0xf]
  %v240 = vld [vmem:[%s0 + $0xf0] sm:$0xf]
  %v241 = vld [vmem:[%s0 + $0xf4] sm:$0xf]
  %v242 = vld [vmem:[%s0 + $0xf8] sm:$0xf]
  %v243 = vld [vmem:[%s0 + $0xfc] sm:$0xf]
  %v244 = vld [vmem:[%s0 + $0x100] sm:$0xf]
  %v245 = vld [vmem:[%s0 + $0x104] sm:$0xf]
  %v246 = vld [vmem:[%s0 + $0x108] sm:$0xf]
  %v247 = vld [vmem:[%s0 + $0x10c] sm:$0xf]
  %v248 = vld [vmem:[%s0 + $0x110] sm:$0xf]
  %v249 = vld [vmem:[%s0 + $0x114] sm:$0xf]
  %v250 = vld [vmem:[%s0 + $0x118] sm:$0xf]
  %v251 = vld [vmem:[%s0 + $0x11c] sm:$0xf]
  %v252 = vld [vmem:[%s0 + $0x120] sm:$0xf]
  %v253 = vld [vmem:[%s0 + $0x124] sm:$0xf]
  %v254 = vld [vmem:[%s0 + $0x128] sm:$0xf]
  %v255 = vld [vmem:[%s0 + $0x12c] sm:$0xf]
  %v256 = vld [vmem:[%s0 + $0x130] sm:$0xf]
  %v257 = vld [vmem:[%s0 + $0x134] sm:$0xf]
  %v258 = vld [vmem:[%s0 + $0x138] sm:$0xf]
  %v259 = vld [vmem:[%s0 + $0x13c] sm:$0xf]
  %v260 = vld [vmem:[%s1] sm:$0xf]
  %v261 = vld [vmem:[%s1 + $0x4] sm:$0xf]
  %v262 = vld [vmem:[%s1 + $0x8] sm:$0xf]
  %v263 = vld [vmem:[%s1 + $0xc] sm:$0xf]
  %v264 = vld [vmem:[%s1 + $0x10] sm:$0xf]
  %v265 = vld [vmem:[%s1 + $0x14] sm:$0xf]
  %v266 = vld [vmem:[%s1 + $0x18] sm:$0xf]
  %v267 = vld [vmem:[%s1 + $0x1c] sm:$0xf]
  %v268 = vld [vmem:[%s1 + $0x20] sm:$0xf]
  %v349 = vunpack.c.l.b16 %v180
  %v350 = vunpack.c.l.b16 %v181
  %v351 = vunpack.c.l.b16 %v182
  %v352 = vunpack.c.l.b16 %v183
  %v353 = vunpack.c.l.b16 %v184
  %v354 = vunpack.c.l.b16 %v185
  %v355 = vunpack.c.l.b16 %v186
  %v356 = vunpack.c.l.b16 %v187
  %v357 = vunpack.c.l.b16 %v188
  %v358 = vunpack.c.l.b16 %v189
  %v359 = vunpack.c.l.b16 %v190
  %v360 = vunpack.c.l.b16 %v191
  %v361 = vunpack.c.l.b16 %v192
  %v362 = vunpack.c.l.b16 %v193
  %v363 = vunpack.c.l.b16 %v194
  %v364 = vunpack.c.l.b16 %v195
  %v365 = vunpack.c.l.b16 %v196
  %v366 = vunpack.c.l.b16 %v197
  %v367 = vunpack.c.l.b16 %v198
  %v368 = vunpack.c.l.b16 %v199
  %v369 = vunpack.c.l.b16 %v200
  %v370 = vunpack.c.l.b16 %v201
  %v371 = vunpack.c.l.b16 %v202
  %v372 = vunpack.c.l.b16 %v203
  %v373 = vunpack.c.l.b16 %v204
  %v374 = vunpack.c.l.b16 %v205
  %v375 = vunpack.c.l.b16 %v206
  %v376 = vunpack.c.l.b16 %v207
  %v377 = vunpack.c.l.b16 %v208
  %v378 = vunpack.c.l.b16 %v209
  %v379 = vunpack.c.l.b16 %v210
  %v380 = vunpack.c.l.b16 %v211
  %v381 = vunpack.c.l.b16 %v212
  %v382 = vunpack.c.l.b16 %v213
  %v383 = vunpack.c.l.b16 %v214
  %v384 = vunpack.c.l.b16 %v215
  %v385 = vunpack.c.l.b16 %v216
  %v386 = vunpack.c.l.b16 %v217
  %v387 = vunpack.c.l.b16 %v218
  %v388 = vunpack.c.l.b16 %v219
  %v389 = vunpack.c.l.b16 %v220
  %v390 = vunpack.c.l.b16 %v221
  %v391 = vunpack.c.l.b16 %v222
  %v392 = vunpack.c.l.b16 %v223
  %v393 = vunpack.c.l.b16 %v224
  %v394 = vunpack.c.l.b16 %v225
  %v395 = vunpack.c.l.b16 %v226
  %v396 = vunpack.c.l.b16 %v227
  %v397 = vunpack.c.l.b16 %v228
  %v398 = vunpack.c.l.b16 %v229
  %v399 = vunpack.c.l.b16 %v230
  %v400 = vunpack.c.l.b16 %v231
  %v401 = vunpack.c.l.b16 %v232
  %v402 = vunpack.c.l.b16 %v233
  %v403 = vunpack.c.l.b16 %v234
  %v404 = vunpack.c.l.b16 %v235
  %v405 = vunpack.c.l.b16 %v236
  %v406 = vunpack.c.l.b16 %v237
  %v407 = vunpack.c.l.b16 %v238
  %v408 = vunpack.c.l.b16 %v239
  %v409 = vunpack.c.l.b16 %v240
  %v410 = vunpack.c.l.b16 %v241
  %v411 = vunpack.c.l.b16 %v242
  %v412 = vunpack.c.l.b16 %v243
  %v413 = vunpack.c.l.b16 %v244
  %v414 = vunpack.c.l.b16 %v245
  %v415 = vunpack.c.l.b16 %v246
  %v416 = vunpack.c.l.b16 %v247
  %v417 = vunpack.c.l.b16 %v248
  %v418 = vunpack.c.l.b16 %v249
  %v419 = vunpack.c.l.b16 %v250
  %v420 = vunpack.c.l.b16 %v251
  %v421 = vunpack.c.l.b16 %v252
  %v422 = vunpack.c.l.b16 %v253
  %v423 = vunpack.c.l.b16 %v254
  %v424 = vunpack.c.l.b16 %v255
  %v425 = vunpack.c.l.b16 %v256
  %v426 = vunpack.c.l.b16 %v257
  %v427 = vunpack.c.l.b16 %v258
  %v428 = vunpack.c.l.b16 %v259
  %v429 = vpack.c.b16 %v350, %v349
  %v430 = vpack.c.b16 %v352, %v351
  %v431 = vpack.c.b16 %v354, %v353
  %v432 = vpack.c.b16 %v356, %v355
  %v433 = vpack.c.b16 %v358, %v357
  %v434 = vpack.c.b16 %v360, %v359
  %v435 = vpack.c.b16 %v362, %v361
  %v436 = vpack.c.b16 %v364, %v363
  %v437 = vpack.c.b16 %v366, %v365
  %v438 = vpack.c.b16 %v368, %v367
  %v439 = vpack.c.b16 %v370, %v369
  %v440 = vpack.c.b16 %v372, %v371
  %v441 = vpack.c.b16 %v374, %v373
  %v442 = vpack.c.b16 %v376, %v375
  %v443 = vpack.c.b16 %v378, %v377
  %v444 = vpack.c.b16 %v380, %v379
  %v445 = vpack.c.b16 %v382, %v381
  %v446 = vpack.c.b16 %v384, %v383
  %v447 = vpack.c.b16 %v386, %v385
  %v448 = vpack.c.b16 %v388, %v387
  %v449 = vpack.c.b16 %v390, %v389
  %v450 = vpack.c.b16 %v392, %v391
  %v451 = vpack.c.b16 %v394, %v393
  %v452 = vpack.c.b16 %v396, %v395
  %v453 = vpack.c.b16 %v398, %v397
  %v454 = vpack.c.b16 %v400, %v399
  %v455 = vpack.c.b16 %v402, %v401
  %v456 = vpack.c.b16 %v404, %v403
  %v457 = vpack.c.b16 %v406, %v405
  %v458 = vpack.c.b16 %v408, %v407
  %v459 = vpack.c.b16 %v410, %v409
  %v460 = vpack.c.b16 %v412, %v411
  %v461 = vpack.c.b16 %v414, %v413
  %v462 = vpack.c.b16 %v416, %v415
  %v463 = vpack.c.b16 %v418, %v417
  %v464 = vpack.c.b16 %v420, %v419
  %v465 = vpack.c.b16 %v422, %v421
  %v466 = vpack.c.b16 %v424, %v423
  %v467 = vpack.c.b16 %v426, %v425
  %v468 = vpack.c.b16 %v428, %v427
  %v478 = vunpack.c.l.b16 %v260
  %v479 = vunpack.c.l.b16 %v261
  %v480 = vunpack.c.l.b16 %v262
  %v481 = vunpack.c.l.b16 %v263
  %v482 = vunpack.c.l.b16 %v264
  %v483 = vunpack.c.l.b16 %v265
  %v484 = vunpack.c.l.b16 %v266
  %v485 = vunpack.c.l.b16 %v267
  %v486 = vunpack.c.l.b16 %v268
  %v487 = vpack.c.b16 %v479, %v478
  %v488 = vpack.c.b16 %v481, %v480
  %v489 = vpack.c.b16 %v483, %v482
  %v490 = vpack.c.b16 %v485, %v484
  %v491 = vpack.c.b16 %v486, %v486
  %vm496 = vcmask 588800
  %v498 = vsel %vm496, %v429, 0
  %v501 = vsel %vm496, %v430, 0
  %v504 = vsel %vm496, %v431, 0
  %v507 = vsel %vm496, %v432, 0
  %v510 = vsel %vm496, %v433, 0
  %v513 = vsel %vm496, %v434, 0
  %v516 = vsel %vm496, %v435, 0
  %v519 = vsel %vm496, %v436, 0
  %v522 = vsel %vm496, %v437, 0
  %v525 = vsel %vm496, %v438, 0
  %v528 = vsel %vm496, %v439, 0
  %v531 = vsel %vm496, %v440, 0
  %v534 = vsel %vm496, %v441, 0
  %v537 = vsel %vm496, %v442, 0
  %v540 = vsel %vm496, %v443, 0
  %v543 = vsel %vm496, %v444, 0
  %v546 = vsel %vm496, %v445, 0
  %v549 = vsel %vm496, %v446, 0
  %v552 = vsel %vm496, %v447, 0
  %v555 = vsel %vm496, %v448, 0
  %v558 = vsel %vm496, %v449, 0
  %v561 = vsel %vm496, %v450, 0
  %v564 = vsel %vm496, %v451, 0
  %v567 = vsel %vm496, %v452, 0
  %v570 = vsel %vm496, %v453, 0
  %v573 = vsel %vm496, %v454, 0
  %v576 = vsel %vm496, %v455, 0
  %v579 = vsel %vm496, %v456, 0
  %v582 = vsel %vm496, %v457, 0
  %v585 = vsel %vm496, %v458, 0
  %v588 = vsel %vm496, %v459, 0
  %v591 = vsel %vm496, %v460, 0
  %v594 = vsel %vm496, %v461, 0
  %v597 = vsel %vm496, %v462, 0
  %v600 = vsel %vm496, %v463, 0
  %v603 = vsel %vm496, %v464, 0
  %v606 = vsel %vm496, %v465, 0
  %v609 = vsel %vm496, %v466, 0
  %v612 = vsel %vm496, %v467, 0
  %v615 = vsel %vm496, %v468, 0
  %vm617 = vcmask 1043456
  %v619 = vsel %vm617, %v491, 0
  %621 = vmatprep.subr.bf16.mxu0 0
  %622 = vmatpush1.bf16.msra.mxu0 %v487
  %623 = vmatprep.subr.bf16.mxu0 0
  %624 = vmatpush1.bf16.msra.mxu0 %v488
  %625 = vmatprep.subr.bf16.mxu0 0
  %626 = vmatpush1.bf16.msra.mxu0 %v489
  %627 = vmatprep.subr.bf16.mxu0 0
  %628 = vmatpush1.bf16.msra.mxu0 %v490
  %629 = vmatprep.subr.bf16.mxu0 0
  %630 = vmatpush1.bf16.msra.mxu0 %v619
  %631 = vmatprep.subr.bf16.mxu0 0
  %632 = vmatpush1.bf16.msra.mxu0 0
  %633 = vmatprep.subr.bf16.mxu0 0
  %634 = vmatpush1.bf16.msra.mxu0 0
  %635 = vmatprep.subr.bf16.mxu0 0
  %636 = vmatpush1.bf16.msra.mxu0 0
  %637 = vmatprep.subr.bf16.mxu0 0
  %638 = vmatpush1.bf16.msra.mxu0 0
  %639 = vmatprep.subr.bf16.mxu0 0
  %640 = vmatpush1.bf16.msra.mxu0 0
  %641 = vmatprep.subr.bf16.mxu0 0
  %642 = vmatpush1.bf16.msra.mxu0 0
  %643 = vmatprep.subr.bf16.mxu0 0
  %644 = vmatpush1.bf16.msra.mxu0 0
  %645 = vmatprep.subr.bf16.mxu0 0
  %646 = vmatpush1.bf16.msra.mxu0 0
  %647 = vmatprep.subr.bf16.mxu0 0
  %648 = vmatpush1.bf16.msra.mxu0 0
  %649 = vmatprep.subr.bf16.mxu0 0
  %650 = vmatpush1.bf16.msra.mxu0 0
  %651 = vmatprep.subr.bf16.mxu0 0
  %652 = vmatpush1.bf16.msra.mxu0 0
  %653 = vmatprep.mubr.bf16.mxu0 0
  %654 = vmatmul.mubr.bf16.gmra.mrb[0].mxu0 %v498
  %v655 = vpop.f32.mrb[0].mxu0
  %v656 = vadd.f32 0.0, %v655
  %v657 = vpop.f32.mrb[0].mxu0
  %v658 = vpop.f32.mrb[0].mxu0
  %v659 = vadd.f32 0.0, %v658
  %v660 = vpop.f32.mrb[0].mxu0
  %661 = vmatprep.mubr.bf16.mxu0 0
  %662 = vmatmul.mubr.bf16.gmra.mrb[0].mxu0 %v501
  %v663 = vpop.f32.mrb[0].mxu0
  %v664 = vadd.f32 0.0, %v663
  %v665 = vpop.f32.mrb[0].mxu0
  %v666 = vpop.f32.mrb[0].mxu0
  %v667 = vadd.f32 0.0, %v666
  %v668 = vpop.f32.mrb[0].mxu0
  %669 = vmatprep.mubr.bf16.mxu0 0
  %670 = vmatmul.mubr.bf16.gmra.mrb[0].mxu0 %v504
  %v671 = vpop.f32.mrb[0].mxu0
  %v672 = vadd.f32 0.0, %v671
  %v673 = vpop.f32.mrb[0].mxu0
  %v674 = vpop.f32.mrb[0].mxu0
  %v675 = vadd.f32 0.0, %v674
  %v676 = vpop.f32.mrb[0].mxu0
  %677 = vmatprep.mubr.bf16.mxu0 0
  %678 = vmatmul.mubr.bf16.gmra.mrb[0].mxu0 %v507
  %v679 = vpop.f32.mrb[0].mxu0
  %v680 = vadd.f32 0.0, %v679
  %v681 = vpop.f32.mrb[0].mxu0
  %v682 = vpop.f32.mrb[0].mxu0
  %v683 = vadd.f32 0.0, %v682
  %v684 = vpop.f32.mrb[0].mxu0
  %685 = vmatprep.mubr.bf16.mxu0 0
  %686 = vmatmul.mubr.bf16.gmra.mrb[0].mxu0 %v510
  %v687 = vpop.f32.mrb[0].mxu0
  %v688 = vadd.f32 0.0, %v687
  %v689 = vpop.f32.mrb[0].mxu0
  %v690 = vpop.f32.mrb[0].mxu0
  %v691 = vadd.f32 0.0, %v690
  %v692 = vpop.f32.mrb[0].mxu0
  %693 = vmatprep.mubr.bf16.mxu0 0
  %694 = vmatmul.mubr.bf16.gmra.mrb[0].mxu0 %v513
  %v695 = vpop.f32.mrb[0].mxu0
  %v696 = vadd.f32 0.0, %v695
  %v697 = vpop.f32.mrb[0].mxu0
  %v698 = vpop.f32.mrb[0].mxu0
  %v699 = vadd.f32 0.0, %v698
  %v700 = vpop.f32.mrb[0].mxu0
  %701 = vmatprep.mubr.bf16.mxu0 0
  %702 = vmatmul.mubr.bf16.gmra.mrb[0].mxu0 %v516
  %v703 = vpop.f32.mrb[0].mxu0
  %v704 = vadd.f32 0.0, %v703
  %v705 = vpop.f32.mrb[0].mxu0
  %v706 = vpop.f32.mrb[0].mxu0
  %v707 = vadd.f32 0.0, %v706
  %v708 = vpop.f32.mrb[0].mxu0
  %709 = vmatprep.mubr.bf16.mxu0 0
  %710 = vmatmul.mubr.bf16.gmra.mrb[0].mxu0 %v519
  %v711 = vpop.f32.mrb[0].mxu0
  %v712 = vadd.f32 0.0, %v711
  %v713 = vpop.f32.mrb[0].mxu0
  %v714 = vpop.f32.mrb[0].mxu0
  %v715 = vadd.f32 0.0, %v714
  %v716 = vpop.f32.mrb[0].mxu0
  %717 = vmatprep.mubr.bf16.mxu0 0
  %718 = vmatmul.mubr.bf16.gmra.mrb[0].mxu0 %v522
  %v719 = vpop.f32.mrb[0].mxu0
  %v720 = vadd.f32 0.0, %v719
  %v721 = vpop.f32.mrb[0].mxu0
  %v722 = vpop.f32.mrb[0].mxu0
  %v723 = vadd.f32 0.0, %v722
  %v724 = vpop.f32.mrb[0].mxu0
  %725 = vmatprep.mubr.bf16.mxu0 0
  %726 = vmatmul.mubr.bf16.gmra.mrb[0].mxu0 %v525
  %v727 = vpop.f32.mrb[0].mxu0
  %v728 = vadd.f32 0.0, %v727
  %v729 = vpop.f32.mrb[0].mxu0
  %v730 = vpop.f32.mrb[0].mxu0
  %v731 = vadd.f32 0.0, %v730
  %v732 = vpop.f32.mrb[0].mxu0
  %733 = vmatprep.mubr.bf16.mxu0 0
  %734 = vmatmul.mubr.bf16.gmra.mrb[0].mxu0 %v528
  %v735 = vpop.f32.mrb[0].mxu0
  %v736 = vadd.f32 0.0, %v735
  %v737 = vpop.f32.mrb[0].mxu0
  %v738 = vpop.f32.mrb[0].mxu0
  %v739 = vadd.f32 0.0, %v738
  %v740 = vpop.f32.mrb[0].mxu0
  %741 = vmatprep.mubr.bf16.mxu0 0
  %742 = vmatmul.mubr.bf16.gmra.mrb[0].mxu0 %v531
  %v743 = vpop.f32.mrb[0].mxu0
  %v744 = vadd.f32 0.0, %v743
  %v745 = vpop.f32.mrb[0].mxu0
  %v746 = vpop.f32.mrb[0].mxu0
  %v747 = vadd.f32 0.0, %v746
  %v748 = vpop.f32.mrb[0].mxu0
  %749 = vmatprep.mubr.bf16.mxu0 0
  %750 = vmatmul.mubr.bf16.gmra.mrb[0].mxu0 %v534
  %v751 = vpop.f32.mrb[0].mxu0
  %v752 = vadd.f32 0.0, %v751
  %v753 = vpop.f32.mrb[0].mxu0
  %v754 = vpop.f32.mrb[0].mxu0
  %v755 = vadd.f32 0.0, %v754
  %v756 = vpop.f32.mrb[0].mxu0
  %757 = vmatprep.mubr.bf16.mxu0 0
  %758 = vmatmul.mubr.bf16.gmra.mrb[0].mxu0 %v537
  %v759 = vpop.f32.mrb[0].mxu0
  %v760 = vadd.f32 0.0, %v759
  %v761 = vpop.f32.mrb[0].mxu0
  %v762 = vpop.f32.mrb[0].mxu0
  %v763 = vadd.f32 0.0, %v762
  %v764 = vpop.f32.mrb[0].mxu0
  %765 = vmatprep.mubr.bf16.mxu0 0
  %766 = vmatmul.mubr.bf16.gmra.mrb[0].mxu0 %v540
  %v767 = vpop.f32.mrb[0].mxu0
  %v768 = vadd.f32 0.0, %v767
  %v769 = vpop.f32.mrb[0].mxu0
  %v770 = vpop.f32.mrb[0].mxu0
  %v771 = vadd.f32 0.0, %v770
  %v772 = vpop.f32.mrb[0].mxu0
  %773 = vmatprep.mubr.bf16.mxu0 0
  %774 = vmatmul.mubr.bf16.gmra.mrb[0].mxu0 %v543
  %v775 = vpop.f32.mrb[0].mxu0
  %v776 = vadd.f32 0.0, %v775
  %v777 = vpop.f32.mrb[0].mxu0
  %v778 = vpop.f32.mrb[0].mxu0
  %v779 = vadd.f32 0.0, %v778
  %v780 = vpop.f32.mrb[0].mxu0
  %781 = vmatprep.mubr.bf16.mxu0 0
  %782 = vmatmul.mubr.bf16.gmra.mrb[0].mxu0 %v546
  %v783 = vpop.f32.mrb[0].mxu0
  %v784 = vadd.f32 0.0, %v783
  %v785 = vpop.f32.mrb[0].mxu0
  %v786 = vpop.f32.mrb[0].mxu0
  %v787 = vadd.f32 0.0, %v786
  %v788 = vpop.f32.mrb[0].mxu0
  %789 = vmatprep.mubr.bf16.mxu0 0
  %790 = vmatmul.mubr.bf16.gmra.mrb[0].mxu0 %v549
  %v791 = vpop.f32.mrb[0].mxu0
  %v792 = vadd.f32 0.0, %v791
  %v793 = vpop.f32.mrb[0].mxu0
  %v794 = vpop.f32.mrb[0].mxu0
  %v795 = vadd.f32 0.0, %v794
  %v796 = vpop.f32.mrb[0].mxu0
  %797 = vmatprep.mubr.bf16.mxu0 0
  %798 = vmatmul.mubr.bf16.gmra.mrb[0].mxu0 %v552
  %v799 = vpop.f32.mrb[0].mxu0
  %v800 = vadd.f32 0.0, %v799
  %v801 = vpop.f32.mrb[0].mxu0
  %v802 = vpop.f32.mrb[0].mxu0
  %v803 = vadd.f32 0.0, %v802
  %v804 = vpop.f32.mrb[0].mxu0
  %805 = vmatprep.mubr.bf16.mxu0 0
  %806 = vmatmul.mubr.bf16.gmra.mrb[0].mxu0 %v555
  %v807 = vpop.f32.mrb[0].mxu0
  %v808 = vadd.f32 0.0, %v807
  %v809 = vpop.f32.mrb[0].mxu0
  %v810 = vpop.f32.mrb[0].mxu0
  %v811 = vadd.f32 0.0, %v810
  %v812 = vpop.f32.mrb[0].mxu0
  %813 = vmatprep.mubr.bf16.mxu0 0
  %814 = vmatmul.mubr.bf16.gmra.mrb[0].mxu0 %v558
  %v815 = vpop.f32.mrb[0].mxu0
  %v816 = vadd.f32 0.0, %v815
  %v817 = vpop.f32.mrb[0].mxu0
  %v818 = vpop.f32.mrb[0].mxu0
  %v819 = vadd.f32 0.0, %v818
  %v820 = vpop.f32.mrb[0].mxu0
  %821 = vmatprep.mubr.bf16.mxu0 0
  %822 = vmatmul.mubr.bf16.gmra.mrb[0].mxu0 %v561
  %v823 = vpop.f32.mrb[0].mxu0
  %v824 = vadd.f32 0.0, %v823
  %v825 = vpop.f32.mrb[0].mxu0
  %v826 = vpop.f32.mrb[0].mxu0
  %v827 = vadd.f32 0.0, %v826
  %v828 = vpop.f32.mrb[0].mxu0
  %829 = vmatprep.mubr.bf16.mxu0 0
  %830 = vmatmul.mubr.bf16.gmra.mrb[0].mxu0 %v564
  %v831 = vpop.f32.mrb[0].mxu0
  %v832 = vadd.f32 0.0, %v831
  %v833 = vpop.f32.mrb[0].mxu0
  %v834 = vpop.f32.mrb[0].mxu0
  %v835 = vadd.f32 0.0, %v834
  %v836 = vpop.f32.mrb[0].mxu0
  %837 = vmatprep.mubr.bf16.mxu0 0
  %838 = vmatmul.mubr.bf16.gmra.mrb[0].mxu0 %v567
  %v839 = vpop.f32.mrb[0].mxu0
  %v840 = vadd.f32 0.0, %v839
  %v841 = vpop.f32.mrb[0].mxu0
  %v842 = vpop.f32.mrb[0].mxu0
  %v843 = vadd.f32 0.0, %v842
  %v844 = vpop.f32.mrb[0].mxu0
  %845 = vmatprep.mubr.bf16.mxu0 0
  %846 = vmatmul.mubr.bf16.gmra.mrb[0].mxu0 %v570
  %v847 = vpop.f32.mrb[0].mxu0
  %v848 = vadd.f32 0.0, %v847
  %v849 = vpop.f32.mrb[0].mxu0
  %v850 = vpop.f32.mrb[0].mxu0
  %v851 = vadd.f32 0.0, %v850
  %v852 = vpop.f32.mrb[0].mxu0
  %853 = vmatprep.mubr.bf16.mxu0 0
  %854 = vmatmul.mubr.bf16.gmra.mrb[0].mxu0 %v573
  %v855 = vpop.f32.mrb[0].mxu0
  %v856 = vadd.f32 0.0, %v855
  %v857 = vpop.f32.mrb[0].mxu0
  %v858 = vpop.f32.mrb[0].mxu0
  %v859 = vadd.f32 0.0, %v858
  %v860 = vpop.f32.mrb[0].mxu0
  %861 = vmatprep.mubr.bf16.mxu0 0
  %862 = vmatmul.mubr.bf16.gmra.mrb[0].mxu0 %v576
  %v863 = vpop.f32.mrb[0].mxu0
  %v864 = vadd.f32 0.0, %v863
  %v865 = vpop.f32.mrb[0].mxu0
  %v866 = vpop.f32.mrb[0].mxu0
  %v867 = vadd.f32 0.0, %v866
  %v868 = vpop.f32.mrb[0].mxu0
  %869 = vmatprep.mubr.bf16.mxu0 0
  %870 = vmatmul.mubr.bf16.gmra.mrb[0].mxu0 %v579
  %v871 = vpop.f32.mrb[0].mxu0
  %v872 = vadd.f32 0.0, %v871
  %v873 = vpop.f32.mrb[0].mxu0
  %v874 = vpop.f32.mrb[0].mxu0
  %v875 = vadd.f32 0.0, %v874
  %v876 = vpop.f32.mrb[0].mxu0
  %877 = vmatprep.mubr.bf16.mxu0 0
  %878 = vmatmul.mubr.bf16.gmra.mrb[0].mxu0 %v582
  %v879 = vpop.f32.mrb[0].mxu0
  %v880 = vadd.f32 0.0, %v879
  %v881 = vpop.f32.mrb[0].mxu0
  %v882 = vpop.f32.mrb[0].mxu0
  %v883 = vadd.f32 0.0, %v882
  %v884 = vpop.f32.mrb[0].mxu0
  %885 = vmatprep.mubr.bf16.mxu0 0
  %886 = vmatmul.mubr.bf16.gmra.mrb[0].mxu0 %v585
  %v887 = vpop.f32.mrb[0].mxu0
  %v888 = vadd.f32 0.0, %v887
  %v889 = vpop.f32.mrb[0].mxu0
  %v890 = vpop.f32.mrb[0].mxu0
  %v891 = vadd.f32 0.0, %v890
  %v892 = vpop.f32.mrb[0].mxu0
  %893 = vmatprep.mubr.bf16.mxu0 0
  %894 = vmatmul.mubr.bf16.gmra.mrb[0].mxu0 %v588
  %v895 = vpop.f32.mrb[0].mxu0
  %v896 = vadd.f32 0.0, %v895
  %v897 = vpop.f32.mrb[0].mxu0
  %v898 = vpop.f32.mrb[0].mxu0
  %v899 = vadd.f32 0.0, %v898
  %v900 = vpop.f32.mrb[0].mxu0
  %901 = vmatprep.mubr.bf16.mxu0 0
  %902 = vmatmul.mubr.bf16.gmra.mrb[0].mxu0 %v591
  %v903 = vpop.f32.mrb[0].mxu0
  %v904 = vadd.f32 0.0, %v903
  %v905 = vpop.f32.mrb[0].mxu0
  %v906 = vpop.f32.mrb[0].mxu0
  %v907 = vadd.f32 0.0, %v906
  %v908 = vpop.f32.mrb[0].mxu0
  %909 = vmatprep.mubr.bf16.mxu0 0
  %910 = vmatmul.mubr.bf16.gmra.mrb[0].mxu0 %v594
  %v911 = vpop.f32.mrb[0].mxu0
  %v912 = vadd.f32 0.0, %v911
  %v913 = vpop.f32.mrb[0].mxu0
  %v914 = vpop.f32.mrb[0].mxu0
  %v915 = vadd.f32 0.0, %v914
  %v916 = vpop.f32.mrb[0].mxu0
  %917 = vmatprep.mubr.bf16.mxu0 0
  %918 = vmatmul.mubr.bf16.gmra.mrb[0].mxu0 %v597
  %v919 = vpop.f32.mrb[0].mxu0
  %v920 = vadd.f32 0.0, %v919
  %v921 = vpop.f32.mrb[0].mxu0
  %v922 = vpop.f32.mrb[0].mxu0
  %v923 = vadd.f32 0.0, %v922
  %v924 = vpop.f32.mrb[0].mxu0
  %925 = vmatprep.mubr.bf16.mxu0 0
  %926 = vmatmul.mubr.bf16.gmra.mrb[0].mxu0 %v600
  %v927 = vpop.f32.mrb[0].mxu0
  %v928 = vadd.f32 0.0, %v927
  %v929 = vpop.f32.mrb[0].mxu0
  %v930 = vpop.f32.mrb[0].mxu0
  %v931 = vadd.f32 0.0, %v930
  %v932 = vpop.f32.mrb[0].mxu0
  %933 = vmatprep.mubr.bf16.mxu0 0
  %934 = vmatmul.mubr.bf16.gmra.mrb[0].mxu0 %v603
  %v935 = vpop.f32.mrb[0].mxu0
  %v936 = vadd.f32 0.0, %v935
  %v937 = vpop.f32.mrb[0].mxu0
  %v938 = vpop.f32.mrb[0].mxu0
  %v939 = vadd.f32 0.0, %v938
  %v940 = vpop.f32.mrb[0].mxu0
  %941 = vmatprep.mubr.bf16.mxu0 0
  %942 = vmatmul.mubr.bf16.gmra.mrb[0].mxu0 %v606
  %v943 = vpop.f32.mrb[0].mxu0
  %v944 = vadd.f32 0.0, %v943
  %v945 = vpop.f32.mrb[0].mxu0
  %v946 = vpop.f32.mrb[0].mxu0
  %v947 = vadd.f32 0.0, %v946
  %v948 = vpop.f32.mrb[0].mxu0
  %949 = vmatprep.mubr.bf16.mxu0 0
  %950 = vmatmul.mubr.bf16.gmra.mrb[0].mxu0 %v609
  %v951 = vpop.f32.mrb[0].mxu0
  %v952 = vadd.f32 0.0, %v951
  %v953 = vpop.f32.mrb[0].mxu0
  %v954 = vpop.f32.mrb[0].mxu0
  %v955 = vadd.f32 0.0, %v954
  %v956 = vpop.f32.mrb[0].mxu0
  %957 = vmatprep.mubr.bf16.mxu0 0
  %958 = vmatmul.mubr.bf16.gmra.mrb[0].mxu0 %v612
  %v959 = vpop.f32.mrb[0].mxu0
  %v960 = vadd.f32 0.0, %v959
  %v961 = vpop.f32.mrb[0].mxu0
  %v962 = vpop.f32.mrb[0].mxu0
  %v963 = vadd.f32 0.0, %v962
  %v964 = vpop.f32.mrb[0].mxu0
  %965 = vmatprep.mubr.bf16.mxu0 0
  %966 = vmatmul.mubr.bf16.gmra.mrb[0].mxu0 %v615
  %v967 = vpop.f32.mrb[0].mxu0
  %v968 = vadd.f32 0.0, %v967
  %v969 = vpop.f32.mrb[0].mxu0
  %v970 = vpop.f32.mrb[0].mxu0
  %v971 = vadd.f32 0.0, %v970
  %v972 = vpop.f32.mrb[0].mxu0
  %973 = vdwg.mxu0
  %v974 = vadd.f32 %v100, %v656
  %v975 = vadd.f32 %v101, %v659
  %v976 = vadd.f32 %v102, %v664
  %v977 = vadd.f32 %v103, %v667
  %v978 = vadd.f32 %v104, %v672
  %v979 = vadd.f32 %v105, %v675
  %v980 = vadd.f32 %v106, %v680
  %v981 = vadd.f32 %v107, %v683
  %v982 = vadd.f32 %v108, %v688
  %v983 = vadd.f32 %v109, %v691
  %v984 = vadd.f32 %v110, %v696
  %v985 = vadd.f32 %v111, %v699
  %v986 = vadd.f32 %v112, %v704
  %v987 = vadd.f32 %v113, %v707
  %v988 = vadd.f32 %v114, %v712
  %v989 = vadd.f32 %v115, %v715
  %v990 = vadd.f32 %v116, %v720
  %v991 = vadd.f32 %v117, %v723
  %v992 = vadd.f32 %v118, %v728
  %v993 = vadd.f32 %v119, %v731
  %v994 = vadd.f32 %v120, %v736
  %v995 = vadd.f32 %v121, %v739
  %v996 = vadd.f32 %v122, %v744
  %v997 = vadd.f32 %v123, %v747
  %v998 = vadd.f32 %v124, %v752
  %v999 = vadd.f32 %v125, %v755
  %v1000 = vadd.f32 %v126, %v760
  %v1001 = vadd.f32 %v127, %v763
  %v1002 = vadd.f32 %v128, %v768
  %v1003 = vadd.f32 %v129, %v771
  %v1004 = vadd.f32 %v130, %v776
  %v1005 = vadd.f32 %v131, %v779
  %v1006 = vadd.f32 %v132, %v784
  %v1007 = vadd.f32 %v133, %v787
  %v1008 = vadd.f32 %v134, %v792
  %v1009 = vadd.f32 %v135, %v795
  %v1010 = vadd.f32 %v136, %v800
  %v1011 = vadd.f32 %v137, %v803
  %v1012 = vadd.f32 %v138, %v808
  %v1013 = vadd.f32 %v139, %v811
  %v1014 = vadd.f32 %v140, %v816
  %v1015 = vadd.f32 %v141, %v819
  %v1016 = vadd.f32 %v142, %v824
  %v1017 = vadd.f32 %v143, %v827
  %v1018 = vadd.f32 %v144, %v832
  %v1019 = vadd.f32 %v145, %v835
  %v1020 = vadd.f32 %v146, %v840
  %v1021 = vadd.f32 %v147, %v843
  %v1022 = vadd.f32 %v148, %v848
  %v1023 = vadd.f32 %v149, %v851
  %v1024 = vadd.f32 %v150, %v856
  %v1025 = vadd.f32 %v151, %v859
  %v1026 = vadd.f32 %v152, %v864
  %v1027 = vadd.f32 %v153, %v867
  %v1028 = vadd.f32 %v154, %v872
  %v1029 = vadd.f32 %v155, %v875
  %v1030 = vadd.f32 %v156, %v880
  %v1031 = vadd.f32 %v157, %v883
  %v1032 = vadd.f32 %v158, %v888
  %v1033 = vadd.f32 %v159, %v891
  %v1034 = vadd.f32 %v160, %v896
  %v1035 = vadd.f32 %v161, %v899
  %v1036 = vadd.f32 %v162, %v904
  %v1037 = vadd.f32 %v163, %v907
  %v1038 = vadd.f32 %v164, %v912
  %v1039 = vadd.f32 %v165, %v915
  %v1040 = vadd.f32 %v166, %v920
  %v1041 = vadd.f32 %v167, %v923
  %v1042 = vadd.f32 %v168, %v928
  %v1043 = vadd.f32 %v169, %v931
  %v1044 = vadd.f32 %v170, %v936
  %v1045 = vadd.f32 %v171, %v939
  %v1046 = vadd.f32 %v172, %v944
  %v1047 = vadd.f32 %v173, %v947
  %v1048 = vadd.f32 %v174, %v952
  %v1049 = vadd.f32 %v175, %v955
  %v1050 = vadd.f32 %v176, %v960
  %v1051 = vadd.f32 %v177, %v963
  %v1052 = vadd.f32 %v178, %v968
  %v1053 = vadd.f32 %v179, %v971
  %vm1054 = vcmask 64512
  %1055 = vst.msk [vmem:[#allocation2] sm:$0xff] %vm1054, %v974
  %1056 = vst.msk [vmem:[#allocation2 + $0x8] sm:$0xff] %vm1054, %v975
  %1057 = vst.msk [vmem:[#allocation2 + $0x10] sm:$0xff] %vm1054, %v976
  %1058 = vst.msk [vmem:[#allocation2 + $0x18] sm:$0xff] %vm1054, %v977
  %1059 = vst.msk [vmem:[#allocation2 + $0x20] sm:$0xff] %vm1054, %v978
  %1060 = vst.msk [vmem:[#allocation2 + $0x28] sm:$0xff] %vm1054, %v979
  %1061 = vst.msk [vmem:[#allocation2 + $0x30] sm:$0xff] %vm1054, %v980
  %1062 = vst.msk [vmem:[#allocation2 + $0x38] sm:$0xff] %vm1054, %v981
  %1063 = vst.msk [vmem:[#allocation2 + $0x40] sm:$0xff] %vm1054, %v982
  %1064 = vst.msk [vmem:[#allocation2 + $0x48] sm:$0xff] %vm1054, %v983
  %1065 = vst.msk [vmem:[#allocation2 + $0x50] sm:$0xff] %vm1054, %v984
  %1066 = vst.msk [vmem:[#allocation2 + $0x58] sm:$0xff] %vm1054, %v985
  %1067 = vst.msk [vmem:[#allocation2 + $0x60] sm:$0xff] %vm1054, %v986
  %1068 = vst.msk [vmem:[#allocation2 + $0x68] sm:$0xff] %vm1054, %v987
  %1069 = vst.msk [vmem:[#allocation2 + $0x70] sm:$0xff] %vm1054, %v988
  %1070 = vst.msk [vmem:[#allocation2 + $0x78] sm:$0xff] %vm1054, %v989
  %1071 = vst.msk [vmem:[#allocation2 + $0x80] sm:$0xff] %vm1054, %v990
  %1072 = vst.msk [vmem:[#allocation2 + $0x88] sm:$0xff] %vm1054, %v991
  %1073 = vst.msk [vmem:[#allocation2 + $0x90] sm:$0xff] %vm1054, %v992
  %1074 = vst.msk [vmem:[#allocation2 + $0x98] sm:$0xff] %vm1054, %v993
  %1075 = vst.msk [vmem:[#allocation2 + $0xa0] sm:$0xff] %vm1054, %v994
  %1076 = vst.msk [vmem:[#allocation2 + $0xa8] sm:$0xff] %vm1054, %v995
  %1077 = vst.msk [vmem:[#allocation2 + $0xb0] sm:$0xff] %vm1054, %v996
  %1078 = vst.msk [vmem:[#allocation2 + $0xb8] sm:$0xff] %vm1054, %v997
  %1079 = vst.msk [vmem:[#allocation2 + $0xc0] sm:$0xff] %vm1054, %v998
  %1080 = vst.msk [vmem:[#allocation2 + $0xc8] sm:$0xff] %vm1054, %v999
  %1081 = vst.msk [vmem:[#allocation2 + $0xd0] sm:$0xff] %vm1054, %v1000
  %1082 = vst.msk [vmem:[#allocation2 + $0xd8] sm:$0xff] %vm1054, %v1001
  %1083 = vst.msk [vmem:[#allocation2 + $0xe0] sm:$0xff] %vm1054, %v1002
  %1084 = vst.msk [vmem:[#allocation2 + $0xe8] sm:$0xff] %vm1054, %v1003
  %1085 = vst.msk [vmem:[#allocation2 + $0xf0] sm:$0xff] %vm1054, %v1004
  %1086 = vst.msk [vmem:[#allocation2 + $0xf8] sm:$0xff] %vm1054, %v1005
  %1087 = vst.msk [vmem:[#allocation2 + $0x100] sm:$0xff] %vm1054, %v1006
  %1088 = vst.msk [vmem:[#allocation2 + $0x108] sm:$0xff] %vm1054, %v1007
  %1089 = vst.msk [vmem:[#allocation2 + $0x110] sm:$0xff] %vm1054, %v1008
  %1090 = vst.msk [vmem:[#allocation2 + $0x118] sm:$0xff] %vm1054, %v1009
  %1091 = vst.msk [vmem:[#allocation2 + $0x120] sm:$0xff] %vm1054, %v1010
  %1092 = vst.msk [vmem:[#allocation2 + $0x128] sm:$0xff] %vm1054, %v1011
  %1093 = vst.msk [vmem:[#allocation2 + $0x130] sm:$0xff] %vm1054, %v1012
  %1094 = vst.msk [vmem:[#allocation2 + $0x138] sm:$0xff] %vm1054, %v1013
  %1095 = vst.msk [vmem:[#allocation2 + $0x140] sm:$0xff] %vm1054, %v1014
  %1096 = vst.msk [vmem:[#allocation2 + $0x148] sm:$0xff] %vm1054, %v1015
  %1097 = vst.msk [vmem:[#allocation2 + $0x150] sm:$0xff] %vm1054, %v1016
  %1098 = vst.msk [vmem:[#allocation2 + $0x158] sm:$0xff] %vm1054, %v1017
  %1099 = vst.msk [vmem:[#allocation2 + $0x160] sm:$0xff] %vm1054, %v1018
  %1100 = vst.msk [vmem:[#allocation2 + $0x168] sm:$0xff] %vm1054, %v1019
  %1101 = vst.msk [vmem:[#allocation2 + $0x170] sm:$0xff] %vm1054, %v1020
  %1102 = vst.msk [vmem:[#allocation2 + $0x178] sm:$0xff] %vm1054, %v1021
  %1103 = vst.msk [vmem:[#allocation2 + $0x180] sm:$0xff] %vm1054, %v1022
  %1104 = vst.msk [vmem:[#allocation2 + $0x188] sm:$0xff] %vm1054, %v1023
  %1105 = vst.msk [vmem:[#allocation2 + $0x190] sm:$0xff] %vm1054, %v1024
  %1106 = vst.msk [vmem:[#allocation2 + $0x198] sm:$0xff] %vm1054, %v1025
  %1107 = vst.msk [vmem:[#allocation2 + $0x1a0] sm:$0xff] %vm1054, %v1026
  %1108 = vst.msk [vmem:[#allocation2 + $0x1a8] sm:$0xff] %vm1054, %v1027
  %1109 = vst.msk [vmem:[#allocation2 + $0x1b0] sm:$0xff] %vm1054, %v1028
  %1110 = vst.msk [vmem:[#allocation2 + $0x1b8] sm:$0xff] %vm1054, %v1029
  %1111 = vst.msk [vmem:[#allocation2 + $0x1c0] sm:$0xff] %vm1054, %v1030
  %1112 = vst.msk [vmem:[#allocation2 + $0x1c8] sm:$0xff] %vm1054, %v1031
  %1113 = vst.msk [vmem:[#allocation2 + $0x1d0] sm:$0xff] %vm1054, %v1032
  %1114 = vst.msk [vmem:[#allocation2 + $0x1d8] sm:$0xff] %vm1054, %v1033
  %1115 = vst.msk [vmem:[#allocation2 + $0x1e0] sm:$0xff] %vm1054, %v1034
  %1116 = vst.msk [vmem:[#allocation2 + $0x1e8] sm:$0xff] %vm1054, %v1035
  %1117 = vst.msk [vmem:[#allocation2 + $0x1f0] sm:$0xff] %vm1054, %v1036
  %1118 = vst.msk [vmem:[#allocation2 + $0x1f8] sm:$0xff] %vm1054, %v1037
  %1119 = vst.msk [vmem:[#allocation2 + $0x200] sm:$0xff] %vm1054, %v1038
  %1120 = vst.msk [vmem:[#allocation2 + $0x208] sm:$0xff] %vm1054, %v1039
  %1121 = vst.msk [vmem:[#allocation2 + $0x210] sm:$0xff] %vm1054, %v1040
  %1122 = vst.msk [vmem:[#allocation2 + $0x218] sm:$0xff] %vm1054, %v1041
  %1123 = vst.msk [vmem:[#allocation2 + $0x220] sm:$0xff] %vm1054, %v1042
  %1124 = vst.msk [vmem:[#allocation2 + $0x228] sm:$0xff] %vm1054, %v1043
  %1125 = vst.msk [vmem:[#allocation2 + $0x230] sm:$0xff] %vm1054, %v1044
  %1126 = vst.msk [vmem:[#allocation2 + $0x238] sm:$0xff] %vm1054, %v1045
  %1127 = vst.msk [vmem:[#allocation2 + $0x240] sm:$0xff] %vm1054, %v1046
  %1128 = vst.msk [vmem:[#allocation2 + $0x248] sm:$0xff] %vm1054, %v1047
  %1129 = vst.msk [vmem:[#allocation2 + $0x250] sm:$0xff] %vm1054, %v1048
  %1130 = vst.msk [vmem:[#allocation2 + $0x258] sm:$0xff] %vm1054, %v1049
  %1131 = vst.msk [vmem:[#allocation2 + $0x260] sm:$0xff] %vm1054, %v1050
  %1132 = vst.msk [vmem:[#allocation2 + $0x268] sm:$0xff] %vm1054, %v1051
  %1133 = vst.msk [vmem:[#allocation2 + $0x270] sm:$0xff] %vm1054, %v1052
  %1134 = vst.msk [vmem:[#allocation2 + $0x278] sm:$0xff] %vm1054, %v1053
  // Predicated region
  $region18: #{jvp__.11} parent=0 // pred_check
    %p1135 = pneg %p15
  $region19: #{jvp__.11} parent=0 // pred_check_branch
    %1137 = sbr.rel (%p1135) target = $region21
  $region20: #{jvp__.11} parent=0 // pred_region
    %v1138 = vld [vmem:[#allocation2] sm:$0xff]
    %v1139 = vld [vmem:[#allocation2 + $0x8] sm:$0xff]
    %v1140 = vld [vmem:[#allocation2 + $0x10] sm:$0xff]
    %v1141 = vld [vmem:[#allocation2 + $0x18] sm:$0xff]
    %v1142 = vld [vmem:[#allocation2 + $0x20] sm:$0xff]
    %v1143 = vld [vmem:[#allocation2 + $0x28] sm:$0xff]
    %v1144 = vld [vmem:[#allocation2 + $0x30] sm:$0xff]
    %v1145 = vld [vmem:[#allocation2 + $0x38] sm:$0xff]
    %v1146 = vld [vmem:[#allocation2 + $0x40] sm:$0xff]
    %v1147 = vld [vmem:[#allocation2 + $0x48] sm:$0xff]
    %v1148 = vld [vmem:[#allocation2 + $0x50] sm:$0xff]
    %v1149 = vld [vmem:[#allocation2 + $0x58] sm:$0xff]
    %v1150 = vld [vmem:[#allocation2 + $0x60] sm:$0xff]
    %v1151 = vld [vmem:[#allocation2 + $0x68] sm:$0xff]
    %v1152 = vld [vmem:[#allocation2 + $0x70] sm:$0xff]
    %v1153 = vld [vmem:[#allocation2 + $0x78] sm:$0xff]
    %v1154 = vld [vmem:[#allocation2 + $0x80] sm:$0xff]
    %v1155 = vld [vmem:[#allocation2 + $0x88] sm:$0xff]
    %v1156 = vld [vmem:[#allocation2 + $0x90] sm:$0xff]
    %v1157 = vld [vmem:[#allocation2 + $0x98] sm:$0xff]
    %v1158 = vld [vmem:[#allocation2 + $0xa0] sm:$0xff]
    %v1159 = vld [vmem:[#allocation2 + $0xa8] sm:$0xff]
    %v1160 = vld [vmem:[#allocation2 + $0xb0] sm:$0xff]
    %v1161 = vld [vmem:[#allocation2 + $0xb8] sm:$0xff]
    %v1162 = vld [vmem:[#allocation2 + $0xc0] sm:$0xff]
    %v1163 = vld [vmem:[#allocation2 + $0xc8] sm:$0xff]
    %v1164 = vld [vmem:[#allocation2 + $0xd0] sm:$0xff]
    %v1165 = vld [vmem:[#allocation2 + $0xd8] sm:$0xff]
    %v1166 = vld [vmem:[#allocation2 + $0xe0] sm:$0xff]
    %v1167 = vld [vmem:[#allocation2 + $0xe8] sm:$0xff]
    %v1168 = vld [vmem:[#allocation2 + $0xf0] sm:$0xff]
    %v1169 = vld [vmem:[#allocation2 + $0xf8] sm:$0xff]
    %v1170 = vld [vmem:[#allocation2 + $0x100] sm:$0xff]
    %v1171 = vld [vmem:[#allocation2 + $0x108] sm:$0xff]
    %v1172 = vld [vmem:[#allocation2 + $0x110] sm:$0xff]
    %v1173 = vld [vmem:[#allocation2 + $0x118] sm:$0xff]
    %v1174 = vld [vmem:[#allocation2 + $0x120] sm:$0xff]
    %v1175 = vld [vmem:[#allocation2 + $0x128] sm:$0xff]
    %v1176 = vld [vmem:[#allocation2 + $0x130] sm:$0xff]
    %v1177 = vld [vmem:[#allocation2 + $0x138] sm:$0xff]
    %v1178 = vld [vmem:[#allocation2 + $0x140] sm:$0xff]
    %v1179 = vld [vmem:[#allocation2 + $0x148] sm:$0xff]
    %v1180 = vld [vmem:[#allocation2 + $0x150] sm:$0xff]
    %v1181 = vld [vmem:[#allocation2 + $0x158] sm:$0xff]
    %v1182 = vld [vmem:[#allocation2 + $0x160] sm:$0xff]
    %v1183 = vld [vmem:[#allocation2 + $0x168] sm:$0xff]
    %v1184 = vld [vmem:[#allocation2 + $0x170] sm:$0xff]
    %v1185 = vld [vmem:[#allocation2 + $0x178] sm:$0xff]
    %v1186 = vld [vmem:[#allocation2 + $0x180] sm:$0xff]
    %v1187 = vld [vmem:[#allocation2 + $0x188] sm:$0xff]
    %v1188 = vld [vmem:[#allocation2 + $0x190] sm:$0xff]
    %v1189 = vld [vmem:[#allocation2 + $0x198] sm:$0xff]
    %v1190 = vld [vmem:[#allocation2 + $0x1a0] sm:$0xff]
    %v1191 = vld [vmem:[#allocation2 + $0x1a8] sm:$0xff]
    %v1192 = vld [vmem:[#allocation2 + $0x1b0] sm:$0xff]
    %v1193 = vld [vmem:[#allocation2 + $0x1b8] sm:$0xff]
    %v1194 = vld [vmem:[#allocation2 + $0x1c0] sm:$0xff]
    %v1195 = vld [vmem:[#allocation2 + $0x1c8] sm:$0xff]
    %v1196 = vld [vmem:[#allocation2 + $0x1d0] sm:$0xff]
    %v1197 = vld [vmem:[#allocation2 + $0x1d8] sm:$0xff]
    %v1198 = vld [vmem:[#allocation2 + $0x1e0] sm:$0xff]
    %v1199 = vld [vmem:[#allocation2 + $0x1e8] sm:$0xff]
    %v1200 = vld [vmem:[#allocation2 + $0x1f0] sm:$0xff]
    %v1201 = vld [vmem:[#allocation2 + $0x1f8] sm:$0xff]
    %v1202 = vld [vmem:[#allocation2 + $0x200] sm:$0xff]
    %v1203 = vld [vmem:[#allocation2 + $0x208] sm:$0xff]
    %v1204 = vld [vmem:[#allocation2 + $0x210] sm:$0xff]
    %v1205 = vld [vmem:[#allocation2 + $0x218] sm:$0xff]
    %v1206 = vld [vmem:[#allocation2 + $0x220] sm:$0xff]
    %v1207 = vld [vmem:[#allocation2 + $0x228] sm:$0xff]
    %v1208 = vld [vmem:[#allocation2 + $0x230] sm:$0xff]
    %v1209 = vld [vmem:[#allocation2 + $0x238] sm:$0xff]
    %v1210 = vld [vmem:[#allocation2 + $0x240] sm:$0xff]
    %v1211 = vld [vmem:[#allocation2 + $0x248] sm:$0xff]
    %v1212 = vld [vmem:[#allocation2 + $0x250] sm:$0xff]
    %v1213 = vld [vmem:[#allocation2 + $0x258] sm:$0xff]
    %v1214 = vld [vmem:[#allocation2 + $0x260] sm:$0xff]
    %v1215 = vld [vmem:[#allocation2 + $0x268] sm:$0xff]
    %v1216 = vld [vmem:[#allocation2 + $0x270] sm:$0xff]
    %v1217 = vld [vmem:[#allocation2 + $0x278] sm:$0xff]
    %v1218 = vld [vmem:[%s2] sm:$0x1]
    %v1220 = vlaneseq
    %v1221 = vshrl.u32 %v1220, 7
    %v1222 = vsub.s32 0, %v1221
    %v1223 = vrot.slane %v1218, %v1222
    %v1225 = vadd.f32 %v1138, %v1223
    %v1226 = vadd.f32 %v1139, %v1223
    %v1227 = vadd.f32 %v1140, %v1223
    %v1228 = vadd.f32 %v1141, %v1223
    %v1229 = vadd.f32 %v1142, %v1223
    %v1230 = vadd.f32 %v1143, %v1223
    %v1231 = vadd.f32 %v1144, %v1223
    %v1232 = vadd.f32 %v1145, %v1223
    %v1233 = vadd.f32 %v1146, %v1223
    %v1234 = vadd.f32 %v1147, %v1223
    %v1235 = vadd.f32 %v1148, %v1223
    %v1236 = vadd.f32 %v1149, %v1223
    %v1237 = vadd.f32 %v1150, %v1223
    %v1238 = vadd.f32 %v1151, %v1223
    %v1239 = vadd.f32 %v1152, %v1223
    %v1240 = vadd.f32 %v1153, %v1223
    %v1241 = vadd.f32 %v1154, %v1223
    %v1242 = vadd.f32 %v1155, %v1223
    %v1243 = vadd.f32 %v1156, %v1223
    %v1244 = vadd.f32 %v1157, %v1223
    %v1245 = vadd.f32 %v1158, %v1223
    %v1246 = vadd.f32 %v1159, %v1223
    %v1247 = vadd.f32 %v1160, %v1223
    %v1248 = vadd.f32 %v1161, %v1223
    %v1249 = vadd.f32 %v1162, %v1223
    %v1250 = vadd.f32 %v1163, %v1223
    %v1251 = vadd.f32 %v1164, %v1223
    %v1252 = vadd.f32 %v1165, %v1223
    %v1253 = vadd.f32 %v1166, %v1223
    %v1254 = vadd.f32 %v1167, %v1223
    %v1255 = vadd.f32 %v1168, %v1223
    %v1256 = vadd.f32 %v1169, %v1223
    %v1257 = vadd.f32 %v1170, %v1223
    %v1258 = vadd.f32 %v1171, %v1223
    %v1259 = vadd.f32 %v1172, %v1223
    %v1260 = vadd.f32 %v1173, %v1223
    %v1261 = vadd.f32 %v1174, %v1223
    %v1262 = vadd.f32 %v1175, %v1223
    %v1263 = vadd.f32 %v1176, %v1223
    %v1264 = vadd.f32 %v1177, %v1223
    %v1265 = vadd.f32 %v1178, %v1223
    %v1266 = vadd.f32 %v1179, %v1223
    %v1267 = vadd.f32 %v1180, %v1223
    %v1268 = vadd.f32 %v1181, %v1223
    %v1269 = vadd.f32 %v1182, %v1223
    %v1270 = vadd.f32 %v1183, %v1223
    %v1271 = vadd.f32 %v1184, %v1223
    %v1272 = vadd.f32 %v1185, %v1223
    %v1273 = vadd.f32 %v1186, %v1223
    %v1274 = vadd.f32 %v1187, %v1223
    %v1275 = vadd.f32 %v1188, %v1223
    %v1276 = vadd.f32 %v1189, %v1223
    %v1277 = vadd.f32 %v1190, %v1223
    %v1278 = vadd.f32 %v1191, %v1223
    %v1279 = vadd.f32 %v1192, %v1223
    %v1280 = vadd.f32 %v1193, %v1223
    %v1281 = vadd.f32 %v1194, %v1223
    %v1282 = vadd.f32 %v1195, %v1223
    %v1283 = vadd.f32 %v1196, %v1223
    %v1284 = vadd.f32 %v1197, %v1223
    %v1285 = vadd.f32 %v1198, %v1223
    %v1286 = vadd.f32 %v1199, %v1223
    %v1287 = vadd.f32 %v1200, %v1223
    %v1288 = vadd.f32 %v1201, %v1223
    %v1289 = vadd.f32 %v1202, %v1223
    %v1290 = vadd.f32 %v1203, %v1223
    %v1291 = vadd.f32 %v1204, %v1223
    %v1292 = vadd.f32 %v1205, %v1223
    %v1293 = vadd.f32 %v1206, %v1223
    %v1294 = vadd.f32 %v1207, %v1223
    %v1295 = vadd.f32 %v1208, %v1223
    %v1296 = vadd.f32 %v1209, %v1223
    %v1297 = vadd.f32 %v1210, %v1223
    %v1298 = vadd.f32 %v1211, %v1223
    %v1299 = vadd.f32 %v1212, %v1223
    %v1300 = vadd.f32 %v1213, %v1223
    %v1301 = vadd.f32 %v1214, %v1223
    %v1302 = vadd.f32 %v1215, %v1223
    %v1303 = vadd.f32 %v1216, %v1223
    %v1304 = vadd.f32 %v1217, %v1223
    %1305 = vst.msk [vmem:[%s3] sm:$0xff] %vm1054, %v1225
    %1306 = vst.msk [vmem:[%s3 + $0x8] sm:$0xff] %vm1054, %v1226
    %1307 = vst.msk [vmem:[%s3 + $0x10] sm:$0xff] %vm1054, %v1227
    %1308 = vst.msk [vmem:[%s3 + $0x18] sm:$0xff] %vm1054, %v1228
    %1309 = vst.msk [vmem:[%s3 + $0x20] sm:$0xff] %vm1054, %v1229
    %1310 = vst.msk [vmem:[%s3 + $0x28] sm:$0xff] %vm1054, %v1230
    %1311 = vst.msk [vmem:[%s3 + $0x30] sm:$0xff] %vm1054, %v1231
    %1312 = vst.msk [vmem:[%s3 + $0x38] sm:$0xff] %vm1054, %v1232
    %1313 = vst.msk [vmem:[%s3 + $0x40] sm:$0xff] %vm1054, %v1233
    %1314 = vst.msk [vmem:[%s3 + $0x48] sm:$0xff] %vm1054, %v1234
    %1315 = vst.msk [vmem:[%s3 + $0x50] sm:$0xff] %vm1054, %v1235
    %1316 = vst.msk [vmem:[%s3 + $0x58] sm:$0xff] %vm1054, %v1236
    %1317 = vst.msk [vmem:[%s3 + $0x60] sm:$0xff] %vm1054, %v1237
    %1318 = vst.msk [vmem:[%s3 + $0x68] sm:$0xff] %vm1054, %v1238
    %1319 = vst.msk [vmem:[%s3 + $0x70] sm:$0xff] %vm1054, %v1239
    %1320 = vst.msk [vmem:[%s3 + $0x78] sm:$0xff] %vm1054, %v1240
    %1321 = vst.msk [vmem:[%s3 + $0x80] sm:$0xff] %vm1054, %v1241
    %1322 = vst.msk [vmem:[%s3 + $0x88] sm:$0xff] %vm1054, %v1242
    %1323 = vst.msk [vmem:[%s3 + $0x90] sm:$0xff] %vm1054, %v1243
    %1324 = vst.msk [vmem:[%s3 + $0x98] sm:$0xff] %vm1054, %v1244
    %1325 = vst.msk [vmem:[%s3 + $0xa0] sm:$0xff] %vm1054, %v1245
    %1326 = vst.msk [vmem:[%s3 + $0xa8] sm:$0xff] %vm1054, %v1246
    %1327 = vst.msk [vmem:[%s3 + $0xb0] sm:$0xff] %vm1054, %v1247
    %1328 = vst.msk [vmem:[%s3 + $0xb8] sm:$0xff] %vm1054, %v1248
    %1329 = vst.msk [vmem:[%s3 + $0xc0] sm:$0xff] %vm1054, %v1249
    %1330 = vst.msk [vmem:[%s3 + $0xc8] sm:$0xff] %vm1054, %v1250
    %1331 = vst.msk [vmem:[%s3 + $0xd0] sm:$0xff] %vm1054, %v1251
    %1332 = vst.msk [vmem:[%s3 + $0xd8] sm:$0xff] %vm1054, %v1252
    %1333 = vst.msk [vmem:[%s3 + $0xe0] sm:$0xff] %vm1054, %v1253
    %1334 = vst.msk [vmem:[%s3 + $0xe8] sm:$0xff] %vm1054, %v1254
    %1335 = vst.msk [vmem:[%s3 + $0xf0] sm:$0xff] %vm1054, %v1255
    %1336 = vst.msk [vmem:[%s3 + $0xf8] sm:$0xff] %vm1054, %v1256
    %1337 = vst.msk [vmem:[%s3 + $0x100] sm:$0xff] %vm1054, %v1257
    %1338 = vst.msk [vmem:[%s3 + $0x108] sm:$0xff] %vm1054, %v1258
    %1339 = vst.msk [vmem:[%s3 + $0x110] sm:$0xff] %vm1054, %v1259
    %1340 = vst.msk [vmem:[%s3 + $0x118] sm:$0xff] %vm1054, %v1260
    %1341 = vst.msk [vmem:[%s3 + $0x120] sm:$0xff] %vm1054, %v1261
    %1342 = vst.msk [vmem:[%s3 + $0x128] sm:$0xff] %vm1054, %v1262
    %1343 = vst.msk [vmem:[%s3 + $0x130] sm:$0xff] %vm1054, %v1263
    %1344 = vst.msk [vmem:[%s3 + $0x138] sm:$0xff] %vm1054, %v1264
    %1345 = vst.msk [vmem:[%s3 + $0x140] sm:$0xff] %vm1054, %v1265
    %1346 = vst.msk [vmem:[%s3 + $0x148] sm:$0xff] %vm1054, %v1266
    %1347 = vst.msk [vmem:[%s3 + $0x150] sm:$0xff] %vm1054, %v1267
    %1348 = vst.msk [vmem:[%s3 + $0x158] sm:$0xff] %vm1054, %v1268
    %1349 = vst.msk [vmem:[%s3 + $0x160] sm:$0xff] %vm1054, %v1269
    %1350 = vst.msk [vmem:[%s3 + $0x168] sm:$0xff] %vm1054, %v1270
    %1351 = vst.msk [vmem:[%s3 + $0x170] sm:$0xff] %vm1054, %v1271
    %1352 = vst.msk [vmem:[%s3 + $0x178] sm:$0xff] %vm1054, %v1272
    %1353 = vst.msk [vmem:[%s3 + $0x180] sm:$0xff] %vm1054, %v1273
    %1354 = vst.msk [vmem:[%s3 + $0x188] sm:$0xff] %vm1054, %v1274
    %1355 = vst.msk [vmem:[%s3 + $0x190] sm:$0xff] %vm1054, %v1275
    %1356 = vst.msk [vmem:[%s3 + $0x198] sm:$0xff] %vm1054, %v1276
    %1357 = vst.msk [vmem:[%s3 + $0x1a0] sm:$0xff] %vm1054, %v1277
    %1358 = vst.msk [vmem:[%s3 + $0x1a8] sm:$0xff] %vm1054, %v1278
    %1359 = vst.msk [vmem:[%s3 + $0x1b0] sm:$0xff] %vm1054, %v1279
    %1360 = vst.msk [vmem:[%s3 + $0x1b8] sm:$0xff] %vm1054, %v1280
    %1361 = vst.msk [vmem:[%s3 + $0x1c0] sm:$0xff] %vm1054, %v1281
    %1362 = vst.msk [vmem:[%s3 + $0x1c8] sm:$0xff] %vm1054, %v1282
    %1363 = vst.msk [vmem:[%s3 + $0x1d0] sm:$0xff] %vm1054, %v1283
    %1364 = vst.msk [vmem:[%s3 + $0x1d8] sm:$0xff] %vm1054, %v1284
    %1365 = vst.msk [vmem:[%s3 + $0x1e0] sm:$0xff] %vm1054, %v1285
    %1366 = vst.msk [vmem:[%s3 + $0x1e8] sm:$0xff] %vm1054, %v1286
    %1367 = vst.msk [vmem:[%s3 + $0x1f0] sm:$0xff] %vm1054, %v1287
    %1368 = vst.msk [vmem:[%s3 + $0x1f8] sm:$0xff] %vm1054, %v1288
    %1369 = vst.msk [vmem:[%s3 + $0x200] sm:$0xff] %vm1054, %v1289
    %1370 = vst.msk [vmem:[%s3 + $0x208] sm:$0xff] %vm1054, %v1290
    %1371 = vst.msk [vmem:[%s3 + $0x210] sm:$0xff] %vm1054, %v1291
    %1372 = vst.msk [vmem:[%s3 + $0x218] sm:$0xff] %vm1054, %v1292
    %1373 = vst.msk [vmem:[%s3 + $0x220] sm:$0xff] %vm1054, %v1293
    %1374 = vst.msk [vmem:[%s3 + $0x228] sm:$0xff] %vm1054, %v1294
    %1375 = vst.msk [vmem:[%s3 + $0x230] sm:$0xff] %vm1054, %v1295
    %1376 = vst.msk [vmem:[%s3 + $0x238] sm:$0xff] %vm1054, %v1296
    %1377 = vst.msk [vmem:[%s3 + $0x240] sm:$0xff] %vm1054, %v1297
    %1378 = vst.msk [vmem:[%s3 + $0x248] sm:$0xff] %vm1054, %v1298
    %1379 = vst.msk [vmem:[%s3 + $0x250] sm:$0xff] %vm1054, %v1299
    %1380 = vst.msk [vmem:[%s3 + $0x258] sm:$0xff] %vm1054, %v1300
    %1381 = vst.msk [vmem:[%s3 + $0x260] sm:$0xff] %vm1054, %v1301
    %1382 = vst.msk [vmem:[%s3 + $0x268] sm:$0xff] %vm1054, %v1302
    %1383 = vst.msk [vmem:[%s3 + $0x270] sm:$0xff] %vm1054, %v1303
    %1384 = vst.msk [vmem:[%s3 + $0x278] sm:$0xff] %vm1054, %v1304
  $region21: #{jvp__.11} parent=0 // pred_fallthru
    _
  // Predicated region
  $region22: #{jvp__.11} parent=0 // pred_check
    _
  $region23: #{jvp__.11} parent=0 // pred_check_branch
    %1386 = sbr.rel (0) target = $region25
  $region24: #{jvp__.11} parent=0 // pred_region
    _
  $region25: #{jvp__.11} parent=0 // pred_fallthru
    _
  // Predicated region
  $region26: #{jvp__.11} parent=0 // pred_check
    _
  $region27: #{jvp__.11} parent=0 // pred_check_branch
    %1388 = sbr.rel (0) target = $region29
  $region28: #{jvp__.11} parent=0 // pred_region
    _
  $region29: #{jvp__.11} parent=0 // pred_fallthru
    _

// kernel: jvp__.12
$region0: #{jvp__.12}
  #allocation0 [shape = 'u32[]', space=smem, size = 0x4, offset = 0x4, fixed_abs, tag = 'smem constant byte address 0x4 - core index']
  #allocation1 [shape = 'u32[144,128]{1,0:T(1,128)}', space=vmem, size = 0x12000, scoped, tag = 'internal scratch']
  #allocation2 [shape = 'f32[160,8]{1,0:T(8,128)}', space=vmem, size = 0x14000, scoped, tag = 'scratch operand']
  %s0 = inlined_call_operand.vmem [shape: bf16[160,72], index: 0, kind: input, shape index: {}]
  %s1 = inlined_call_operand.vmem [shape: bf16[72,8], index: 1, kind: input, shape index: {}]
  %s2 = inlined_call_operand.vmem [shape: f32[1,8], index: 2, kind: input, shape index: {}]
  %s3 = inlined_call_operand.vmem [shape: f32[160,8], index: 3, kind: output, shape index: {}]
  %s4 = sld [smem:[#allocation0]]
  $region30: #{jvp__.12} parent=0
    _
  %s6 = ssub.s32 1, %s4
  %s7 = scalar_select 0, %s6, %s4
  // Predicated region
  $region2: #{jvp__.12} parent=0 // pred_check
    _
  $region3: #{jvp__.12} parent=0 // pred_check_branch
    %9 = sbr.rel (0) target = $region5
  $region4: #{jvp__.12} parent=0 // pred_region
    _
  $region5: #{jvp__.12} parent=0 // pred_fallthru
    _
  // Predicated region
  $region6: #{jvp__.12} parent=0 // pred_check
    _
  $region7: #{jvp__.12} parent=0 // pred_check_branch
    %11 = sbr.rel (0) target = $region9
  $region8: #{jvp__.12} parent=0 // pred_region
    _
  $region9: #{jvp__.12} parent=0 // pred_fallthru
    _
  // Predicated region
  $region10: #{jvp__.12} parent=0 // pred_check
    _
  $region11: #{jvp__.12} parent=0 // pred_check_branch
    %13 = sbr.rel (0) target = $region13
  $region12: #{jvp__.12} parent=0 // pred_region
    _
  $region13: #{jvp__.12} parent=0 // pred_fallthru
    _
  %p15 = scmp.eq.s32.totalorder 0, 0
  // Predicated region
  $region14: #{jvp__.12} parent=0 // pred_check
    %p16 = pneg %p15
  $region15: #{jvp__.12} parent=0 // pred_check_branch
    %18 = sbr.rel (%p16) target = $region17
  $region16: #{jvp__.12} parent=0 // pred_region
    %vm19 = vcmask 64512
    %20 = vst.msk [vmem:[#allocation2] sm:$0xff] %vm19, 0.0
    %21 = vst.msk [vmem:[#allocation2 + $0x8] sm:$0xff] %vm19, 0.0
    %22 = vst.msk [vmem:[#allocation2 + $0x10] sm:$0xff] %vm19, 0.0
    %23 = vst.msk [vmem:[#allocation2 + $0x18] sm:$0xff] %vm19, 0.0
    %24 = vst.msk [vmem:[#allocation2 + $0x20] sm:$0xff] %vm19, 0.0
    %25 = vst.msk [vmem:[#allocation2 + $0x28] sm:$0xff] %vm19, 0.0
    %26 = vst.msk [vmem:[#allocation2 + $0x30] sm:$0xff] %vm19, 0.0
    %27 = vst.msk [vmem:[#allocation2 + $0x38] sm:$0xff] %vm19, 0.0
    %28 = vst.msk [vmem:[#allocation2 + $0x40] sm:$0xff] %vm19, 0.0
    %29 = vst.msk [vmem:[#allocation2 + $0x48] sm:$0xff] %vm19, 0.0
    %30 = vst.msk [vmem:[#allocation2 + $0x50] sm:$0xff] %vm19, 0.0
    %31 = vst.msk [vmem:[#allocation2 + $0x58] sm:$0xff] %vm19, 0.0
    %32 = vst.msk [vmem:[#allocation2 + $0x60] sm:$0xff] %vm19, 0.0
    %33 = vst.msk [vmem:[#allocation2 + $0x68] sm:$0xff] %vm19, 0.0
    %34 = vst.msk [vmem:[#allocation2 + $0x70] sm:$0xff] %vm19, 0.0
    %35 = vst.msk [vmem:[#allocation2 + $0x78] sm:$0xff] %vm19, 0.0
    %36 = vst.msk [vmem:[#allocation2 + $0x80] sm:$0xff] %vm19, 0.0
    %37 = vst.msk [vmem:[#allocation2 + $0x88] sm:$0xff] %vm19, 0.0
    %38 = vst.msk [vmem:[#allocation2 + $0x90] sm:$0xff] %vm19, 0.0
    %39 = vst.msk [vmem:[#allocation2 + $0x98] sm:$0xff] %vm19, 0.0
  $region17: #{jvp__.12} parent=0 // pred_fallthru
    _
  %v40 = vld [vmem:[#allocation2] sm:$0xff]
  %v41 = vld [vmem:[#allocation2 + $0x8] sm:$0xff]
  %v42 = vld [vmem:[#allocation2 + $0x10] sm:$0xff]
  %v43 = vld [vmem:[#allocation2 + $0x18] sm:$0xff]
  %v44 = vld [vmem:[#allocation2 + $0x20] sm:$0xff]
  %v45 = vld [vmem:[#allocation2 + $0x28] sm:$0xff]
  %v46 = vld [vmem:[#allocation2 + $0x30] sm:$0xff]
  %v47 = vld [vmem:[#allocation2 + $0x38] sm:$0xff]
  %v48 = vld [vmem:[#allocation2 + $0x40] sm:$0xff]
  %v49 = vld [vmem:[#allocation2 + $0x48] sm:$0xff]
  %v50 = vld [vmem:[#allocation2 + $0x50] sm:$0xff]
  %v51 = vld [vmem:[#allocation2 + $0x58] sm:$0xff]
  %v52 = vld [vmem:[#allocation2 + $0x60] sm:$0xff]
  %v53 = vld [vmem:[#allocation2 + $0x68] sm:$0xff]
  %v54 = vld [vmem:[#allocation2 + $0x70] sm:$0xff]
  %v55 = vld [vmem:[#allocation2 + $0x78] sm:$0xff]
  %v56 = vld [vmem:[#allocation2 + $0x80] sm:$0xff]
  %v57 = vld [vmem:[#allocation2 + $0x88] sm:$0xff]
  %v58 = vld [vmem:[#allocation2 + $0x90] sm:$0xff]
  %v59 = vld [vmem:[#allocation2 + $0x98] sm:$0xff]
  %v60 = vld [vmem:[%s0] sm:$0xf]
  %v61 = vld [vmem:[%s0 + $0x4] sm:$0xf]
  %v62 = vld [vmem:[%s0 + $0x8] sm:$0xf]
  %v63 = vld [vmem:[%s0 + $0xc] sm:$0xf]
  %v64 = vld [vmem:[%s0 + $0x10] sm:$0xf]
  %v65 = vld [vmem:[%s0 + $0x14] sm:$0xf]
  %v66 = vld [vmem:[%s0 + $0x18] sm:$0xf]
  %v67 = vld [vmem:[%s0 + $0x1c] sm:$0xf]
  %v68 = vld [vmem:[%s0 + $0x20] sm:$0xf]
  %v69 = vld [vmem:[%s0 + $0x24] sm:$0xf]
  %v70 = vld [vmem:[%s0 + $0x28] sm:$0xf]
  %v71 = vld [vmem:[%s0 + $0x2c] sm:$0xf]
  %v72 = vld [vmem:[%s0 + $0x30] sm:$0xf]
  %v73 = vld [vmem:[%s0 + $0x34] sm:$0xf]
  %v74 = vld [vmem:[%s0 + $0x38] sm:$0xf]
  %v75 = vld [vmem:[%s0 + $0x3c] sm:$0xf]
  %v76 = vld [vmem:[%s0 + $0x40] sm:$0xf]
  %v77 = vld [vmem:[%s0 + $0x44] sm:$0xf]
  %v78 = vld [vmem:[%s0 + $0x48] sm:$0xf]
  %v79 = vld [vmem:[%s0 + $0x4c] sm:$0xf]
  %v80 = vld [vmem:[%s1] sm:$0xf]
  %v81 = vld [vmem:[%s1 + $0x4] sm:$0xf]
  %v82 = vld [vmem:[%s1 + $0x8] sm:$0xf]
  %v83 = vld [vmem:[%s1 + $0xc] sm:$0xf]
  %v84 = vld [vmem:[%s1 + $0x10] sm:$0xf]
  %v85 = vld [vmem:[%s1 + $0x14] sm:$0xf]
  %v86 = vld [vmem:[%s1 + $0x18] sm:$0xf]
  %v87 = vld [vmem:[%s1 + $0x1c] sm:$0xf]
  %v88 = vld [vmem:[%s1 + $0x20] sm:$0xf]
  %v109 = vunpack.c.l.b16 %v60
  %v110 = vunpack.c.l.b16 %v61
  %v111 = vunpack.c.l.b16 %v62
  %v112 = vunpack.c.l.b16 %v63
  %v113 = vunpack.c.l.b16 %v64
  %v114 = vunpack.c.l.b16 %v65
  %v115 = vunpack.c.l.b16 %v66
  %v116 = vunpack.c.l.b16 %v67
  %v117 = vunpack.c.l.b16 %v68
  %v118 = vunpack.c.l.b16 %v69
  %v119 = vunpack.c.l.b16 %v70
  %v120 = vunpack.c.l.b16 %v71
  %v121 = vunpack.c.l.b16 %v72
  %v122 = vunpack.c.l.b16 %v73
  %v123 = vunpack.c.l.b16 %v74
  %v124 = vunpack.c.l.b16 %v75
  %v125 = vunpack.c.l.b16 %v76
  %v126 = vunpack.c.l.b16 %v77
  %v127 = vunpack.c.l.b16 %v78
  %v128 = vunpack.c.l.b16 %v79
  %v129 = vpack.c.b16 %v110, %v109
  %v130 = vpack.c.b16 %v112, %v111
  %v131 = vpack.c.b16 %v114, %v113
  %v132 = vpack.c.b16 %v116, %v115
  %v133 = vpack.c.b16 %v118, %v117
  %v134 = vpack.c.b16 %v120, %v119
  %v135 = vpack.c.b16 %v122, %v121
  %v136 = vpack.c.b16 %v124, %v123
  %v137 = vpack.c.b16 %v126, %v125
  %v138 = vpack.c.b16 %v128, %v127
  %v148 = vunpack.c.l.b16 %v80
  %v149 = vunpack.c.l.b16 %v81
  %v150 = vunpack.c.l.b16 %v82
  %v151 = vunpack.c.l.b16 %v83
  %v152 = vunpack.c.l.b16 %v84
  %v153 = vunpack.c.l.b16 %v85
  %v154 = vunpack.c.l.b16 %v86
  %v155 = vunpack.c.l.b16 %v87
  %v156 = vunpack.c.l.b16 %v88
  %v157 = vpack.c.b16 %v149, %v148
  %v158 = vpack.c.b16 %v151, %v150
  %v159 = vpack.c.b16 %v153, %v152
  %v160 = vpack.c.b16 %v155, %v154
  %v161 = vpack.c.b16 %v156, %v156
  %vm166 = vcmask 588800
  %v168 = vsel %vm166, %v129, 0
  %v171 = vsel %vm166, %v130, 0
  %v174 = vsel %vm166, %v131, 0
  %v177 = vsel %vm166, %v132, 0
  %v180 = vsel %vm166, %v133, 0
  %v183 = vsel %vm166, %v134, 0
  %v186 = vsel %vm166, %v135, 0
  %v189 = vsel %vm166, %v136, 0
  %v192 = vsel %vm166, %v137, 0
  %v195 = vsel %vm166, %v138, 0
  %vm197 = vcmask 1043456
  %v199 = vsel %vm197, %v161, 0
  %201 = vmatprep.subr.bf16.mxu0 0
  %202 = vmatpush1.bf16.msra.mxu0 %v157
  %203 = vmatprep.subr.bf16.mxu0 0
  %204 = vmatpush1.bf16.msra.mxu0 %v158
  %205 = vmatprep.subr.bf16.mxu0 0
  %206 = vmatpush1.bf16.msra.mxu0 %v159
  %207 = vmatprep.subr.bf16.mxu0 0
  %208 = vmatpush1.bf16.msra.mxu0 %v160
  %209 = vmatprep.subr.bf16.mxu0 0
  %210 = vmatpush1.bf16.msra.mxu0 %v199
  %211 = vmatprep.subr.bf16.mxu0 0
  %212 = vmatpush1.bf16.msra.mxu0 0
  %213 = vmatprep.subr.bf16.mxu0 0
  %214 = vmatpush1.bf16.msra.mxu0 0
  %215 = vmatprep.subr.bf16.mxu0 0
  %216 = vmatpush1.bf16.msra.mxu0 0
  %217 = vmatprep.subr.bf16.mxu0 0
  %218 = vmatpush1.bf16.msra.mxu0 0
  %219 = vmatprep.subr.bf16.mxu0 0
  %220 = vmatpush1.bf16.msra.mxu0 0
  %221 = vmatprep.subr.bf16.mxu0 0
  %222 = vmatpush1.bf16.msra.mxu0 0
  %223 = vmatprep.subr.bf16.mxu0 0
  %224 = vmatpush1.bf16.msra.mxu0 0
  %225 = vmatprep.subr.bf16.mxu0 0
  %226 = vmatpush1.bf16.msra.mxu0 0
  %227 = vmatprep.subr.bf16.mxu0 0
  %228 = vmatpush1.bf16.msra.mxu0 0
  %229 = vmatprep.subr.bf16.mxu0 0
  %230 = vmatpush1.bf16.msra.mxu0 0
  %231 = vmatprep.subr.bf16.mxu0 0
  %232 = vmatpush1.bf16.msra.mxu0 0
  %233 = vmatprep.mubr.bf16.mxu0 0
  %234 = vmatmul.mubr.bf16.gmra.mrb[0].mxu0 %v168
  %v235 = vpop.f32.mrb[0].mxu0
  %v236 = vadd.f32 0.0, %v235
  %v237 = vpop.f32.mrb[0].mxu0
  %v238 = vpop.f32.mrb[0].mxu0
  %v239 = vadd.f32 0.0, %v238
  %v240 = vpop.f32.mrb[0].mxu0
  %241 = vmatprep.mubr.bf16.mxu0 0
  %242 = vmatmul.mubr.bf16.gmra.mrb[0].mxu0 %v171
  %v243 = vpop.f32.mrb[0].mxu0
  %v244 = vadd.f32 0.0, %v243
  %v245 = vpop.f32.mrb[0].mxu0
  %v246 = vpop.f32.mrb[0].mxu0
  %v247 = vadd.f32 0.0, %v246
  %v248 = vpop.f32.mrb[0].mxu0
  %249 = vmatprep.mubr.bf16.mxu0 0
  %250 = vmatmul.mubr.bf16.gmra.mrb[0].mxu0 %v174
  %v251 = vpop.f32.mrb[0].mxu0
  %v252 = vadd.f32 0.0, %v251
  %v253 = vpop.f32.mrb[0].mxu0
  %v254 = vpop.f32.mrb[0].mxu0
  %v255 = vadd.f32 0.0, %v254
  %v256 = vpop.f32.mrb[0].mxu0
  %257 = vmatprep.mubr.bf16.mxu0 0
  %258 = vmatmul.mubr.bf16.gmra.mrb[0].mxu0 %v177
  %v259 = vpop.f32.mrb[0].mxu0
  %v260 = vadd.f32 0.0, %v259
  %v261 = vpop.f32.mrb[0].mxu0
  %v262 = vpop.f32.mrb[0].mxu0
  %v263 = vadd.f32 0.0, %v262
  %v264 = vpop.f32.mrb[0].mxu0
  %265 = vmatprep.mubr.bf16.mxu0 0
  %266 = vmatmul.mubr.bf16.gmra.mrb[0].mxu0 %v180
  %v267 = vpop.f32.mrb[0].mxu0
  %v268 = vadd.f32 0.0, %v267
  %v269 = vpop.f32.mrb[0].mxu0
  %v270 = vpop.f32.mrb[0].mxu0
  %v271 = vadd.f32 0.0, %v270
  %v272 = vpop.f32.mrb[0].mxu0
  %273 = vmatprep.mubr.bf16.mxu0 0
  %274 = vmatmul.mubr.bf16.gmra.mrb[0].mxu0 %v183
  %v275 = vpop.f32.mrb[0].mxu0
  %v276 = vadd.f32 0.0, %v275
  %v277 = vpop.f32.mrb[0].mxu0
  %v278 = vpop.f32.mrb[0].mxu0
  %v279 = vadd.f32 0.0, %v278
  %v280 = vpop.f32.mrb[0].mxu0
  %281 = vmatprep.mubr.bf16.mxu0 0
  %282 = vmatmul.mubr.bf16.gmra.mrb[0].mxu0 %v186
  %v283 = vpop.f32.mrb[0].mxu0
  %v284 = vadd.f32 0.0, %v283
  %v285 = vpop.f32.mrb[0].mxu0
  %v286 = vpop.f32.mrb[0].mxu0
  %v287 = vadd.f32 0.0, %v286
  %v288 = vpop.f32.mrb[0].mxu0
  %289 = vmatprep.mubr.bf16.mxu0 0
  %290 = vmatmul.mubr.bf16.gmra.mrb[0].mxu0 %v189
  %v291 = vpop.f32.mrb[0].mxu0
  %v292 = vadd.f32 0.0, %v291
  %v293 = vpop.f32.mrb[0].mxu0
  %v294 = vpop.f32.mrb[0].mxu0
  %v295 = vadd.f32 0.0, %v294
  %v296 = vpop.f32.mrb[0].mxu0
  %297 = vmatprep.mubr.bf16.mxu0 0
  %298 = vmatmul.mubr.bf16.gmra.mrb[0].mxu0 %v192
  %v299 = vpop.f32.mrb[0].mxu0
  %v300 = vadd.f32 0.0, %v299
  %v301 = vpop.f32.mrb[0].mxu0
  %v302 = vpop.f32.mrb[0].mxu0
  %v303 = vadd.f32 0.0, %v302
  %v304 = vpop.f32.mrb[0].mxu0
  %305 = vmatprep.mubr.bf16.mxu0 0
  %306 = vmatmul.mubr.bf16.gmra.mrb[0].mxu0 %v195
  %v307 = vpop.f32.mrb[0].mxu0
  %v308 = vadd.f32 0.0, %v307
  %v309 = vpop.f32.mrb[0].mxu0
  %v310 = vpop.f32.mrb[0].mxu0
  %v311 = vadd.f32 0.0, %v310
  %v312 = vpop.f32.mrb[0].mxu0
  %313 = vdwg.mxu0
  %v314 = vadd.f32 %v40, %v236
  %v315 = vadd.f32 %v41, %v239
  %v316 = vadd.f32 %v42, %v244
  %v317 = vadd.f32 %v43, %v247
  %v318 = vadd.f32 %v44, %v252
  %v319 = vadd.f32 %v45, %v255
  %v320 = vadd.f32 %v46, %v260
  %v321 = vadd.f32 %v47, %v263
  %v322 = vadd.f32 %v48, %v268
  %v323 = vadd.f32 %v49, %v271
  %v324 = vadd.f32 %v50, %v276
  %v325 = vadd.f32 %v51, %v279
  %v326 = vadd.f32 %v52, %v284
  %v327 = vadd.f32 %v53, %v287
  %v328 = vadd.f32 %v54, %v292
  %v329 = vadd.f32 %v55, %v295
  %v330 = vadd.f32 %v56, %v300
  %v331 = vadd.f32 %v57, %v303
  %v332 = vadd.f32 %v58, %v308
  %v333 = vadd.f32 %v59, %v311
  %vm334 = vcmask 64512
  %335 = vst.msk [vmem:[#allocation2] sm:$0xff] %vm334, %v314
  %336 = vst.msk [vmem:[#allocation2 + $0x8] sm:$0xff] %vm334, %v315
  %337 = vst.msk [vmem:[#allocation2 + $0x10] sm:$0xff] %vm334, %v316
  %338 = vst.msk [vmem:[#allocation2 + $0x18] sm:$0xff] %vm334, %v317
  %339 = vst.msk [vmem:[#allocation2 + $0x20] sm:$0xff] %vm334, %v318
  %340 = vst.msk [vmem:[#allocation2 + $0x28] sm:$0xff] %vm334, %v319
  %341 = vst.msk [vmem:[#allocation2 + $0x30] sm:$0xff] %vm334, %v320
  %342 = vst.msk [vmem:[#allocation2 + $0x38] sm:$0xff] %vm334, %v321
  %343 = vst.msk [vmem:[#allocation2 + $0x40] sm:$0xff] %vm334, %v322
  %344 = vst.msk [vmem:[#allocation2 + $0x48] sm:$0xff] %vm334, %v323
  %345 = vst.msk [vmem:[#allocation2 + $0x50] sm:$0xff] %vm334, %v324
  %346 = vst.msk [vmem:[#allocation2 + $0x58] sm:$0xff] %vm334, %v325
  %347 = vst.msk [vmem:[#allocation2 + $0x60] sm:$0xff] %vm334, %v326
  %348 = vst.msk [vmem:[#allocation2 + $0x68] sm:$0xff] %vm334, %v327
  %349 = vst.msk [vmem:[#allocation2 + $0x70] sm:$0xff] %vm334, %v328
  %350 = vst.msk [vmem:[#allocation2 + $0x78] sm:$0xff] %vm334, %v329
  %351 = vst.msk [vmem:[#allocation2 + $0x80] sm:$0xff] %vm334, %v330
  %352 = vst.msk [vmem:[#allocation2 + $0x88] sm:$0xff] %vm334, %v331
  %353 = vst.msk [vmem:[#allocation2 + $0x90] sm:$0xff] %vm334, %v332
  %354 = vst.msk [vmem:[#allocation2 + $0x98] sm:$0xff] %vm334, %v333
  // Predicated region
  $region18: #{jvp__.12} parent=0 // pred_check
    %p355 = pneg %p15
  $region19: #{jvp__.12} parent=0 // pred_check_branch
    %357 = sbr.rel (%p355) target = $region21
  $region20: #{jvp__.12} parent=0 // pred_region
    %v358 = vld [vmem:[#allocation2] sm:$0xff]
    %v359 = vld [vmem:[#allocation2 + $0x8] sm:$0xff]
    %v360 = vld [vmem:[#allocation2 + $0x10] sm:$0xff]
    %v361 = vld [vmem:[#allocation2 + $0x18] sm:$0xff]
    %v362 = vld [vmem:[#allocation2 + $0x20] sm:$0xff]
    %v363 = vld [vmem:[#allocation2 + $0x28] sm:$0xff]
    %v364 = vld [vmem:[#allocation2 + $0x30] sm:$0xff]
    %v365 = vld [vmem:[#allocation2 + $0x38] sm:$0xff]
    %v366 = vld [vmem:[#allocation2 + $0x40] sm:$0xff]
    %v367 = vld [vmem:[#allocation2 + $0x48] sm:$0xff]
    %v368 = vld [vmem:[#allocation2 + $0x50] sm:$0xff]
    %v369 = vld [vmem:[#allocation2 + $0x58] sm:$0xff]
    %v370 = vld [vmem:[#allocation2 + $0x60] sm:$0xff]
    %v371 = vld [vmem:[#allocation2 + $0x68] sm:$0xff]
    %v372 = vld [vmem:[#allocation2 + $0x70] sm:$0xff]
    %v373 = vld [vmem:[#allocation2 + $0x78] sm:$0xff]
    %v374 = vld [vmem:[#allocation2 + $0x80] sm:$0xff]
    %v375 = vld [vmem:[#allocation2 + $0x88] sm:$0xff]
    %v376 = vld [vmem:[#allocation2 + $0x90] sm:$0xff]
    %v377 = vld [vmem:[#allocation2 + $0x98] sm:$0xff]
    %v378 = vld [vmem:[%s2] sm:$0x1]
    %v380 = vlaneseq
    %v381 = vshrl.u32 %v380, 7
    %v382 = vsub.s32 0, %v381
    %v383 = vrot.slane %v378, %v382
    %v385 = vadd.f32 %v358, %v383
    %v386 = vadd.f32 %v359, %v383
    %v387 = vadd.f32 %v360, %v383
    %v388 = vadd.f32 %v361, %v383
    %v389 = vadd.f32 %v362, %v383
    %v390 = vadd.f32 %v363, %v383
    %v391 = vadd.f32 %v364, %v383
    %v392 = vadd.f32 %v365, %v383
    %v393 = vadd.f32 %v366, %v383
    %v394 = vadd.f32 %v367, %v383
    %v395 = vadd.f32 %v368, %v383
    %v396 = vadd.f32 %v369, %v383
    %v397 = vadd.f32 %v370, %v383
    %v398 = vadd.f32 %v371, %v383
    %v399 = vadd.f32 %v372, %v383
    %v400 = vadd.f32 %v373, %v383
    %v401 = vadd.f32 %v374, %v383
    %v402 = vadd.f32 %v375, %v383
    %v403 = vadd.f32 %v376, %v383
    %v404 = vadd.f32 %v377, %v383
    %405 = vst.msk [vmem:[%s3] sm:$0xff] %vm334, %v385
    %406 = vst.msk [vmem:[%s3 + $0x8] sm:$0xff] %vm334, %v386
    %407 = vst.msk [vmem:[%s3 + $0x10] sm:$0xff] %vm334, %v387
    %408 = vst.msk [vmem:[%s3 + $0x18] sm:$0xff] %vm334, %v388
    %409 = vst.msk [vmem:[%s3 + $0x20] sm:$0xff] %vm334, %v389
    %410 = vst.msk [vmem:[%s3 + $0x28] sm:$0xff] %vm334, %v390
    %411 = vst.msk [vmem:[%s3 + $0x30] sm:$0xff] %vm334, %v391
    %412 = vst.msk [vmem:[%s3 + $0x38] sm:$0xff] %vm334, %v392
    %413 = vst.msk [vmem:[%s3 + $0x40] sm:$0xff] %vm334, %v393
    %414 = vst.msk [vmem:[%s3 + $0x48] sm:$0xff] %vm334, %v394
    %415 = vst.msk [vmem:[%s3 + $0x50] sm:$0xff] %vm334, %v395
    %416 = vst.msk [vmem:[%s3 + $0x58] sm:$0xff] %vm334, %v396
    %417 = vst.msk [vmem:[%s3 + $0x60] sm:$0xff] %vm334, %v397
    %418 = vst.msk [vmem:[%s3 + $0x68] sm:$0xff] %vm334, %v398
    %419 = vst.msk [vmem:[%s3 + $0x70] sm:$0xff] %vm334, %v399
    %420 = vst.msk [vmem:[%s3 + $0x78] sm:$0xff] %vm334, %v400
    %421 = vst.msk [vmem:[%s3 + $0x80] sm:$0xff] %vm334, %v401
    %422 = vst.msk [vmem:[%s3 + $0x88] sm:$0xff] %vm334, %v402
    %423 = vst.msk [vmem:[%s3 + $0x90] sm:$0xff] %vm334, %v403
    %424 = vst.msk [vmem:[%s3 + $0x98] sm:$0xff] %vm334, %v404
  $region21: #{jvp__.12} parent=0 // pred_fallthru
    _
  // Predicated region
  $region22: #{jvp__.12} parent=0 // pred_check
    _
  $region23: #{jvp__.12} parent=0 // pred_check_branch
    %426 = sbr.rel (0) target = $region25
  $region24: #{jvp__.12} parent=0 // pred_region
    _
  $region25: #{jvp__.12} parent=0 // pred_fallthru
    _
  // Predicated region
  $region26: #{jvp__.12} parent=0 // pred_check
    _
  $region27: #{jvp__.12} parent=0 // pred_check_branch
    %428 = sbr.rel (0) target = $region29
  $region28: #{jvp__.12} parent=0 // pred_region
    _
  $region29: #{jvp__.12} parent=0 // pred_fallthru
    _

// kernel: jvp__.13
$region0: #{jvp__.13}
  #allocation0 [shape = 'u32[]', space=smem, size = 0x4, offset = 0x4, fixed_abs, tag = 'smem constant byte address 0x4 - core index']
  #allocation1 [shape = 'u32[144,128]{1,0:T(1,128)}', space=vmem, size = 0x12000, scoped, tag = 'internal scratch']
  #allocation2 [shape = 'f32[40,8]{1,0:T(8,128)}', space=vmem, size = 0x5000, scoped, tag = 'scratch operand']
  %s0 = inlined_call_operand.vmem [shape: bf16[40,72], index: 0, kind: input, shape index: {}]
  %s1 = inlined_call_operand.vmem [shape: bf16[72,8], index: 1, kind: input, shape index: {}]
  %s2 = inlined_call_operand.vmem [shape: f32[1,8], index: 2, kind: input, shape index: {}]
  %s3 = inlined_call_operand.vmem [shape: f32[40,8], index: 3, kind: output, shape index: {}]
  %s4 = sld [smem:[#allocation0]]
  $region30: #{jvp__.13} parent=0
    _
  %s6 = ssub.s32 1, %s4
  %s7 = scalar_select 0, %s6, %s4
  // Predicated region
  $region2: #{jvp__.13} parent=0 // pred_check
    _
  $region3: #{jvp__.13} parent=0 // pred_check_branch
    %9 = sbr.rel (0) target = $region5
  $region4: #{jvp__.13} parent=0 // pred_region
    _
  $region5: #{jvp__.13} parent=0 // pred_fallthru
    _
  // Predicated region
  $region6: #{jvp__.13} parent=0 // pred_check
    _
  $region7: #{jvp__.13} parent=0 // pred_check_branch
    %11 = sbr.rel (0) target = $region9
  $region8: #{jvp__.13} parent=0 // pred_region
    _
  $region9: #{jvp__.13} parent=0 // pred_fallthru
    _
  // Predicated region
  $region10: #{jvp__.13} parent=0 // pred_check
    _
  $region11: #{jvp__.13} parent=0 // pred_check_branch
    %13 = sbr.rel (0) target = $region13
  $region12: #{jvp__.13} parent=0 // pred_region
    _
  $region13: #{jvp__.13} parent=0 // pred_fallthru
    _
  %p15 = scmp.eq.s32.totalorder 0, 0
  // Predicated region
  $region14: #{jvp__.13} parent=0 // pred_check
    %p16 = pneg %p15
  $region15: #{jvp__.13} parent=0 // pred_check_branch
    %18 = sbr.rel (%p16) target = $region17
  $region16: #{jvp__.13} parent=0 // pred_region
    %vm19 = vcmask 64512
    %20 = vst.msk [vmem:[#allocation2] sm:$0xff] %vm19, 0.0
    %21 = vst.msk [vmem:[#allocation2 + $0x8] sm:$0xff] %vm19, 0.0
    %22 = vst.msk [vmem:[#allocation2 + $0x10] sm:$0xff] %vm19, 0.0
    %23 = vst.msk [vmem:[#allocation2 + $0x18] sm:$0xff] %vm19, 0.0
    %24 = vst.msk [vmem:[#allocation2 + $0x20] sm:$0xff] %vm19, 0.0
  $region17: #{jvp__.13} parent=0 // pred_fallthru
    _
  %v25 = vld [vmem:[#allocation2] sm:$0xff]
  %v26 = vld [vmem:[#allocation2 + $0x8] sm:$0xff]
  %v27 = vld [vmem:[#allocation2 + $0x10] sm:$0xff]
  %v28 = vld [vmem:[#allocation2 + $0x18] sm:$0xff]
  %v29 = vld [vmem:[#allocation2 + $0x20] sm:$0xff]
  %v30 = vld [vmem:[%s0] sm:$0xf]
  %v31 = vld [vmem:[%s0 + $0x4] sm:$0xf]
  %v32 = vld [vmem:[%s0 + $0x8] sm:$0xf]
  %v33 = vld [vmem:[%s0 + $0xc] sm:$0xf]
  %v34 = vld [vmem:[%s0 + $0x10] sm:$0xf]
  %v35 = vld [vmem:[%s1] sm:$0xf]
  %v36 = vld [vmem:[%s1 + $0x4] sm:$0xf]
  %v37 = vld [vmem:[%s1 + $0x8] sm:$0xf]
  %v38 = vld [vmem:[%s1 + $0xc] sm:$0xf]
  %v39 = vld [vmem:[%s1 + $0x10] sm:$0xf]
  %v40 = vld [vmem:[%s1 + $0x14] sm:$0xf]
  %v41 = vld [vmem:[%s1 + $0x18] sm:$0xf]
  %v42 = vld [vmem:[%s1 + $0x1c] sm:$0xf]
  %v43 = vld [vmem:[%s1 + $0x20] sm:$0xf]
  %v49 = vunpack.c.l.b16 %v30
  %v50 = vunpack.c.l.b16 %v31
  %v51 = vunpack.c.l.b16 %v32
  %v52 = vunpack.c.l.b16 %v33
  %v53 = vunpack.c.l.b16 %v34
  %v54 = vpack.c.b16 %v50, %v49
  %v55 = vpack.c.b16 %v52, %v51
  %v56 = vpack.c.b16 %v53, %v53
  %v66 = vunpack.c.l.b16 %v35
  %v67 = vunpack.c.l.b16 %v36
  %v68 = vunpack.c.l.b16 %v37
  %v69 = vunpack.c.l.b16 %v38
  %v70 = vunpack.c.l.b16 %v39
  %v71 = vunpack.c.l.b16 %v40
  %v72 = vunpack.c.l.b16 %v41
  %v73 = vunpack.c.l.b16 %v42
  %v74 = vunpack.c.l.b16 %v43
  %v75 = vpack.c.b16 %v67, %v66
  %v76 = vpack.c.b16 %v69, %v68
  %v77 = vpack.c.b16 %v71, %v70
  %v78 = vpack.c.b16 %v73, %v72
  %v79 = vpack.c.b16 %v74, %v74
  %vm84 = vcmask 588800
  %v86 = vsel %vm84, %v54, 0
  %v89 = vsel %vm84, %v55, 0
  %v92 = vsel %vm84, %v56, 0
  %vm94 = vcmask 1043456
  %v96 = vsel %vm94, %v79, 0
  %98 = vmatprep.subr.bf16.mxu0 0
  %99 = vmatpush1.bf16.msra.mxu0 %v75
  %100 = vmatprep.subr.bf16.mxu0 0
  %101 = vmatpush1.bf16.msra.mxu0 %v76
  %102 = vmatprep.subr.bf16.mxu0 0
  %103 = vmatpush1.bf16.msra.mxu0 %v77
  %104 = vmatprep.subr.bf16.mxu0 0
  %105 = vmatpush1.bf16.msra.mxu0 %v78
  %106 = vmatprep.subr.bf16.mxu0 0
  %107 = vmatpush1.bf16.msra.mxu0 %v96
  %108 = vmatprep.subr.bf16.mxu0 0
  %109 = vmatpush1.bf16.msra.mxu0 0
  %110 = vmatprep.subr.bf16.mxu0 0
  %111 = vmatpush1.bf16.msra.mxu0 0
  %112 = vmatprep.subr.bf16.mxu0 0
  %113 = vmatpush1.bf16.msra.mxu0 0
  %114 = vmatprep.subr.bf16.mxu0 0
  %115 = vmatpush1.bf16.msra.mxu0 0
  %116 = vmatprep.subr.bf16.mxu0 0
  %117 = vmatpush1.bf16.msra.mxu0 0
  %118 = vmatprep.subr.bf16.mxu0 0
  %119 = vmatpush1.bf16.msra.mxu0 0
  %120 = vmatprep.subr.bf16.mxu0 0
  %121 = vmatpush1.bf16.msra.mxu0 0
  %122 = vmatprep.subr.bf16.mxu0 0
  %123 = vmatpush1.bf16.msra.mxu0 0
  %124 = vmatprep.subr.bf16.mxu0 0
  %125 = vmatpush1.bf16.msra.mxu0 0
  %126 = vmatprep.subr.bf16.mxu0 0
  %127 = vmatpush1.bf16.msra.mxu0 0
  %128 = vmatprep.subr.bf16.mxu0 0
  %129 = vmatpush1.bf16.msra.mxu0 0
  %130 = vmatprep.mubr.bf16.mxu0 0
  %131 = vmatmul.mubr.bf16.gmra.mrb[0].mxu0 %v86
  %v132 = vpop.f32.mrb[0].mxu0
  %v133 = vadd.f32 0.0, %v132
  %v134 = vpop.f32.mrb[0].mxu0
  %v135 = vpop.f32.mrb[0].mxu0
  %v136 = vadd.f32 0.0, %v135
  %v137 = vpop.f32.mrb[0].mxu0
  %138 = vmatprep.mubr.bf16.mxu0 0
  %139 = vmatmul.mubr.bf16.gmra.mrb[0].mxu0 %v89
  %v140 = vpop.f32.mrb[0].mxu0
  %v141 = vadd.f32 0.0, %v140
  %v142 = vpop.f32.mrb[0].mxu0
  %v143 = vpop.f32.mrb[0].mxu0
  %v144 = vadd.f32 0.0, %v143
  %v145 = vpop.f32.mrb[0].mxu0
  %146 = vmatprep.mubr.bf16.mxu0 0
  %147 = vmatmul.mubr.bf16.gmra.mrb[0].mxu0 %v92
  %v148 = vpop.f32.mrb[0].mxu0
  %v149 = vadd.f32 0.0, %v148
  %v150 = vpop.f32.mrb[0].mxu0
  %v151 = vpop.f32.mrb[0].mxu0
  %v152 = vpop.f32.mrb[0].mxu0
  %153 = vdwg.mxu0
  %v154 = vadd.f32 %v25, %v133
  %v155 = vadd.f32 %v26, %v136
  %v156 = vadd.f32 %v27, %v141
  %v157 = vadd.f32 %v28, %v144
  %v158 = vadd.f32 %v29, %v149
  %vm159 = vcmask 64512
  %160 = vst.msk [vmem:[#allocation2] sm:$0xff] %vm159, %v154
  %161 = vst.msk [vmem:[#allocation2 + $0x8] sm:$0xff] %vm159, %v155
  %162 = vst.msk [vmem:[#allocation2 + $0x10] sm:$0xff] %vm159, %v156
  %163 = vst.msk [vmem:[#allocation2 + $0x18] sm:$0xff] %vm159, %v157
  %164 = vst.msk [vmem:[#allocation2 + $0x20] sm:$0xff] %vm159, %v158
  // Predicated region
  $region18: #{jvp__.13} parent=0 // pred_check
    %p165 = pneg %p15
  $region19: #{jvp__.13} parent=0 // pred_check_branch
    %167 = sbr.rel (%p165) target = $region21
  $region20: #{jvp__.13} parent=0 // pred_region
    %v168 = vld [vmem:[#allocation2] sm:$0xff]
    %v169 = vld [vmem:[#allocation2 + $0x8] sm:$0xff]
    %v170 = vld [vmem:[#allocation2 + $0x10] sm:$0xff]
    %v171 = vld [vmem:[#allocation2 + $0x18] sm:$0xff]
    %v172 = vld [vmem:[#allocation2 + $0x20] sm:$0xff]
    %v173 = vld [vmem:[%s2] sm:$0x1]
    %v175 = vlaneseq
    %v176 = vshrl.u32 %v175, 7
    %v177 = vsub.s32 0, %v176
    %v178 = vrot.slane %v173, %v177
    %v180 = vadd.f32 %v168, %v178
    %v181 = vadd.f32 %v169, %v178
    %v182 = vadd.f32 %v170, %v178
    %v183 = vadd.f32 %v171, %v178
    %v184 = vadd.f32 %v172, %v178
    %185 = vst.msk [vmem:[%s3] sm:$0xff] %vm159, %v180
    %186 = vst.msk [vmem:[%s3 + $0x8] sm:$0xff] %vm159, %v181
    %187 = vst.msk [vmem:[%s3 + $0x10] sm:$0xff] %vm159, %v182
    %188 = vst.msk [vmem:[%s3 + $0x18] sm:$0xff] %vm159, %v183
    %189 = vst.msk [vmem:[%s3 + $0x20] sm:$0xff] %vm159, %v184
  $region21: #{jvp__.13} parent=0 // pred_fallthru
    _
  // Predicated region
  $region22: #{jvp__.13} parent=0 // pred_check
    _
  $region23: #{jvp__.13} parent=0 // pred_check_branch
    %191 = sbr.rel (0) target = $region25
  $region24: #{jvp__.13} parent=0 // pred_region
    _
  $region25: #{jvp__.13} parent=0 // pred_fallthru
    _
  // Predicated region
  $region26: #{jvp__.13} parent=0 // pred_check
    _
  $region27: #{jvp__.13} parent=0 // pred_check_branch
    %193 = sbr.rel (0) target = $region29
  $region28: #{jvp__.13} parent=0 // pred_region
    _
  $region29: #{jvp__.13} parent=0 // pred_fallthru
    _

// kernel: jvp__.14
$region0: #{jvp__.14}
  #allocation0 [shape = 'u32[]', space=smem, size = 0x4, offset = 0x4, fixed_abs, tag = 'smem constant byte address 0x4 - core index']
  #allocation1 [shape = 'u32[144,128]{1,0:T(1,128)}', space=vmem, size = 0x12000, scoped, tag = 'internal scratch']
  #allocation2 [shape = 'f32[16,5]{1,0:T(8,128)}', space=vmem, size = 0x2000, scoped, tag = 'scratch operand']
  %s0 = inlined_call_operand.vmem [shape: bf16[10,8], index: 0, kind: input, shape index: {}]
  %s1 = inlined_call_operand.vmem [shape: bf16[8,5], index: 1, kind: input, shape index: {}]
  %s2 = inlined_call_operand.vmem [shape: f32[1,5], index: 2, kind: input, shape index: {}]
  %s3 = inlined_call_operand.vmem [shape: f32[10,5], index: 3, kind: output, shape index: {}]
  %s4 = sld [smem:[#allocation0]]
  $region30: #{jvp__.14} parent=0
    _
  %s6 = ssub.s32 1, %s4
  %s7 = scalar_select 0, %s6, %s4
  // Predicated region
  $region2: #{jvp__.14} parent=0 // pred_check
    _
  $region3: #{jvp__.14} parent=0 // pred_check_branch
    %9 = sbr.rel (0) target = $region5
  $region4: #{jvp__.14} parent=0 // pred_region
    _
  $region5: #{jvp__.14} parent=0 // pred_fallthru
    _
  // Predicated region
  $region6: #{jvp__.14} parent=0 // pred_check
    _
  $region7: #{jvp__.14} parent=0 // pred_check_branch
    %11 = sbr.rel (0) target = $region9
  $region8: #{jvp__.14} parent=0 // pred_region
    _
  $region9: #{jvp__.14} parent=0 // pred_fallthru
    _
  // Predicated region
  $region10: #{jvp__.14} parent=0 // pred_check
    _
  $region11: #{jvp__.14} parent=0 // pred_check_branch
    %13 = sbr.rel (0) target = $region13
  $region12: #{jvp__.14} parent=0 // pred_region
    _
  $region13: #{jvp__.14} parent=0 // pred_fallthru
    _
  %p15 = scmp.eq.s32.totalorder 0, 0
  // Predicated region
  $region14: #{jvp__.14} parent=0 // pred_check
    %p16 = pneg %p15
  $region15: #{jvp__.14} parent=0 // pred_check_branch
    %18 = sbr.rel (%p16) target = $region17
  $region16: #{jvp__.14} parent=0 // pred_region
    %vm19 = vcmask 39936
    %20 = vst.msk [vmem:[#allocation2] sm:$0xff] %vm19, 0.0
    %21 = vst.msk [vmem:[#allocation2 + $0x8] sm:$0xff] %vm19, 0.0
  $region17: #{jvp__.14} parent=0 // pred_fallthru
    _
  %v22 = vld [vmem:[#allocation2] sm:$0xff]
  %v23 = vld [vmem:[#allocation2 + $0x8] sm:$0xff]
  %v24 = vld [vmem:[%s0] sm:$0xf]
  %v25 = vld [vmem:[%s0 + $0x4] sm:$0xf]
  %v26 = vld [vmem:[%s1] sm:$0xf]
  %v29 = vunpack.c.l.b16 %v24
  %v30 = vunpack.c.l.b16 %v25
  %v31 = vpack.c.b16 %v30, %v29
  %vm32 = vcmask 64512
  %v34 = vsel %vm32, %v31, 0
  %vm36 = vcmask 1043456
  %v38 = vsel %vm36, %v26, 0
  %40 = vmatprep.subr.bf16.mxu0 0
  %41 = vmatpush1.bf16.msra.mxu0 %v38
  %42 = vmatprep.subr.bf16.mxu0 0
  %43 = vmatpush1.bf16.msra.mxu0 0
  %44 = vmatprep.subr.bf16.mxu0 0
  %45 = vmatpush1.bf16.msra.mxu0 0
  %46 = vmatprep.subr.bf16.mxu0 0
  %47 = vmatpush1.bf16.msra.mxu0 0
  %48 = vmatprep.subr.bf16.mxu0 0
  %49 = vmatpush1.bf16.msra.mxu0 0
  %50 = vmatprep.subr.bf16.mxu0 0
  %51 = vmatpush1.bf16.msra.mxu0 0
  %52 = vmatprep.subr.bf16.mxu0 0
  %53 = vmatpush1.bf16.msra.mxu0 0
  %54 = vmatprep.subr.bf16.mxu0 0
  %55 = vmatpush1.bf16.msra.mxu0 0
  %56 = vmatprep.subr.bf16.mxu0 0
  %57 = vmatpush1.bf16.msra.mxu0 0
  %58 = vmatprep.subr.bf16.mxu0 0
  %59 = vmatpush1.bf16.msra.mxu0 0
  %60 = vmatprep.subr.bf16.mxu0 0
  %61 = vmatpush1.bf16.msra.mxu0 0
  %62 = vmatprep.subr.bf16.mxu0 0
  %63 = vmatpush1.bf16.msra.mxu0 0
  %64 = vmatprep.subr.bf16.mxu0 0
  %65 = vmatpush1.bf16.msra.mxu0 0
  %66 = vmatprep.subr.bf16.mxu0 0
  %67 = vmatpush1.bf16.msra.mxu0 0
  %68 = vmatprep.subr.bf16.mxu0 0
  %69 = vmatpush1.bf16.msra.mxu0 0
  %70 = vmatprep.subr.bf16.mxu0 0
  %71 = vmatpush1.bf16.msra.mxu0 0
  %72 = vmatprep.mubr.bf16.mxu0 0
  %73 = vmatmul.mubr.bf16.gmra.mrb[0].mxu0 %v34
  %v74 = vpop.f32.mrb[0].mxu0
  %v75 = vadd.f32 0.0, %v74
  %v76 = vpop.f32.mrb[0].mxu0
  %v77 = vpop.f32.mrb[0].mxu0
  %v78 = vadd.f32 0.0, %v77
  %v79 = vpop.f32.mrb[0].mxu0
  %80 = vdwg.mxu0
  %v81 = vadd.f32 %v22, %v75
  %v82 = vadd.f32 %v23, %v78
  %vm83 = vcmask 39936
  %84 = vst.msk [vmem:[#allocation2] sm:$0xff] %vm83, %v81
  %85 = vst.msk [vmem:[#allocation2 + $0x8] sm:$0xff] %vm83, %v82
  // Predicated region
  $region18: #{jvp__.14} parent=0 // pred_check
    %p86 = pneg %p15
  $region19: #{jvp__.14} parent=0 // pred_check_branch
    %88 = sbr.rel (%p86) target = $region21
  $region20: #{jvp__.14} parent=0 // pred_region
    %v89 = vld [vmem:[#allocation2] sm:$0xff]
    %v90 = vld [vmem:[#allocation2 + $0x8] sm:$0xff]
    %v91 = vld [vmem:[%s2] sm:$0x1]
    %v93 = vlaneseq
    %v94 = vshrl.u32 %v93, 7
    %v95 = vsub.s32 0, %v94
    %v96 = vrot.slane %v91, %v95
    %v98 = vadd.f32 %v89, %v96
    %v99 = vadd.f32 %v90, %v96
    %100 = vst.msk [vmem:[%s3] sm:$0xff] %vm83, %v98
    %101 = vst.msk [vmem:[%s3 + $0x8] sm:$0xff] %vm83, %v99
  $region21: #{jvp__.14} parent=0 // pred_fallthru
    _
  // Predicated region
  $region22: #{jvp__.14} parent=0 // pred_check
    _
  $region23: #{jvp__.14} parent=0 // pred_check_branch
    %103 = sbr.rel (0) target = $region25
  $region24: #{jvp__.14} parent=0 // pred_region
    _
  $region25: #{jvp__.14} parent=0 // pred_fallthru
    _
  // Predicated region
  $region26: #{jvp__.14} parent=0 // pred_check
    _
  $region27: #{jvp__.14} parent=0 // pred_check_branch
    %105 = sbr.rel (0) target = $region29
  $region28: #{jvp__.14} parent=0 // pred_region
    _
  $region29: #{jvp__.14} parent=0 // pred_fallthru
    _

// kernel: maml_forward.11
$region0: #{maml_forward.11}
  #allocation0 [shape = 'u32[]', space=smem, size = 0x4, offset = 0x4, fixed_abs, tag = 'smem constant byte address 0x4 - core index']
  #allocation1 [shape = 'u32[144,128]{1,0:T(1,128)}', space=vmem, size = 0x12000, scoped, tag = 'internal scratch']
  %s0 = inlined_call_operand.vmem [shape: f32[16,5], index: 0, kind: input, shape index: {}]
  %s1 = inlined_call_operand.vmem [shape: s32[16,1], index: 1, kind: input, shape index: {}]
  %s2 = inlined_call_operand.hbm [shape: f32[1,1], index: 2, kind: output, shape index: {0}]
  %s3 = inlined_call_operand.hbm [shape: f32[1,1], index: 3, kind: output, shape index: {1}]
  %4 = xla_tuple %s2, %s3
  %s5 = sld [smem:[#allocation0]]
  $region26: #{maml_forward.11} parent=0
    _
  %s7 = ssub.s32 1, %s5
  %s8 = scalar_select 0, %s7, %s5
  $region1: #{maml_forward.11} parent=0
    #allocation2 [shape = 'u8[512]{0}', space=vmem, size = 0x400, scoped, tag = 'output window, operand 0, single buffered']
    #allocation3 [shape = 's32[1]{0}', space=sflag, size = 0x4, scoped, tag = 'scoped memory for maml_forward.11']
    #allocation4 [shape = 'u8[512]{0}', space=vmem, size = 0x400, scoped, tag = 'output window, operand 1, single buffered']
    #allocation5 [shape = 's32[1]{0}', space=sflag, size = 0x4, scoped, tag = 'scoped memory for maml_forward.11']
    %9 = vsyncpa [#allocation3], 0
    %10 = vsyncpa [#allocation5], 0
    // Predicated region
    $region2: #{maml_forward.11} parent=1 // pred_check
      _
    $region3: #{maml_forward.11} parent=1 // pred_check_branch
      %12 = sbr.rel (0) target = $region5
    $region4: #{maml_forward.11} parent=1 // pred_region
      _
    $region5: #{maml_forward.11} parent=1 // pred_fallthru
      _
    // Predicated region
    $region6: #{maml_forward.11} parent=1 // pred_check
      _
    $region7: #{maml_forward.11} parent=1 // pred_check_branch
      %14 = sbr.rel (0) target = $region9
    $region8: #{maml_forward.11} parent=1 // pred_region
      _
    $region9: #{maml_forward.11} parent=1 // pred_fallthru
      _
    %v15 = vld [vmem:[%s0] sm:$0xff]
    %v16 = vld [vmem:[%s0 + $0x8] sm:$0xff]
    %v17 = vld [vmem:[%s1] sm:$0xff]
    %v18 = vld [vmem:[%s1 + $0x8] sm:$0xff]
    %v19 = vlaneseq
    %v20 = vand.u32 %v19, 127
    %21 = vset.pattern.permute.xlu0 0
    %22 = vperm.xlu0 %21, %v17
    %v23 = vpop.permute.xlu0 %22
    %24 = vset.pattern.permute.xlu0 0
    %25 = vperm.xlu0 %24, %v18
    %v26 = vpop.permute.xlu0 %25
    %vm27 = vcmp.eq.s32.totalorder %v20, %v23
    %vm28 = vcmp.eq.s32.totalorder %v20, %v26
    %v29 = vsel %vm27, 1, 0
    %v30 = vsel %vm28, 1, 0
    %v31 = vcvt.s32.f32 %v29
    %v32 = vcvt.s32.f32 %v30
    %vm33 = vcmask 39936
    %v34 = vsel %vm33, %v15, -inf
    %35 = vmax.xlane.f32.xlu0 %v34
    %v36 = vpop.xlane.xlu0 %35
    %v37 = vsel %vm33, %v16, -inf
    %38 = vmax.xlane.f32.xlu0 %v37
    %v39 = vpop.xlane.xlu0 %38
    %v40 = vsub.f32 %v15, %v36
    %v41 = vsub.f32 %v16, %v39
    %v42 = vmul.f32 %v40, 1.442695
    %v43 = vpow.pop %v42
    %v44 = vmul.f32 %v41, 1.442695
    %v45 = vpow.pop %v44
    %v46 = vsel %vm33, %v43, 0.0
    %47 = vadd.xlane.f32.xlu0 %v46
    %v48 = vpop.xlane.xlu0 %47
    %v49 = vsel %vm33, %v45, 0.0
    %50 = vadd.xlane.f32.xlu0 %v49
    %v51 = vpop.xlane.xlu0 %50
    %v52 = vlog2.pop %v48
    %v53 = vmul.f32 %v52, 0.6931472
    %v54 = vlog2.pop %v51
    %v55 = vmul.f32 %v54, 0.6931472
    %v56 = vsub.f32 %v40, %v53
    %v57 = vsub.f32 %v41, %v55
    %v58 = vmul.f32 %v31, %v56
    %v59 = vmul.f32 %v32, %v57
    %v60 = vsel %vm33, %v58, 0.0
    %61 = vadd.xlane.f32.xlu0 %v60
    %v62 = vpop.xlane.xlu0 %61
    %v63 = vsel %vm33, %v59, 0.0
    %64 = vadd.xlane.f32.xlu0 %v63
    %v65 = vpop.xlane.xlu0 %64
    %v66 = vsub.f32 0.0, %v62
    %v67 = vsub.f32 0.0, %v65
    %vm68 = vcmp.ge.f32.partialorder %v15, %v36
    %vm69 = vcmp.ge.f32.partialorder %v16, %v39
    %v70 = vcvt.s32.f32 %v20
    %v71 = vsel %vm68, %v70, 5.0
    %v72 = vsel %vm69, %v70, 5.0
    %v73 = vsel %vm33, %v71, inf
    %74 = vmin.xlane.f32.xlu0 %v73
    %v75 = vpop.xlane.xlu0 %74
    %v76 = vsel %vm33, %v72, inf
    %77 = vmin.xlane.f32.xlu0 %v76
    %v78 = vpop.xlane.xlu0 %77
    %v79 = vcvt.s32.f32 %v17
    %v80 = vcvt.s32.f32 %v18
    %vm81 = vcmp.eq.f32.partialorder %v75, %v79
    %vm82 = vcmp.eq.f32.partialorder %v78, %v80
    %v83 = vsel %vm81, 1, 0
    %v84 = vsel %vm82, 1, 0
    %v85 = vcvt.s32.f32 %v83
    %v86 = vcvt.s32.f32 %v84
    %v87 = vadd.f32 %v66, %v67
    %v88 = vrot.slane %v87, 4
    %v89 = vadd.f32 %v87, %v88
    %v90 = vrot.slane %v89, 2
    %v91 = vadd.f32 %v89, %v90
    %v92 = vrot.slane %v91, 1
    %v93 = vadd.f32 %v91, %v92
    %v94 = vmul.f32 %v93, 0.1
    %vm95 = vcmask 0
    %96 = vst.msk [vmem:[#allocation2] sm:$0x1] %vm95, %v94
    %vm97 = vcmask 7168
    %v98 = vsel %vm97, %v85, 0.0
    %v99 = vsel %vm97, %v86, 0.0
    %v100 = vadd.f32 %v98, %v99
    %v101 = vrot.slane %v100, 4
    %v102 = vadd.f32 %v100, %v101
    %v103 = vrot.slane %v102, 2
    %v104 = vadd.f32 %v102, %v103
    %v105 = vrot.slane %v104, 1
    %v106 = vadd.f32 %v104, %v105
    %v107 = vmul.f32 %v106, 0.1
    %108 = vst.msk [vmem:[#allocation4] sm:$0x1] %vm95, %v107
    // Predicated region
    $region10: #{maml_forward.11} parent=1 // pred_check
      _
    $region11: #{maml_forward.11} parent=1 // pred_check_branch
      %110 = sbr.rel (0) target = $region13
    $region12: #{maml_forward.11} parent=1 // pred_region
      %s112 = ssub.s32 16, 16
      %113 = vsyncadd [#allocation3], %s112
      %s115 = sshll.u32 [#allocation2], 4
      %s116 = int_to_ptr.vmem [resolvable:$true] %s115
      %118 = dma.vmem_to_hbm [thread:$0]  %s116, 16, %s2, [#allocation3]
    $region13: #{maml_forward.11} parent=1 // pred_fallthru
      _
    // Predicated region
    $region14: #{maml_forward.11} parent=1 // pred_check
      _
    $region15: #{maml_forward.11} parent=1 // pred_check_branch
      %120 = sbr.rel (0) target = $region17
    $region16: #{maml_forward.11} parent=1 // pred_region
      %s122 = ssub.s32 16, 16
      %123 = vsyncadd [#allocation5], %s122
      %s125 = sshll.u32 [#allocation4], 4
      %s126 = int_to_ptr.vmem [resolvable:$true] %s125
      %128 = dma.vmem_to_hbm [thread:$0]  %s126, 16, %s3, [#allocation5]
    $region17: #{maml_forward.11} parent=1 // pred_fallthru
      _
    // Predicated region
    $region18: #{maml_forward.11} parent=1 // pred_check
      _
    $region19: #{maml_forward.11} parent=1 // pred_check_branch
      %130 = sbr.rel (0) target = $region21
    $region20: #{maml_forward.11} parent=1 // pred_region
      %131 = dma.done [#allocation3], 16
    $region21: #{maml_forward.11} parent=1 // pred_fallthru
      _
    // Predicated region
    $region22: #{maml_forward.11} parent=1 // pred_check
      _
    $region23: #{maml_forward.11} parent=1 // pred_check_branch
      %133 = sbr.rel (0) target = $region25
    $region24: #{maml_forward.11} parent=1 // pred_region
      %134 = dma.done [#allocation5], 16
    $region25: #{maml_forward.11} parent=1 // pred_fallthru
      _
    %135 = vsyncpa [#allocation3], 1
    %136 = vsyncpa [#allocation5], 1

</llo_original>
